<compile_context>
chip_gen: v6e
topology: v6e:2x2x1
jax: 0.10.0
libtpu: 0.0.40
codegen_flags: <defaults>
</compile_context>

<pallas_src>
import functools
import math

import jax
import jax.numpy as jnp
from jax.experimental import pallas as pl
from jax.experimental.pallas import tpu as pltpu

N_HEADS = 4
N_LAYERS = 3
DIM_FF = 2048          # PyTorch TransformerEncoderLayer default dim_feedforward
LN_EPS = 1e-5          # PyTorch LayerNorm default eps
VMEM_LIMIT = 32 * 1024 * 1024


def _block(m, cap, align=1):
    """Largest divisor of m that is <= cap (and a multiple of `align` when tiling)."""
    if m <= cap:
        return m
    for b in range(cap, align - 1, -1):
        if m % b == 0 and b % align == 0:
            return b
    return m


# ----------------------------- Pallas kernels ------------------------------

def _embed_kernel(x_ref, w_ref, o_ref):
    # (bm, V) f32 -> bf16 MXU matmul -> (bm, E) f32.  No bias in the module.
    o_ref[...] = jnp.dot(x_ref[...].astype(jnp.bfloat16), w_ref[...],
                         preferred_element_type=jnp.float32)


def embed_pallas(x, w):
    """x: (M, V) f32, w: (V, E) bf16 -> (M, E) f32."""
    M, V = x.shape
    E = w.shape[1]
    bm = _block(M, 512, align=8)
    return pl.pallas_call(
        _embed_kernel,
        out_shape=jax.ShapeDtypeStruct((M, E), jnp.float32),
        grid=(M // bm,),
        in_specs=[pl.BlockSpec((bm, V), lambda i: (i, 0)),
                  pl.BlockSpec((V, E), lambda i: (0, 0))],
        out_specs=pl.BlockSpec((bm, E), lambda i: (i, 0)),
        compiler_params=pltpu.CompilerParams(
            dimension_semantics=("parallel",),
            vmem_limit_bytes=VMEM_LIMIT),
    )(x, w)


def _mha_ln_kernel(x_ref, wq_ref, wk_ref, wv_ref, bq_ref, bk_ref, bv_ref,
                   wo_ref, bo_ref, g_ref, b_ref, o_ref, *, n_heads, scale, eps):
    """Fused multi-head self-attention + out-proj + residual + LayerNorm.

    x: (bn, L, E) where bn is a block of the transformer "batch" axis (S) and
    L is the transformer "sequence" axis (B).  All heads handled here with
    batched einsums (no grid loop over heads, no external transposes).
    """
    x = x_ref[...]                                   # (bn, L, E) f32
    bn, L, E = x.shape
    hd = E // n_heads
    xb = x.astype(jnp.bfloat16)

    y = jnp.zeros((bn, L, E), jnp.float32)
    for h in range(n_heads):                         # H=4, unrolled at trace time
        wq = jnp.broadcast_to(wq_ref[h], (bn, E, hd))
        wk = jnp.broadcast_to(wk_ref[h], (bn, E, hd))
        wv = jnp.broadcast_to(wv_ref[h], (bn, E, hd))
        q = jnp.einsum('nle,ned->nld', xb, wq,
                       preferred_element_type=jnp.float32) + bq_ref[h]
        k = jnp.einsum('nle,ned->nld', xb, wk,
                       preferred_element_type=jnp.float32) + bk_ref[h]
        v = jnp.einsum('nle,ned->nld', xb, wv,
                       preferred_element_type=jnp.float32) + bv_ref[h]

        s = jnp.einsum('nld,nmd->nlm', q.astype(jnp.bfloat16),
                       k.astype(jnp.bfloat16),
                       preferred_element_type=jnp.float32) * scale
        s = s - jnp.max(s, axis=-1, keepdims=True)
        p = jnp.exp(s)
        p = p * pl.reciprocal(jnp.sum(p, axis=-1, keepdims=True), approx=True)

        a = jnp.einsum('nlm,nmd->nld', p.astype(jnp.bfloat16),
                       v.astype(jnp.bfloat16),
                       preferred_element_type=jnp.float32)
        wo = jnp.broadcast_to(wo_ref[h], (bn, hd, E))
        y = y + jnp.einsum('nld,nde->nle', a.astype(jnp.bfloat16), wo,
                           preferred_element_type=jnp.float32)

    y = y + bo_ref[...]                              # out-proj bias
    z = x + y                                        # residual (post-norm layer)
    mean = jnp.mean(z, axis=-1, keepdims=True)
    var = jnp.mean(jnp.square(z - mean), axis=-1, keepdims=True)
    zn = (z - mean) * jax.lax.rsqrt(var + eps)
    o_ref[...] = zn * g_ref[...] + b_ref[...]


def mha_ln_pallas(x, lp):
    """x: (N, L, E) f32 -> LayerNorm(x + MHA(x)): (N, L, E) f32."""
    N, L, E = x.shape
    H = lp["wq"].shape[0]
    hd = E // H
    bn = _block(N, 64)

    full3 = lambda shp: pl.BlockSpec(shp, lambda i: (0, 0, 0))
    full4 = lambda shp: pl.BlockSpec(shp, lambda i: (0, 0, 0, 0))

    return pl.pallas_call(
        functools.partial(_mha_ln_kernel, n_heads=H,
                          scale=1.0 / math.sqrt(hd), eps=LN_EPS),
        out_shape=jax.ShapeDtypeStruct((N, L, E), jnp.float32),
        grid=(N // bn,),
        in_specs=[pl.BlockSpec((bn, L, E), lambda i: (i, 0, 0)),
                  full3((H, E, hd)), full3((H, E, hd)), full3((H, E, hd)),
                  full4((H, 1, 1, hd)), full4((H, 1, 1, hd)), full4((H, 1, 1, hd)),
                  full3((H, hd, E)),
                  full3((1, 1, E)), full3((1, 1, E)), full3((1, 1, E))],
        out_specs=pl.BlockSpec((bn, L, E), lambda i: (i, 0, 0)),
        compiler_params=pltpu.CompilerParams(
            dimension_semantics=("parallel",),
            vmem_limit_bytes=VMEM_LIMIT),
    )(x, lp["wq"], lp["wk"], lp["wv"], lp["bq"], lp["bk"], lp["bv"],
      lp["wo"], lp["bo"], lp["ln1_g"], lp["ln1_b"])


def _ffn_ln_kernel(x_ref, w1_ref, b1_ref, w2_ref, b2_ref, g_ref, b_ref, o_ref,
                   *, eps):
    """Fused FF1 + ReLU + FF2 + residual + LayerNorm (row-wise, 2-D dots)."""
    x = x_ref[...]                                   # (bm, E) f32
    h = jnp.dot(x.astype(jnp.bfloat16), w1_ref[...],
                preferred_element_type=jnp.float32) + b1_ref[...]
    h = jnp.maximum(h, 0.0)
    y = jnp.dot(h.astype(jnp.bfloat16), w2_ref[...],
                preferred_element_type=jnp.float32) + b2_ref[...]
    z = x + y
    mean = jnp.mean(z, axis=-1, keepdims=True)
    var = jnp.mean(jnp.square(z - mean), axis=-1, keepdims=True)
    zn = (z - mean) * jax.lax.rsqrt(var + eps)
    o_ref[...] = zn * g_ref[...] + b_ref[...]


def ffn_ln_pallas(x, lp):
    """x: (M, E) f32 -> LayerNorm(x + FF(x)): (M, E) f32."""
    M, E = x.shape
    F = lp["ff1_w"].shape[1]
    bm = _block(M, 256, align=8)
    return pl.pallas_call(
        functools.partial(_ffn_ln_kernel, eps=LN_EPS),
        out_shape=jax.ShapeDtypeStruct((M, E), jnp.float32),
        grid=(M // bm,),
        in_specs=[pl.BlockSpec((bm, E), lambda i: (i, 0)),
                  pl.BlockSpec((E, F), lambda i: (0, 0)),
                  pl.BlockSpec((1, F), lambda i: (0, 0)),
                  pl.BlockSpec((F, E), lambda i: (0, 0)),
                  pl.BlockSpec((1, E), lambda i: (0, 0)),
                  pl.BlockSpec((1, E), lambda i: (0, 0)),
                  pl.BlockSpec((1, E), lambda i: (0, 0))],
        out_specs=pl.BlockSpec((bm, E), lambda i: (i, 0)),
        compiler_params=pltpu.CompilerParams(
            dimension_semantics=("parallel",),
            vmem_limit_bytes=VMEM_LIMIT),
    )(x, lp["ff1_w"], lp["ff1_b"], lp["ff2_w"], lp["ff2_b"],
      lp["ln2_g"], lp["ln2_b"])


def _head_kernel(x_ref, whw_ref, bhw_ref, wf_ref, bf_ref, wo_ref, bo_ref, o_ref):
    """Fused highway(Linear+ReLU) -> feature2out(Linear+ReLU) -> out2logits(Linear+Sigmoid)."""
    x = x_ref[...]                                   # (bB, S*E) f32
    h = jnp.dot(x.astype(jnp.bfloat16), whw_ref[...],
                preferred_element_type=jnp.float32) + bhw_ref[...]
    h = jnp.maximum(h, 0.0)
    f = jnp.dot(h.astype(jnp.bfloat16), wf_ref[...],
                preferred_element_type=jnp.float32) + bf_ref[...]
    f = jnp.maximum(f, 0.0)
    logit = jnp.dot(f.astype(jnp.bfloat16), wo_ref[...],
                    preferred_element_type=jnp.float32) + bo_ref[...]
    logit = jnp.clip(logit, -30.0, 30.0)             # overflow-safe sigmoid, f32
    o_ref[...] = 1.0 / (1.0 + jnp.exp(-logit))


def head_pallas(x, params):
    """x: (B, S*E) f32 -> sigmoid logits (B, 1) f32."""
    B, SE = x.shape
    E = params["highway_w"].shape[1]
    P = params["f2o_w"].shape[1]
    bb = _block(B, 256, align=8)
    return pl.pallas_call(
        _head_kernel,
        out_shape=jax.ShapeDtypeStruct((B, 1), jnp.float32),
        grid=(B // bb,),
        in_specs=[pl.BlockSpec((bb, SE), lambda i: (i, 0)),
                  pl.BlockSpec((SE, E), lambda i: (0, 0)),
                  pl.BlockSpec((1, E), lambda i: (0, 0)),
                  pl.BlockSpec((E, P), lambda i: (0, 0)),
                  pl.BlockSpec((1, P), lambda i: (0, 0)),
                  pl.BlockSpec((P, 1), lambda i: (0, 0)),
                  pl.BlockSpec((1, 1), lambda i: (0, 0))],
        out_specs=pl.BlockSpec((bb, 1), lambda i: (i, 0)),
        compiler_params=pltpu.CompilerParams(
            dimension_semantics=("parallel",),
            vmem_limit_bytes=VMEM_LIMIT),
    )(x, params["highway_w"], params["highway_b"],
      params["f2o_w"], params["f2o_b"],
      params["o2l_w"], params["o2l_b"])


# --------------------------- parameters / glue ------------------------------

def positional_encoding(max_seq_len, embed_dim):
    p_idx = jnp.arange(max_seq_len, dtype=jnp.float32)[:, None]
    d_idx = jnp.arange(embed_dim // 2, dtype=jnp.float32)[None, :]
    term = p_idx / (10000.0 ** (2.0 * d_idx / embed_dim))
    enc = jnp.zeros((max_seq_len, embed_dim), jnp.float32)
    enc = enc.at[:, 0::2].set(jnp.sin(term))
    enc = enc.at[:, 1::2].set(jnp.cos(term))
    return enc[None]                                  # (1, S, E)


def init_params(key, embed_dim, max_seq_len, vocab_size):
    E, S, V = embed_dim, max_seq_len, vocab_size
    H, hd = N_HEADS, embed_dim // N_HEADS
    keys = jax.random.split(key, 4 + N_LAYERS)

    def nrm(k, shape, std):
        # weights stored in bf16 (MXU-native); accumulation stays f32 in-kernel
        return (std * jax.random.normal(k, shape, jnp.float32)).astype(jnp.bfloat16)

    params = {
        "emb_w": nrm(keys[0], (V, E), 1.0 / math.sqrt(V)),     # Linear(V,E,bias=False)
        "highway_w": nrm(keys[1], (S * E, E), 1.0 / math.sqrt(S * E)),
        "highway_b": jnp.zeros((1, E), jnp.float32),
        "f2o_w": nrm(keys[2], (E, 100), 1.0 / math.sqrt(E)),
        "f2o_b": jnp.zeros((1, 100), jnp.float32),
        "o2l_w": nrm(keys[3], (100, 1), 0.1),
        "o2l_b": jnp.zeros((1, 1), jnp.float32),
        "pos_enc": positional_encoding(S, E),
        "layers": [],
    }
    for l in range(N_LAYERS):
        lk = jax.random.split(keys[4 + l], 6)
        params["layers"].append({
            # per-head projection weights (pre-split so the fused kernel needs
            # no lane slicing / head transposes)
            "wq": nrm(lk[0], (H, E, hd), 1.0 / math.sqrt(E)),
            "wk": nrm(lk[1], (H, E, hd), 1.0 / math.sqrt(E)),
            "wv": nrm(lk[2], (H, E, hd), 1.0 / math.sqrt(E)),
            "bq": jnp.zeros((H, 1, 1, hd), jnp.float32),
            "bk": jnp.zeros((H, 1, 1, hd), jnp.float32),
            "bv": jnp.zeros((H, 1, 1, hd), jnp.float32),
            "wo": nrm(lk[3], (H, hd, E), 1.0 / math.sqrt(E)),
            "bo": jnp.zeros((1, 1, E), jnp.float32),
            "ln1_g": jnp.ones((1, 1, E), jnp.float32),
            "ln1_b": jnp.zeros((1, 1, E), jnp.float32),
            "ff1_w": nrm(lk[4], (E, DIM_FF), 1.0 / math.sqrt(E)),
            "ff1_b": jnp.zeros((1, DIM_FF), jnp.float32),
            "ff2_w": nrm(lk[5], (DIM_FF, E), 1.0 / math.sqrt(DIM_FF)),
            "ff2_b": jnp.zeros((1, E), jnp.float32),
            "ln2_g": jnp.ones((1, E), jnp.float32),
            "ln2_b": jnp.zeros((1, E), jnp.float32),
        })
    return params


def ourgan_d_forward(inp, params):
    """inp: (B, S, V) -> sigmoid logits (B, 1)."""
    B, S, V = inp.shape
    E = params["emb_w"].shape[1]

    # embeddings (Linear, no bias).  NOTE: for strictly one-hot inputs this
    # could be a row gather, but the module contract is a dense Linear on
    # (B, S, V), so the general matmul is kept.
    emb = embed_pallas(inp.reshape(B * S, V), params["emb_w"]).reshape(B, S, E)
    emb = emb + params["pos_enc"][:, :S, :]

    # PyTorch TransformerEncoder without batch_first: dim0=B is the sequence
    # axis L, dim1=S is the batch axis N.  Arrange once as (N, L, E) so the
    # fused kernels use leading-batch einsums; transpose back at the end.
    x3 = jnp.transpose(emb, (1, 0, 2))                # (S, B, E) == (N, L, E)
    N, L = S, B
    for lp in params["layers"]:
        x3 = mha_ln_pallas(x3, lp)                            # MHA + res + LN1
        x2 = ffn_ln_pallas(x3.reshape(N * L, E), lp)          # FFN + res + LN2
        x3 = x2.reshape(N, L, E)

    trans = jnp.transpose(x3, (1, 0, 2))              # back to (B, S, E)

    # highway -> feature2out -> out2logits -> sigmoid (single fused kernel)
    logits = head_pallas(trans.reshape(B, S * E), params)
    return logits                                      # (B, 1)


# ---------------------------------- main ------------------------------------

if __name__ == "__main__":
    B, S, V, E = 2, 8, 16, 32           # batch, max_seq_len, vocab, embed_dim

    key = jax.random.PRNGKey(0)
    k_tok, k_par = jax.random.split(key)

    tokens = jax.random.randint(k_tok, (B, S), 0, V)
    inp = jax.nn.one_hot(tokens, V, dtype=jnp.float32)          # (B, S, V)

    params = init_params(k_par, E, S, V)

    fwd = jax.jit(ourgan_d_forward)
    out = fwd(inp, params)
    jax.block_until_ready(out)

    assert out.shape == (B, 1), out.shape
    assert bool(jnp.all(jnp.isfinite(out)))
    assert bool(jnp.all((out >= 0.0) & (out <= 1.0)))   # sigmoid output
    print("KERNEL_OK")
</pallas_src>

<mosaic_0001>
module attributes {stable_mosaic.version = 11 : i64} {
  func.func @_embed_kernel(%arg0: i32, %arg1: memref<16x16xf32, #tpu.memory_space<vmem>>, %arg2: memref<16x32xbf16, #tpu.memory_space<vmem>>, %arg3: memref<16x32xf32, #tpu.memory_space<vmem>>) attributes {dimension_semantics = [#tpu.dimension_semantics<parallel>], iteration_bounds = array<i64: 1>, scalar_prefetch = 0 : i64, scratch_operands = 0 : i64, tpu.core_type = #tpu.core_type<tc>, window_params = [{transform_indices = @transform_0, window_bounds = array<i64: 16, 16>}, {pipeline_mode = #tpu.pipeline_mode<synchronous>, transform_indices = @transform_1, window_bounds = array<i64: 16, 32>}, {transform_indices = @transform_2, window_bounds = array<i64: 16, 32>}]} {
    %c0 = arith.constant 0 : index
    %c0_0 = arith.constant 0 : index
    %0 = vector.load %arg1[%c0, %c0_0] : memref<16x16xf32, #tpu.memory_space<vmem>>, vector<16x16xf32>
    %1 = arith.truncf %0 : vector<16x16xf32> to vector<16x16xbf16>
    %c0_1 = arith.constant 0 : index
    %c0_2 = arith.constant 0 : index
    %2 = vector.load %arg2[%c0_1, %c0_2] : memref<16x32xbf16, #tpu.memory_space<vmem>>, vector<16x32xbf16>
    %cst = arith.constant dense<0.000000e+00> : vector<16x32xf32>
    %3 = tpu.matmul %1, %2, %cst {dimension_numbers = #tpu.dot_dimension_numbers<[1], [0], [0], [1], [0, 0, 1, 1], [], []>} : vector<16x16xbf16>, vector<16x32xbf16>, vector<16x32xf32> -> vector<16x32xf32>
    %c0_3 = arith.constant 0 : index
    %c0_4 = arith.constant 0 : index
    %4 = vector.load %arg3[%c0_3, %c0_4] : memref<16x32xf32, #tpu.memory_space<vmem>>, vector<16x32xf32>
    tpu.vector_store %arg3[%c0_3, %c0_4], %3 {strides = array<i32>} : memref<16x32xf32, #tpu.memory_space<vmem>>, vector<16x32xf32>,
    return
  }
  func.func @transform_0(%arg0: i32) -> (i32, i32) {
    %c0_i32 = arith.constant 0 : i32
    %c0_i32_0 = arith.constant 0 : i32
    return %arg0, %c0_i32 : i32, i32
  }
  func.func @transform_1(%arg0: i32) -> (i32, i32) {
    %c0_i32 = arith.constant 0 : i32
    %c0_i32_0 = arith.constant 0 : i32
    %c0_i32_1 = arith.constant 0 : i32
    return %c0_i32, %c0_i32_0 : i32, i32
  }
  func.func @transform_2(%arg0: i32) -> (i32, i32) {
    %c0_i32 = arith.constant 0 : i32
    %c0_i32_0 = arith.constant 0 : i32
    return %arg0, %c0_i32 : i32, i32
  }
}

module attributes {stable_mosaic.version = 11 : i64} {
  func.func @_mha_ln_kernel(%arg0: i32, %arg1: memref<8x2x32xf32, #tpu.memory_space<vmem>>, %arg2: memref<4x32x8xbf16, #tpu.memory_space<vmem>>, %arg3: memref<4x32x8xbf16, #tpu.memory_space<vmem>>, %arg4: memref<4x32x8xbf16, #tpu.memory_space<vmem>>, %arg5: memref<4x1x1x8xf32, #tpu.memory_space<vmem>>, %arg6: memref<4x1x1x8xf32, #tpu.memory_space<vmem>>, %arg7: memref<4x1x1x8xf32, #tpu.memory_space<vmem>>, %arg8: memref<4x8x32xbf16, #tpu.memory_space<vmem>>, %arg9: memref<1x1x32xf32, #tpu.memory_space<vmem>>, %arg10: memref<1x1x32xf32, #tpu.memory_space<vmem>>, %arg11: memref<1x1x32xf32, #tpu.memory_space<vmem>>, %arg12: memref<8x2x32xf32, #tpu.memory_space<vmem>>) attributes {dimension_semantics = [#tpu.dimension_semantics<parallel>], iteration_bounds = array<i64: 1>, scalar_prefetch = 0 : i64, scratch_operands = 0 : i64, tpu.core_type = #tpu.core_type<tc>, window_params = [{transform_indices = @transform_0, window_bounds = array<i64: 8, 2, 32>}, {pipeline_mode = #tpu.pipeline_mode<synchronous>, transform_indices = @transform_1, window_bounds = array<i64: 4, 32, 8>}, {pipeline_mode = #tpu.pipeline_mode<synchronous>, transform_indices = @transform_2, window_bounds = array<i64: 4, 32, 8>}, {pipeline_mode = #tpu.pipeline_mode<synchronous>, transform_indices = @transform_3, window_bounds = array<i64: 4, 32, 8>}, {pipeline_mode = #tpu.pipeline_mode<synchronous>, transform_indices = @transform_4, window_bounds = array<i64: 4, 1, 1, 8>}, {pipeline_mode = #tpu.pipeline_mode<synchronous>, transform_indices = @transform_5, window_bounds = array<i64: 4, 1, 1, 8>}, {pipeline_mode = #tpu.pipeline_mode<synchronous>, transform_indices = @transform_6, window_bounds = array<i64: 4, 1, 1, 8>}, {pipeline_mode = #tpu.pipeline_mode<synchronous>, transform_indices = @transform_7, window_bounds = array<i64: 4, 8, 32>}, {pipeline_mode = #tpu.pipeline_mode<synchronous>, transform_indices = @transform_8, window_bounds = array<i64: 1, 1, 32>}, {pipeline_mode = #tpu.pipeline_mode<synchronous>, transform_indices = @transform_9, window_bounds = array<i64: 1, 1, 32>}, {pipeline_mode = #tpu.pipeline_mode<synchronous>, transform_indices = @transform_10, window_bounds = array<i64: 1, 1, 32>}, {transform_indices = @transform_11, window_bounds = array<i64: 8, 2, 32>}]} {
    %c0 = arith.constant 0 : index
    %c0_0 = arith.constant 0 : index
    %c0_1 = arith.constant 0 : index
    %0 = vector.load %arg1[%c0, %c0_0, %c0_1] : memref<8x2x32xf32, #tpu.memory_space<vmem>>, vector<8x2x32xf32>
    %1 = arith.truncf %0 : vector<8x2x32xf32> to vector<8x2x32xbf16>
    %cst = arith.constant 0.000000e+00 : f32
    %2 = vector.broadcast %cst : f32 to vector<8x2x32xf32>
    %c0_2 = arith.constant 0 : index
    %c0_3 = arith.constant 0 : index
    %c0_4 = arith.constant 0 : index
    %3 = vector.load %arg2[%c0_2, %c0_3, %c0_4] : memref<4x32x8xbf16, #tpu.memory_space<vmem>>, vector<1x32x8xbf16>
    %4 = vector.shape_cast %3 : vector<1x32x8xbf16> to vector<32x8xbf16>
    %5 = vector.shape_cast %4 : vector<32x8xbf16> to vector<1x32x8xbf16>
    %6 = vector.broadcast %5 : vector<1x32x8xbf16> to vector<8x32x8xbf16>
    %c0_5 = arith.constant 0 : index
    %c0_6 = arith.constant 0 : index
    %c0_7 = arith.constant 0 : index
    %7 = vector.load %arg3[%c0_5, %c0_6, %c0_7] : memref<4x32x8xbf16, #tpu.memory_space<vmem>>, vector<1x32x8xbf16>
    %8 = vector.shape_cast %7 : vector<1x32x8xbf16> to vector<32x8xbf16>
    %9 = vector.shape_cast %8 : vector<32x8xbf16> to vector<1x32x8xbf16>
    %10 = vector.broadcast %9 : vector<1x32x8xbf16> to vector<8x32x8xbf16>
    %c0_8 = arith.constant 0 : index
    %c0_9 = arith.constant 0 : index
    %c0_10 = arith.constant 0 : index
    %11 = vector.load %arg4[%c0_8, %c0_9, %c0_10] : memref<4x32x8xbf16, #tpu.memory_space<vmem>>, vector<1x32x8xbf16>
    %12 = vector.shape_cast %11 : vector<1x32x8xbf16> to vector<32x8xbf16>
    %13 = vector.shape_cast %12 : vector<32x8xbf16> to vector<1x32x8xbf16>
    %14 = vector.broadcast %13 : vector<1x32x8xbf16> to vector<8x32x8xbf16>
    "tpu.trace_start"() <{level = 10 : i32, message = "nle,ned->nld"}> : () -> ()
    %cst_11 = arith.constant dense<0.000000e+00> : vector<8x2x8xf32>
    %15 = tpu.matmul %1, %6, %cst_11 {dimension_numbers = #tpu.dot_dimension_numbers<[2], [1], [1], [2], [0, 0, 0, 1, 1, 2], [0], [0]>} : vector<8x2x32xbf16>, vector<8x32x8xbf16>, vector<8x2x8xf32> -> vector<8x2x8xf32>
    "tpu.trace_stop"() : () -> ()
    %c0_12 = arith.constant 0 : index
    %c0_13 = arith.constant 0 : index
    %c0_14 = arith.constant 0 : index
    %c0_15 = arith.constant 0 : index
    %16 = vector.load %arg5[%c0_12, %c0_13, %c0_14, %c0_15] : memref<4x1x1x8xf32, #tpu.memory_space<vmem>>, vector<1x1x1x8xf32>
    %17 = vector.shape_cast %16 : vector<1x1x1x8xf32> to vector<1x1x8xf32>
    %18 = vector.broadcast %17 : vector<1x1x8xf32> to vector<8x2x8xf32>
    %19 = arith.addf %15, %18 : vector<8x2x8xf32>
    "tpu.trace_start"() <{level = 10 : i32, message = "nle,ned->nld"}> : () -> ()
    %cst_16 = arith.constant dense<0.000000e+00> : vector<8x2x8xf32>
    %20 = tpu.matmul %1, %10, %cst_16 {dimension_numbers = #tpu.dot_dimension_numbers<[2], [1], [1], [2], [0, 0, 0, 1, 1, 2], [0], [0]>} : vector<8x2x32xbf16>, vector<8x32x8xbf16>, vector<8x2x8xf32> -> vector<8x2x8xf32>
    "tpu.trace_stop"() : () -> ()
    %c0_17 = arith.constant 0 : index
    %c0_18 = arith.constant 0 : index
    %c0_19 = arith.constant 0 : index
    %c0_20 = arith.constant 0 : index
    %21 = vector.load %arg6[%c0_17, %c0_18, %c0_19, %c0_20] : memref<4x1x1x8xf32, #tpu.memory_space<vmem>>, vector<1x1x1x8xf32>
    %22 = vector.shape_cast %21 : vector<1x1x1x8xf32> to vector<1x1x8xf32>
    %23 = vector.broadcast %22 : vector<1x1x8xf32> to vector<8x2x8xf32>
    %24 = arith.addf %20, %23 : vector<8x2x8xf32>
    "tpu.trace_start"() <{level = 10 : i32, message = "nle,ned->nld"}> : () -> ()
    %cst_21 = arith.constant dense<0.000000e+00> : vector<8x2x8xf32>
    %25 = tpu.matmul %1, %14, %cst_21 {dimension_numbers = #tpu.dot_dimension_numbers<[2], [1], [1], [2], [0, 0, 0, 1, 1, 2], [0], [0]>} : vector<8x2x32xbf16>, vector<8x32x8xbf16>, vector<8x2x8xf32> -> vector<8x2x8xf32>
    "tpu.trace_stop"() : () -> ()
    %c0_22 = arith.constant 0 : index
    %c0_23 = arith.constant 0 : index
    %c0_24 = arith.constant 0 : index
    %c0_25 = arith.constant 0 : index
    %26 = vector.load %arg7[%c0_22, %c0_23, %c0_24, %c0_25] : memref<4x1x1x8xf32, #tpu.memory_space<vmem>>, vector<1x1x1x8xf32>
    %27 = vector.shape_cast %26 : vector<1x1x1x8xf32> to vector<1x1x8xf32>
    %28 = vector.broadcast %27 : vector<1x1x8xf32> to vector<8x2x8xf32>
    %29 = arith.addf %25, %28 : vector<8x2x8xf32>
    %30 = arith.truncf %19 : vector<8x2x8xf32> to vector<8x2x8xbf16>
    %31 = arith.truncf %24 : vector<8x2x8xf32> to vector<8x2x8xbf16>
    "tpu.trace_start"() <{level = 10 : i32, message = "nld,nmd->nlm"}> : () -> ()
    %cst_26 = arith.constant dense<0.000000e+00> : vector<8x2x2xf32>
    %32 = tpu.matmul %30, %31, %cst_26 {dimension_numbers = #tpu.dot_dimension_numbers<[2], [2], [1], [1], [0, 0, 0, 1, 1, 1], [0], [0]>} : vector<8x2x8xbf16>, vector<8x2x8xbf16>, vector<8x2x2xf32> -> vector<8x2x2xf32>
    "tpu.trace_stop"() : () -> ()
    %cst_27 = arith.constant 0.353553385 : f32
    %33 = vector.broadcast %cst_27 : f32 to vector<8x2x2xf32>
    %34 = arith.mulf %32, %33 : vector<8x2x2xf32>
    %cst_28 = arith.constant dense<0xFF800000> : vector<8x2xf32>
    %35 = vector.multi_reduction <maximumf>, %34, %cst_28 [2] : vector<8x2x2xf32> to vector<8x2xf32>
    %36 = vector.shape_cast %35 : vector<8x2xf32> to vector<8x2x1xf32>
    %37 = vector.broadcast %36 : vector<8x2x1xf32> to vector<8x2x2xf32>
    %38 = arith.subf %34, %37 : vector<8x2x2xf32>
    %39 = math.exp %38 : vector<8x2x2xf32>
    %cst_29 = arith.constant dense<0.000000e+00> : vector<8x2xf32>
    %40 = vector.multi_reduction <add>, %39, %cst_29 [2] : vector<8x2x2xf32> to vector<8x2xf32>
    %41 = vector.shape_cast %40 : vector<8x2xf32> to vector<8x2x1xf32>
    %42 = tpu.reciprocal %41 {approx = true} : vector<8x2x1xf32> -> vector<8x2x1xf32>
    %43 = vector.broadcast %42 : vector<8x2x1xf32> to vector<8x2x2xf32>
    %44 = arith.mulf %39, %43 : vector<8x2x2xf32>
    %45 = arith.truncf %44 : vector<8x2x2xf32> to vector<8x2x2xbf16>
    %46 = arith.truncf %29 : vector<8x2x8xf32> to vector<8x2x8xbf16>
    "tpu.trace_start"() <{level = 10 : i32, message = "nlm,nmd->nld"}> : () -> ()
    %cst_30 = arith.constant dense<0.000000e+00> : vector<8x2x8xf32>
    %47 = tpu.matmul %45, %46, %cst_30 {dimension_numbers = #tpu.dot_dimension_numbers<[2], [1], [1], [2], [0, 0, 0, 1, 1, 2], [0], [0]>} : vector<8x2x2xbf16>, vector<8x2x8xbf16>, vector<8x2x8xf32> -> vector<8x2x8xf32>
    "tpu.trace_stop"() : () -> ()
    %c0_31 = arith.constant 0 : index
    %c0_32 = arith.constant 0 : index
    %c0_33 = arith.constant 0 : index
    %48 = vector.load %arg8[%c0_31, %c0_32, %c0_33] : memref<4x8x32xbf16, #tpu.memory_space<vmem>>, vector<1x8x32xbf16>
    %49 = vector.shape_cast %48 : vector<1x8x32xbf16> to vector<8x32xbf16>
    %50 = vector.shape_cast %49 : vector<8x32xbf16> to vector<1x8x32xbf16>
    %51 = vector.broadcast %50 : vector<1x8x32xbf16> to vector<8x8x32xbf16>
    %52 = arith.truncf %47 : vector<8x2x8xf32> to vector<8x2x8xbf16>
    "tpu.trace_start"() <{level = 10 : i32, message = "nld,nde->nle"}> : () -> ()
    %cst_34 = arith.constant dense<0.000000e+00> : vector<8x2x32xf32>
    %53 = tpu.matmul %52, %51, %cst_34 {dimension_numbers = #tpu.dot_dimension_numbers<[2], [1], [1], [2], [0, 0, 0, 1, 1, 2], [0], [0]>} : vector<8x2x8xbf16>, vector<8x8x32xbf16>, vector<8x2x32xf32> -> vector<8x2x32xf32>
    "tpu.trace_stop"() : () -> ()
    %54 = arith.addf %2, %53 : vector<8x2x32xf32>
    %c1 = arith.constant 1 : index
    %c0_35 = arith.constant 0 : index
    %c0_36 = arith.constant 0 : index
    %55 = vector.load %arg2[%c1, %c0_35, %c0_36] : memref<4x32x8xbf16, #tpu.memory_space<vmem>>, vector<1x32x8xbf16>
    %56 = vector.shape_cast %55 : vector<1x32x8xbf16> to vector<32x8xbf16>
    %57 = vector.shape_cast %56 : vector<32x8xbf16> to vector<1x32x8xbf16>
    %58 = vector.broadcast %57 : vector<1x32x8xbf16> to vector<8x32x8xbf16>
    %c1_37 = arith.constant 1 : index
    %c0_38 = arith.constant 0 : index
    %c0_39 = arith.constant 0 : index
    %59 = vector.load %arg3[%c1_37, %c0_38, %c0_39] : memref<4x32x8xbf16, #tpu.memory_space<vmem>>, vector<1x32x8xbf16>
    %60 = vector.shape_cast %59 : vector<1x32x8xbf16> to vector<32x8xbf16>
    %61 = vector.shape_cast %60 : vector<32x8xbf16> to vector<1x32x8xbf16>
    %62 = vector.broadcast %61 : vector<1x32x8xbf16> to vector<8x32x8xbf16>
    %c1_40 = arith.constant 1 : index
    %c0_41 = arith.constant 0 : index
    %c0_42 = arith.constant 0 : index
    %63 = vector.load %arg4[%c1_40, %c0_41, %c0_42] : memref<4x32x8xbf16, #tpu.memory_space<vmem>>, vector<1x32x8xbf16>
    %64 = vector.shape_cast %63 : vector<1x32x8xbf16> to vector<32x8xbf16>
    %65 = vector.shape_cast %64 : vector<32x8xbf16> to vector<1x32x8xbf16>
    %66 = vector.broadcast %65 : vector<1x32x8xbf16> to vector<8x32x8xbf16>
    "tpu.trace_start"() <{level = 10 : i32, message = "nle,ned->nld"}> : () -> ()
    %cst_43 = arith.constant dense<0.000000e+00> : vector<8x2x8xf32>
    %67 = tpu.matmul %1, %58, %cst_43 {dimension_numbers = #tpu.dot_dimension_numbers<[2], [1], [1], [2], [0, 0, 0, 1, 1, 2], [0], [0]>} : vector<8x2x32xbf16>, vector<8x32x8xbf16>, vector<8x2x8xf32> -> vector<8x2x8xf32>
    "tpu.trace_stop"() : () -> ()
    %c1_44 = arith.constant 1 : index
    %c0_45 = arith.constant 0 : index
    %c0_46 = arith.constant 0 : index
    %c0_47 = arith.constant 0 : index
    %68 = vector.load %arg5[%c1_44, %c0_45, %c0_46, %c0_47] : memref<4x1x1x8xf32, #tpu.memory_space<vmem>>, vector<1x1x1x8xf32>
    %69 = vector.shape_cast %68 : vector<1x1x1x8xf32> to vector<1x1x8xf32>
    %70 = vector.broadcast %69 : vector<1x1x8xf32> to vector<8x2x8xf32>
    %71 = arith.addf %67, %70 : vector<8x2x8xf32>
    "tpu.trace_start"() <{level = 10 : i32, message = "nle,ned->nld"}> : () -> ()
    %cst_48 = arith.constant dense<0.000000e+00> : vector<8x2x8xf32>
    %72 = tpu.matmul %1, %62, %cst_48 {dimension_numbers = #tpu.dot_dimension_numbers<[2], [1], [1], [2], [0, 0, 0, 1, 1, 2], [0], [0]>} : vector<8x2x32xbf16>, vector<8x32x8xbf16>, vector<8x2x8xf32> -> vector<8x2x8xf32>
    "tpu.trace_stop"() : () -> ()
    %c1_49 = arith.constant 1 : index
    %c0_50 = arith.constant 0 : index
    %c0_51 = arith.constant 0 : index
    %c0_52 = arith.constant 0 : index
    %73 = vector.load %arg6[%c1_49, %c0_50, %c0_51, %c0_52] : memref<4x1x1x8xf32, #tpu.memory_space<vmem>>, vector<1x1x1x8xf32>
    %74 = vector.shape_cast %73 : vector<1x1x1x8xf32> to vector<1x1x8xf32>
    %75 = vector.broadcast %74 : vector<1x1x8xf32> to vector<8x2x8xf32>
    %76 = arith.addf %72, %75 : vector<8x2x8xf32>
    "tpu.trace_start"() <{level = 10 : i32, message = "nle,ned->nld"}> : () -> ()
    %cst_53 = arith.constant dense<0.000000e+00> : vector<8x2x8xf32>
    %77 = tpu.matmul %1, %66, %cst_53 {dimension_numbers = #tpu.dot_dimension_numbers<[2], [1], [1], [2], [0, 0, 0, 1, 1, 2], [0], [0]>} : vector<8x2x32xbf16>, vector<8x32x8xbf16>, vector<8x2x8xf32> -> vector<8x2x8xf32>
    "tpu.trace_stop"() : () -> ()
    %c1_54 = arith.constant 1 : index
    %c0_55 = arith.constant 0 : index
    %c0_56 = arith.constant 0 : index
    %c0_57 = arith.constant 0 : index
    %78 = vector.load %arg7[%c1_54, %c0_55, %c0_56, %c0_57] : memref<4x1x1x8xf32, #tpu.memory_space<vmem>>, vector<1x1x1x8xf32>
    %79 = vector.shape_cast %78 : vector<1x1x1x8xf32> to vector<1x1x8xf32>
    %80 = vector.broadcast %79 : vector<1x1x8xf32> to vector<8x2x8xf32>
    %81 = arith.addf %77, %80 : vector<8x2x8xf32>
    %82 = arith.truncf %71 : vector<8x2x8xf32> to vector<8x2x8xbf16>
    %83 = arith.truncf %76 : vector<8x2x8xf32> to vector<8x2x8xbf16>
    "tpu.trace_start"() <{level = 10 : i32, message = "nld,nmd->nlm"}> : () -> ()
    %cst_58 = arith.constant dense<0.000000e+00> : vector<8x2x2xf32>
    %84 = tpu.matmul %82, %83, %cst_58 {dimension_numbers = #tpu.dot_dimension_numbers<[2], [2], [1], [1], [0, 0, 0, 1, 1, 1], [0], [0]>} : vector<8x2x8xbf16>, vector<8x2x8xbf16>, vector<8x2x2xf32> -> vector<8x2x2xf32>
    "tpu.trace_stop"() : () -> ()
    %cst_59 = arith.constant 0.353553385 : f32
    %85 = vector.broadcast %cst_59 : f32 to vector<8x2x2xf32>
    %86 = arith.mulf %84, %85 : vector<8x2x2xf32>
    %cst_60 = arith.constant dense<0xFF800000> : vector<8x2xf32>
    %87 = vector.multi_reduction <maximumf>, %86, %cst_60 [2] : vector<8x2x2xf32> to vector<8x2xf32>
    %88 = vector.shape_cast %87 : vector<8x2xf32> to vector<8x2x1xf32>
    %89 = vector.broadcast %88 : vector<8x2x1xf32> to vector<8x2x2xf32>
    %90 = arith.subf %86, %89 : vector<8x2x2xf32>
    %91 = math.exp %90 : vector<8x2x2xf32>
    %cst_61 = arith.constant dense<0.000000e+00> : vector<8x2xf32>
    %92 = vector.multi_reduction <add>, %91, %cst_61 [2] : vector<8x2x2xf32> to vector<8x2xf32>
    %93 = vector.shape_cast %92 : vector<8x2xf32> to vector<8x2x1xf32>
    %94 = tpu.reciprocal %93 {approx = true} : vector<8x2x1xf32> -> vector<8x2x1xf32>
    %95 = vector.broadcast %94 : vector<8x2x1xf32> to vector<8x2x2xf32>
    %96 = arith.mulf %91, %95 : vector<8x2x2xf32>
    %97 = arith.truncf %96 : vector<8x2x2xf32> to vector<8x2x2xbf16>
    %98 = arith.truncf %81 : vector<8x2x8xf32> to vector<8x2x8xbf16>
    "tpu.trace_start"() <{level = 10 : i32, message = "nlm,nmd->nld"}> : () -> ()
    %cst_62 = arith.constant dense<0.000000e+00> : vector<8x2x8xf32>
    %99 = tpu.matmul %97, %98, %cst_62 {dimension_numbers = #tpu.dot_dimension_numbers<[2], [1], [1], [2], [0, 0, 0, 1, 1, 2], [0], [0]>} : vector<8x2x2xbf16>, vector<8x2x8xbf16>, vector<8x2x8xf32> -> vector<8x2x8xf32>
    "tpu.trace_stop"() : () -> ()
    %c1_63 = arith.constant 1 : index
    %c0_64 = arith.constant 0 : index
    %c0_65 = arith.constant 0 : index
    %100 = vector.load %arg8[%c1_63, %c0_64, %c0_65] : memref<4x8x32xbf16, #tpu.memory_space<vmem>>, vector<1x8x32xbf16>
    %101 = vector.shape_cast %100 : vector<1x8x32xbf16> to vector<8x32xbf16>
    %102 = vector.shape_cast %101 : vector<8x32xbf16> to vector<1x8x32xbf16>
    %103 = vector.broadcast %102 : vector<1x8x32xbf16> to vector<8x8x32xbf16>
    %104 = arith.truncf %99 : vector<8x2x8xf32> to vector<8x2x8xbf16>
    "tpu.trace_start"() <{level = 10 : i32, message = "nld,nde->nle"}> : () -> ()
    %cst_66 = arith.constant dense<0.000000e+00> : vector<8x2x32xf32>
    %105 = tpu.matmul %104, %103, %cst_66 {dimension_numbers = #tpu.dot_dimension_numbers<[2], [1], [1], [2], [0, 0, 0, 1, 1, 2], [0], [0]>} : vector<8x2x8xbf16>, vector<8x8x32xbf16>, vector<8x2x32xf32> -> vector<8x2x32xf32>
    "tpu.trace_stop"() : () -> ()
    %106 = arith.addf %54, %105 : vector<8x2x32xf32>
    %c2 = arith.constant 2 : index
    %c0_67 = arith.constant 0 : index
    %c0_68 = arith.constant 0 : index
    %107 = vector.load %arg2[%c2, %c0_67, %c0_68] : memref<4x32x8xbf16, #tpu.memory_space<vmem>>, vector<1x32x8xbf16>
    %108 = vector.shape_cast %107 : vector<1x32x8xbf16> to vector<32x8xbf16>
    %109 = vector.shape_cast %108 : vector<32x8xbf16> to vector<1x32x8xbf16>
    %110 = vector.broadcast %109 : vector<1x32x8xbf16> to vector<8x32x8xbf16>
    %c2_69 = arith.constant 2 : index
    %c0_70 = arith.constant 0 : index
    %c0_71 = arith.constant 0 : index
    %111 = vector.load %arg3[%c2_69, %c0_70, %c0_71] : memref<4x32x8xbf16, #tpu.memory_space<vmem>>, vector<1x32x8xbf16>
    %112 = vector.shape_cast %111 : vector<1x32x8xbf16> to vector<32x8xbf16>
    %113 = vector.shape_cast %112 : vector<32x8xbf16> to vector<1x32x8xbf16>
    %114 = vector.broadcast %113 : vector<1x32x8xbf16> to vector<8x32x8xbf16>
    %c2_72 = arith.constant 2 : index
    %c0_73 = arith.constant 0 : index
    %c0_74 = arith.constant 0 : index
    %115 = vector.load %arg4[%c2_72, %c0_73, %c0_74] : memref<4x32x8xbf16, #tpu.memory_space<vmem>>, vector<1x32x8xbf16>
    %116 = vector.shape_cast %115 : vector<1x32x8xbf16> to vector<32x8xbf16>
    %117 = vector.shape_cast %116 : vector<32x8xbf16> to vector<1x32x8xbf16>
    %118 = vector.broadcast %117 : vector<1x32x8xbf16> to vector<8x32x8xbf16>
    "tpu.trace_start"() <{level = 10 : i32, message = "nle,ned->nld"}> : () -> ()
    %cst_75 = arith.constant dense<0.000000e+00> : vector<8x2x8xf32>
    %119 = tpu.matmul %1, %110, %cst_75 {dimension_numbers = #tpu.dot_dimension_numbers<[2], [1], [1], [2], [0, 0, 0, 1, 1, 2], [0], [0]>} : vector<8x2x32xbf16>, vector<8x32x8xbf16>, vector<8x2x8xf32> -> vector<8x2x8xf32>
    "tpu.trace_stop"() : () -> ()
    %c2_76 = arith.constant 2 : index
    %c0_77 = arith.constant 0 : index
    %c0_78 = arith.constant 0 : index
    %c0_79 = arith.constant 0 : index
    %120 = vector.load %arg5[%c2_76, %c0_77, %c0_78, %c0_79] : memref<4x1x1x8xf32, #tpu.memory_space<vmem>>, vector<1x1x1x8xf32>
    %121 = vector.shape_cast %120 : vector<1x1x1x8xf32> to vector<1x1x8xf32>
    %122 = vector.broadcast %121 : vector<1x1x8xf32> to vector<8x2x8xf32>
    %123 = arith.addf %119, %122 : vector<8x2x8xf32>
    "tpu.trace_start"() <{level = 10 : i32, message = "nle,ned->nld"}> : () -> ()
    %cst_80 = arith.constant dense<0.000000e+00> : vector<8x2x8xf32>
    %124 = tpu.matmul %1, %114, %cst_80 {dimension_numbers = #tpu.dot_dimension_numbers<[2], [1], [1], [2], [0, 0, 0, 1, 1, 2], [0], [0]>} : vector<8x2x32xbf16>, vector<8x32x8xbf16>, vector<8x2x8xf32> -> vector<8x2x8xf32>
    "tpu.trace_stop"() : () -> ()
    %c2_81 = arith.constant 2 : index
    %c0_82 = arith.constant 0 : index
    %c0_83 = arith.constant 0 : index
    %c0_84 = arith.constant 0 : index
    %125 = vector.load %arg6[%c2_81, %c0_82, %c0_83, %c0_84] : memref<4x1x1x8xf32, #tpu.memory_space<vmem>>, vector<1x1x1x8xf32>
    %126 = vector.shape_cast %125 : vector<1x1x1x8xf32> to vector<1x1x8xf32>
    %127 = vector.broadcast %126 : vector<1x1x8xf32> to vector<8x2x8xf32>
    %128 = arith.addf %124, %127 : vector<8x2x8xf32>
    "tpu.trace_start"() <{level = 10 : i32, message = "nle,ned->nld"}> : () -> ()
    %cst_85 = arith.constant dense<0.000000e+00> : vector<8x2x8xf32>
    %129 = tpu.matmul %1, %118, %cst_85 {dimension_numbers = #tpu.dot_dimension_numbers<[2], [1], [1], [2], [0, 0, 0, 1, 1, 2], [0], [0]>} : vector<8x2x32xbf16>, vector<8x32x8xbf16>, vector<8x2x8xf32> -> vector<8x2x8xf32>
    "tpu.trace_stop"() : () -> ()
    %c2_86 = arith.constant 2 : index
    %c0_87 = arith.constant 0 : index
    %c0_88 = arith.constant 0 : index
    %c0_89 = arith.constant 0 : index
    %130 = vector.load %arg7[%c2_86, %c0_87, %c0_88, %c0_89] : memref<4x1x1x8xf32, #tpu.memory_space<vmem>>, vector<1x1x1x8xf32>
    %131 = vector.shape_cast %130 : vector<1x1x1x8xf32> to vector<1x1x8xf32>
    %132 = vector.broadcast %131 : vector<1x1x8xf32> to vector<8x2x8xf32>
    %133 = arith.addf %129, %132 : vector<8x2x8xf32>
    %134 = arith.truncf %123 : vector<8x2x8xf32> to vector<8x2x8xbf16>
    %135 = arith.truncf %128 : vector<8x2x8xf32> to vector<8x2x8xbf16>
    "tpu.trace_start"() <{level = 10 : i32, message = "nld,nmd->nlm"}> : () -> ()
    %cst_90 = arith.constant dense<0.000000e+00> : vector<8x2x2xf32>
    %136 = tpu.matmul %134, %135, %cst_90 {dimension_numbers = #tpu.dot_dimension_numbers<[2], [2], [1], [1], [0, 0, 0, 1, 1, 1], [0], [0]>} : vector<8x2x8xbf16>, vector<8x2x8xbf16>, vector<8x2x2xf32> -> vector<8x2x2xf32>
    "tpu.trace_stop"() : () -> ()
    %cst_91 = arith.constant 0.353553385 : f32
    %137 = vector.broadcast %cst_91 : f32 to vector<8x2x2xf32>
    %138 = arith.mulf %136, %137 : vector<8x2x2xf32>
    %cst_92 = arith.constant dense<0xFF800000> : vector<8x2xf32>
    %139 = vector.multi_reduction <maximumf>, %138, %cst_92 [2] : vector<8x2x2xf32> to vector<8x2xf32>
    %140 = vector.shape_cast %139 : vector<8x2xf32> to vector<8x2x1xf32>
    %141 = vector.broadcast %140 : vector<8x2x1xf32> to vector<8x2x2xf32>
    %142 = arith.subf %138, %141 : vector<8x2x2xf32>
    %143 = math.exp %142 : vector<8x2x2xf32>
    %cst_93 = arith.constant dense<0.000000e+00> : vector<8x2xf32>
    %144 = vector.multi_reduction <add>, %143, %cst_93 [2] : vector<8x2x2xf32> to vector<8x2xf32>
    %145 = vector.shape_cast %144 : vector<8x2xf32> to vector<8x2x1xf32>
    %146 = tpu.reciprocal %145 {approx = true} : vector<8x2x1xf32> -> vector<8x2x1xf32>
    %147 = vector.broadcast %146 : vector<8x2x1xf32> to vector<8x2x2xf32>
    %148 = arith.mulf %143, %147 : vector<8x2x2xf32>
    %149 = arith.truncf %148 : vector<8x2x2xf32> to vector<8x2x2xbf16>
    %150 = arith.truncf %133 : vector<8x2x8xf32> to vector<8x2x8xbf16>
    "tpu.trace_start"() <{level = 10 : i32, message = "nlm,nmd->nld"}> : () -> ()
    %cst_94 = arith.constant dense<0.000000e+00> : vector<8x2x8xf32>
    %151 = tpu.matmul %149, %150, %cst_94 {dimension_numbers = #tpu.dot_dimension_numbers<[2], [1], [1], [2], [0, 0, 0, 1, 1, 2], [0], [0]>} : vector<8x2x2xbf16>, vector<8x2x8xbf16>, vector<8x2x8xf32> -> vector<8x2x8xf32>
    "tpu.trace_stop"() : () -> ()
    %c2_95 = arith.constant 2 : index
    %c0_96 = arith.constant 0 : index
    %c0_97 = arith.constant 0 : index
    %152 = vector.load %arg8[%c2_95, %c0_96, %c0_97] : memref<4x8x32xbf16, #tpu.memory_space<vmem>>, vector<1x8x32xbf16>
    %153 = vector.shape_cast %152 : vector<1x8x32xbf16> to vector<8x32xbf16>
    %154 = vector.shape_cast %153 : vector<8x32xbf16> to vector<1x8x32xbf16>
    %155 = vector.broadcast %154 : vector<1x8x32xbf16> to vector<8x8x32xbf16>
    %156 = arith.truncf %151 : vector<8x2x8xf32> to vector<8x2x8xbf16>
    "tpu.trace_start"() <{level = 10 : i32, message = "nld,nde->nle"}> : () -> ()
    %cst_98 = arith.constant dense<0.000000e+00> : vector<8x2x32xf32>
    %157 = tpu.matmul %156, %155, %cst_98 {dimension_numbers = #tpu.dot_dimension_numbers<[2], [1], [1], [2], [0, 0, 0, 1, 1, 2], [0], [0]>} : vector<8x2x8xbf16>, vector<8x8x32xbf16>, vector<8x2x32xf32> -> vector<8x2x32xf32>
    "tpu.trace_stop"() : () -> ()
    %158 = arith.addf %106, %157 : vector<8x2x32xf32>
    %c3 = arith.constant 3 : index
    %c0_99 = arith.constant 0 : index
    %c0_100 = arith.constant 0 : index
    %159 = vector.load %arg2[%c3, %c0_99, %c0_100] : memref<4x32x8xbf16, #tpu.memory_space<vmem>>, vector<1x32x8xbf16>
    %160 = vector.shape_cast %159 : vector<1x32x8xbf16> to vector<32x8xbf16>
    %161 = vector.shape_cast %160 : vector<32x8xbf16> to vector<1x32x8xbf16>
    %162 = vector.broadcast %161 : vector<1x32x8xbf16> to vector<8x32x8xbf16>
    %c3_101 = arith.constant 3 : index
    %c0_102 = arith.constant 0 : index
    %c0_103 = arith.constant 0 : index
    %163 = vector.load %arg3[%c3_101, %c0_102, %c0_103] : memref<4x32x8xbf16, #tpu.memory_space<vmem>>, vector<1x32x8xbf16>
    %164 = vector.shape_cast %163 : vector<1x32x8xbf16> to vector<32x8xbf16>
    %165 = vector.shape_cast %164 : vector<32x8xbf16> to vector<1x32x8xbf16>
    %166 = vector.broadcast %165 : vector<1x32x8xbf16> to vector<8x32x8xbf16>
    %c3_104 = arith.constant 3 : index
    %c0_105 = arith.constant 0 : index
    %c0_106 = arith.constant 0 : index
    %167 = vector.load %arg4[%c3_104, %c0_105, %c0_106] : memref<4x32x8xbf16, #tpu.memory_space<vmem>>, vector<1x32x8xbf16>
    %168 = vector.shape_cast %167 : vector<1x32x8xbf16> to vector<32x8xbf16>
    %169 = vector.shape_cast %168 : vector<32x8xbf16> to vector<1x32x8xbf16>
    %170 = vector.broadcast %169 : vector<1x32x8xbf16> to vector<8x32x8xbf16>
    "tpu.trace_start"() <{level = 10 : i32, message = "nle,ned->nld"}> : () -> ()
    %cst_107 = arith.constant dense<0.000000e+00> : vector<8x2x8xf32>
    %171 = tpu.matmul %1, %162, %cst_107 {dimension_numbers = #tpu.dot_dimension_numbers<[2], [1], [1], [2], [0, 0, 0, 1, 1, 2], [0], [0]>} : vector<8x2x32xbf16>, vector<8x32x8xbf16>, vector<8x2x8xf32> -> vector<8x2x8xf32>
    "tpu.trace_stop"() : () -> ()
    %c3_108 = arith.constant 3 : index
    %c0_109 = arith.constant 0 : index
    %c0_110 = arith.constant 0 : index
    %c0_111 = arith.constant 0 : index
    %172 = vector.load %arg5[%c3_108, %c0_109, %c0_110, %c0_111] : memref<4x1x1x8xf32, #tpu.memory_space<vmem>>, vector<1x1x1x8xf32>
    %173 = vector.shape_cast %172 : vector<1x1x1x8xf32> to vector<1x1x8xf32>
    %174 = vector.broadcast %173 : vector<1x1x8xf32> to vector<8x2x8xf32>
    %175 = arith.addf %171, %174 : vector<8x2x8xf32>
    "tpu.trace_start"() <{level = 10 : i32, message = "nle,ned->nld"}> : () -> ()
    %cst_112 = arith.constant dense<0.000000e+00> : vector<8x2x8xf32>
    %176 = tpu.matmul %1, %166, %cst_112 {dimension_numbers = #tpu.dot_dimension_numbers<[2], [1], [1], [2], [0, 0, 0, 1, 1, 2], [0], [0]>} : vector<8x2x32xbf16>, vector<8x32x8xbf16>, vector<8x2x8xf32> -> vector<8x2x8xf32>
    "tpu.trace_stop"() : () -> ()
    %c3_113 = arith.constant 3 : index
    %c0_114 = arith.constant 0 : index
    %c0_115 = arith.constant 0 : index
    %c0_116 = arith.constant 0 : index
    %177 = vector.load %arg6[%c3_113, %c0_114, %c0_115, %c0_116] : memref<4x1x1x8xf32, #tpu.memory_space<vmem>>, vector<1x1x1x8xf32>
    %178 = vector.shape_cast %177 : vector<1x1x1x8xf32> to vector<1x1x8xf32>
    %179 = vector.broadcast %178 : vector<1x1x8xf32> to vector<8x2x8xf32>
    %180 = arith.addf %176, %179 : vector<8x2x8xf32>
    "tpu.trace_start"() <{level = 10 : i32, message = "nle,ned->nld"}> : () -> ()
    %cst_117 = arith.constant dense<0.000000e+00> : vector<8x2x8xf32>
    %181 = tpu.matmul %1, %170, %cst_117 {dimension_numbers = #tpu.dot_dimension_numbers<[2], [1], [1], [2], [0, 0, 0, 1, 1, 2], [0], [0]>} : vector<8x2x32xbf16>, vector<8x32x8xbf16>, vector<8x2x8xf32> -> vector<8x2x8xf32>
    "tpu.trace_stop"() : () -> ()
    %c3_118 = arith.constant 3 : index
    %c0_119 = arith.constant 0 : index
    %c0_120 = arith.constant 0 : index
    %c0_121 = arith.constant 0 : index
    %182 = vector.load %arg7[%c3_118, %c0_119, %c0_120, %c0_121] : memref<4x1x1x8xf32, #tpu.memory_space<vmem>>, vector<1x1x1x8xf32>
    %183 = vector.shape_cast %182 : vector<1x1x1x8xf32> to vector<1x1x8xf32>
    %184 = vector.broadcast %183 : vector<1x1x8xf32> to vector<8x2x8xf32>
    %185 = arith.addf %181, %184 : vector<8x2x8xf32>
    %186 = arith.truncf %175 : vector<8x2x8xf32> to vector<8x2x8xbf16>
    %187 = arith.truncf %180 : vector<8x2x8xf32> to vector<8x2x8xbf16>
    "tpu.trace_start"() <{level = 10 : i32, message = "nld,nmd->nlm"}> : () -> ()
    %cst_122 = arith.constant dense<0.000000e+00> : vector<8x2x2xf32>
    %188 = tpu.matmul %186, %187, %cst_122 {dimension_numbers = #tpu.dot_dimension_numbers<[2], [2], [1], [1], [0, 0, 0, 1, 1, 1], [0], [0]>} : vector<8x2x8xbf16>, vector<8x2x8xbf16>, vector<8x2x2xf32> -> vector<8x2x2xf32>
    "tpu.trace_stop"() : () -> ()
    %cst_123 = arith.constant 0.353553385 : f32
    %189 = vector.broadcast %cst_123 : f32 to vector<8x2x2xf32>
    %190 = arith.mulf %188, %189 : vector<8x2x2xf32>
    %cst_124 = arith.constant dense<0xFF800000> : vector<8x2xf32>
    %191 = vector.multi_reduction <maximumf>, %190, %cst_124 [2] : vector<8x2x2xf32> to vector<8x2xf32>
    %192 = vector.shape_cast %191 : vector<8x2xf32> to vector<8x2x1xf32>
    %193 = vector.broadcast %192 : vector<8x2x1xf32> to vector<8x2x2xf32>
    %194 = arith.subf %190, %193 : vector<8x2x2xf32>
    %195 = math.exp %194 : vector<8x2x2xf32>
    %cst_125 = arith.constant dense<0.000000e+00> : vector<8x2xf32>
    %196 = vector.multi_reduction <add>, %195, %cst_125 [2] : vector<8x2x2xf32> to vector<8x2xf32>
    %197 = vector.shape_cast %196 : vector<8x2xf32> to vector<8x2x1xf32>
    %198 = tpu.reciprocal %197 {approx = true} : vector<8x2x1xf32> -> vector<8x2x1xf32>
    %199 = vector.broadcast %198 : vector<8x2x1xf32> to vector<8x2x2xf32>
    %200 = arith.mulf %195, %199 : vector<8x2x2xf32>
    %201 = arith.truncf %200 : vector<8x2x2xf32> to vector<8x2x2xbf16>
    %202 = arith.truncf %185 : vector<8x2x8xf32> to vector<8x2x8xbf16>
    "tpu.trace_start"() <{level = 10 : i32, message = "nlm,nmd->nld"}> : () -> ()
    %cst_126 = arith.constant dense<0.000000e+00> : vector<8x2x8xf32>
    %203 = tpu.matmul %201, %202, %cst_126 {dimension_numbers = #tpu.dot_dimension_numbers<[2], [1], [1], [2], [0, 0, 0, 1, 1, 2], [0], [0]>} : vector<8x2x2xbf16>, vector<8x2x8xbf16>, vector<8x2x8xf32> -> vector<8x2x8xf32>
    "tpu.trace_stop"() : () -> ()
    %c3_127 = arith.constant 3 : index
    %c0_128 = arith.constant 0 : index
    %c0_129 = arith.constant 0 : index
    %204 = vector.load %arg8[%c3_127, %c0_128, %c0_129] : memref<4x8x32xbf16, #tpu.memory_space<vmem>>, vector<1x8x32xbf16>
    %205 = vector.shape_cast %204 : vector<1x8x32xbf16> to vector<8x32xbf16>
    %206 = vector.shape_cast %205 : vector<8x32xbf16> to vector<1x8x32xbf16>
    %207 = vector.broadcast %206 : vector<1x8x32xbf16> to vector<8x8x32xbf16>
    %208 = arith.truncf %203 : vector<8x2x8xf32> to vector<8x2x8xbf16>
    "tpu.trace_start"() <{level = 10 : i32, message = "nld,nde->nle"}> : () -> ()
    %cst_130 = arith.constant dense<0.000000e+00> : vector<8x2x32xf32>
    %209 = tpu.matmul %208, %207, %cst_130 {dimension_numbers = #tpu.dot_dimension_numbers<[2], [1], [1], [2], [0, 0, 0, 1, 1, 2], [0], [0]>} : vector<8x2x8xbf16>, vector<8x8x32xbf16>, vector<8x2x32xf32> -> vector<8x2x32xf32>
    "tpu.trace_stop"() : () -> ()
    %210 = arith.addf %158, %209 : vector<8x2x32xf32>
    %c0_131 = arith.constant 0 : index
    %c0_132 = arith.constant 0 : index
    %c0_133 = arith.constant 0 : index
    %211 = vector.load %arg9[%c0_131, %c0_132, %c0_133] : memref<1x1x32xf32, #tpu.memory_space<vmem>>, vector<1x1x32xf32>
    %212 = vector.broadcast %211 : vector<1x1x32xf32> to vector<8x2x32xf32>
    %213 = arith.addf %210, %212 : vector<8x2x32xf32>
    %214 = arith.addf %0, %213 : vector<8x2x32xf32>
    %cst_134 = arith.constant dense<0.000000e+00> : vector<8x2xf32>
    %215 = vector.multi_reduction <add>, %214, %cst_134 [2] : vector<8x2x32xf32> to vector<8x2xf32>
    %216 = vector.shape_cast %215 : vector<8x2xf32> to vector<8x2x1xf32>
    %cst_135 = arith.constant 3.200000e+01 : f32
    %217 = vector.broadcast %cst_135 : f32 to vector<8x2x1xf32>
    %218 = arith.divf %216, %217 : vector<8x2x1xf32>
    %219 = vector.broadcast %218 : vector<8x2x1xf32> to vector<8x2x32xf32>
    %220 = arith.subf %214, %219 : vector<8x2x32xf32>
    %221 = arith.mulf %220, %220 : vector<8x2x32xf32>
    %cst_136 = arith.constant dense<0.000000e+00> : vector<8x2xf32>
    %222 = vector.multi_reduction <add>, %221, %cst_136 [2] : vector<8x2x32xf32> to vector<8x2xf32>
    %223 = vector.shape_cast %222 : vector<8x2xf32> to vector<8x2x1xf32>
    %cst_137 = arith.constant 3.200000e+01 : f32
    %224 = vector.broadcast %cst_137 : f32 to vector<8x2x1xf32>
    %225 = arith.divf %223, %224 : vector<8x2x1xf32>
    %226 = vector.broadcast %218 : vector<8x2x1xf32> to vector<8x2x32xf32>
    %227 = arith.subf %214, %226 : vector<8x2x32xf32>
    %cst_138 = arith.constant 9.99999974E-6 : f32
    %228 = vector.broadcast %cst_138 : f32 to vector<8x2x1xf32>
    %229 = arith.addf %225, %228 : vector<8x2x1xf32>
    %230 = math.rsqrt %229 : vector<8x2x1xf32>
    %231 = vector.broadcast %230 : vector<8x2x1xf32> to vector<8x2x32xf32>
    %232 = arith.mulf %227, %231 : vector<8x2x32xf32>
    %c0_139 = arith.constant 0 : index
    %c0_140 = arith.constant 0 : index
    %c0_141 = arith.constant 0 : index
    %233 = vector.load %arg10[%c0_139, %c0_140, %c0_141] : memref<1x1x32xf32, #tpu.memory_space<vmem>>, vector<1x1x32xf32>
    %234 = vector.broadcast %233 : vector<1x1x32xf32> to vector<8x2x32xf32>
    %235 = arith.mulf %232, %234 : vector<8x2x32xf32>
    %c0_142 = arith.constant 0 : index
    %c0_143 = arith.constant 0 : index
    %c0_144 = arith.constant 0 : index
    %236 = vector.load %arg11[%c0_142, %c0_143, %c0_144] : memref<1x1x32xf32, #tpu.memory_space<vmem>>, vector<1x1x32xf32>
    %237 = vector.broadcast %236 : vector<1x1x32xf32> to vector<8x2x32xf32>
    %238 = arith.addf %235, %237 : vector<8x2x32xf32>
    %c0_145 = arith.constant 0 : index
    %c0_146 = arith.constant 0 : index
    %c0_147 = arith.constant 0 : index
    %239 = vector.load %arg12[%c0_145, %c0_146, %c0_147] : memref<8x2x32xf32, #tpu.memory_space<vmem>>, vector<8x2x32xf32>
    tpu.vector_store %arg12[%c0_145, %c0_146, %c0_147], %238 {strides = array<i32>} : memref<8x2x32xf32, #tpu.memory_space<vmem>>, vector<8x2x32xf32>,
    return
  }
  func.func @transform_0(%arg0: i32) -> (i32, i32, i32) {
    %c0_i32 = arith.constant 0 : i32
    %c0_i32_0 = arith.constant 0 : i32
    %c0_i32_1 = arith.constant 0 : i32
    return %arg0, %c0_i32, %c0_i32_0 : i32, i32, i32
  }
  func.func @transform_1(%arg0: i32) -> (i32, i32, i32) {
    %c0_i32 = arith.constant 0 : i32
    %c0_i32_0 = arith.constant 0 : i32
    %c0_i32_1 = arith.constant 0 : i32
    %c0_i32_2 = arith.constant 0 : i32
    return %c0_i32, %c0_i32_0, %c0_i32_1 : i32, i32, i32
  }
  func.func @transform_2(%arg0: i32) -> (i32, i32, i32) {
    %c0_i32 = arith.constant 0 : i32
    %c0_i32_0 = arith.constant 0 : i32
    %c0_i32_1 = arith.constant 0 : i32
    %c0_i32_2 = arith.constant 0 : i32
    return %c0_i32, %c0_i32_0, %c0_i32_1 : i32, i32, i32
  }
  func.func @transform_3(%arg0: i32) -> (i32, i32, i32) {
    %c0_i32 = arith.constant 0 : i32
    %c0_i32_0 = arith.constant 0 : i32
    %c0_i32_1 = arith.constant 0 : i32
    %c0_i32_2 = arith.constant 0 : i32
    return %c0_i32, %c0_i32_0, %c0_i32_1 : i32, i32, i32
  }
  func.func @transform_4(%arg0: i32) -> (i32, i32, i32, i32) {
    %c0_i32 = arith.constant 0 : i32
    %c0_i32_0 = arith.constant 0 : i32
    %c0_i32_1 = arith.constant 0 : i32
    %c0_i32_2 = arith.constant 0 : i32
    %c0_i32_3 = arith.constant 0 : i32
    return %c0_i32, %c0_i32_0, %c0_i32_1, %c0_i32_2 : i32, i32, i32, i32
  }
  func.func @transform_5(%arg0: i32) -> (i32, i32, i32, i32) {
    %c0_i32 = arith.constant 0 : i32
    %c0_i32_0 = arith.constant 0 : i32
    %c0_i32_1 = arith.constant 0 : i32
    %c0_i32_2 = arith.constant 0 : i32
    %c0_i32_3 = arith.constant 0 : i32
    return %c0_i32, %c0_i32_0, %c0_i32_1, %c0_i32_2 : i32, i32, i32, i32
  }
  func.func @transform_6(%arg0: i32) -> (i32, i32, i32, i32) {
    %c0_i32 = arith.constant 0 : i32
    %c0_i32_0 = arith.constant 0 : i32
    %c0_i32_1 = arith.constant 0 : i32
    %c0_i32_2 = arith.constant 0 : i32
    %c0_i32_3 = arith.constant 0 : i32
    return %c0_i32, %c0_i32_0, %c0_i32_1, %c0_i32_2 : i32, i32, i32, i32
  }
  func.func @transform_7(%arg0: i32) -> (i32, i32, i32) {
    %c0_i32 = arith.constant 0 : i32
    %c0_i32_0 = arith.constant 0 : i32
    %c0_i32_1 = arith.constant 0 : i32
    %c0_i32_2 = arith.constant 0 : i32
    return %c0_i32, %c0_i32_0, %c0_i32_1 : i32, i32, i32
  }
  func.func @transform_8(%arg0: i32) -> (i32, i32, i32) {
    %c0_i32 = arith.constant 0 : i32
    %c0_i32_0 = arith.constant 0 : i32
    %c0_i32_1 = arith.constant 0 : i32
    %c0_i32_2 = arith.constant 0 : i32
    return %c0_i32, %c0_i32_0, %c0_i32_1 : i32, i32, i32
  }
  func.func @transform_9(%arg0: i32) -> (i32, i32, i32) {
    %c0_i32 = arith.constant 0 : i32
    %c0_i32_0 = arith.constant 0 : i32
    %c0_i32_1 = arith.constant 0 : i32
    %c0_i32_2 = arith.constant 0 : i32
    return %c0_i32, %c0_i32_0, %c0_i32_1 : i32, i32, i32
  }
  func.func @transform_10(%arg0: i32) -> (i32, i32, i32) {
    %c0_i32 = arith.constant 0 : i32
    %c0_i32_0 = arith.constant 0 : i32
    %c0_i32_1 = arith.constant 0 : i32
    %c0_i32_2 = arith.constant 0 : i32
    return %c0_i32, %c0_i32_0, %c0_i32_1 : i32, i32, i32
  }
  func.func @transform_11(%arg0: i32) -> (i32, i32, i32) {
    %c0_i32 = arith.constant 0 : i32
    %c0_i32_0 = arith.constant 0 : i32
    %c0_i32_1 = arith.constant 0 : i32
    return %arg0, %c0_i32, %c0_i32_0 : i32, i32, i32
  }
}

module attributes {stable_mosaic.version = 11 : i64} {
  func.func @_ffn_ln_kernel(%arg0: i32, %arg1: memref<16x32xf32, #tpu.memory_space<vmem>>, %arg2: memref<32x2048xbf16, #tpu.memory_space<vmem>>, %arg3: memref<1x2048xf32, #tpu.memory_space<vmem>>, %arg4: memref<2048x32xbf16, #tpu.memory_space<vmem>>, %arg5: memref<1x32xf32, #tpu.memory_space<vmem>>, %arg6: memref<1x32xf32, #tpu.memory_space<vmem>>, %arg7: memref<1x32xf32, #tpu.memory_space<vmem>>, %arg8: memref<16x32xf32, #tpu.memory_space<vmem>>) attributes {dimension_semantics = [#tpu.dimension_semantics<parallel>], iteration_bounds = array<i64: 1>, scalar_prefetch = 0 : i64, scratch_operands = 0 : i64, tpu.core_type = #tpu.core_type<tc>, window_params = [{transform_indices = @transform_0, window_bounds = array<i64: 16, 32>}, {pipeline_mode = #tpu.pipeline_mode<synchronous>, transform_indices = @transform_1, window_bounds = array<i64: 32, 2048>}, {pipeline_mode = #tpu.pipeline_mode<synchronous>, transform_indices = @transform_2, window_bounds = array<i64: 1, 2048>}, {pipeline_mode = #tpu.pipeline_mode<synchronous>, transform_indices = @transform_3, window_bounds = array<i64: 2048, 32>}, {pipeline_mode = #tpu.pipeline_mode<synchronous>, transform_indices = @transform_4, window_bounds = array<i64: 1, 32>}, {pipeline_mode = #tpu.pipeline_mode<synchronous>, transform_indices = @transform_5, window_bounds = array<i64: 1, 32>}, {pipeline_mode = #tpu.pipeline_mode<synchronous>, transform_indices = @transform_6, window_bounds = array<i64: 1, 32>}, {transform_indices = @transform_7, window_bounds = array<i64: 16, 32>}]} {
    %c0 = arith.constant 0 : index
    %c0_0 = arith.constant 0 : index
    %0 = vector.load %arg1[%c0, %c0_0] : memref<16x32xf32, #tpu.memory_space<vmem>>, vector<16x32xf32>
    %1 = arith.truncf %0 : vector<16x32xf32> to vector<16x32xbf16>
    %c0_1 = arith.constant 0 : index
    %c0_2 = arith.constant 0 : index
    %2 = vector.load %arg2[%c0_1, %c0_2] : memref<32x2048xbf16, #tpu.memory_space<vmem>>, vector<32x2048xbf16>
    %cst = arith.constant dense<0.000000e+00> : vector<16x2048xf32>
    %3 = tpu.matmul %1, %2, %cst {dimension_numbers = #tpu.dot_dimension_numbers<[1], [0], [0], [1], [0, 0, 1, 1], [], []>} : vector<16x32xbf16>, vector<32x2048xbf16>, vector<16x2048xf32> -> vector<16x2048xf32>
    %c0_3 = arith.constant 0 : index
    %c0_4 = arith.constant 0 : index
    %4 = vector.load %arg3[%c0_3, %c0_4] : memref<1x2048xf32, #tpu.memory_space<vmem>>, vector<1x2048xf32>
    %5 = vector.broadcast %4 : vector<1x2048xf32> to vector<16x2048xf32>
    %6 = arith.addf %3, %5 : vector<16x2048xf32>
    %cst_5 = arith.constant 0.000000e+00 : f32
    %7 = vector.broadcast %cst_5 : f32 to vector<16x2048xf32>
    %8 = arith.maximumf %6, %7 : vector<16x2048xf32>
    %9 = arith.truncf %8 : vector<16x2048xf32> to vector<16x2048xbf16>
    %c0_6 = arith.constant 0 : index
    %c0_7 = arith.constant 0 : index
    %10 = vector.load %arg4[%c0_6, %c0_7] : memref<2048x32xbf16, #tpu.memory_space<vmem>>, vector<2048x32xbf16>
    %cst_8 = arith.constant dense<0.000000e+00> : vector<16x32xf32>
    %11 = tpu.matmul %9, %10, %cst_8 {dimension_numbers = #tpu.dot_dimension_numbers<[1], [0], [0], [1], [0, 0, 1, 1], [], []>} : vector<16x2048xbf16>, vector<2048x32xbf16>, vector<16x32xf32> -> vector<16x32xf32>
    %c0_9 = arith.constant 0 : index
    %c0_10 = arith.constant 0 : index
    %12 = vector.load %arg5[%c0_9, %c0_10] : memref<1x32xf32, #tpu.memory_space<vmem>>, vector<1x32xf32>
    %13 = vector.broadcast %12 : vector<1x32xf32> to vector<16x32xf32>
    %14 = arith.addf %11, %13 : vector<16x32xf32>
    %15 = arith.addf %0, %14 : vector<16x32xf32>
    %cst_11 = arith.constant dense<0.000000e+00> : vector<16xf32>
    %16 = vector.multi_reduction <add>, %15, %cst_11 [1] : vector<16x32xf32> to vector<16xf32>
    %17 = vector.shape_cast %16 : vector<16xf32> to vector<16x1xf32>
    %cst_12 = arith.constant 3.200000e+01 : f32
    %18 = vector.broadcast %cst_12 : f32 to vector<16x1xf32>
    %19 = arith.divf %17, %18 : vector<16x1xf32>
    %20 = vector.broadcast %19 : vector<16x1xf32> to vector<16x32xf32>
    %21 = arith.subf %15, %20 : vector<16x32xf32>
    %22 = arith.mulf %21, %21 : vector<16x32xf32>
    %cst_13 = arith.constant dense<0.000000e+00> : vector<16xf32>
    %23 = vector.multi_reduction <add>, %22, %cst_13 [1] : vector<16x32xf32> to vector<16xf32>
    %24 = vector.shape_cast %23 : vector<16xf32> to vector<16x1xf32>
    %cst_14 = arith.constant 3.200000e+01 : f32
    %25 = vector.broadcast %cst_14 : f32 to vector<16x1xf32>
    %26 = arith.divf %24, %25 : vector<16x1xf32>
    %27 = vector.broadcast %19 : vector<16x1xf32> to vector<16x32xf32>
    %28 = arith.subf %15, %27 : vector<16x32xf32>
    %cst_15 = arith.constant 9.99999974E-6 : f32
    %29 = vector.broadcast %cst_15 : f32 to vector<16x1xf32>
    %30 = arith.addf %26, %29 : vector<16x1xf32>
    %31 = math.rsqrt %30 : vector<16x1xf32>
    %32 = vector.broadcast %31 : vector<16x1xf32> to vector<16x32xf32>
    %33 = arith.mulf %28, %32 : vector<16x32xf32>
    %c0_16 = arith.constant 0 : index
    %c0_17 = arith.constant 0 : index
    %34 = vector.load %arg6[%c0_16, %c0_17] : memref<1x32xf32, #tpu.memory_space<vmem>>, vector<1x32xf32>
    %35 = vector.broadcast %34 : vector<1x32xf32> to vector<16x32xf32>
    %36 = arith.mulf %33, %35 : vector<16x32xf32>
    %c0_18 = arith.constant 0 : index
    %c0_19 = arith.constant 0 : index
    %37 = vector.load %arg7[%c0_18, %c0_19] : memref<1x32xf32, #tpu.memory_space<vmem>>, vector<1x32xf32>
    %38 = vector.broadcast %37 : vector<1x32xf32> to vector<16x32xf32>
    %39 = arith.addf %36, %38 : vector<16x32xf32>
    %c0_20 = arith.constant 0 : index
    %c0_21 = arith.constant 0 : index
    %40 = vector.load %arg8[%c0_20, %c0_21] : memref<16x32xf32, #tpu.memory_space<vmem>>, vector<16x32xf32>
    tpu.vector_store %arg8[%c0_20, %c0_21], %39 {strides = array<i32>} : memref<16x32xf32, #tpu.memory_space<vmem>>, vector<16x32xf32>,
    return
  }
  func.func @transform_0(%arg0: i32) -> (i32, i32) {
    %c0_i32 = arith.constant 0 : i32
    %c0_i32_0 = arith.constant 0 : i32
    return %arg0, %c0_i32 : i32, i32
  }
  func.func @transform_1(%arg0: i32) -> (i32, i32) {
    %c0_i32 = arith.constant 0 : i32
    %c0_i32_0 = arith.constant 0 : i32
    %c0_i32_1 = arith.constant 0 : i32
    return %c0_i32, %c0_i32_0 : i32, i32
  }
  func.func @transform_2(%arg0: i32) -> (i32, i32) {
    %c0_i32 = arith.constant 0 : i32
    %c0_i32_0 = arith.constant 0 : i32
    %c0_i32_1 = arith.constant 0 : i32
    return %c0_i32, %c0_i32_0 : i32, i32
  }
  func.func @transform_3(%arg0: i32) -> (i32, i32) {
    %c0_i32 = arith.constant 0 : i32
    %c0_i32_0 = arith.constant 0 : i32
    %c0_i32_1 = arith.constant 0 : i32
    return %c0_i32, %c0_i32_0 : i32, i32
  }
  func.func @transform_4(%arg0: i32) -> (i32, i32) {
    %c0_i32 = arith.constant 0 : i32
    %c0_i32_0 = arith.constant 0 : i32
    %c0_i32_1 = arith.constant 0 : i32
    return %c0_i32, %c0_i32_0 : i32, i32
  }
  func.func @transform_5(%arg0: i32) -> (i32, i32) {
    %c0_i32 = arith.constant 0 : i32
    %c0_i32_0 = arith.constant 0 : i32
    %c0_i32_1 = arith.constant 0 : i32
    return %c0_i32, %c0_i32_0 : i32, i32
  }
  func.func @transform_6(%arg0: i32) -> (i32, i32) {
    %c0_i32 = arith.constant 0 : i32
    %c0_i32_0 = arith.constant 0 : i32
    %c0_i32_1 = arith.constant 0 : i32
    return %c0_i32, %c0_i32_0 : i32, i32
  }
  func.func @transform_7(%arg0: i32) -> (i32, i32) {
    %c0_i32 = arith.constant 0 : i32
    %c0_i32_0 = arith.constant 0 : i32
    return %arg0, %c0_i32 : i32, i32
  }
}

module attributes {stable_mosaic.version = 11 : i64} {
  func.func @_head_kernel(%arg0: i32, %arg1: memref<2x256xf32, #tpu.memory_space<vmem>>, %arg2: memref<256x32xbf16, #tpu.memory_space<vmem>>, %arg3: memref<1x32xf32, #tpu.memory_space<vmem>>, %arg4: memref<32x100xbf16, #tpu.memory_space<vmem>>, %arg5: memref<1x100xf32, #tpu.memory_space<vmem>>, %arg6: memref<100x1xbf16, #tpu.memory_space<vmem>>, %arg7: memref<1x1xf32, #tpu.memory_space<vmem>>, %arg8: memref<2x1xf32, #tpu.memory_space<vmem>>) attributes {dimension_semantics = [#tpu.dimension_semantics<parallel>], iteration_bounds = array<i64: 1>, scalar_prefetch = 0 : i64, scratch_operands = 0 : i64, tpu.core_type = #tpu.core_type<tc>, window_params = [{transform_indices = @transform_0, window_bounds = array<i64: 2, 256>}, {pipeline_mode = #tpu.pipeline_mode<synchronous>, transform_indices = @transform_1, window_bounds = array<i64: 256, 32>}, {pipeline_mode = #tpu.pipeline_mode<synchronous>, transform_indices = @transform_2, window_bounds = array<i64: 1, 32>}, {pipeline_mode = #tpu.pipeline_mode<synchronous>, transform_indices = @transform_3, window_bounds = array<i64: 32, 100>}, {pipeline_mode = #tpu.pipeline_mode<synchronous>, transform_indices = @transform_4, window_bounds = array<i64: 1, 100>}, {pipeline_mode = #tpu.pipeline_mode<synchronous>, transform_indices = @transform_5, window_bounds = array<i64: 100, 1>}, {pipeline_mode = #tpu.pipeline_mode<synchronous>, transform_indices = @transform_6, window_bounds = array<i64: 1, 1>}, {transform_indices = @transform_7, window_bounds = array<i64: 2, 1>}]} {
    %c0 = arith.constant 0 : index
    %c0_0 = arith.constant 0 : index
    %0 = vector.load %arg1[%c0, %c0_0] : memref<2x256xf32, #tpu.memory_space<vmem>>, vector<2x256xf32>
    %1 = arith.truncf %0 : vector<2x256xf32> to vector<2x256xbf16>
    %c0_1 = arith.constant 0 : index
    %c0_2 = arith.constant 0 : index
    %2 = vector.load %arg2[%c0_1, %c0_2] : memref<256x32xbf16, #tpu.memory_space<vmem>>, vector<256x32xbf16>
    %cst = arith.constant dense<0.000000e+00> : vector<2x32xf32>
    %3 = tpu.matmul %1, %2, %cst {dimension_numbers = #tpu.dot_dimension_numbers<[1], [0], [0], [1], [0, 0, 1, 1], [], []>} : vector<2x256xbf16>, vector<256x32xbf16>, vector<2x32xf32> -> vector<2x32xf32>
    %c0_3 = arith.constant 0 : index
    %c0_4 = arith.constant 0 : index
    %4 = vector.load %arg3[%c0_3, %c0_4] : memref<1x32xf32, #tpu.memory_space<vmem>>, vector<1x32xf32>
    %5 = vector.broadcast %4 : vector<1x32xf32> to vector<2x32xf32>
    %6 = arith.addf %3, %5 : vector<2x32xf32>
    %cst_5 = arith.constant 0.000000e+00 : f32
    %7 = vector.broadcast %cst_5 : f32 to vector<2x32xf32>
    %8 = arith.maximumf %6, %7 : vector<2x32xf32>
    %9 = arith.truncf %8 : vector<2x32xf32> to vector<2x32xbf16>
    %c0_6 = arith.constant 0 : index
    %c0_7 = arith.constant 0 : index
    %10 = vector.load %arg4[%c0_6, %c0_7] : memref<32x100xbf16, #tpu.memory_space<vmem>>, vector<32x100xbf16>
    %cst_8 = arith.constant dense<0.000000e+00> : vector<2x100xf32>
    %11 = tpu.matmul %9, %10, %cst_8 {dimension_numbers = #tpu.dot_dimension_numbers<[1], [0], [0], [1], [0, 0, 1, 1], [], []>} : vector<2x32xbf16>, vector<32x100xbf16>, vector<2x100xf32> -> vector<2x100xf32>
    %c0_9 = arith.constant 0 : index
    %c0_10 = arith.constant 0 : index
    %12 = vector.load %arg5[%c0_9, %c0_10] : memref<1x100xf32, #tpu.memory_space<vmem>>, vector<1x100xf32>
    %13 = vector.broadcast %12 : vector<1x100xf32> to vector<2x100xf32>
    %14 = arith.addf %11, %13 : vector<2x100xf32>
    %cst_11 = arith.constant 0.000000e+00 : f32
    %15 = vector.broadcast %cst_11 : f32 to vector<2x100xf32>
    %16 = arith.maximumf %14, %15 : vector<2x100xf32>
    %17 = arith.truncf %16 : vector<2x100xf32> to vector<2x100xbf16>
    %c0_12 = arith.constant 0 : index
    %c0_13 = arith.constant 0 : index
    %18 = vector.load %arg6[%c0_12, %c0_13] : memref<100x1xbf16, #tpu.memory_space<vmem>>, vector<100x1xbf16>
    %cst_14 = arith.constant dense<0.000000e+00> : vector<2x1xf32>
    %19 = tpu.matmul %17, %18, %cst_14 {dimension_numbers = #tpu.dot_dimension_numbers<[1], [0], [0], [1], [0, 0, 1, 1], [], []>} : vector<2x100xbf16>, vector<100x1xbf16>, vector<2x1xf32> -> vector<2x1xf32>
    %c0_15 = arith.constant 0 : index
    %c0_16 = arith.constant 0 : index
    %20 = vector.load %arg7[%c0_15, %c0_16] : memref<1x1xf32, #tpu.memory_space<vmem>>, vector<1x1xf32>
    %21 = vector.broadcast %20 : vector<1x1xf32> to vector<2x1xf32>
    %22 = arith.addf %19, %21 : vector<2x1xf32>
    %cst_17 = arith.constant -3.000000e+01 : f32
    %cst_18 = arith.constant 3.000000e+01 : f32
    %23 = vector.broadcast %cst_17 : f32 to vector<2x1xf32>
    %24 = arith.maximumf %23, %22 : vector<2x1xf32>
    %25 = vector.broadcast %cst_18 : f32 to vector<2x1xf32>
    %26 = arith.minimumf %25, %24 : vector<2x1xf32>
    %cst_19 = arith.constant 0.000000e+00 : f32
    %27 = vector.broadcast %cst_19 : f32 to vector<2x1xf32>
    %28 = arith.subf %27, %26 : vector<2x1xf32>
    %29 = math.exp %28 : vector<2x1xf32>
    %cst_20 = arith.constant 1.000000e+00 : f32
    %30 = vector.broadcast %cst_20 : f32 to vector<2x1xf32>
    %31 = arith.addf %30, %29 : vector<2x1xf32>
    %cst_21 = arith.constant 1.000000e+00 : f32
    %32 = vector.broadcast %cst_21 : f32 to vector<2x1xf32>
    %33 = arith.divf %32, %31 : vector<2x1xf32>
    %c0_22 = arith.constant 0 : index
    %c0_23 = arith.constant 0 : index
    %34 = vector.load %arg8[%c0_22, %c0_23] : memref<2x1xf32, #tpu.memory_space<vmem>>, vector<2x1xf32>
    tpu.vector_store %arg8[%c0_22, %c0_23], %33 {strides = array<i32>} : memref<2x1xf32, #tpu.memory_space<vmem>>, vector<2x1xf32>,
    return
  }
  func.func @transform_0(%arg0: i32) -> (i32, i32) {
    %c0_i32 = arith.constant 0 : i32
    %c0_i32_0 = arith.constant 0 : i32
    return %arg0, %c0_i32 : i32, i32
  }
  func.func @transform_1(%arg0: i32) -> (i32, i32) {
    %c0_i32 = arith.constant 0 : i32
    %c0_i32_0 = arith.constant 0 : i32
    %c0_i32_1 = arith.constant 0 : i32
    return %c0_i32, %c0_i32_0 : i32, i32
  }
  func.func @transform_2(%arg0: i32) -> (i32, i32) {
    %c0_i32 = arith.constant 0 : i32
    %c0_i32_0 = arith.constant 0 : i32
    %c0_i32_1 = arith.constant 0 : i32
    return %c0_i32, %c0_i32_0 : i32, i32
  }
  func.func @transform_3(%arg0: i32) -> (i32, i32) {
    %c0_i32 = arith.constant 0 : i32
    %c0_i32_0 = arith.constant 0 : i32
    %c0_i32_1 = arith.constant 0 : i32
    return %c0_i32, %c0_i32_0 : i32, i32
  }
  func.func @transform_4(%arg0: i32) -> (i32, i32) {
    %c0_i32 = arith.constant 0 : i32
    %c0_i32_0 = arith.constant 0 : i32
    %c0_i32_1 = arith.constant 0 : i32
    return %c0_i32, %c0_i32_0 : i32, i32
  }
  func.func @transform_5(%arg0: i32) -> (i32, i32) {
    %c0_i32 = arith.constant 0 : i32
    %c0_i32_0 = arith.constant 0 : i32
    %c0_i32_1 = arith.constant 0 : i32
    return %c0_i32, %c0_i32_0 : i32, i32
  }
  func.func @transform_6(%arg0: i32) -> (i32, i32) {
    %c0_i32 = arith.constant 0 : i32
    %c0_i32_0 = arith.constant 0 : i32
    %c0_i32_1 = arith.constant 0 : i32
    return %c0_i32, %c0_i32_0 : i32, i32
  }
  func.func @transform_7(%arg0: i32) -> (i32, i32) {
    %c0_i32 = arith.constant 0 : i32
    %c0_i32_0 = arith.constant 0 : i32
    return %arg0, %c0_i32 : i32, i32
  }
}

</mosaic_0001>

<llo_original>
// kernel: ourgan_d_forward.8
$region0: #{ourgan_d_forward.8}
  #allocation0 [shape = 'u32[]', space=smem, size = 0x4, offset = 0x4, fixed_abs, tag = 'smem constant byte address 0x4 - core index']
  #allocation1 [shape = 'u32[144,128]{1,0:T(1,128)}', space=vmem, size = 0x12000, scoped, tag = 'internal scratch']
  %s0 = inlined_call_operand.vmem [shape: f32[16,16], index: 0, kind: input, shape index: {}]
  %s1 = inlined_call_operand.vmem [shape: bf16[16,32], index: 1, kind: input, shape index: {}]
  %s2 = inlined_call_operand.vmem [shape: f32[16,32], index: 2, kind: output, shape index: {}]
  %s3 = sld [smem:[#allocation0]]
  $region18: #{ourgan_d_forward.8} parent=0
    _
  %s5 = ssub.s32 1, %s3
  %s6 = scalar_select 0, %s5, %s3
  // Predicated region
  $region2: #{ourgan_d_forward.8} parent=0 // pred_check
    _
  $region3: #{ourgan_d_forward.8} parent=0 // pred_check_branch
    %8 = sbr.rel (0) target = $region5
  $region4: #{ourgan_d_forward.8} parent=0 // pred_region
    _
  $region5: #{ourgan_d_forward.8} parent=0 // pred_fallthru
    _
  // Predicated region
  $region6: #{ourgan_d_forward.8} parent=0 // pred_check
    _
  $region7: #{ourgan_d_forward.8} parent=0 // pred_check_branch
    %10 = sbr.rel (0) target = $region9
  $region8: #{ourgan_d_forward.8} parent=0 // pred_region
    _
  $region9: #{ourgan_d_forward.8} parent=0 // pred_fallthru
    _
  %v12 = vld [vmem:[%s0] sm:$0xff]
  %v13 = vld [vmem:[%s0 + $0x8] sm:$0xff]
  %v14 = vpack.c.bf16 %v13, %v12
  %v15 = vld [vmem:[%s1] sm:$0xf]
  %v16 = vld [vmem:[%s1 + $0x4] sm:$0xf]
  %v19 = vunpack.c.l.b16 %v15
  %v20 = vunpack.c.l.b16 %v16
  %v21 = vpack.c.b16 %v20, %v19
  %vm23 = vcmask 130048
  %v25 = vsel %vm23, %v14, 0
  %27 = vmatprep.subr.bf16.mxu0 0
  %28 = vmatpush1.bf16.msra.mxu0 0
  %29 = vmatprep.subr.bf16.mxu0 0
  %30 = vmatpush1.bf16.msra.mxu0 0
  %31 = vmatprep.subr.bf16.mxu0 0
  %32 = vmatpush1.bf16.msra.mxu0 0
  %33 = vmatprep.subr.bf16.mxu0 0
  %34 = vmatpush1.bf16.msra.mxu0 0
  %35 = vmatprep.subr.bf16.mxu0 0
  %36 = vmatpush1.bf16.msra.mxu0 0
  %37 = vmatprep.subr.bf16.mxu0 0
  %38 = vmatpush1.bf16.msra.mxu0 0
  %39 = vmatprep.subr.bf16.mxu0 0
  %40 = vmatpush1.bf16.msra.mxu0 0
  %41 = vmatprep.subr.bf16.mxu0 0
  %42 = vmatpush1.bf16.msra.mxu0 %v21
  %43 = vmatprep.subr.bf16.mxu0 0
  %44 = vmatpush2.bf16.msra.mxu0 0
  %45 = vmatprep.subr.bf16.mxu0 0
  %46 = vmatpush2.bf16.msra.mxu0 0
  %47 = vmatprep.subr.bf16.mxu0 0
  %48 = vmatpush2.bf16.msra.mxu0 0
  %49 = vmatprep.subr.bf16.mxu0 0
  %50 = vmatpush2.bf16.msra.mxu0 0
  %51 = vmatprep.subr.bf16.mxu0 0
  %52 = vmatpush2.bf16.msra.mxu0 0
  %53 = vmatprep.subr.bf16.mxu0 0
  %54 = vmatpush2.bf16.msra.mxu0 0
  %55 = vmatprep.subr.bf16.mxu0 0
  %56 = vmatpush2.bf16.msra.mxu0 0
  %57 = vmatprep.subr.bf16.mxu0 0
  %58 = vmatpush2.bf16.msra.mxu0 0
  %59 = vmatprep.mubr.bf16.mxu0 0
  %60 = vmatmul.mubr.bf16.gmra.mxu0 %v25
  %v61 = vpop.f32.mrf.mxu0
  %v62 = vadd.f32 0.0, %v61
  %v63 = vpop.f32.mrf.mxu0
  %v64 = vpop.f32.mrf.mxu0
  %v65 = vadd.f32 0.0, %v64
  %v66 = vpop.f32.mrf.mxu0
  %67 = vdwg.mxu0
  %vm68 = vcmask 261120
  %69 = vst.msk [vmem:[%s2] sm:$0xff] %vm68, %v62
  %70 = vst.msk [vmem:[%s2 + $0x8] sm:$0xff] %vm68, %v65
  // Predicated region
  $region10: #{ourgan_d_forward.8} parent=0 // pred_check
    _
  $region11: #{ourgan_d_forward.8} parent=0 // pred_check_branch
    %72 = sbr.rel (0) target = $region13
  $region12: #{ourgan_d_forward.8} parent=0 // pred_region
    _
  $region13: #{ourgan_d_forward.8} parent=0 // pred_fallthru
    _
  // Predicated region
  $region14: #{ourgan_d_forward.8} parent=0 // pred_check
    _
  $region15: #{ourgan_d_forward.8} parent=0 // pred_check_branch
    %74 = sbr.rel (0) target = $region17
  $region16: #{ourgan_d_forward.8} parent=0 // pred_region
    _
  $region17: #{ourgan_d_forward.8} parent=0 // pred_fallthru
    _

// kernel: ourgan_d_forward.10
$region0: #{ourgan_d_forward.10}
  #allocation0 [shape = 'u32[]', space=smem, size = 0x4, offset = 0x4, fixed_abs, tag = 'smem constant byte address 0x4 - core index']
  #allocation1 [shape = 'u32[144,128]{1,0:T(1,128)}', space=vmem, size = 0x12000, scoped, tag = 'internal scratch']
  %s0 = inlined_call_operand.vmem [shape: f32[16,32], index: 0, kind: input, shape index: {}]
  %s1 = inlined_call_operand.vmem [shape: bf16[32,2048], index: 1, kind: input, shape index: {}]
  %s2 = inlined_call_operand.vmem [shape: f32[1,2048], index: 2, kind: input, shape index: {}]
  %s3 = inlined_call_operand.vmem [shape: bf16[2048,32], index: 3, kind: input, shape index: {}]
  %s4 = inlined_call_operand.vmem [shape: f32[1,32], index: 4, kind: input, shape index: {}]
  %s5 = inlined_call_operand.vmem [shape: f32[1,32], index: 5, kind: input, shape index: {}]
  %s6 = inlined_call_operand.vmem [shape: f32[1,32], index: 6, kind: input, shape index: {}]
  %s7 = inlined_call_operand.vmem [shape: f32[16,32], index: 7, kind: output, shape index: {}]
  %s8 = sld [smem:[#allocation0]]
  $region38: #{ourgan_d_forward.10} parent=0
    _
  %s10 = ssub.s32 1, %s8
  %s11 = scalar_select 0, %s10, %s8
  // Predicated region
  $region2: #{ourgan_d_forward.10} parent=0 // pred_check
    _
  $region3: #{ourgan_d_forward.10} parent=0 // pred_check_branch
    %13 = sbr.rel (0) target = $region5
  $region4: #{ourgan_d_forward.10} parent=0 // pred_region
    _
  $region5: #{ourgan_d_forward.10} parent=0 // pred_fallthru
    _
  // Predicated region
  $region6: #{ourgan_d_forward.10} parent=0 // pred_check
    _
  $region7: #{ourgan_d_forward.10} parent=0 // pred_check_branch
    %15 = sbr.rel (0) target = $region9
  $region8: #{ourgan_d_forward.10} parent=0 // pred_region
    _
  $region9: #{ourgan_d_forward.10} parent=0 // pred_fallthru
    _
  // Predicated region
  $region10: #{ourgan_d_forward.10} parent=0 // pred_check
    _
  $region11: #{ourgan_d_forward.10} parent=0 // pred_check_branch
    %17 = sbr.rel (0) target = $region13
  $region12: #{ourgan_d_forward.10} parent=0 // pred_region
    _
  $region13: #{ourgan_d_forward.10} parent=0 // pred_fallthru
    _
  // Predicated region
  $region14: #{ourgan_d_forward.10} parent=0 // pred_check
    _
  $region15: #{ourgan_d_forward.10} parent=0 // pred_check_branch
    %19 = sbr.rel (0) target = $region17
  $region16: #{ourgan_d_forward.10} parent=0 // pred_region
    _
  $region17: #{ourgan_d_forward.10} parent=0 // pred_fallthru
    _
  // Predicated region
  $region18: #{ourgan_d_forward.10} parent=0 // pred_check
    _
  $region19: #{ourgan_d_forward.10} parent=0 // pred_check_branch
    %21 = sbr.rel (0) target = $region21
  $region20: #{ourgan_d_forward.10} parent=0 // pred_region
    _
  $region21: #{ourgan_d_forward.10} parent=0 // pred_fallthru
    _
  // Predicated region
  $region22: #{ourgan_d_forward.10} parent=0 // pred_check
    _
  $region23: #{ourgan_d_forward.10} parent=0 // pred_check_branch
    %23 = sbr.rel (0) target = $region25
  $region24: #{ourgan_d_forward.10} parent=0 // pred_region
    _
  $region25: #{ourgan_d_forward.10} parent=0 // pred_fallthru
    _
  // Predicated region
  $region26: #{ourgan_d_forward.10} parent=0 // pred_check
    _
  $region27: #{ourgan_d_forward.10} parent=0 // pred_check_branch
    %25 = sbr.rel (0) target = $region29
  $region28: #{ourgan_d_forward.10} parent=0 // pred_region
    _
  $region29: #{ourgan_d_forward.10} parent=0 // pred_fallthru
    _
  %v27 = vld [vmem:[%s0] sm:$0xff]
  %v28 = vld [vmem:[%s0 + $0x8] sm:$0xff]
  %v29 = vpack.c.bf16 %v28, %v27
  %v30 = vld [vmem:[%s1] sm:$0xff]
  %v31 = vld [vmem:[%s1 + $0x8] sm:$0xff]
  %v32 = vld [vmem:[%s1 + $0x10] sm:$0xff]
  %v33 = vld [vmem:[%s1 + $0x18] sm:$0xff]
  %v34 = vld [vmem:[%s1 + $0x20] sm:$0xff]
  %v35 = vld [vmem:[%s1 + $0x28] sm:$0xff]
  %v36 = vld [vmem:[%s1 + $0x30] sm:$0xff]
  %v37 = vld [vmem:[%s1 + $0x38] sm:$0xff]
  %v38 = vld [vmem:[%s1 + $0x40] sm:$0xff]
  %v39 = vld [vmem:[%s1 + $0x48] sm:$0xff]
  %v40 = vld [vmem:[%s1 + $0x50] sm:$0xff]
  %v41 = vld [vmem:[%s1 + $0x58] sm:$0xff]
  %v42 = vld [vmem:[%s1 + $0x60] sm:$0xff]
  %v43 = vld [vmem:[%s1 + $0x68] sm:$0xff]
  %v44 = vld [vmem:[%s1 + $0x70] sm:$0xff]
  %v45 = vld [vmem:[%s1 + $0x78] sm:$0xff]
  %v46 = vld [vmem:[%s1 + $0x80] sm:$0xff]
  %v47 = vld [vmem:[%s1 + $0x88] sm:$0xff]
  %v48 = vld [vmem:[%s1 + $0x90] sm:$0xff]
  %v49 = vld [vmem:[%s1 + $0x98] sm:$0xff]
  %v50 = vld [vmem:[%s1 + $0xa0] sm:$0xff]
  %v51 = vld [vmem:[%s1 + $0xa8] sm:$0xff]
  %v52 = vld [vmem:[%s1 + $0xb0] sm:$0xff]
  %v53 = vld [vmem:[%s1 + $0xb8] sm:$0xff]
  %v54 = vld [vmem:[%s1 + $0xc0] sm:$0xff]
  %v55 = vld [vmem:[%s1 + $0xc8] sm:$0xff]
  %v56 = vld [vmem:[%s1 + $0xd0] sm:$0xff]
  %v57 = vld [vmem:[%s1 + $0xd8] sm:$0xff]
  %v58 = vld [vmem:[%s1 + $0xe0] sm:$0xff]
  %v59 = vld [vmem:[%s1 + $0xe8] sm:$0xff]
  %v60 = vld [vmem:[%s1 + $0xf0] sm:$0xff]
  %v61 = vld [vmem:[%s1 + $0xf8] sm:$0xff]
  %v62 = vld [vmem:[%s2] sm:$0xff]
  %v63 = vld [vmem:[%s2 + $0x8] sm:$0xff]
  %v66 = vlaneseq
  %v67 = vshrl.u32 %v66, 7
  %v68 = vsub.s32 0, %v67
  %v69 = vrot.slane %v62, %v68
  %v70 = vlaneseq
  %v71 = vshrl.u32 %v70, 7
  %v72 = vsub.s32 1, %v71
  %v73 = vrot.slane %v62, %v72
  %v74 = vlaneseq
  %v75 = vshrl.u32 %v74, 7
  %v76 = vsub.s32 2, %v75
  %v77 = vrot.slane %v62, %v76
  %v78 = vlaneseq
  %v79 = vshrl.u32 %v78, 7
  %v80 = vsub.s32 3, %v79
  %v81 = vrot.slane %v62, %v80
  %v82 = vlaneseq
  %v83 = vshrl.u32 %v82, 7
  %v84 = vsub.s32 4, %v83
  %v85 = vrot.slane %v62, %v84
  %v86 = vlaneseq
  %v87 = vshrl.u32 %v86, 7
  %v88 = vsub.s32 5, %v87
  %v89 = vrot.slane %v62, %v88
  %v90 = vlaneseq
  %v91 = vshrl.u32 %v90, 7
  %v92 = vsub.s32 6, %v91
  %v93 = vrot.slane %v62, %v92
  %v94 = vlaneseq
  %v95 = vshrl.u32 %v94, 7
  %v96 = vsub.s32 7, %v95
  %v97 = vrot.slane %v62, %v96
  %v98 = vlaneseq
  %v99 = vshrl.u32 %v98, 7
  %v100 = vsub.s32 0, %v99
  %v101 = vrot.slane %v63, %v100
  %v102 = vlaneseq
  %v103 = vshrl.u32 %v102, 7
  %v104 = vsub.s32 1, %v103
  %v105 = vrot.slane %v63, %v104
  %v106 = vlaneseq
  %v107 = vshrl.u32 %v106, 7
  %v108 = vsub.s32 2, %v107
  %v109 = vrot.slane %v63, %v108
  %v110 = vlaneseq
  %v111 = vshrl.u32 %v110, 7
  %v112 = vsub.s32 3, %v111
  %v113 = vrot.slane %v63, %v112
  %v114 = vlaneseq
  %v115 = vshrl.u32 %v114, 7
  %v116 = vsub.s32 4, %v115
  %v117 = vrot.slane %v63, %v116
  %v118 = vlaneseq
  %v119 = vshrl.u32 %v118, 7
  %v120 = vsub.s32 5, %v119
  %v121 = vrot.slane %v63, %v120
  %v122 = vlaneseq
  %v123 = vshrl.u32 %v122, 7
  %v124 = vsub.s32 6, %v123
  %v125 = vrot.slane %v63, %v124
  %v126 = vlaneseq
  %v127 = vshrl.u32 %v126, 7
  %v128 = vsub.s32 7, %v127
  %v129 = vrot.slane %v63, %v128
  %v178 = vunpack.c.l.b16 %v30
  %v179 = vunpack.c.h.b16 %v30
  %v180 = vunpack.c.l.b16 %v31
  %v181 = vunpack.c.h.b16 %v31
  %v182 = vunpack.c.l.b16 %v32
  %v183 = vunpack.c.h.b16 %v32
  %v184 = vunpack.c.l.b16 %v33
  %v185 = vunpack.c.h.b16 %v33
  %v186 = vunpack.c.l.b16 %v34
  %v187 = vunpack.c.h.b16 %v34
  %v188 = vunpack.c.l.b16 %v35
  %v189 = vunpack.c.h.b16 %v35
  %v190 = vunpack.c.l.b16 %v36
  %v191 = vunpack.c.h.b16 %v36
  %v192 = vunpack.c.l.b16 %v37
  %v193 = vunpack.c.h.b16 %v37
  %v194 = vunpack.c.l.b16 %v38
  %v195 = vunpack.c.h.b16 %v38
  %v196 = vunpack.c.l.b16 %v39
  %v197 = vunpack.c.h.b16 %v39
  %v198 = vunpack.c.l.b16 %v40
  %v199 = vunpack.c.h.b16 %v40
  %v200 = vunpack.c.l.b16 %v41
  %v201 = vunpack.c.h.b16 %v41
  %v202 = vunpack.c.l.b16 %v42
  %v203 = vunpack.c.h.b16 %v42
  %v204 = vunpack.c.l.b16 %v43
  %v205 = vunpack.c.h.b16 %v43
  %v206 = vunpack.c.l.b16 %v44
  %v207 = vunpack.c.h.b16 %v44
  %v208 = vunpack.c.l.b16 %v45
  %v209 = vunpack.c.h.b16 %v45
  %v210 = vunpack.c.l.b16 %v46
  %v211 = vunpack.c.h.b16 %v46
  %v212 = vunpack.c.l.b16 %v47
  %v213 = vunpack.c.h.b16 %v47
  %v214 = vunpack.c.l.b16 %v48
  %v215 = vunpack.c.h.b16 %v48
  %v216 = vunpack.c.l.b16 %v49
  %v217 = vunpack.c.h.b16 %v49
  %v218 = vunpack.c.l.b16 %v50
  %v219 = vunpack.c.h.b16 %v50
  %v220 = vunpack.c.l.b16 %v51
  %v221 = vunpack.c.h.b16 %v51
  %v222 = vunpack.c.l.b16 %v52
  %v223 = vunpack.c.h.b16 %v52
  %v224 = vunpack.c.l.b16 %v53
  %v225 = vunpack.c.h.b16 %v53
  %v226 = vunpack.c.l.b16 %v54
  %v227 = vunpack.c.h.b16 %v54
  %v228 = vunpack.c.l.b16 %v55
  %v229 = vunpack.c.h.b16 %v55
  %v230 = vunpack.c.l.b16 %v56
  %v231 = vunpack.c.h.b16 %v56
  %v232 = vunpack.c.l.b16 %v57
  %v233 = vunpack.c.h.b16 %v57
  %v234 = vunpack.c.l.b16 %v58
  %v235 = vunpack.c.h.b16 %v58
  %v236 = vunpack.c.l.b16 %v59
  %v237 = vunpack.c.h.b16 %v59
  %v238 = vunpack.c.l.b16 %v60
  %v239 = vunpack.c.h.b16 %v60
  %v240 = vunpack.c.l.b16 %v61
  %v241 = vunpack.c.h.b16 %v61
  %v242 = vpack.c.b16 %v194, %v178
  %v243 = vpack.c.b16 %v195, %v179
  %v244 = vpack.c.b16 %v196, %v180
  %v245 = vpack.c.b16 %v197, %v181
  %v246 = vpack.c.b16 %v198, %v182
  %v247 = vpack.c.b16 %v199, %v183
  %v248 = vpack.c.b16 %v200, %v184
  %v249 = vpack.c.b16 %v201, %v185
  %v250 = vpack.c.b16 %v202, %v186
  %v251 = vpack.c.b16 %v203, %v187
  %v252 = vpack.c.b16 %v204, %v188
  %v253 = vpack.c.b16 %v205, %v189
  %v254 = vpack.c.b16 %v206, %v190
  %v255 = vpack.c.b16 %v207, %v191
  %v256 = vpack.c.b16 %v208, %v192
  %v257 = vpack.c.b16 %v209, %v193
  %v258 = vpack.c.b16 %v226, %v210
  %v259 = vpack.c.b16 %v227, %v211
  %v260 = vpack.c.b16 %v228, %v212
  %v261 = vpack.c.b16 %v229, %v213
  %v262 = vpack.c.b16 %v230, %v214
  %v263 = vpack.c.b16 %v231, %v215
  %v264 = vpack.c.b16 %v232, %v216
  %v265 = vpack.c.b16 %v233, %v217
  %v266 = vpack.c.b16 %v234, %v218
  %v267 = vpack.c.b16 %v235, %v219
  %v268 = vpack.c.b16 %v236, %v220
  %v269 = vpack.c.b16 %v237, %v221
  %v270 = vpack.c.b16 %v238, %v222
  %v271 = vpack.c.b16 %v239, %v223
  %v272 = vpack.c.b16 %v240, %v224
  %v273 = vpack.c.b16 %v241, %v225
  %vm306 = vcmask 261120
  %v308 = vsel %vm306, %v29, 0
  %310 = vmatprep.subr.bf16.mxu0 0
  %311 = vmatpush1.bf16.msra.mxu0 0
  %312 = vmatprep.subr.bf16.mxu0 0
  %313 = vmatpush1.bf16.msra.mxu0 0
  %314 = vmatprep.subr.bf16.mxu0 0
  %315 = vmatpush1.bf16.msra.mxu0 0
  %316 = vmatprep.subr.bf16.mxu0 0
  %317 = vmatpush1.bf16.msra.mxu0 0
  %318 = vmatprep.subr.bf16.mxu0 0
  %319 = vmatpush1.bf16.msra.mxu0 0
  %320 = vmatprep.subr.bf16.mxu0 0
  %321 = vmatpush1.bf16.msra.mxu0 0
  %322 = vmatprep.subr.bf16.mxu0 %v259
  %323 = vmatpush1.bf16.msra.mxu0 %v258
  %324 = vmatprep.subr.bf16.mxu0 %v243
  %325 = vmatpush1.bf16.msra.mxu0 %v242
  %326 = vmatprep.subr.bf16.mxu0 0
  %327 = vmatpush2.bf16.msra.mxu0 0
  %328 = vmatprep.subr.bf16.mxu0 0
  %329 = vmatpush2.bf16.msra.mxu0 0
  %330 = vmatprep.subr.bf16.mxu0 0
  %331 = vmatpush2.bf16.msra.mxu0 0
  %332 = vmatprep.subr.bf16.mxu0 0
  %333 = vmatpush2.bf16.msra.mxu0 0
  %334 = vmatprep.subr.bf16.mxu0 0
  %335 = vmatpush2.bf16.msra.mxu0 0
  %336 = vmatprep.subr.bf16.mxu0 0
  %337 = vmatpush2.bf16.msra.mxu0 0
  %338 = vmatprep.subr.bf16.mxu0 0
  %339 = vmatpush2.bf16.msra.mxu0 0
  %340 = vmatprep.subr.bf16.mxu0 0
  %341 = vmatpush2.bf16.msra.mxu0 0
  %342 = vmatprep.mubr.bf16.mxu0 0
  %343 = vmatmul.mubr.bf16.gmra.mxu0 %v308
  %v344 = vpop.f32.mrf.mxu0
  %v345 = vadd.f32 %v69, %v344
  %v346 = vpop.f32.mrf.mxu0
  %v347 = vadd.f32 %v73, %v346
  %v348 = vpop.f32.mrf.mxu0
  %v349 = vadd.f32 %v69, %v348
  %v350 = vpop.f32.mrf.mxu0
  %v351 = vadd.f32 %v73, %v350
  %352 = vdwg.mxu0
  %353 = vmatprep.subr.bf16.mxu0 0
  %354 = vmatpush1.bf16.msra.mxu0 0
  %355 = vmatprep.subr.bf16.mxu0 0
  %356 = vmatpush1.bf16.msra.mxu0 0
  %357 = vmatprep.subr.bf16.mxu0 0
  %358 = vmatpush1.bf16.msra.mxu0 0
  %359 = vmatprep.subr.bf16.mxu0 0
  %360 = vmatpush1.bf16.msra.mxu0 0
  %361 = vmatprep.subr.bf16.mxu0 0
  %362 = vmatpush1.bf16.msra.mxu0 0
  %363 = vmatprep.subr.bf16.mxu0 0
  %364 = vmatpush1.bf16.msra.mxu0 0
  %365 = vmatprep.subr.bf16.mxu0 %v261
  %366 = vmatpush1.bf16.msra.mxu0 %v260
  %367 = vmatprep.subr.bf16.mxu0 %v245
  %368 = vmatpush1.bf16.msra.mxu0 %v244
  %369 = vmatprep.subr.bf16.mxu0 0
  %370 = vmatpush2.bf16.msra.mxu0 0
  %371 = vmatprep.subr.bf16.mxu0 0
  %372 = vmatpush2.bf16.msra.mxu0 0
  %373 = vmatprep.subr.bf16.mxu0 0
  %374 = vmatpush2.bf16.msra.mxu0 0
  %375 = vmatprep.subr.bf16.mxu0 0
  %376 = vmatpush2.bf16.msra.mxu0 0
  %377 = vmatprep.subr.bf16.mxu0 0
  %378 = vmatpush2.bf16.msra.mxu0 0
  %379 = vmatprep.subr.bf16.mxu0 0
  %380 = vmatpush2.bf16.msra.mxu0 0
  %381 = vmatprep.subr.bf16.mxu0 0
  %382 = vmatpush2.bf16.msra.mxu0 0
  %383 = vmatprep.subr.bf16.mxu0 0
  %384 = vmatpush2.bf16.msra.mxu0 0
  %385 = vmatprep.mubr.bf16.mxu0 0
  %386 = vmatmul.mubr.bf16.gmra.mxu0 %v308
  %v387 = vpop.f32.mrf.mxu0
  %v388 = vadd.f32 %v77, %v387
  %v389 = vpop.f32.mrf.mxu0
  %v390 = vadd.f32 %v81, %v389
  %v391 = vpop.f32.mrf.mxu0
  %v392 = vadd.f32 %v77, %v391
  %v393 = vpop.f32.mrf.mxu0
  %v394 = vadd.f32 %v81, %v393
  %395 = vdwg.mxu0
  %396 = vmatprep.subr.bf16.mxu0 0
  %397 = vmatpush1.bf16.msra.mxu0 0
  %398 = vmatprep.subr.bf16.mxu0 0
  %399 = vmatpush1.bf16.msra.mxu0 0
  %400 = vmatprep.subr.bf16.mxu0 0
  %401 = vmatpush1.bf16.msra.mxu0 0
  %402 = vmatprep.subr.bf16.mxu0 0
  %403 = vmatpush1.bf16.msra.mxu0 0
  %404 = vmatprep.subr.bf16.mxu0 0
  %405 = vmatpush1.bf16.msra.mxu0 0
  %406 = vmatprep.subr.bf16.mxu0 0
  %407 = vmatpush1.bf16.msra.mxu0 0
  %408 = vmatprep.subr.bf16.mxu0 %v263
  %409 = vmatpush1.bf16.msra.mxu0 %v262
  %410 = vmatprep.subr.bf16.mxu0 %v247
  %411 = vmatpush1.bf16.msra.mxu0 %v246
  %412 = vmatprep.subr.bf16.mxu0 0
  %413 = vmatpush2.bf16.msra.mxu0 0
  %414 = vmatprep.subr.bf16.mxu0 0
  %415 = vmatpush2.bf16.msra.mxu0 0
  %416 = vmatprep.subr.bf16.mxu0 0
  %417 = vmatpush2.bf16.msra.mxu0 0
  %418 = vmatprep.subr.bf16.mxu0 0
  %419 = vmatpush2.bf16.msra.mxu0 0
  %420 = vmatprep.subr.bf16.mxu0 0
  %421 = vmatpush2.bf16.msra.mxu0 0
  %422 = vmatprep.subr.bf16.mxu0 0
  %423 = vmatpush2.bf16.msra.mxu0 0
  %424 = vmatprep.subr.bf16.mxu0 0
  %425 = vmatpush2.bf16.msra.mxu0 0
  %426 = vmatprep.subr.bf16.mxu0 0
  %427 = vmatpush2.bf16.msra.mxu0 0
  %428 = vmatprep.mubr.bf16.mxu0 0
  %429 = vmatmul.mubr.bf16.gmra.mxu0 %v308
  %v430 = vpop.f32.mrf.mxu0
  %v431 = vadd.f32 %v85, %v430
  %v432 = vpop.f32.mrf.mxu0
  %v433 = vadd.f32 %v89, %v432
  %v434 = vpop.f32.mrf.mxu0
  %v435 = vadd.f32 %v85, %v434
  %v436 = vpop.f32.mrf.mxu0
  %v437 = vadd.f32 %v89, %v436
  %438 = vdwg.mxu0
  %439 = vmatprep.subr.bf16.mxu0 0
  %440 = vmatpush1.bf16.msra.mxu0 0
  %441 = vmatprep.subr.bf16.mxu0 0
  %442 = vmatpush1.bf16.msra.mxu0 0
  %443 = vmatprep.subr.bf16.mxu0 0
  %444 = vmatpush1.bf16.msra.mxu0 0
  %445 = vmatprep.subr.bf16.mxu0 0
  %446 = vmatpush1.bf16.msra.mxu0 0
  %447 = vmatprep.subr.bf16.mxu0 0
  %448 = vmatpush1.bf16.msra.mxu0 0
  %449 = vmatprep.subr.bf16.mxu0 0
  %450 = vmatpush1.bf16.msra.mxu0 0
  %451 = vmatprep.subr.bf16.mxu0 %v265
  %452 = vmatpush1.bf16.msra.mxu0 %v264
  %453 = vmatprep.subr.bf16.mxu0 %v249
  %454 = vmatpush1.bf16.msra.mxu0 %v248
  %455 = vmatprep.subr.bf16.mxu0 0
  %456 = vmatpush2.bf16.msra.mxu0 0
  %457 = vmatprep.subr.bf16.mxu0 0
  %458 = vmatpush2.bf16.msra.mxu0 0
  %459 = vmatprep.subr.bf16.mxu0 0
  %460 = vmatpush2.bf16.msra.mxu0 0
  %461 = vmatprep.subr.bf16.mxu0 0
  %462 = vmatpush2.bf16.msra.mxu0 0
  %463 = vmatprep.subr.bf16.mxu0 0
  %464 = vmatpush2.bf16.msra.mxu0 0
  %465 = vmatprep.subr.bf16.mxu0 0
  %466 = vmatpush2.bf16.msra.mxu0 0
  %467 = vmatprep.subr.bf16.mxu0 0
  %468 = vmatpush2.bf16.msra.mxu0 0
  %469 = vmatprep.subr.bf16.mxu0 0
  %470 = vmatpush2.bf16.msra.mxu0 0
  %471 = vmatprep.mubr.bf16.mxu0 0
  %472 = vmatmul.mubr.bf16.gmra.mxu0 %v308
  %v473 = vpop.f32.mrf.mxu0
  %v474 = vadd.f32 %v93, %v473
  %v475 = vpop.f32.mrf.mxu0
  %v476 = vadd.f32 %v97, %v475
  %v477 = vpop.f32.mrf.mxu0
  %v478 = vadd.f32 %v93, %v477
  %v479 = vpop.f32.mrf.mxu0
  %v480 = vadd.f32 %v97, %v479
  %481 = vdwg.mxu0
  %482 = vmatprep.subr.bf16.mxu0 0
  %483 = vmatpush1.bf16.msra.mxu0 0
  %484 = vmatprep.subr.bf16.mxu0 0
  %485 = vmatpush1.bf16.msra.mxu0 0
  %486 = vmatprep.subr.bf16.mxu0 0
  %487 = vmatpush1.bf16.msra.mxu0 0
  %488 = vmatprep.subr.bf16.mxu0 0
  %489 = vmatpush1.bf16.msra.mxu0 0
  %490 = vmatprep.subr.bf16.mxu0 0
  %491 = vmatpush1.bf16.msra.mxu0 0
  %492 = vmatprep.subr.bf16.mxu0 0
  %493 = vmatpush1.bf16.msra.mxu0 0
  %494 = vmatprep.subr.bf16.mxu0 %v267
  %495 = vmatpush1.bf16.msra.mxu0 %v266
  %496 = vmatprep.subr.bf16.mxu0 %v251
  %497 = vmatpush1.bf16.msra.mxu0 %v250
  %498 = vmatprep.subr.bf16.mxu0 0
  %499 = vmatpush2.bf16.msra.mxu0 0
  %500 = vmatprep.subr.bf16.mxu0 0
  %501 = vmatpush2.bf16.msra.mxu0 0
  %502 = vmatprep.subr.bf16.mxu0 0
  %503 = vmatpush2.bf16.msra.mxu0 0
  %504 = vmatprep.subr.bf16.mxu0 0
  %505 = vmatpush2.bf16.msra.mxu0 0
  %506 = vmatprep.subr.bf16.mxu0 0
  %507 = vmatpush2.bf16.msra.mxu0 0
  %508 = vmatprep.subr.bf16.mxu0 0
  %509 = vmatpush2.bf16.msra.mxu0 0
  %510 = vmatprep.subr.bf16.mxu0 0
  %511 = vmatpush2.bf16.msra.mxu0 0
  %512 = vmatprep.subr.bf16.mxu0 0
  %513 = vmatpush2.bf16.msra.mxu0 0
  %514 = vmatprep.mubr.bf16.mxu0 0
  %515 = vmatmul.mubr.bf16.gmra.mxu0 %v308
  %v516 = vpop.f32.mrf.mxu0
  %v517 = vadd.f32 %v101, %v516
  %v518 = vpop.f32.mrf.mxu0
  %v519 = vadd.f32 %v105, %v518
  %v520 = vpop.f32.mrf.mxu0
  %v521 = vadd.f32 %v101, %v520
  %v522 = vpop.f32.mrf.mxu0
  %v523 = vadd.f32 %v105, %v522
  %524 = vdwg.mxu0
  %525 = vmatprep.subr.bf16.mxu0 0
  %526 = vmatpush1.bf16.msra.mxu0 0
  %527 = vmatprep.subr.bf16.mxu0 0
  %528 = vmatpush1.bf16.msra.mxu0 0
  %529 = vmatprep.subr.bf16.mxu0 0
  %530 = vmatpush1.bf16.msra.mxu0 0
  %531 = vmatprep.subr.bf16.mxu0 0
  %532 = vmatpush1.bf16.msra.mxu0 0
  %533 = vmatprep.subr.bf16.mxu0 0
  %534 = vmatpush1.bf16.msra.mxu0 0
  %535 = vmatprep.subr.bf16.mxu0 0
  %536 = vmatpush1.bf16.msra.mxu0 0
  %537 = vmatprep.subr.bf16.mxu0 %v269
  %538 = vmatpush1.bf16.msra.mxu0 %v268
  %539 = vmatprep.subr.bf16.mxu0 %v253
  %540 = vmatpush1.bf16.msra.mxu0 %v252
  %541 = vmatprep.subr.bf16.mxu0 0
  %542 = vmatpush2.bf16.msra.mxu0 0
  %543 = vmatprep.subr.bf16.mxu0 0
  %544 = vmatpush2.bf16.msra.mxu0 0
  %545 = vmatprep.subr.bf16.mxu0 0
  %546 = vmatpush2.bf16.msra.mxu0 0
  %547 = vmatprep.subr.bf16.mxu0 0
  %548 = vmatpush2.bf16.msra.mxu0 0
  %549 = vmatprep.subr.bf16.mxu0 0
  %550 = vmatpush2.bf16.msra.mxu0 0
  %551 = vmatprep.subr.bf16.mxu0 0
  %552 = vmatpush2.bf16.msra.mxu0 0
  %553 = vmatprep.subr.bf16.mxu0 0
  %554 = vmatpush2.bf16.msra.mxu0 0
  %555 = vmatprep.subr.bf16.mxu0 0
  %556 = vmatpush2.bf16.msra.mxu0 0
  %557 = vmatprep.mubr.bf16.mxu0 0
  %558 = vmatmul.mubr.bf16.gmra.mxu0 %v308
  %v559 = vpop.f32.mrf.mxu0
  %v560 = vadd.f32 %v109, %v559
  %v561 = vpop.f32.mrf.mxu0
  %v562 = vadd.f32 %v113, %v561
  %v563 = vpop.f32.mrf.mxu0
  %v564 = vadd.f32 %v109, %v563
  %v565 = vpop.f32.mrf.mxu0
  %v566 = vadd.f32 %v113, %v565
  %567 = vdwg.mxu0
  %568 = vmatprep.subr.bf16.mxu0 0
  %569 = vmatpush1.bf16.msra.mxu0 0
  %570 = vmatprep.subr.bf16.mxu0 0
  %571 = vmatpush1.bf16.msra.mxu0 0
  %572 = vmatprep.subr.bf16.mxu0 0
  %573 = vmatpush1.bf16.msra.mxu0 0
  %574 = vmatprep.subr.bf16.mxu0 0
  %575 = vmatpush1.bf16.msra.mxu0 0
  %576 = vmatprep.subr.bf16.mxu0 0
  %577 = vmatpush1.bf16.msra.mxu0 0
  %578 = vmatprep.subr.bf16.mxu0 0
  %579 = vmatpush1.bf16.msra.mxu0 0
  %580 = vmatprep.subr.bf16.mxu0 %v271
  %581 = vmatpush1.bf16.msra.mxu0 %v270
  %582 = vmatprep.subr.bf16.mxu0 %v255
  %583 = vmatpush1.bf16.msra.mxu0 %v254
  %584 = vmatprep.subr.bf16.mxu0 0
  %585 = vmatpush2.bf16.msra.mxu0 0
  %586 = vmatprep.subr.bf16.mxu0 0
  %587 = vmatpush2.bf16.msra.mxu0 0
  %588 = vmatprep.subr.bf16.mxu0 0
  %589 = vmatpush2.bf16.msra.mxu0 0
  %590 = vmatprep.subr.bf16.mxu0 0
  %591 = vmatpush2.bf16.msra.mxu0 0
  %592 = vmatprep.subr.bf16.mxu0 0
  %593 = vmatpush2.bf16.msra.mxu0 0
  %594 = vmatprep.subr.bf16.mxu0 0
  %595 = vmatpush2.bf16.msra.mxu0 0
  %596 = vmatprep.subr.bf16.mxu0 0
  %597 = vmatpush2.bf16.msra.mxu0 0
  %598 = vmatprep.subr.bf16.mxu0 0
  %599 = vmatpush2.bf16.msra.mxu0 0
  %600 = vmatprep.mubr.bf16.mxu0 0
  %601 = vmatmul.mubr.bf16.gmra.mxu0 %v308
  %v602 = vpop.f32.mrf.mxu0
  %v603 = vadd.f32 %v117, %v602
  %v604 = vpop.f32.mrf.mxu0
  %v605 = vadd.f32 %v121, %v604
  %v606 = vpop.f32.mrf.mxu0
  %v607 = vadd.f32 %v117, %v606
  %v608 = vpop.f32.mrf.mxu0
  %v609 = vadd.f32 %v121, %v608
  %610 = vdwg.mxu0
  %611 = vmatprep.subr.bf16.mxu0 0
  %612 = vmatpush1.bf16.msra.mxu0 0
  %613 = vmatprep.subr.bf16.mxu0 0
  %614 = vmatpush1.bf16.msra.mxu0 0
  %615 = vmatprep.subr.bf16.mxu0 0
  %616 = vmatpush1.bf16.msra.mxu0 0
  %617 = vmatprep.subr.bf16.mxu0 0
  %618 = vmatpush1.bf16.msra.mxu0 0
  %619 = vmatprep.subr.bf16.mxu0 0
  %620 = vmatpush1.bf16.msra.mxu0 0
  %621 = vmatprep.subr.bf16.mxu0 0
  %622 = vmatpush1.bf16.msra.mxu0 0
  %623 = vmatprep.subr.bf16.mxu0 %v273
  %624 = vmatpush1.bf16.msra.mxu0 %v272
  %625 = vmatprep.subr.bf16.mxu0 %v257
  %626 = vmatpush1.bf16.msra.mxu0 %v256
  %627 = vmatprep.subr.bf16.mxu0 0
  %628 = vmatpush2.bf16.msra.mxu0 0
  %629 = vmatprep.subr.bf16.mxu0 0
  %630 = vmatpush2.bf16.msra.mxu0 0
  %631 = vmatprep.subr.bf16.mxu0 0
  %632 = vmatpush2.bf16.msra.mxu0 0
  %633 = vmatprep.subr.bf16.mxu0 0
  %634 = vmatpush2.bf16.msra.mxu0 0
  %635 = vmatprep.subr.bf16.mxu0 0
  %636 = vmatpush2.bf16.msra.mxu0 0
  %637 = vmatprep.subr.bf16.mxu0 0
  %638 = vmatpush2.bf16.msra.mxu0 0
  %639 = vmatprep.subr.bf16.mxu0 0
  %640 = vmatpush2.bf16.msra.mxu0 0
  %641 = vmatprep.subr.bf16.mxu0 0
  %642 = vmatpush2.bf16.msra.mxu0 0
  %643 = vmatprep.mubr.bf16.mxu0 0
  %644 = vmatmul.mubr.bf16.gmra.mxu0 %v308
  %v645 = vpop.f32.mrf.mxu0
  %v646 = vadd.f32 %v125, %v645
  %v647 = vpop.f32.mrf.mxu0
  %v648 = vadd.f32 %v129, %v647
  %v649 = vpop.f32.mrf.mxu0
  %v650 = vadd.f32 %v125, %v649
  %v651 = vpop.f32.mrf.mxu0
  %v652 = vadd.f32 %v129, %v651
  %653 = vdwg.mxu0
  %v654 = vmax.f32 %v345, 0.0
  %v655 = vmax.f32 %v347, 0.0
  %v656 = vmax.f32 %v388, 0.0
  %v657 = vmax.f32 %v390, 0.0
  %v658 = vmax.f32 %v431, 0.0
  %v659 = vmax.f32 %v433, 0.0
  %v660 = vmax.f32 %v474, 0.0
  %v661 = vmax.f32 %v476, 0.0
  %v662 = vmax.f32 %v517, 0.0
  %v663 = vmax.f32 %v519, 0.0
  %v664 = vmax.f32 %v560, 0.0
  %v665 = vmax.f32 %v562, 0.0
  %v666 = vmax.f32 %v603, 0.0
  %v667 = vmax.f32 %v605, 0.0
  %v668 = vmax.f32 %v646, 0.0
  %v669 = vmax.f32 %v648, 0.0
  %v670 = vmax.f32 %v349, 0.0
  %v671 = vmax.f32 %v351, 0.0
  %v672 = vmax.f32 %v392, 0.0
  %v673 = vmax.f32 %v394, 0.0
  %v674 = vmax.f32 %v435, 0.0
  %v675 = vmax.f32 %v437, 0.0
  %v676 = vmax.f32 %v478, 0.0
  %v677 = vmax.f32 %v480, 0.0
  %v678 = vmax.f32 %v521, 0.0
  %v679 = vmax.f32 %v523, 0.0
  %v680 = vmax.f32 %v564, 0.0
  %v681 = vmax.f32 %v566, 0.0
  %v682 = vmax.f32 %v607, 0.0
  %v683 = vmax.f32 %v609, 0.0
  %v684 = vmax.f32 %v650, 0.0
  %v685 = vmax.f32 %v652, 0.0
  %v686 = vpack.c.bf16 %v670, %v654
  %v687 = vpack.c.bf16 %v671, %v655
  %v688 = vpack.c.bf16 %v672, %v656
  %v689 = vpack.c.bf16 %v673, %v657
  %v690 = vpack.c.bf16 %v674, %v658
  %v691 = vpack.c.bf16 %v675, %v659
  %v692 = vpack.c.bf16 %v676, %v660
  %v693 = vpack.c.bf16 %v677, %v661
  %v694 = vpack.c.bf16 %v678, %v662
  %v695 = vpack.c.bf16 %v679, %v663
  %v696 = vpack.c.bf16 %v680, %v664
  %v697 = vpack.c.bf16 %v681, %v665
  %v698 = vpack.c.bf16 %v682, %v666
  %v699 = vpack.c.bf16 %v683, %v667
  %v700 = vpack.c.bf16 %v684, %v668
  %v701 = vpack.c.bf16 %v685, %v669
  %v702 = vld [vmem:[%s3] sm:$0xf]
  %v703 = vld [vmem:[%s3 + $0x4] sm:$0xf]
  %v704 = vld [vmem:[%s3 + $0x8] sm:$0xf]
  %v705 = vld [vmem:[%s3 + $0xc] sm:$0xf]
  %v706 = vld [vmem:[%s3 + $0x10] sm:$0xf]
  %v707 = vld [vmem:[%s3 + $0x14] sm:$0xf]
  %v708 = vld [vmem:[%s3 + $0x18] sm:$0xf]
  %v709 = vld [vmem:[%s3 + $0x1c] sm:$0xf]
  %v710 = vld [vmem:[%s3 + $0x20] sm:$0xf]
  %v711 = vld [vmem:[%s3 + $0x24] sm:$0xf]
  %v712 = vld [vmem:[%s3 + $0x28] sm:$0xf]
  %v713 = vld [vmem:[%s3 + $0x2c] sm:$0xf]
  %v714 = vld [vmem:[%s3 + $0x30] sm:$0xf]
  %v715 = vld [vmem:[%s3 + $0x34] sm:$0xf]
  %v716 = vld [vmem:[%s3 + $0x38] sm:$0xf]
  %v717 = vld [vmem:[%s3 + $0x3c] sm:$0xf]
  %v718 = vld [vmem:[%s3 + $0x40] sm:$0xf]
  %v719 = vld [vmem:[%s3 + $0x44] sm:$0xf]
  %v720 = vld [vmem:[%s3 + $0x48] sm:$0xf]
  %v721 = vld [vmem:[%s3 + $0x4c] sm:$0xf]
  %v722 = vld [vmem:[%s3 + $0x50] sm:$0xf]
  %v723 = vld [vmem:[%s3 + $0x54] sm:$0xf]
  %v724 = vld [vmem:[%s3 + $0x58] sm:$0xf]
  %v725 = vld [vmem:[%s3 + $0x5c] sm:$0xf]
  %v726 = vld [vmem:[%s3 + $0x60] sm:$0xf]
  %v727 = vld [vmem:[%s3 + $0x64] sm:$0xf]
  %v728 = vld [vmem:[%s3 + $0x68] sm:$0xf]
  %v729 = vld [vmem:[%s3 + $0x6c] sm:$0xf]
  %v730 = vld [vmem:[%s3 + $0x70] sm:$0xf]
  %v731 = vld [vmem:[%s3 + $0x74] sm:$0xf]
  %v732 = vld [vmem:[%s3 + $0x78] sm:$0xf]
  %v733 = vld [vmem:[%s3 + $0x7c] sm:$0xf]
  %v734 = vld [vmem:[%s3 + $0x80] sm:$0xf]
  %v735 = vld [vmem:[%s3 + $0x84] sm:$0xf]
  %v736 = vld [vmem:[%s3 + $0x88] sm:$0xf]
  %v737 = vld [vmem:[%s3 + $0x8c] sm:$0xf]
  %v738 = vld [vmem:[%s3 + $0x90] sm:$0xf]
  %v739 = vld [vmem:[%s3 + $0x94] sm:$0xf]
  %v740 = vld [vmem:[%s3 + $0x98] sm:$0xf]
  %v741 = vld [vmem:[%s3 + $0x9c] sm:$0xf]
  %v742 = vld [vmem:[%s3 + $0xa0] sm:$0xf]
  %v743 = vld [vmem:[%s3 + $0xa4] sm:$0xf]
  %v744 = vld [vmem:[%s3 + $0xa8] sm:$0xf]
  %v745 = vld [vmem:[%s3 + $0xac] sm:$0xf]
  %v746 = vld [vmem:[%s3 + $0xb0] sm:$0xf]
  %v747 = vld [vmem:[%s3 + $0xb4] sm:$0xf]
  %v748 = vld [vmem:[%s3 + $0xb8] sm:$0xf]
  %v749 = vld [vmem:[%s3 + $0xbc] sm:$0xf]
  %v750 = vld [vmem:[%s3 + $0xc0] sm:$0xf]
  %v751 = vld [vmem:[%s3 + $0xc4] sm:$0xf]
  %v752 = vld [vmem:[%s3 + $0xc8] sm:$0xf]
  %v753 = vld [vmem:[%s3 + $0xcc] sm:$0xf]
  %v754 = vld [vmem:[%s3 + $0xd0] sm:$0xf]
  %v755 = vld [vmem:[%s3 + $0xd4] sm:$0xf]
  %v756 = vld [vmem:[%s3 + $0xd8] sm:$0xf]
  %v757 = vld [vmem:[%s3 + $0xdc] sm:$0xf]
  %v758 = vld [vmem:[%s3 + $0xe0] sm:$0xf]
  %v759 = vld [vmem:[%s3 + $0xe4] sm:$0xf]
  %v760 = vld [vmem:[%s3 + $0xe8] sm:$0xf]
  %v761 = vld [vmem:[%s3 + $0xec] sm:$0xf]
  %v762 = vld [vmem:[%s3 + $0xf0] sm:$0xf]
  %v763 = vld [vmem:[%s3 + $0xf4] sm:$0xf]
  %v764 = vld [vmem:[%s3 + $0xf8] sm:$0xf]
  %v765 = vld [vmem:[%s3 + $0xfc] sm:$0xf]
  %v766 = vld [vmem:[%s3 + $0x100] sm:$0xf]
  %v767 = vld [vmem:[%s3 + $0x104] sm:$0xf]
  %v768 = vld [vmem:[%s3 + $0x108] sm:$0xf]
  %v769 = vld [vmem:[%s3 + $0x10c] sm:$0xf]
  %v770 = vld [vmem:[%s3 + $0x110] sm:$0xf]
  %v771 = vld [vmem:[%s3 + $0x114] sm:$0xf]
  %v772 = vld [vmem:[%s3 + $0x118] sm:$0xf]
  %v773 = vld [vmem:[%s3 + $0x11c] sm:$0xf]
  %v774 = vld [vmem:[%s3 + $0x120] sm:$0xf]
  %v775 = vld [vmem:[%s3 + $0x124] sm:$0xf]
  %v776 = vld [vmem:[%s3 + $0x128] sm:$0xf]
  %v777 = vld [vmem:[%s3 + $0x12c] sm:$0xf]
  %v778 = vld [vmem:[%s3 + $0x130] sm:$0xf]
  %v779 = vld [vmem:[%s3 + $0x134] sm:$0xf]
  %v780 = vld [vmem:[%s3 + $0x138] sm:$0xf]
  %v781 = vld [vmem:[%s3 + $0x13c] sm:$0xf]
  %v782 = vld [vmem:[%s3 + $0x140] sm:$0xf]
  %v783 = vld [vmem:[%s3 + $0x144] sm:$0xf]
  %v784 = vld [vmem:[%s3 + $0x148] sm:$0xf]
  %v785 = vld [vmem:[%s3 + $0x14c] sm:$0xf]
  %v786 = vld [vmem:[%s3 + $0x150] sm:$0xf]
  %v787 = vld [vmem:[%s3 + $0x154] sm:$0xf]
  %v788 = vld [vmem:[%s3 + $0x158] sm:$0xf]
  %v789 = vld [vmem:[%s3 + $0x15c] sm:$0xf]
  %v790 = vld [vmem:[%s3 + $0x160] sm:$0xf]
  %v791 = vld [vmem:[%s3 + $0x164] sm:$0xf]
  %v792 = vld [vmem:[%s3 + $0x168] sm:$0xf]
  %v793 = vld [vmem:[%s3 + $0x16c] sm:$0xf]
  %v794 = vld [vmem:[%s3 + $0x170] sm:$0xf]
  %v795 = vld [vmem:[%s3 + $0x174] sm:$0xf]
  %v796 = vld [vmem:[%s3 + $0x178] sm:$0xf]
  %v797 = vld [vmem:[%s3 + $0x17c] sm:$0xf]
  %v798 = vld [vmem:[%s3 + $0x180] sm:$0xf]
  %v799 = vld [vmem:[%s3 + $0x184] sm:$0xf]
  %v800 = vld [vmem:[%s3 + $0x188] sm:$0xf]
  %v801 = vld [vmem:[%s3 + $0x18c] sm:$0xf]
  %v802 = vld [vmem:[%s3 + $0x190] sm:$0xf]
  %v803 = vld [vmem:[%s3 + $0x194] sm:$0xf]
  %v804 = vld [vmem:[%s3 + $0x198] sm:$0xf]
  %v805 = vld [vmem:[%s3 + $0x19c] sm:$0xf]
  %v806 = vld [vmem:[%s3 + $0x1a0] sm:$0xf]
  %v807 = vld [vmem:[%s3 + $0x1a4] sm:$0xf]
  %v808 = vld [vmem:[%s3 + $0x1a8] sm:$0xf]
  %v809 = vld [vmem:[%s3 + $0x1ac] sm:$0xf]
  %v810 = vld [vmem:[%s3 + $0x1b0] sm:$0xf]
  %v811 = vld [vmem:[%s3 + $0x1b4] sm:$0xf]
  %v812 = vld [vmem:[%s3 + $0x1b8] sm:$0xf]
  %v813 = vld [vmem:[%s3 + $0x1bc] sm:$0xf]
  %v814 = vld [vmem:[%s3 + $0x1c0] sm:$0xf]
  %v815 = vld [vmem:[%s3 + $0x1c4] sm:$0xf]
  %v816 = vld [vmem:[%s3 + $0x1c8] sm:$0xf]
  %v817 = vld [vmem:[%s3 + $0x1cc] sm:$0xf]
  %v818 = vld [vmem:[%s3 + $0x1d0] sm:$0xf]
  %v819 = vld [vmem:[%s3 + $0x1d4] sm:$0xf]
  %v820 = vld [vmem:[%s3 + $0x1d8] sm:$0xf]
  %v821 = vld [vmem:[%s3 + $0x1dc] sm:$0xf]
  %v822 = vld [vmem:[%s3 + $0x1e0] sm:$0xf]
  %v823 = vld [vmem:[%s3 + $0x1e4] sm:$0xf]
  %v824 = vld [vmem:[%s3 + $0x1e8] sm:$0xf]
  %v825 = vld [vmem:[%s3 + $0x1ec] sm:$0xf]
  %v826 = vld [vmem:[%s3 + $0x1f0] sm:$0xf]
  %v827 = vld [vmem:[%s3 + $0x1f4] sm:$0xf]
  %v828 = vld [vmem:[%s3 + $0x1f8] sm:$0xf]
  %v829 = vld [vmem:[%s3 + $0x1fc] sm:$0xf]
  %v830 = vld [vmem:[%s3 + $0x200] sm:$0xf]
  %v831 = vld [vmem:[%s3 + $0x204] sm:$0xf]
  %v832 = vld [vmem:[%s3 + $0x208] sm:$0xf]
  %v833 = vld [vmem:[%s3 + $0x20c] sm:$0xf]
  %v834 = vld [vmem:[%s3 + $0x210] sm:$0xf]
  %v835 = vld [vmem:[%s3 + $0x214] sm:$0xf]
  %v836 = vld [vmem:[%s3 + $0x218] sm:$0xf]
  %v837 = vld [vmem:[%s3 + $0x21c] sm:$0xf]
  %v838 = vld [vmem:[%s3 + $0x220] sm:$0xf]
  %v839 = vld [vmem:[%s3 + $0x224] sm:$0xf]
  %v840 = vld [vmem:[%s3 + $0x228] sm:$0xf]
  %v841 = vld [vmem:[%s3 + $0x22c] sm:$0xf]
  %v842 = vld [vmem:[%s3 + $0x230] sm:$0xf]
  %v843 = vld [vmem:[%s3 + $0x234] sm:$0xf]
  %v844 = vld [vmem:[%s3 + $0x238] sm:$0xf]
  %v845 = vld [vmem:[%s3 + $0x23c] sm:$0xf]
  %v846 = vld [vmem:[%s3 + $0x240] sm:$0xf]
  %v847 = vld [vmem:[%s3 + $0x244] sm:$0xf]
  %v848 = vld [vmem:[%s3 + $0x248] sm:$0xf]
  %v849 = vld [vmem:[%s3 + $0x24c] sm:$0xf]
  %v850 = vld [vmem:[%s3 + $0x250] sm:$0xf]
  %v851 = vld [vmem:[%s3 + $0x254] sm:$0xf]
  %v852 = vld [vmem:[%s3 + $0x258] sm:$0xf]
  %v853 = vld [vmem:[%s3 + $0x25c] sm:$0xf]
  %v854 = vld [vmem:[%s3 + $0x260] sm:$0xf]
  %v855 = vld [vmem:[%s3 + $0x264] sm:$0xf]
  %v856 = vld [vmem:[%s3 + $0x268] sm:$0xf]
  %v857 = vld [vmem:[%s3 + $0x26c] sm:$0xf]
  %v858 = vld [vmem:[%s3 + $0x270] sm:$0xf]
  %v859 = vld [vmem:[%s3 + $0x274] sm:$0xf]
  %v860 = vld [vmem:[%s3 + $0x278] sm:$0xf]
  %v861 = vld [vmem:[%s3 + $0x27c] sm:$0xf]
  %v862 = vld [vmem:[%s3 + $0x280] sm:$0xf]
  %v863 = vld [vmem:[%s3 + $0x284] sm:$0xf]
  %v864 = vld [vmem:[%s3 + $0x288] sm:$0xf]
  %v865 = vld [vmem:[%s3 + $0x28c] sm:$0xf]
  %v866 = vld [vmem:[%s3 + $0x290] sm:$0xf]
  %v867 = vld [vmem:[%s3 + $0x294] sm:$0xf]
  %v868 = vld [vmem:[%s3 + $0x298] sm:$0xf]
  %v869 = vld [vmem:[%s3 + $0x29c] sm:$0xf]
  %v870 = vld [vmem:[%s3 + $0x2a0] sm:$0xf]
  %v871 = vld [vmem:[%s3 + $0x2a4] sm:$0xf]
  %v872 = vld [vmem:[%s3 + $0x2a8] sm:$0xf]
  %v873 = vld [vmem:[%s3 + $0x2ac] sm:$0xf]
  %v874 = vld [vmem:[%s3 + $0x2b0] sm:$0xf]
  %v875 = vld [vmem:[%s3 + $0x2b4] sm:$0xf]
  %v876 = vld [vmem:[%s3 + $0x2b8] sm:$0xf]
  %v877 = vld [vmem:[%s3 + $0x2bc] sm:$0xf]
  %v878 = vld [vmem:[%s3 + $0x2c0] sm:$0xf]
  %v879 = vld [vmem:[%s3 + $0x2c4] sm:$0xf]
  %v880 = vld [vmem:[%s3 + $0x2c8] sm:$0xf]
  %v881 = vld [vmem:[%s3 + $0x2cc] sm:$0xf]
  %v882 = vld [vmem:[%s3 + $0x2d0] sm:$0xf]
  %v883 = vld [vmem:[%s3 + $0x2d4] sm:$0xf]
  %v884 = vld [vmem:[%s3 + $0x2d8] sm:$0xf]
  %v885 = vld [vmem:[%s3 + $0x2dc] sm:$0xf]
  %v886 = vld [vmem:[%s3 + $0x2e0] sm:$0xf]
  %v887 = vld [vmem:[%s3 + $0x2e4] sm:$0xf]
  %v888 = vld [vmem:[%s3 + $0x2e8] sm:$0xf]
  %v889 = vld [vmem:[%s3 + $0x2ec] sm:$0xf]
  %v890 = vld [vmem:[%s3 + $0x2f0] sm:$0xf]
  %v891 = vld [vmem:[%s3 + $0x2f4] sm:$0xf]
  %v892 = vld [vmem:[%s3 + $0x2f8] sm:$0xf]
  %v893 = vld [vmem:[%s3 + $0x2fc] sm:$0xf]
  %v894 = vld [vmem:[%s3 + $0x300] sm:$0xf]
  %v895 = vld [vmem:[%s3 + $0x304] sm:$0xf]
  %v896 = vld [vmem:[%s3 + $0x308] sm:$0xf]
  %v897 = vld [vmem:[%s3 + $0x30c] sm:$0xf]
  %v898 = vld [vmem:[%s3 + $0x310] sm:$0xf]
  %v899 = vld [vmem:[%s3 + $0x314] sm:$0xf]
  %v900 = vld [vmem:[%s3 + $0x318] sm:$0xf]
  %v901 = vld [vmem:[%s3 + $0x31c] sm:$0xf]
  %v902 = vld [vmem:[%s3 + $0x320] sm:$0xf]
  %v903 = vld [vmem:[%s3 + $0x324] sm:$0xf]
  %v904 = vld [vmem:[%s3 + $0x328] sm:$0xf]
  %v905 = vld [vmem:[%s3 + $0x32c] sm:$0xf]
  %v906 = vld [vmem:[%s3 + $0x330] sm:$0xf]
  %v907 = vld [vmem:[%s3 + $0x334] sm:$0xf]
  %v908 = vld [vmem:[%s3 + $0x338] sm:$0xf]
  %v909 = vld [vmem:[%s3 + $0x33c] sm:$0xf]
  %v910 = vld [vmem:[%s3 + $0x340] sm:$0xf]
  %v911 = vld [vmem:[%s3 + $0x344] sm:$0xf]
  %v912 = vld [vmem:[%s3 + $0x348] sm:$0xf]
  %v913 = vld [vmem:[%s3 + $0x34c] sm:$0xf]
  %v914 = vld [vmem:[%s3 + $0x350] sm:$0xf]
  %v915 = vld [vmem:[%s3 + $0x354] sm:$0xf]
  %v916 = vld [vmem:[%s3 + $0x358] sm:$0xf]
  %v917 = vld [vmem:[%s3 + $0x35c] sm:$0xf]
  %v918 = vld [vmem:[%s3 + $0x360] sm:$0xf]
  %v919 = vld [vmem:[%s3 + $0x364] sm:$0xf]
  %v920 = vld [vmem:[%s3 + $0x368] sm:$0xf]
  %v921 = vld [vmem:[%s3 + $0x36c] sm:$0xf]
  %v922 = vld [vmem:[%s3 + $0x370] sm:$0xf]
  %v923 = vld [vmem:[%s3 + $0x374] sm:$0xf]
  %v924 = vld [vmem:[%s3 + $0x378] sm:$0xf]
  %v925 = vld [vmem:[%s3 + $0x37c] sm:$0xf]
  %v926 = vld [vmem:[%s3 + $0x380] sm:$0xf]
  %v927 = vld [vmem:[%s3 + $0x384] sm:$0xf]
  %v928 = vld [vmem:[%s3 + $0x388] sm:$0xf]
  %v929 = vld [vmem:[%s3 + $0x38c] sm:$0xf]
  %v930 = vld [vmem:[%s3 + $0x390] sm:$0xf]
  %v931 = vld [vmem:[%s3 + $0x394] sm:$0xf]
  %v932 = vld [vmem:[%s3 + $0x398] sm:$0xf]
  %v933 = vld [vmem:[%s3 + $0x39c] sm:$0xf]
  %v934 = vld [vmem:[%s3 + $0x3a0] sm:$0xf]
  %v935 = vld [vmem:[%s3 + $0x3a4] sm:$0xf]
  %v936 = vld [vmem:[%s3 + $0x3a8] sm:$0xf]
  %v937 = vld [vmem:[%s3 + $0x3ac] sm:$0xf]
  %v938 = vld [vmem:[%s3 + $0x3b0] sm:$0xf]
  %v939 = vld [vmem:[%s3 + $0x3b4] sm:$0xf]
  %v940 = vld [vmem:[%s3 + $0x3b8] sm:$0xf]
  %v941 = vld [vmem:[%s3 + $0x3bc] sm:$0xf]
  %v942 = vld [vmem:[%s3 + $0x3c0] sm:$0xf]
  %v943 = vld [vmem:[%s3 + $0x3c4] sm:$0xf]
  %v944 = vld [vmem:[%s3 + $0x3c8] sm:$0xf]
  %v945 = vld [vmem:[%s3 + $0x3cc] sm:$0xf]
  %v946 = vld [vmem:[%s3 + $0x3d0] sm:$0xf]
  %v947 = vld [vmem:[%s3 + $0x3d4] sm:$0xf]
  %v948 = vld [vmem:[%s3 + $0x3d8] sm:$0xf]
  %v949 = vld [vmem:[%s3 + $0x3dc] sm:$0xf]
  %v950 = vld [vmem:[%s3 + $0x3e0] sm:$0xf]
  %v951 = vld [vmem:[%s3 + $0x3e4] sm:$0xf]
  %v952 = vld [vmem:[%s3 + $0x3e8] sm:$0xf]
  %v953 = vld [vmem:[%s3 + $0x3ec] sm:$0xf]
  %v954 = vld [vmem:[%s3 + $0x3f0] sm:$0xf]
  %v955 = vld [vmem:[%s3 + $0x3f4] sm:$0xf]
  %v956 = vld [vmem:[%s3 + $0x3f8] sm:$0xf]
  %v957 = vld [vmem:[%s3 + $0x3fc] sm:$0xf]
  %v958 = vld [vmem:[%s4] sm:$0x1]
  %v960 = vlaneseq
  %v961 = vshrl.u32 %v960, 7
  %v962 = vsub.s32 0, %v961
  %v963 = vrot.slane %v958, %v962
  %v1221 = vunpack.c.l.b16 %v702
  %v1222 = vunpack.c.l.b16 %v703
  %v1223 = vunpack.c.l.b16 %v704
  %v1224 = vunpack.c.l.b16 %v705
  %v1225 = vunpack.c.l.b16 %v706
  %v1226 = vunpack.c.l.b16 %v707
  %v1227 = vunpack.c.l.b16 %v708
  %v1228 = vunpack.c.l.b16 %v709
  %v1229 = vunpack.c.l.b16 %v710
  %v1230 = vunpack.c.l.b16 %v711
  %v1231 = vunpack.c.l.b16 %v712
  %v1232 = vunpack.c.l.b16 %v713
  %v1233 = vunpack.c.l.b16 %v714
  %v1234 = vunpack.c.l.b16 %v715
  %v1235 = vunpack.c.l.b16 %v716
  %v1236 = vunpack.c.l.b16 %v717
  %v1237 = vunpack.c.l.b16 %v718
  %v1238 = vunpack.c.l.b16 %v719
  %v1239 = vunpack.c.l.b16 %v720
  %v1240 = vunpack.c.l.b16 %v721
  %v1241 = vunpack.c.l.b16 %v722
  %v1242 = vunpack.c.l.b16 %v723
  %v1243 = vunpack.c.l.b16 %v724
  %v1244 = vunpack.c.l.b16 %v725
  %v1245 = vunpack.c.l.b16 %v726
  %v1246 = vunpack.c.l.b16 %v727
  %v1247 = vunpack.c.l.b16 %v728
  %v1248 = vunpack.c.l.b16 %v729
  %v1249 = vunpack.c.l.b16 %v730
  %v1250 = vunpack.c.l.b16 %v731
  %v1251 = vunpack.c.l.b16 %v732
  %v1252 = vunpack.c.l.b16 %v733
  %v1253 = vunpack.c.l.b16 %v734
  %v1254 = vunpack.c.l.b16 %v735
  %v1255 = vunpack.c.l.b16 %v736
  %v1256 = vunpack.c.l.b16 %v737
  %v1257 = vunpack.c.l.b16 %v738
  %v1258 = vunpack.c.l.b16 %v739
  %v1259 = vunpack.c.l.b16 %v740
  %v1260 = vunpack.c.l.b16 %v741
  %v1261 = vunpack.c.l.b16 %v742
  %v1262 = vunpack.c.l.b16 %v743
  %v1263 = vunpack.c.l.b16 %v744
  %v1264 = vunpack.c.l.b16 %v745
  %v1265 = vunpack.c.l.b16 %v746
  %v1266 = vunpack.c.l.b16 %v747
  %v1267 = vunpack.c.l.b16 %v748
  %v1268 = vunpack.c.l.b16 %v749
  %v1269 = vunpack.c.l.b16 %v750
  %v1270 = vunpack.c.l.b16 %v751
  %v1271 = vunpack.c.l.b16 %v752
  %v1272 = vunpack.c.l.b16 %v753
  %v1273 = vunpack.c.l.b16 %v754
  %v1274 = vunpack.c.l.b16 %v755
  %v1275 = vunpack.c.l.b16 %v756
  %v1276 = vunpack.c.l.b16 %v757
  %v1277 = vunpack.c.l.b16 %v758
  %v1278 = vunpack.c.l.b16 %v759
  %v1279 = vunpack.c.l.b16 %v760
  %v1280 = vunpack.c.l.b16 %v761
  %v1281 = vunpack.c.l.b16 %v762
  %v1282 = vunpack.c.l.b16 %v763
  %v1283 = vunpack.c.l.b16 %v764
  %v1284 = vunpack.c.l.b16 %v765
  %v1285 = vunpack.c.l.b16 %v766
  %v1286 = vunpack.c.l.b16 %v767
  %v1287 = vunpack.c.l.b16 %v768
  %v1288 = vunpack.c.l.b16 %v769
  %v1289 = vunpack.c.l.b16 %v770
  %v1290 = vunpack.c.l.b16 %v771
  %v1291 = vunpack.c.l.b16 %v772
  %v1292 = vunpack.c.l.b16 %v773
  %v1293 = vunpack.c.l.b16 %v774
  %v1294 = vunpack.c.l.b16 %v775
  %v1295 = vunpack.c.l.b16 %v776
  %v1296 = vunpack.c.l.b16 %v777
  %v1297 = vunpack.c.l.b16 %v778
  %v1298 = vunpack.c.l.b16 %v779
  %v1299 = vunpack.c.l.b16 %v780
  %v1300 = vunpack.c.l.b16 %v781
  %v1301 = vunpack.c.l.b16 %v782
  %v1302 = vunpack.c.l.b16 %v783
  %v1303 = vunpack.c.l.b16 %v784
  %v1304 = vunpack.c.l.b16 %v785
  %v1305 = vunpack.c.l.b16 %v786
  %v1306 = vunpack.c.l.b16 %v787
  %v1307 = vunpack.c.l.b16 %v788
  %v1308 = vunpack.c.l.b16 %v789
  %v1309 = vunpack.c.l.b16 %v790
  %v1310 = vunpack.c.l.b16 %v791
  %v1311 = vunpack.c.l.b16 %v792
  %v1312 = vunpack.c.l.b16 %v793
  %v1313 = vunpack.c.l.b16 %v794
  %v1314 = vunpack.c.l.b16 %v795
  %v1315 = vunpack.c.l.b16 %v796
  %v1316 = vunpack.c.l.b16 %v797
  %v1317 = vunpack.c.l.b16 %v798
  %v1318 = vunpack.c.l.b16 %v799
  %v1319 = vunpack.c.l.b16 %v800
  %v1320 = vunpack.c.l.b16 %v801
  %v1321 = vunpack.c.l.b16 %v802
  %v1322 = vunpack.c.l.b16 %v803
  %v1323 = vunpack.c.l.b16 %v804
  %v1324 = vunpack.c.l.b16 %v805
  %v1325 = vunpack.c.l.b16 %v806
  %v1326 = vunpack.c.l.b16 %v807
  %v1327 = vunpack.c.l.b16 %v808
  %v1328 = vunpack.c.l.b16 %v809
  %v1329 = vunpack.c.l.b16 %v810
  %v1330 = vunpack.c.l.b16 %v811
  %v1331 = vunpack.c.l.b16 %v812
  %v1332 = vunpack.c.l.b16 %v813
  %v1333 = vunpack.c.l.b16 %v814
  %v1334 = vunpack.c.l.b16 %v815
  %v1335 = vunpack.c.l.b16 %v816
  %v1336 = vunpack.c.l.b16 %v817
  %v1337 = vunpack.c.l.b16 %v818
  %v1338 = vunpack.c.l.b16 %v819
  %v1339 = vunpack.c.l.b16 %v820
  %v1340 = vunpack.c.l.b16 %v821
  %v1341 = vunpack.c.l.b16 %v822
  %v1342 = vunpack.c.l.b16 %v823
  %v1343 = vunpack.c.l.b16 %v824
  %v1344 = vunpack.c.l.b16 %v825
  %v1345 = vunpack.c.l.b16 %v826
  %v1346 = vunpack.c.l.b16 %v827
  %v1347 = vunpack.c.l.b16 %v828
  %v1348 = vunpack.c.l.b16 %v829
  %v1349 = vunpack.c.l.b16 %v830
  %v1350 = vunpack.c.l.b16 %v831
  %v1351 = vunpack.c.l.b16 %v832
  %v1352 = vunpack.c.l.b16 %v833
  %v1353 = vunpack.c.l.b16 %v834
  %v1354 = vunpack.c.l.b16 %v835
  %v1355 = vunpack.c.l.b16 %v836
  %v1356 = vunpack.c.l.b16 %v837
  %v1357 = vunpack.c.l.b16 %v838
  %v1358 = vunpack.c.l.b16 %v839
  %v1359 = vunpack.c.l.b16 %v840
  %v1360 = vunpack.c.l.b16 %v841
  %v1361 = vunpack.c.l.b16 %v842
  %v1362 = vunpack.c.l.b16 %v843
  %v1363 = vunpack.c.l.b16 %v844
  %v1364 = vunpack.c.l.b16 %v845
  %v1365 = vunpack.c.l.b16 %v846
  %v1366 = vunpack.c.l.b16 %v847
  %v1367 = vunpack.c.l.b16 %v848
  %v1368 = vunpack.c.l.b16 %v849
  %v1369 = vunpack.c.l.b16 %v850
  %v1370 = vunpack.c.l.b16 %v851
  %v1371 = vunpack.c.l.b16 %v852
  %v1372 = vunpack.c.l.b16 %v853
  %v1373 = vunpack.c.l.b16 %v854
  %v1374 = vunpack.c.l.b16 %v855
  %v1375 = vunpack.c.l.b16 %v856
  %v1376 = vunpack.c.l.b16 %v857
  %v1377 = vunpack.c.l.b16 %v858
  %v1378 = vunpack.c.l.b16 %v859
  %v1379 = vunpack.c.l.b16 %v860
  %v1380 = vunpack.c.l.b16 %v861
  %v1381 = vunpack.c.l.b16 %v862
  %v1382 = vunpack.c.l.b16 %v863
  %v1383 = vunpack.c.l.b16 %v864
  %v1384 = vunpack.c.l.b16 %v865
  %v1385 = vunpack.c.l.b16 %v866
  %v1386 = vunpack.c.l.b16 %v867
  %v1387 = vunpack.c.l.b16 %v868
  %v1388 = vunpack.c.l.b16 %v869
  %v1389 = vunpack.c.l.b16 %v870
  %v1390 = vunpack.c.l.b16 %v871
  %v1391 = vunpack.c.l.b16 %v872
  %v1392 = vunpack.c.l.b16 %v873
  %v1393 = vunpack.c.l.b16 %v874
  %v1394 = vunpack.c.l.b16 %v875
  %v1395 = vunpack.c.l.b16 %v876
  %v1396 = vunpack.c.l.b16 %v877
  %v1397 = vunpack.c.l.b16 %v878
  %v1398 = vunpack.c.l.b16 %v879
  %v1399 = vunpack.c.l.b16 %v880
  %v1400 = vunpack.c.l.b16 %v881
  %v1401 = vunpack.c.l.b16 %v882
  %v1402 = vunpack.c.l.b16 %v883
  %v1403 = vunpack.c.l.b16 %v884
  %v1404 = vunpack.c.l.b16 %v885
  %v1405 = vunpack.c.l.b16 %v886
  %v1406 = vunpack.c.l.b16 %v887
  %v1407 = vunpack.c.l.b16 %v888
  %v1408 = vunpack.c.l.b16 %v889
  %v1409 = vunpack.c.l.b16 %v890
  %v1410 = vunpack.c.l.b16 %v891
  %v1411 = vunpack.c.l.b16 %v892
  %v1412 = vunpack.c.l.b16 %v893
  %v1413 = vunpack.c.l.b16 %v894
  %v1414 = vunpack.c.l.b16 %v895
  %v1415 = vunpack.c.l.b16 %v896
  %v1416 = vunpack.c.l.b16 %v897
  %v1417 = vunpack.c.l.b16 %v898
  %v1418 = vunpack.c.l.b16 %v899
  %v1419 = vunpack.c.l.b16 %v900
  %v1420 = vunpack.c.l.b16 %v901
  %v1421 = vunpack.c.l.b16 %v902
  %v1422 = vunpack.c.l.b16 %v903
  %v1423 = vunpack.c.l.b16 %v904
  %v1424 = vunpack.c.l.b16 %v905
  %v1425 = vunpack.c.l.b16 %v906
  %v1426 = vunpack.c.l.b16 %v907
  %v1427 = vunpack.c.l.b16 %v908
  %v1428 = vunpack.c.l.b16 %v909
  %v1429 = vunpack.c.l.b16 %v910
  %v1430 = vunpack.c.l.b16 %v911
  %v1431 = vunpack.c.l.b16 %v912
  %v1432 = vunpack.c.l.b16 %v913
  %v1433 = vunpack.c.l.b16 %v914
  %v1434 = vunpack.c.l.b16 %v915
  %v1435 = vunpack.c.l.b16 %v916
  %v1436 = vunpack.c.l.b16 %v917
  %v1437 = vunpack.c.l.b16 %v918
  %v1438 = vunpack.c.l.b16 %v919
  %v1439 = vunpack.c.l.b16 %v920
  %v1440 = vunpack.c.l.b16 %v921
  %v1441 = vunpack.c.l.b16 %v922
  %v1442 = vunpack.c.l.b16 %v923
  %v1443 = vunpack.c.l.b16 %v924
  %v1444 = vunpack.c.l.b16 %v925
  %v1445 = vunpack.c.l.b16 %v926
  %v1446 = vunpack.c.l.b16 %v927
  %v1447 = vunpack.c.l.b16 %v928
  %v1448 = vunpack.c.l.b16 %v929
  %v1449 = vunpack.c.l.b16 %v930
  %v1450 = vunpack.c.l.b16 %v931
  %v1451 = vunpack.c.l.b16 %v932
  %v1452 = vunpack.c.l.b16 %v933
  %v1453 = vunpack.c.l.b16 %v934
  %v1454 = vunpack.c.l.b16 %v935
  %v1455 = vunpack.c.l.b16 %v936
  %v1456 = vunpack.c.l.b16 %v937
  %v1457 = vunpack.c.l.b16 %v938
  %v1458 = vunpack.c.l.b16 %v939
  %v1459 = vunpack.c.l.b16 %v940
  %v1460 = vunpack.c.l.b16 %v941
  %v1461 = vunpack.c.l.b16 %v942
  %v1462 = vunpack.c.l.b16 %v943
  %v1463 = vunpack.c.l.b16 %v944
  %v1464 = vunpack.c.l.b16 %v945
  %v1465 = vunpack.c.l.b16 %v946
  %v1466 = vunpack.c.l.b16 %v947
  %v1467 = vunpack.c.l.b16 %v948
  %v1468 = vunpack.c.l.b16 %v949
  %v1469 = vunpack.c.l.b16 %v950
  %v1470 = vunpack.c.l.b16 %v951
  %v1471 = vunpack.c.l.b16 %v952
  %v1472 = vunpack.c.l.b16 %v953
  %v1473 = vunpack.c.l.b16 %v954
  %v1474 = vunpack.c.l.b16 %v955
  %v1475 = vunpack.c.l.b16 %v956
  %v1476 = vunpack.c.l.b16 %v957
  %v1477 = vpack.c.b16 %v1222, %v1221
  %v1478 = vpack.c.b16 %v1224, %v1223
  %v1479 = vpack.c.b16 %v1226, %v1225
  %v1480 = vpack.c.b16 %v1228, %v1227
  %v1481 = vpack.c.b16 %v1230, %v1229
  %v1482 = vpack.c.b16 %v1232, %v1231
  %v1483 = vpack.c.b16 %v1234, %v1233
  %v1484 = vpack.c.b16 %v1236, %v1235
  %v1485 = vpack.c.b16 %v1238, %v1237
  %v1486 = vpack.c.b16 %v1240, %v1239
  %v1487 = vpack.c.b16 %v1242, %v1241
  %v1488 = vpack.c.b16 %v1244, %v1243
  %v1489 = vpack.c.b16 %v1246, %v1245
  %v1490 = vpack.c.b16 %v1248, %v1247
  %v1491 = vpack.c.b16 %v1250, %v1249
  %v1492 = vpack.c.b16 %v1252, %v1251
  %v1493 = vpack.c.b16 %v1254, %v1253
  %v1494 = vpack.c.b16 %v1256, %v1255
  %v1495 = vpack.c.b16 %v1258, %v1257
  %v1496 = vpack.c.b16 %v1260, %v1259
  %v1497 = vpack.c.b16 %v1262, %v1261
  %v1498 = vpack.c.b16 %v1264, %v1263
  %v1499 = vpack.c.b16 %v1266, %v1265
  %v1500 = vpack.c.b16 %v1268, %v1267
  %v1501 = vpack.c.b16 %v1270, %v1269
  %v1502 = vpack.c.b16 %v1272, %v1271
  %v1503 = vpack.c.b16 %v1274, %v1273
  %v1504 = vpack.c.b16 %v1276, %v1275
  %v1505 = vpack.c.b16 %v1278, %v1277
  %v1506 = vpack.c.b16 %v1280, %v1279
  %v1507 = vpack.c.b16 %v1282, %v1281
  %v1508 = vpack.c.b16 %v1284, %v1283
  %v1509 = vpack.c.b16 %v1286, %v1285
  %v1510 = vpack.c.b16 %v1288, %v1287
  %v1511 = vpack.c.b16 %v1290, %v1289
  %v1512 = vpack.c.b16 %v1292, %v1291
  %v1513 = vpack.c.b16 %v1294, %v1293
  %v1514 = vpack.c.b16 %v1296, %v1295
  %v1515 = vpack.c.b16 %v1298, %v1297
  %v1516 = vpack.c.b16 %v1300, %v1299
  %v1517 = vpack.c.b16 %v1302, %v1301
  %v1518 = vpack.c.b16 %v1304, %v1303
  %v1519 = vpack.c.b16 %v1306, %v1305
  %v1520 = vpack.c.b16 %v1308, %v1307
  %v1521 = vpack.c.b16 %v1310, %v1309
  %v1522 = vpack.c.b16 %v1312, %v1311
  %v1523 = vpack.c.b16 %v1314, %v1313
  %v1524 = vpack.c.b16 %v1316, %v1315
  %v1525 = vpack.c.b16 %v1318, %v1317
  %v1526 = vpack.c.b16 %v1320, %v1319
  %v1527 = vpack.c.b16 %v1322, %v1321
  %v1528 = vpack.c.b16 %v1324, %v1323
  %v1529 = vpack.c.b16 %v1326, %v1325
  %v1530 = vpack.c.b16 %v1328, %v1327
  %v1531 = vpack.c.b16 %v1330, %v1329
  %v1532 = vpack.c.b16 %v1332, %v1331
  %v1533 = vpack.c.b16 %v1334, %v1333
  %v1534 = vpack.c.b16 %v1336, %v1335
  %v1535 = vpack.c.b16 %v1338, %v1337
  %v1536 = vpack.c.b16 %v1340, %v1339
  %v1537 = vpack.c.b16 %v1342, %v1341
  %v1538 = vpack.c.b16 %v1344, %v1343
  %v1539 = vpack.c.b16 %v1346, %v1345
  %v1540 = vpack.c.b16 %v1348, %v1347
  %v1541 = vpack.c.b16 %v1350, %v1349
  %v1542 = vpack.c.b16 %v1352, %v1351
  %v1543 = vpack.c.b16 %v1354, %v1353
  %v1544 = vpack.c.b16 %v1356, %v1355
  %v1545 = vpack.c.b16 %v1358, %v1357
  %v1546 = vpack.c.b16 %v1360, %v1359
  %v1547 = vpack.c.b16 %v1362, %v1361
  %v1548 = vpack.c.b16 %v1364, %v1363
  %v1549 = vpack.c.b16 %v1366, %v1365
  %v1550 = vpack.c.b16 %v1368, %v1367
  %v1551 = vpack.c.b16 %v1370, %v1369
  %v1552 = vpack.c.b16 %v1372, %v1371
  %v1553 = vpack.c.b16 %v1374, %v1373
  %v1554 = vpack.c.b16 %v1376, %v1375
  %v1555 = vpack.c.b16 %v1378, %v1377
  %v1556 = vpack.c.b16 %v1380, %v1379
  %v1557 = vpack.c.b16 %v1382, %v1381
  %v1558 = vpack.c.b16 %v1384, %v1383
  %v1559 = vpack.c.b16 %v1386, %v1385
  %v1560 = vpack.c.b16 %v1388, %v1387
  %v1561 = vpack.c.b16 %v1390, %v1389
  %v1562 = vpack.c.b16 %v1392, %v1391
  %v1563 = vpack.c.b16 %v1394, %v1393
  %v1564 = vpack.c.b16 %v1396, %v1395
  %v1565 = vpack.c.b16 %v1398, %v1397
  %v1566 = vpack.c.b16 %v1400, %v1399
  %v1567 = vpack.c.b16 %v1402, %v1401
  %v1568 = vpack.c.b16 %v1404, %v1403
  %v1569 = vpack.c.b16 %v1406, %v1405
  %v1570 = vpack.c.b16 %v1408, %v1407
  %v1571 = vpack.c.b16 %v1410, %v1409
  %v1572 = vpack.c.b16 %v1412, %v1411
  %v1573 = vpack.c.b16 %v1414, %v1413
  %v1574 = vpack.c.b16 %v1416, %v1415
  %v1575 = vpack.c.b16 %v1418, %v1417
  %v1576 = vpack.c.b16 %v1420, %v1419
  %v1577 = vpack.c.b16 %v1422, %v1421
  %v1578 = vpack.c.b16 %v1424, %v1423
  %v1579 = vpack.c.b16 %v1426, %v1425
  %v1580 = vpack.c.b16 %v1428, %v1427
  %v1581 = vpack.c.b16 %v1430, %v1429
  %v1582 = vpack.c.b16 %v1432, %v1431
  %v1583 = vpack.c.b16 %v1434, %v1433
  %v1584 = vpack.c.b16 %v1436, %v1435
  %v1585 = vpack.c.b16 %v1438, %v1437
  %v1586 = vpack.c.b16 %v1440, %v1439
  %v1587 = vpack.c.b16 %v1442, %v1441
  %v1588 = vpack.c.b16 %v1444, %v1443
  %v1589 = vpack.c.b16 %v1446, %v1445
  %v1590 = vpack.c.b16 %v1448, %v1447
  %v1591 = vpack.c.b16 %v1450, %v1449
  %v1592 = vpack.c.b16 %v1452, %v1451
  %v1593 = vpack.c.b16 %v1454, %v1453
  %v1594 = vpack.c.b16 %v1456, %v1455
  %v1595 = vpack.c.b16 %v1458, %v1457
  %v1596 = vpack.c.b16 %v1460, %v1459
  %v1597 = vpack.c.b16 %v1462, %v1461
  %v1598 = vpack.c.b16 %v1464, %v1463
  %v1599 = vpack.c.b16 %v1466, %v1465
  %v1600 = vpack.c.b16 %v1468, %v1467
  %v1601 = vpack.c.b16 %v1470, %v1469
  %v1602 = vpack.c.b16 %v1472, %v1471
  %v1603 = vpack.c.b16 %v1474, %v1473
  %v1604 = vpack.c.b16 %v1476, %v1475
  %1733 = vmatprep.subr.bf16.mxu0 0
  %1734 = vmatpush1.bf16.msra.mxu0 %v1484
  %1735 = vmatprep.subr.bf16.mxu0 0
  %1736 = vmatpush1.bf16.msra.mxu0 %v1483
  %1737 = vmatprep.subr.bf16.mxu0 0
  %1738 = vmatpush1.bf16.msra.mxu0 %v1482
  %1739 = vmatprep.subr.bf16.mxu0 0
  %1740 = vmatpush1.bf16.msra.mxu0 %v1481
  %1741 = vmatprep.subr.bf16.mxu0 0
  %1742 = vmatpush1.bf16.msra.mxu0 %v1480
  %1743 = vmatprep.subr.bf16.mxu0 0
  %1744 = vmatpush1.bf16.msra.mxu0 %v1479
  %1745 = vmatprep.subr.bf16.mxu0 0
  %1746 = vmatpush1.bf16.msra.mxu0 %v1478
  %1747 = vmatprep.subr.bf16.mxu0 0
  %1748 = vmatpush1.bf16.msra.mxu0 %v1477
  %1749 = vmatprep.subr.bf16.mxu0 0
  %1750 = vmatpush2.bf16.msra.mxu0 %v1492
  %1751 = vmatprep.subr.bf16.mxu0 0
  %1752 = vmatpush2.bf16.msra.mxu0 %v1491
  %1753 = vmatprep.subr.bf16.mxu0 0
  %1754 = vmatpush2.bf16.msra.mxu0 %v1490
  %1755 = vmatprep.subr.bf16.mxu0 0
  %1756 = vmatpush2.bf16.msra.mxu0 %v1489
  %1757 = vmatprep.subr.bf16.mxu0 0
  %1758 = vmatpush2.bf16.msra.mxu0 %v1488
  %1759 = vmatprep.subr.bf16.mxu0 0
  %1760 = vmatpush2.bf16.msra.mxu0 %v1487
  %1761 = vmatprep.subr.bf16.mxu0 0
  %1762 = vmatpush2.bf16.msra.mxu0 %v1486
  %1763 = vmatprep.subr.bf16.mxu0 0
  %1764 = vmatpush2.bf16.msra.mxu0 %v1485
  %1765 = vmatprep.mubr.bf16.mxu0 %v687
  %1766 = vmatmul.mubr.bf16.gmra.mxu0 %v686
  %v1767 = vpop.f32.mrf.mxu0
  %v1768 = vadd.f32 %v963, %v1767
  %v1769 = vpop.f32.mrf.mxu0
  %v1770 = vpop.f32.mrf.mxu0
  %v1771 = vadd.f32 %v963, %v1770
  %v1772 = vpop.f32.mrf.mxu0
  %1773 = vdwg.mxu0
  %1774 = vmatprep.subr.bf16.mxu0 0
  %1775 = vmatpush1.bf16.msra.mxu0 %v1500
  %1776 = vmatprep.subr.bf16.mxu0 0
  %1777 = vmatpush1.bf16.msra.mxu0 %v1499
  %1778 = vmatprep.subr.bf16.mxu0 0
  %1779 = vmatpush1.bf16.msra.mxu0 %v1498
  %1780 = vmatprep.subr.bf16.mxu0 0
  %1781 = vmatpush1.bf16.msra.mxu0 %v1497
  %1782 = vmatprep.subr.bf16.mxu0 0
  %1783 = vmatpush1.bf16.msra.mxu0 %v1496
  %1784 = vmatprep.subr.bf16.mxu0 0
  %1785 = vmatpush1.bf16.msra.mxu0 %v1495
  %1786 = vmatprep.subr.bf16.mxu0 0
  %1787 = vmatpush1.bf16.msra.mxu0 %v1494
  %1788 = vmatprep.subr.bf16.mxu0 0
  %1789 = vmatpush1.bf16.msra.mxu0 %v1493
  %1790 = vmatprep.subr.bf16.mxu0 0
  %1791 = vmatpush2.bf16.msra.mxu0 %v1508
  %1792 = vmatprep.subr.bf16.mxu0 0
  %1793 = vmatpush2.bf16.msra.mxu0 %v1507
  %1794 = vmatprep.subr.bf16.mxu0 0
  %1795 = vmatpush2.bf16.msra.mxu0 %v1506
  %1796 = vmatprep.subr.bf16.mxu0 0
  %1797 = vmatpush2.bf16.msra.mxu0 %v1505
  %1798 = vmatprep.subr.bf16.mxu0 0
  %1799 = vmatpush2.bf16.msra.mxu0 %v1504
  %1800 = vmatprep.subr.bf16.mxu0 0
  %1801 = vmatpush2.bf16.msra.mxu0 %v1503
  %1802 = vmatprep.subr.bf16.mxu0 0
  %1803 = vmatpush2.bf16.msra.mxu0 %v1502
  %1804 = vmatprep.subr.bf16.mxu0 0
  %1805 = vmatpush2.bf16.msra.mxu0 %v1501
  %1806 = vmatprep.mubr.bf16.mxu0 %v689
  %1807 = vmatmul.mubr.bf16.gmra.mxu0 %v688
  %v1808 = vpop.f32.mrf.mxu0
  %v1809 = vadd.f32 %v1768, %v1808
  %v1810 = vpop.f32.mrf.mxu0
  %v1811 = vpop.f32.mrf.mxu0
  %v1812 = vadd.f32 %v1771, %v1811
  %v1813 = vpop.f32.mrf.mxu0
  %1814 = vdwg.mxu0
  %1815 = vmatprep.subr.bf16.mxu0 0
  %1816 = vmatpush1.bf16.msra.mxu0 %v1516
  %1817 = vmatprep.subr.bf16.mxu0 0
  %1818 = vmatpush1.bf16.msra.mxu0 %v1515
  %1819 = vmatprep.subr.bf16.mxu0 0
  %1820 = vmatpush1.bf16.msra.mxu0 %v1514
  %1821 = vmatprep.subr.bf16.mxu0 0
  %1822 = vmatpush1.bf16.msra.mxu0 %v1513
  %1823 = vmatprep.subr.bf16.mxu0 0
  %1824 = vmatpush1.bf16.msra.mxu0 %v1512
  %1825 = vmatprep.subr.bf16.mxu0 0
  %1826 = vmatpush1.bf16.msra.mxu0 %v1511
  %1827 = vmatprep.subr.bf16.mxu0 0
  %1828 = vmatpush1.bf16.msra.mxu0 %v1510
  %1829 = vmatprep.subr.bf16.mxu0 0
  %1830 = vmatpush1.bf16.msra.mxu0 %v1509
  %1831 = vmatprep.subr.bf16.mxu0 0
  %1832 = vmatpush2.bf16.msra.mxu0 %v1524
  %1833 = vmatprep.subr.bf16.mxu0 0
  %1834 = vmatpush2.bf16.msra.mxu0 %v1523
  %1835 = vmatprep.subr.bf16.mxu0 0
  %1836 = vmatpush2.bf16.msra.mxu0 %v1522
  %1837 = vmatprep.subr.bf16.mxu0 0
  %1838 = vmatpush2.bf16.msra.mxu0 %v1521
  %1839 = vmatprep.subr.bf16.mxu0 0
  %1840 = vmatpush2.bf16.msra.mxu0 %v1520
  %1841 = vmatprep.subr.bf16.mxu0 0
  %1842 = vmatpush2.bf16.msra.mxu0 %v1519
  %1843 = vmatprep.subr.bf16.mxu0 0
  %1844 = vmatpush2.bf16.msra.mxu0 %v1518
  %1845 = vmatprep.subr.bf16.mxu0 0
  %1846 = vmatpush2.bf16.msra.mxu0 %v1517
  %1847 = vmatprep.mubr.bf16.mxu0 %v691
  %1848 = vmatmul.mubr.bf16.gmra.mxu0 %v690
  %v1849 = vpop.f32.mrf.mxu0
  %v1850 = vadd.f32 %v1809, %v1849
  %v1851 = vpop.f32.mrf.mxu0
  %v1852 = vpop.f32.mrf.mxu0
  %v1853 = vadd.f32 %v1812, %v1852
  %v1854 = vpop.f32.mrf.mxu0
  %1855 = vdwg.mxu0
  %1856 = vmatprep.subr.bf16.mxu0 0
  %1857 = vmatpush1.bf16.msra.mxu0 %v1532
  %1858 = vmatprep.subr.bf16.mxu0 0
  %1859 = vmatpush1.bf16.msra.mxu0 %v1531
  %1860 = vmatprep.subr.bf16.mxu0 0
  %1861 = vmatpush1.bf16.msra.mxu0 %v1530
  %1862 = vmatprep.subr.bf16.mxu0 0
  %1863 = vmatpush1.bf16.msra.mxu0 %v1529
  %1864 = vmatprep.subr.bf16.mxu0 0
  %1865 = vmatpush1.bf16.msra.mxu0 %v1528
  %1866 = vmatprep.subr.bf16.mxu0 0
  %1867 = vmatpush1.bf16.msra.mxu0 %v1527
  %1868 = vmatprep.subr.bf16.mxu0 0
  %1869 = vmatpush1.bf16.msra.mxu0 %v1526
  %1870 = vmatprep.subr.bf16.mxu0 0
  %1871 = vmatpush1.bf16.msra.mxu0 %v1525
  %1872 = vmatprep.subr.bf16.mxu0 0
  %1873 = vmatpush2.bf16.msra.mxu0 %v1540
  %1874 = vmatprep.subr.bf16.mxu0 0
  %1875 = vmatpush2.bf16.msra.mxu0 %v1539
  %1876 = vmatprep.subr.bf16.mxu0 0
  %1877 = vmatpush2.bf16.msra.mxu0 %v1538
  %1878 = vmatprep.subr.bf16.mxu0 0
  %1879 = vmatpush2.bf16.msra.mxu0 %v1537
  %1880 = vmatprep.subr.bf16.mxu0 0
  %1881 = vmatpush2.bf16.msra.mxu0 %v1536
  %1882 = vmatprep.subr.bf16.mxu0 0
  %1883 = vmatpush2.bf16.msra.mxu0 %v1535
  %1884 = vmatprep.subr.bf16.mxu0 0
  %1885 = vmatpush2.bf16.msra.mxu0 %v1534
  %1886 = vmatprep.subr.bf16.mxu0 0
  %1887 = vmatpush2.bf16.msra.mxu0 %v1533
  %1888 = vmatprep.mubr.bf16.mxu0 %v693
  %1889 = vmatmul.mubr.bf16.gmra.mxu0 %v692
  %v1890 = vpop.f32.mrf.mxu0
  %v1891 = vadd.f32 %v1850, %v1890
  %v1892 = vpop.f32.mrf.mxu0
  %v1893 = vpop.f32.mrf.mxu0
  %v1894 = vadd.f32 %v1853, %v1893
  %v1895 = vpop.f32.mrf.mxu0
  %1896 = vdwg.mxu0
  %1897 = vmatprep.subr.bf16.mxu0 0
  %1898 = vmatpush1.bf16.msra.mxu0 %v1548
  %1899 = vmatprep.subr.bf16.mxu0 0
  %1900 = vmatpush1.bf16.msra.mxu0 %v1547
  %1901 = vmatprep.subr.bf16.mxu0 0
  %1902 = vmatpush1.bf16.msra.mxu0 %v1546
  %1903 = vmatprep.subr.bf16.mxu0 0
  %1904 = vmatpush1.bf16.msra.mxu0 %v1545
  %1905 = vmatprep.subr.bf16.mxu0 0
  %1906 = vmatpush1.bf16.msra.mxu0 %v1544
  %1907 = vmatprep.subr.bf16.mxu0 0
  %1908 = vmatpush1.bf16.msra.mxu0 %v1543
  %1909 = vmatprep.subr.bf16.mxu0 0
  %1910 = vmatpush1.bf16.msra.mxu0 %v1542
  %1911 = vmatprep.subr.bf16.mxu0 0
  %1912 = vmatpush1.bf16.msra.mxu0 %v1541
  %1913 = vmatprep.subr.bf16.mxu0 0
  %1914 = vmatpush2.bf16.msra.mxu0 %v1556
  %1915 = vmatprep.subr.bf16.mxu0 0
  %1916 = vmatpush2.bf16.msra.mxu0 %v1555
  %1917 = vmatprep.subr.bf16.mxu0 0
  %1918 = vmatpush2.bf16.msra.mxu0 %v1554
  %1919 = vmatprep.subr.bf16.mxu0 0
  %1920 = vmatpush2.bf16.msra.mxu0 %v1553
  %1921 = vmatprep.subr.bf16.mxu0 0
  %1922 = vmatpush2.bf16.msra.mxu0 %v1552
  %1923 = vmatprep.subr.bf16.mxu0 0
  %1924 = vmatpush2.bf16.msra.mxu0 %v1551
  %1925 = vmatprep.subr.bf16.mxu0 0
  %1926 = vmatpush2.bf16.msra.mxu0 %v1550
  %1927 = vmatprep.subr.bf16.mxu0 0
  %1928 = vmatpush2.bf16.msra.mxu0 %v1549
  %1929 = vmatprep.mubr.bf16.mxu0 %v695
  %1930 = vmatmul.mubr.bf16.gmra.mxu0 %v694
  %v1931 = vpop.f32.mrf.mxu0
  %v1932 = vadd.f32 %v1891, %v1931
  %v1933 = vpop.f32.mrf.mxu0
  %v1934 = vpop.f32.mrf.mxu0
  %v1935 = vadd.f32 %v1894, %v1934
  %v1936 = vpop.f32.mrf.mxu0
  %1937 = vdwg.mxu0
  %1938 = vmatprep.subr.bf16.mxu0 0
  %1939 = vmatpush1.bf16.msra.mxu0 %v1564
  %1940 = vmatprep.subr.bf16.mxu0 0
  %1941 = vmatpush1.bf16.msra.mxu0 %v1563
  %1942 = vmatprep.subr.bf16.mxu0 0
  %1943 = vmatpush1.bf16.msra.mxu0 %v1562
  %1944 = vmatprep.subr.bf16.mxu0 0
  %1945 = vmatpush1.bf16.msra.mxu0 %v1561
  %1946 = vmatprep.subr.bf16.mxu0 0
  %1947 = vmatpush1.bf16.msra.mxu0 %v1560
  %1948 = vmatprep.subr.bf16.mxu0 0
  %1949 = vmatpush1.bf16.msra.mxu0 %v1559
  %1950 = vmatprep.subr.bf16.mxu0 0
  %1951 = vmatpush1.bf16.msra.mxu0 %v1558
  %1952 = vmatprep.subr.bf16.mxu0 0
  %1953 = vmatpush1.bf16.msra.mxu0 %v1557
  %1954 = vmatprep.subr.bf16.mxu0 0
  %1955 = vmatpush2.bf16.msra.mxu0 %v1572
  %1956 = vmatprep.subr.bf16.mxu0 0
  %1957 = vmatpush2.bf16.msra.mxu0 %v1571
  %1958 = vmatprep.subr.bf16.mxu0 0
  %1959 = vmatpush2.bf16.msra.mxu0 %v1570
  %1960 = vmatprep.subr.bf16.mxu0 0
  %1961 = vmatpush2.bf16.msra.mxu0 %v1569
  %1962 = vmatprep.subr.bf16.mxu0 0
  %1963 = vmatpush2.bf16.msra.mxu0 %v1568
  %1964 = vmatprep.subr.bf16.mxu0 0
  %1965 = vmatpush2.bf16.msra.mxu0 %v1567
  %1966 = vmatprep.subr.bf16.mxu0 0
  %1967 = vmatpush2.bf16.msra.mxu0 %v1566
  %1968 = vmatprep.subr.bf16.mxu0 0
  %1969 = vmatpush2.bf16.msra.mxu0 %v1565
  %1970 = vmatprep.mubr.bf16.mxu0 %v697
  %1971 = vmatmul.mubr.bf16.gmra.mxu0 %v696
  %v1972 = vpop.f32.mrf.mxu0
  %v1973 = vadd.f32 %v1932, %v1972
  %v1974 = vpop.f32.mrf.mxu0
  %v1975 = vpop.f32.mrf.mxu0
  %v1976 = vadd.f32 %v1935, %v1975
  %v1977 = vpop.f32.mrf.mxu0
  %1978 = vdwg.mxu0
  %1979 = vmatprep.subr.bf16.mxu0 0
  %1980 = vmatpush1.bf16.msra.mxu0 %v1580
  %1981 = vmatprep.subr.bf16.mxu0 0
  %1982 = vmatpush1.bf16.msra.mxu0 %v1579
  %1983 = vmatprep.subr.bf16.mxu0 0
  %1984 = vmatpush1.bf16.msra.mxu0 %v1578
  %1985 = vmatprep.subr.bf16.mxu0 0
  %1986 = vmatpush1.bf16.msra.mxu0 %v1577
  %1987 = vmatprep.subr.bf16.mxu0 0
  %1988 = vmatpush1.bf16.msra.mxu0 %v1576
  %1989 = vmatprep.subr.bf16.mxu0 0
  %1990 = vmatpush1.bf16.msra.mxu0 %v1575
  %1991 = vmatprep.subr.bf16.mxu0 0
  %1992 = vmatpush1.bf16.msra.mxu0 %v1574
  %1993 = vmatprep.subr.bf16.mxu0 0
  %1994 = vmatpush1.bf16.msra.mxu0 %v1573
  %1995 = vmatprep.subr.bf16.mxu0 0
  %1996 = vmatpush2.bf16.msra.mxu0 %v1588
  %1997 = vmatprep.subr.bf16.mxu0 0
  %1998 = vmatpush2.bf16.msra.mxu0 %v1587
  %1999 = vmatprep.subr.bf16.mxu0 0
  %2000 = vmatpush2.bf16.msra.mxu0 %v1586
  %2001 = vmatprep.subr.bf16.mxu0 0
  %2002 = vmatpush2.bf16.msra.mxu0 %v1585
  %2003 = vmatprep.subr.bf16.mxu0 0
  %2004 = vmatpush2.bf16.msra.mxu0 %v1584
  %2005 = vmatprep.subr.bf16.mxu0 0
  %2006 = vmatpush2.bf16.msra.mxu0 %v1583
  %2007 = vmatprep.subr.bf16.mxu0 0
  %2008 = vmatpush2.bf16.msra.mxu0 %v1582
  %2009 = vmatprep.subr.bf16.mxu0 0
  %2010 = vmatpush2.bf16.msra.mxu0 %v1581
  %2011 = vmatprep.mubr.bf16.mxu0 %v699
  %2012 = vmatmul.mubr.bf16.gmra.mxu0 %v698
  %v2013 = vpop.f32.mrf.mxu0
  %v2014 = vadd.f32 %v1973, %v2013
  %v2015 = vpop.f32.mrf.mxu0
  %v2016 = vpop.f32.mrf.mxu0
  %v2017 = vadd.f32 %v1976, %v2016
  %v2018 = vpop.f32.mrf.mxu0
  %2019 = vdwg.mxu0
  %2020 = vmatprep.subr.bf16.mxu0 0
  %2021 = vmatpush1.bf16.msra.mxu0 %v1596
  %2022 = vmatprep.subr.bf16.mxu0 0
  %2023 = vmatpush1.bf16.msra.mxu0 %v1595
  %2024 = vmatprep.subr.bf16.mxu0 0
  %2025 = vmatpush1.bf16.msra.mxu0 %v1594
  %2026 = vmatprep.subr.bf16.mxu0 0
  %2027 = vmatpush1.bf16.msra.mxu0 %v1593
  %2028 = vmatprep.subr.bf16.mxu0 0
  %2029 = vmatpush1.bf16.msra.mxu0 %v1592
  %2030 = vmatprep.subr.bf16.mxu0 0
  %2031 = vmatpush1.bf16.msra.mxu0 %v1591
  %2032 = vmatprep.subr.bf16.mxu0 0
  %2033 = vmatpush1.bf16.msra.mxu0 %v1590
  %2034 = vmatprep.subr.bf16.mxu0 0
  %2035 = vmatpush1.bf16.msra.mxu0 %v1589
  %2036 = vmatprep.subr.bf16.mxu0 0
  %2037 = vmatpush2.bf16.msra.mxu0 %v1604
  %2038 = vmatprep.subr.bf16.mxu0 0
  %2039 = vmatpush2.bf16.msra.mxu0 %v1603
  %2040 = vmatprep.subr.bf16.mxu0 0
  %2041 = vmatpush2.bf16.msra.mxu0 %v1602
  %2042 = vmatprep.subr.bf16.mxu0 0
  %2043 = vmatpush2.bf16.msra.mxu0 %v1601
  %2044 = vmatprep.subr.bf16.mxu0 0
  %2045 = vmatpush2.bf16.msra.mxu0 %v1600
  %2046 = vmatprep.subr.bf16.mxu0 0
  %2047 = vmatpush2.bf16.msra.mxu0 %v1599
  %2048 = vmatprep.subr.bf16.mxu0 0
  %2049 = vmatpush2.bf16.msra.mxu0 %v1598
  %2050 = vmatprep.subr.bf16.mxu0 0
  %2051 = vmatpush2.bf16.msra.mxu0 %v1597
  %2052 = vmatprep.mubr.bf16.mxu0 %v701
  %2053 = vmatmul.mubr.bf16.gmra.mxu0 %v700
  %v2054 = vpop.f32.mrf.mxu0
  %v2055 = vadd.f32 %v2014, %v2054
  %v2056 = vpop.f32.mrf.mxu0
  %v2057 = vpop.f32.mrf.mxu0
  %v2058 = vadd.f32 %v2017, %v2057
  %v2059 = vpop.f32.mrf.mxu0
  %2060 = vdwg.mxu0
  %v2061 = vadd.f32 %v27, %v2055
  %v2062 = vadd.f32 %v28, %v2058
  %v2063 = vsel %vm306, %v2061, 0.0
  %2064 = vadd.xlane.f32.xlu0 %v2063
  %v2065 = vpop.xlane.xlu0 %2064
  %v2066 = vsel %vm306, %v2062, 0.0
  %2067 = vadd.xlane.f32.xlu0 %v2066
  %v2068 = vpop.xlane.xlu0 %2067
  %v2069 = vrcp.pop 32.0
  %v2070 = vmul.f32 %v2065, %v2069
  %v2071 = vmul.f32 %v2068, %v2069
  %v2072 = vsub.f32 %v2061, %v2070
  %v2073 = vsub.f32 %v2062, %v2071
  %v2074 = vmul.f32 %v2072, %v2072
  %v2075 = vmul.f32 %v2073, %v2073
  %v2076 = vsel %vm306, %v2074, 0.0
  %2077 = vadd.xlane.f32.xlu0 %v2076
  %v2078 = vpop.xlane.xlu0 %2077
  %v2079 = vsel %vm306, %v2075, 0.0
  %2080 = vadd.xlane.f32.xlu0 %v2079
  %v2081 = vpop.xlane.xlu0 %2080
  %v2082 = vmul.f32 %v2078, %v2069
  %v2083 = vmul.f32 %v2081, %v2069
  %v2084 = vadd.f32 %v2082, 1e-05
  %v2085 = vadd.f32 %v2083, 1e-05
  %v2086 = vrsqrt.pop %v2084
  %v2087 = vrsqrt.pop %v2085
  %v2088 = vmul.f32 %v2072, %v2086
  %v2089 = vmul.f32 %v2073, %v2087
  %v2090 = vld [vmem:[%s5] sm:$0x1]
  %v2092 = vlaneseq
  %v2093 = vshrl.u32 %v2092, 7
  %v2094 = vsub.s32 0, %v2093
  %v2095 = vrot.slane %v2090, %v2094
  %v2097 = vmul.f32 %v2088, %v2095
  %v2098 = vmul.f32 %v2089, %v2095
  %v2099 = vld [vmem:[%s6] sm:$0x1]
  %v2101 = vlaneseq
  %v2102 = vshrl.u32 %v2101, 7
  %v2103 = vsub.s32 0, %v2102
  %v2104 = vrot.slane %v2099, %v2103
  %v2106 = vadd.f32 %v2097, %v2104
  %v2107 = vadd.f32 %v2098, %v2104
  %2108 = vst.msk [vmem:[%s7] sm:$0xff] %vm306, %v2106
  %2109 = vst.msk [vmem:[%s7 + $0x8] sm:$0xff] %vm306, %v2107
  // Predicated region
  $region30: #{ourgan_d_forward.10} parent=0 // pred_check
    _
  $region31: #{ourgan_d_forward.10} parent=0 // pred_check_branch
    %2111 = sbr.rel (0) target = $region33
  $region32: #{ourgan_d_forward.10} parent=0 // pred_region
    _
  $region33: #{ourgan_d_forward.10} parent=0 // pred_fallthru
    _
  // Predicated region
  $region34: #{ourgan_d_forward.10} parent=0 // pred_check
    _
  $region35: #{ourgan_d_forward.10} parent=0 // pred_check_branch
    %2113 = sbr.rel (0) target = $region37
  $region36: #{ourgan_d_forward.10} parent=0 // pred_region
    _
  $region37: #{ourgan_d_forward.10} parent=0 // pred_fallthru
    _

// kernel: ourgan_d_forward.15
$region0: #{ourgan_d_forward.15}
  #allocation0 [shape = 'u32[]', space=smem, size = 0x4, offset = 0x4, fixed_abs, tag = 'smem constant byte address 0x4 - core index']
  #allocation1 [shape = 'u32[144,128]{1,0:T(1,128)}', space=vmem, size = 0x12000, scoped, tag = 'internal scratch']
  #allocation2 [shape = 'f32[1,1]{1,0:T(1,128)S(1)}', space=vmem, size = 0x200, scoped, tag = 'scoped memory for ourgan_d_forward.15']
  %s0 = inlined_call_operand.vmem [shape: f32[2,256], index: 0, kind: input, shape index: {}]
  %s1 = inlined_call_operand.vmem [shape: bf16[256,32], index: 1, kind: input, shape index: {}]
  %s2 = inlined_call_operand.vmem [shape: f32[1,32], index: 2, kind: input, shape index: {}]
  %s3 = inlined_call_operand.vmem [shape: bf16[32,100], index: 3, kind: input, shape index: {}]
  %s4 = inlined_call_operand.vmem [shape: f32[1,100], index: 4, kind: input, shape index: {}]
  %s5 = inlined_call_operand.vmem [shape: bf16[100,1], index: 5, kind: input, shape index: {}]
  %s6 = inlined_call_operand.<no memory space> [shape: f32[1,1], index: 6, kind: input, shape index: {}]
  %s7 = inlined_call_operand.vmem [shape: f32[2,1], index: 7, kind: output, shape index: {}]
  %s8 = sld [smem:[#allocation0]]
  $region38: #{ourgan_d_forward.15} parent=0
    _
  %s10 = ssub.s32 1, %s8
  %s11 = scalar_select 0, %s10, %s8
  %v12 = vstv %s6
  %13 = vst [vmem:[#allocation2] sm:$0x1] %v12
  // Predicated region
  $region2: #{ourgan_d_forward.15} parent=0 // pred_check
    _
  $region3: #{ourgan_d_forward.15} parent=0 // pred_check_branch
    %15 = sbr.rel (0) target = $region5
  $region4: #{ourgan_d_forward.15} parent=0 // pred_region
    _
  $region5: #{ourgan_d_forward.15} parent=0 // pred_fallthru
    _
  // Predicated region
  $region6: #{ourgan_d_forward.15} parent=0 // pred_check
    _
  $region7: #{ourgan_d_forward.15} parent=0 // pred_check_branch
    %17 = sbr.rel (0) target = $region9
  $region8: #{ourgan_d_forward.15} parent=0 // pred_region
    _
  $region9: #{ourgan_d_forward.15} parent=0 // pred_fallthru
    _
  // Predicated region
  $region10: #{ourgan_d_forward.15} parent=0 // pred_check
    _
  $region11: #{ourgan_d_forward.15} parent=0 // pred_check_branch
    %19 = sbr.rel (0) target = $region13
  $region12: #{ourgan_d_forward.15} parent=0 // pred_region
    _
  $region13: #{ourgan_d_forward.15} parent=0 // pred_fallthru
    _
  // Predicated region
  $region14: #{ourgan_d_forward.15} parent=0 // pred_check
    _
  $region15: #{ourgan_d_forward.15} parent=0 // pred_check_branch
    %21 = sbr.rel (0) target = $region17
  $region16: #{ourgan_d_forward.15} parent=0 // pred_region
    _
  $region17: #{ourgan_d_forward.15} parent=0 // pred_fallthru
    _
  // Predicated region
  $region18: #{ourgan_d_forward.15} parent=0 // pred_check
    _
  $region19: #{ourgan_d_forward.15} parent=0 // pred_check_branch
    %23 = sbr.rel (0) target = $region21
  $region20: #{ourgan_d_forward.15} parent=0 // pred_region
    _
  $region21: #{ourgan_d_forward.15} parent=0 // pred_fallthru
    _
  // Predicated region
  $region22: #{ourgan_d_forward.15} parent=0 // pred_check
    _
  $region23: #{ourgan_d_forward.15} parent=0 // pred_check_branch
    %25 = sbr.rel (0) target = $region25
  $region24: #{ourgan_d_forward.15} parent=0 // pred_region
    _
  $region25: #{ourgan_d_forward.15} parent=0 // pred_fallthru
    _
  // Predicated region
  $region26: #{ourgan_d_forward.15} parent=0 // pred_check
    _
  $region27: #{ourgan_d_forward.15} parent=0 // pred_check_branch
    %27 = sbr.rel (0) target = $region29
  $region28: #{ourgan_d_forward.15} parent=0 // pred_region
    _
  $region29: #{ourgan_d_forward.15} parent=0 // pred_fallthru
    _
  %v29 = vld [vmem:[%s0] sm:$0xf]
  %v32 = vunpack.c.l.s4 1983009808
  %v33 = vunpack.c.0.s8 %v32
  %v34 = vlaneseq
  %v35 = vshrl.u32 %v34, 7
  %v36 = vsub.s32 %v33, %v35
  %v37 = vrot.slane %v29, %v36
  %v38 = vcombine.high %v37, %v37
  %v41 = vpack.c.bf16 %v37, %v37
  %v42 = vpack.c.bf16 %v38, %v38
  %v43 = vld [vmem:[%s1] sm:$0xf]
  %v44 = vld [vmem:[%s1 + $0x4] sm:$0xf]
  %v45 = vld [vmem:[%s1 + $0x8] sm:$0xf]
  %v46 = vld [vmem:[%s1 + $0xc] sm:$0xf]
  %v47 = vld [vmem:[%s1 + $0x10] sm:$0xf]
  %v48 = vld [vmem:[%s1 + $0x14] sm:$0xf]
  %v49 = vld [vmem:[%s1 + $0x18] sm:$0xf]
  %v50 = vld [vmem:[%s1 + $0x1c] sm:$0xf]
  %v51 = vld [vmem:[%s1 + $0x20] sm:$0xf]
  %v52 = vld [vmem:[%s1 + $0x24] sm:$0xf]
  %v53 = vld [vmem:[%s1 + $0x28] sm:$0xf]
  %v54 = vld [vmem:[%s1 + $0x2c] sm:$0xf]
  %v55 = vld [vmem:[%s1 + $0x30] sm:$0xf]
  %v56 = vld [vmem:[%s1 + $0x34] sm:$0xf]
  %v57 = vld [vmem:[%s1 + $0x38] sm:$0xf]
  %v58 = vld [vmem:[%s1 + $0x3c] sm:$0xf]
  %v59 = vld [vmem:[%s1 + $0x40] sm:$0xf]
  %v60 = vld [vmem:[%s1 + $0x44] sm:$0xf]
  %v61 = vld [vmem:[%s1 + $0x48] sm:$0xf]
  %v62 = vld [vmem:[%s1 + $0x4c] sm:$0xf]
  %v63 = vld [vmem:[%s1 + $0x50] sm:$0xf]
  %v64 = vld [vmem:[%s1 + $0x54] sm:$0xf]
  %v65 = vld [vmem:[%s1 + $0x58] sm:$0xf]
  %v66 = vld [vmem:[%s1 + $0x5c] sm:$0xf]
  %v67 = vld [vmem:[%s1 + $0x60] sm:$0xf]
  %v68 = vld [vmem:[%s1 + $0x64] sm:$0xf]
  %v69 = vld [vmem:[%s1 + $0x68] sm:$0xf]
  %v70 = vld [vmem:[%s1 + $0x6c] sm:$0xf]
  %v71 = vld [vmem:[%s1 + $0x70] sm:$0xf]
  %v72 = vld [vmem:[%s1 + $0x74] sm:$0xf]
  %v73 = vld [vmem:[%s1 + $0x78] sm:$0xf]
  %v74 = vld [vmem:[%s1 + $0x7c] sm:$0xf]
  %v75 = vld [vmem:[%s2] sm:$0x1]
  %v77 = vlaneseq
  %v78 = vshrl.u32 %v77, 7
  %v79 = vsub.s32 0, %v78
  %v80 = vrot.slane %v75, %v79
  %v114 = vunpack.c.l.b16 %v43
  %v115 = vunpack.c.l.b16 %v44
  %v116 = vunpack.c.l.b16 %v45
  %v117 = vunpack.c.l.b16 %v46
  %v118 = vunpack.c.l.b16 %v47
  %v119 = vunpack.c.l.b16 %v48
  %v120 = vunpack.c.l.b16 %v49
  %v121 = vunpack.c.l.b16 %v50
  %v122 = vunpack.c.l.b16 %v51
  %v123 = vunpack.c.l.b16 %v52
  %v124 = vunpack.c.l.b16 %v53
  %v125 = vunpack.c.l.b16 %v54
  %v126 = vunpack.c.l.b16 %v55
  %v127 = vunpack.c.l.b16 %v56
  %v128 = vunpack.c.l.b16 %v57
  %v129 = vunpack.c.l.b16 %v58
  %v130 = vunpack.c.l.b16 %v59
  %v131 = vunpack.c.l.b16 %v60
  %v132 = vunpack.c.l.b16 %v61
  %v133 = vunpack.c.l.b16 %v62
  %v134 = vunpack.c.l.b16 %v63
  %v135 = vunpack.c.l.b16 %v64
  %v136 = vunpack.c.l.b16 %v65
  %v137 = vunpack.c.l.b16 %v66
  %v138 = vunpack.c.l.b16 %v67
  %v139 = vunpack.c.l.b16 %v68
  %v140 = vunpack.c.l.b16 %v69
  %v141 = vunpack.c.l.b16 %v70
  %v142 = vunpack.c.l.b16 %v71
  %v143 = vunpack.c.l.b16 %v72
  %v144 = vunpack.c.l.b16 %v73
  %v145 = vunpack.c.l.b16 %v74
  %v146 = vpack.c.b16 %v115, %v114
  %v147 = vpack.c.b16 %v117, %v116
  %v148 = vpack.c.b16 %v119, %v118
  %v149 = vpack.c.b16 %v121, %v120
  %v150 = vpack.c.b16 %v123, %v122
  %v151 = vpack.c.b16 %v125, %v124
  %v152 = vpack.c.b16 %v127, %v126
  %v153 = vpack.c.b16 %v129, %v128
  %v154 = vpack.c.b16 %v131, %v130
  %v155 = vpack.c.b16 %v133, %v132
  %v156 = vpack.c.b16 %v135, %v134
  %v157 = vpack.c.b16 %v137, %v136
  %v158 = vpack.c.b16 %v139, %v138
  %v159 = vpack.c.b16 %v141, %v140
  %v160 = vpack.c.b16 %v143, %v142
  %v161 = vpack.c.b16 %v145, %v144
  %178 = vmatprep.subr.bf16.mxu0 0
  %179 = vmatpush1.bf16.msra.mxu0 %v153
  %180 = vmatprep.subr.bf16.mxu0 0
  %181 = vmatpush1.bf16.msra.mxu0 %v152
  %182 = vmatprep.subr.bf16.mxu0 0
  %183 = vmatpush1.bf16.msra.mxu0 %v151
  %184 = vmatprep.subr.bf16.mxu0 0
  %185 = vmatpush1.bf16.msra.mxu0 %v150
  %186 = vmatprep.subr.bf16.mxu0 0
  %187 = vmatpush1.bf16.msra.mxu0 %v149
  %188 = vmatprep.subr.bf16.mxu0 0
  %189 = vmatpush1.bf16.msra.mxu0 %v148
  %190 = vmatprep.subr.bf16.mxu0 0
  %191 = vmatpush1.bf16.msra.mxu0 %v147
  %192 = vmatprep.subr.bf16.mxu0 0
  %193 = vmatpush1.bf16.msra.mxu0 %v146
  %194 = vmatprep.subr.bf16.mxu0 0
  %195 = vmatpush2.bf16.msra.mxu0 %v161
  %196 = vmatprep.subr.bf16.mxu0 0
  %197 = vmatpush2.bf16.msra.mxu0 %v160
  %198 = vmatprep.subr.bf16.mxu0 0
  %199 = vmatpush2.bf16.msra.mxu0 %v159
  %200 = vmatprep.subr.bf16.mxu0 0
  %201 = vmatpush2.bf16.msra.mxu0 %v158
  %202 = vmatprep.subr.bf16.mxu0 0
  %203 = vmatpush2.bf16.msra.mxu0 %v157
  %204 = vmatprep.subr.bf16.mxu0 0
  %205 = vmatpush2.bf16.msra.mxu0 %v156
  %206 = vmatprep.subr.bf16.mxu0 0
  %207 = vmatpush2.bf16.msra.mxu0 %v155
  %208 = vmatprep.subr.bf16.mxu0 0
  %209 = vmatpush2.bf16.msra.mxu0 %v154
  %210 = vmatprep.mubr.bf16.mxu0 %v42
  %211 = vmatmul.mubr.bf16.gmra.mxu0 %v41
  %v212 = vpop.f32.mrf.mxu0
  %v213 = vadd.f32 %v80, %v212
  %v214 = vpop.f32.mrf.mxu0
  %v215 = vpop.f32.mrf.mxu0
  %v216 = vpop.f32.mrf.mxu0
  %217 = vdwg.mxu0
  %v218 = vmax.f32 %v213, 0.0
  %v219 = vpack.c.bf16 %v218, %v218
  %v220 = vld [vmem:[%s3] sm:$0xf]
  %v221 = vld [vmem:[%s3 + $0x4] sm:$0xf]
  %v222 = vld [vmem:[%s3 + $0x8] sm:$0xf]
  %v223 = vld [vmem:[%s3 + $0xc] sm:$0xf]
  %v224 = vld [vmem:[%s4] sm:$0x1]
  %v226 = vlaneseq
  %v227 = vshrl.u32 %v226, 7
  %v228 = vsub.s32 0, %v227
  %v229 = vrot.slane %v224, %v228
  %v235 = vunpack.c.l.b16 %v220
  %v236 = vunpack.c.l.b16 %v221
  %v237 = vunpack.c.l.b16 %v222
  %v238 = vunpack.c.l.b16 %v223
  %v239 = vpack.c.b16 %v236, %v235
  %v240 = vpack.c.b16 %v238, %v237
  %vm243 = vcmask 261120
  %v245 = vsel %vm243, %v219, 0
  %247 = vmatprep.subr.bf16.mxu0 0
  %248 = vmatpush1.bf16.msra.mxu0 0
  %249 = vmatprep.subr.bf16.mxu0 0
  %250 = vmatpush1.bf16.msra.mxu0 0
  %251 = vmatprep.subr.bf16.mxu0 0
  %252 = vmatpush1.bf16.msra.mxu0 0
  %253 = vmatprep.subr.bf16.mxu0 0
  %254 = vmatpush1.bf16.msra.mxu0 0
  %255 = vmatprep.subr.bf16.mxu0 0
  %256 = vmatpush1.bf16.msra.mxu0 0
  %257 = vmatprep.subr.bf16.mxu0 0
  %258 = vmatpush1.bf16.msra.mxu0 0
  %259 = vmatprep.subr.bf16.mxu0 0
  %260 = vmatpush1.bf16.msra.mxu0 %v240
  %261 = vmatprep.subr.bf16.mxu0 0
  %262 = vmatpush1.bf16.msra.mxu0 %v239
  %263 = vmatprep.subr.bf16.mxu0 0
  %264 = vmatpush2.bf16.msra.mxu0 0
  %265 = vmatprep.subr.bf16.mxu0 0
  %266 = vmatpush2.bf16.msra.mxu0 0
  %267 = vmatprep.subr.bf16.mxu0 0
  %268 = vmatpush2.bf16.msra.mxu0 0
  %269 = vmatprep.subr.bf16.mxu0 0
  %270 = vmatpush2.bf16.msra.mxu0 0
  %271 = vmatprep.subr.bf16.mxu0 0
  %272 = vmatpush2.bf16.msra.mxu0 0
  %273 = vmatprep.subr.bf16.mxu0 0
  %274 = vmatpush2.bf16.msra.mxu0 0
  %275 = vmatprep.subr.bf16.mxu0 0
  %276 = vmatpush2.bf16.msra.mxu0 0
  %277 = vmatprep.subr.bf16.mxu0 0
  %278 = vmatpush2.bf16.msra.mxu0 0
  %279 = vmatprep.mubr.bf16.mxu0 0
  %280 = vmatmul.mubr.bf16.gmra.mxu0 %v245
  %v281 = vpop.f32.mrf.mxu0
  %v282 = vadd.f32 %v229, %v281
  %v283 = vpop.f32.mrf.mxu0
  %v284 = vpop.f32.mrf.mxu0
  %v285 = vpop.f32.mrf.mxu0
  %286 = vdwg.mxu0
  %v287 = vmax.f32 %v282, 0.0
  %v288 = vpack.c.bf16 %v287, %v287
  %v289 = vld [vmem:[%s5] sm:$0xf]
  %v290 = vld [vmem:[%s5 + $0x4] sm:$0xf]
  %v291 = vld [vmem:[%s5 + $0x8] sm:$0xf]
  %v292 = vld [vmem:[%s5 + $0xc] sm:$0xf]
  %v293 = vld [vmem:[%s5 + $0x10] sm:$0xf]
  %v294 = vld [vmem:[%s5 + $0x14] sm:$0xf]
  %v295 = vld [vmem:[%s5 + $0x18] sm:$0xf]
  %v296 = vld [vmem:[%s5 + $0x1c] sm:$0xf]
  %v297 = vld [vmem:[%s5 + $0x20] sm:$0xf]
  %v298 = vld [vmem:[%s5 + $0x24] sm:$0xf]
  %v299 = vld [vmem:[%s5 + $0x28] sm:$0xf]
  %v300 = vld [vmem:[%s5 + $0x2c] sm:$0xf]
  %v301 = vld [vmem:[%s5 + $0x30] sm:$0x3]
  %v302 = vld [vmem:[#allocation2] sm:$0x1]
  %v304 = vlaneseq
  %v305 = vshrl.u32 %v304, 7
  %v306 = vsub.s32 0, %v305
  %v307 = vrot.slane %v302, %v306
  %v322 = vunpack.c.l.b16 %v289
  %v323 = vunpack.c.l.b16 %v290
  %v324 = vunpack.c.l.b16 %v291
  %v325 = vunpack.c.l.b16 %v292
  %v326 = vunpack.c.l.b16 %v293
  %v327 = vunpack.c.l.b16 %v294
  %v328 = vunpack.c.l.b16 %v295
  %v329 = vunpack.c.l.b16 %v296
  %v330 = vunpack.c.l.b16 %v297
  %v331 = vunpack.c.l.b16 %v298
  %v332 = vunpack.c.l.b16 %v299
  %v333 = vunpack.c.l.b16 %v300
  %v334 = vunpack.c.l.b16 %v301
  %v335 = vpack.c.b16 %v323, %v322
  %v336 = vpack.c.b16 %v325, %v324
  %v337 = vpack.c.b16 %v327, %v326
  %v338 = vpack.c.b16 %v329, %v328
  %v339 = vpack.c.b16 %v331, %v330
  %v340 = vpack.c.b16 %v333, %v332
  %v341 = vpack.c.b16 %v334, %v334
  %vm348 = vcmask 818176
  %v350 = vsel %vm348, %v288, 0
  %vm352 = vcmask 1041408
  %v354 = vsel %vm352, %v341, 0
  %356 = vmatprep.subr.bf16.mxu0 0
  %357 = vmatpush1.bf16.msra.mxu0 0
  %358 = vmatprep.subr.bf16.mxu0 0
  %359 = vmatpush1.bf16.msra.mxu0 %v354
  %360 = vmatprep.subr.bf16.mxu0 0
  %361 = vmatpush1.bf16.msra.mxu0 %v340
  %362 = vmatprep.subr.bf16.mxu0 0
  %363 = vmatpush1.bf16.msra.mxu0 %v339
  %364 = vmatprep.subr.bf16.mxu0 0
  %365 = vmatpush1.bf16.msra.mxu0 %v338
  %366 = vmatprep.subr.bf16.mxu0 0
  %367 = vmatpush1.bf16.msra.mxu0 %v337
  %368 = vmatprep.subr.bf16.mxu0 0
  %369 = vmatpush1.bf16.msra.mxu0 %v336
  %370 = vmatprep.subr.bf16.mxu0 0
  %371 = vmatpush1.bf16.msra.mxu0 %v335
  %372 = vmatprep.subr.bf16.mxu0 0
  %373 = vmatpush2.bf16.msra.mxu0 0
  %374 = vmatprep.subr.bf16.mxu0 0
  %375 = vmatpush2.bf16.msra.mxu0 0
  %376 = vmatprep.subr.bf16.mxu0 0
  %377 = vmatpush2.bf16.msra.mxu0 0
  %378 = vmatprep.subr.bf16.mxu0 0
  %379 = vmatpush2.bf16.msra.mxu0 0
  %380 = vmatprep.subr.bf16.mxu0 0
  %381 = vmatpush2.bf16.msra.mxu0 0
  %382 = vmatprep.subr.bf16.mxu0 0
  %383 = vmatpush2.bf16.msra.mxu0 0
  %384 = vmatprep.subr.bf16.mxu0 0
  %385 = vmatpush2.bf16.msra.mxu0 0
  %386 = vmatprep.subr.bf16.mxu0 0
  %387 = vmatpush2.bf16.msra.mxu0 0
  %388 = vmatprep.mubr.bf16.mxu0 0
  %389 = vmatmul.mubr.bf16.gmra.mxu0 %v350
  %v390 = vpop.f32.mrf.mxu0
  %v391 = vadd.f32 %v307, %v390
  %v392 = vpop.f32.mrf.mxu0
  %v393 = vpop.f32.mrf.mxu0
  %v394 = vpop.f32.mrf.mxu0
  %395 = vdwg.mxu0
  %v396 = vmax.f32 %v391, -30.0
  %v397 = vmin.f32 %v396, 30.0
  %v398 = vsub.f32 0.0, %v397
  %v399 = vmul.f32 %v398, 1.442695
  %v400 = vpow.pop %v399
  %v401 = vadd.f32 %v400, 1.0
  %v402 = vrcp.pop %v401
  %v403 = vmul.f32 1.0, %v402
  %vm404 = vcmask 1024
  %405 = vst.msk [vmem:[%s7] sm:$0x3] %vm404, %v403
  // Predicated region
  $region30: #{ourgan_d_forward.15} parent=0 // pred_check
    _
  $region31: #{ourgan_d_forward.15} parent=0 // pred_check_branch
    %407 = sbr.rel (0) target = $region33
  $region32: #{ourgan_d_forward.15} parent=0 // pred_region
    _
  $region33: #{ourgan_d_forward.15} parent=0 // pred_fallthru
    _
  // Predicated region
  $region34: #{ourgan_d_forward.15} parent=0 // pred_check
    _
  $region35: #{ourgan_d_forward.15} parent=0 // pred_check_branch
    %409 = sbr.rel (0) target = $region37
  $region36: #{ourgan_d_forward.15} parent=0 // pred_region
    _
  $region37: #{ourgan_d_forward.15} parent=0 // pred_fallthru
    _

// kernel: ourgan_d_forward.9
$region0: #{ourgan_d_forward.9}
  #allocation0 [shape = 'u32[]', space=smem, size = 0x4, offset = 0x4, fixed_abs, tag = 'smem constant byte address 0x4 - core index']
  #allocation1 [shape = 'u32[144,128]{1,0:T(1,128)}', space=vmem, size = 0x12000, scoped, tag = 'internal scratch']
  %s0 = inlined_call_operand.vmem [shape: f32[8,2,32], index: 0, kind: input, shape index: {}]
  %s1 = inlined_call_operand.vmem [shape: bf16[4,32,8], index: 1, kind: input, shape index: {}]
  %s2 = inlined_call_operand.vmem [shape: bf16[4,32,8], index: 2, kind: input, shape index: {}]
  %s3 = inlined_call_operand.vmem [shape: bf16[4,32,8], index: 3, kind: input, shape index: {}]
  %s4 = inlined_call_operand.vmem [shape: f32[4,1,1,8], index: 4, kind: input, shape index: {}]
  %s5 = inlined_call_operand.vmem [shape: f32[4,1,1,8], index: 5, kind: input, shape index: {}]
  %s6 = inlined_call_operand.vmem [shape: f32[4,1,1,8], index: 6, kind: input, shape index: {}]
  %s7 = inlined_call_operand.vmem [shape: bf16[4,8,32], index: 7, kind: input, shape index: {}]
  %s8 = inlined_call_operand.vmem [shape: f32[1,1,32], index: 8, kind: input, shape index: {}]
  %s9 = inlined_call_operand.vmem [shape: f32[1,1,32], index: 9, kind: input, shape index: {}]
  %s10 = inlined_call_operand.vmem [shape: f32[1,1,32], index: 10, kind: input, shape index: {}]
  %s11 = inlined_call_operand.vmem [shape: f32[8,2,32], index: 11, kind: output, shape index: {}]
  %s12 = sld [smem:[#allocation0]]
  $region54: #{ourgan_d_forward.9} parent=0
    _
  %s14 = ssub.s32 1, %s12
  %s15 = scalar_select 0, %s14, %s12
  // Predicated region
  $region2: #{ourgan_d_forward.9} parent=0 // pred_check
    _
  $region3: #{ourgan_d_forward.9} parent=0 // pred_check_branch
    %17 = sbr.rel (0) target = $region5
  $region4: #{ourgan_d_forward.9} parent=0 // pred_region
    _
  $region5: #{ourgan_d_forward.9} parent=0 // pred_fallthru
    _
  // Predicated region
  $region6: #{ourgan_d_forward.9} parent=0 // pred_check
    _
  $region7: #{ourgan_d_forward.9} parent=0 // pred_check_branch
    %19 = sbr.rel (0) target = $region9
  $region8: #{ourgan_d_forward.9} parent=0 // pred_region
    _
  $region9: #{ourgan_d_forward.9} parent=0 // pred_fallthru
    _
  // Predicated region
  $region10: #{ourgan_d_forward.9} parent=0 // pred_check
    _
  $region11: #{ourgan_d_forward.9} parent=0 // pred_check_branch
    %21 = sbr.rel (0) target = $region13
  $region12: #{ourgan_d_forward.9} parent=0 // pred_region
    _
  $region13: #{ourgan_d_forward.9} parent=0 // pred_fallthru
    _
  // Predicated region
  $region14: #{ourgan_d_forward.9} parent=0 // pred_check
    _
  $region15: #{ourgan_d_forward.9} parent=0 // pred_check_branch
    %23 = sbr.rel (0) target = $region17
  $region16: #{ourgan_d_forward.9} parent=0 // pred_region
    _
  $region17: #{ourgan_d_forward.9} parent=0 // pred_fallthru
    _
  // Predicated region
  $region18: #{ourgan_d_forward.9} parent=0 // pred_check
    _
  $region19: #{ourgan_d_forward.9} parent=0 // pred_check_branch
    %25 = sbr.rel (0) target = $region21
  $region20: #{ourgan_d_forward.9} parent=0 // pred_region
    _
  $region21: #{ourgan_d_forward.9} parent=0 // pred_fallthru
    _
  // Predicated region
  $region22: #{ourgan_d_forward.9} parent=0 // pred_check
    _
  $region23: #{ourgan_d_forward.9} parent=0 // pred_check_branch
    %27 = sbr.rel (0) target = $region25
  $region24: #{ourgan_d_forward.9} parent=0 // pred_region
    _
  $region25: #{ourgan_d_forward.9} parent=0 // pred_fallthru
    _
  // Predicated region
  $region26: #{ourgan_d_forward.9} parent=0 // pred_check
    _
  $region27: #{ourgan_d_forward.9} parent=0 // pred_check_branch
    %29 = sbr.rel (0) target = $region29
  $region28: #{ourgan_d_forward.9} parent=0 // pred_region
    _
  $region29: #{ourgan_d_forward.9} parent=0 // pred_fallthru
    _
  // Predicated region
  $region30: #{ourgan_d_forward.9} parent=0 // pred_check
    _
  $region31: #{ourgan_d_forward.9} parent=0 // pred_check_branch
    %31 = sbr.rel (0) target = $region33
  $region32: #{ourgan_d_forward.9} parent=0 // pred_region
    _
  $region33: #{ourgan_d_forward.9} parent=0 // pred_fallthru
    _
  // Predicated region
  $region34: #{ourgan_d_forward.9} parent=0 // pred_check
    _
  $region35: #{ourgan_d_forward.9} parent=0 // pred_check_branch
    %33 = sbr.rel (0) target = $region37
  $region36: #{ourgan_d_forward.9} parent=0 // pred_region
    _
  $region37: #{ourgan_d_forward.9} parent=0 // pred_fallthru
    _
  // Predicated region
  $region38: #{ourgan_d_forward.9} parent=0 // pred_check
    _
  $region39: #{ourgan_d_forward.9} parent=0 // pred_check_branch
    %35 = sbr.rel (0) target = $region41
  $region40: #{ourgan_d_forward.9} parent=0 // pred_region
    _
  $region41: #{ourgan_d_forward.9} parent=0 // pred_fallthru
    _
  // Predicated region
  $region42: #{ourgan_d_forward.9} parent=0 // pred_check
    _
  $region43: #{ourgan_d_forward.9} parent=0 // pred_check_branch
    %37 = sbr.rel (0) target = $region45
  $region44: #{ourgan_d_forward.9} parent=0 // pred_region
    _
  $region45: #{ourgan_d_forward.9} parent=0 // pred_fallthru
    _
  %v39 = vld [vmem:[%s0] sm:$0x3]
  %v40 = vld [vmem:[%s0 + $0x2] sm:$0x3]
  %v41 = vld [vmem:[%s0 + $0x4] sm:$0x3]
  %v42 = vld [vmem:[%s0 + $0x6] sm:$0x3]
  %v43 = vld [vmem:[%s0 + $0x8] sm:$0x3]
  %v44 = vld [vmem:[%s0 + $0xa] sm:$0x3]
  %v45 = vld [vmem:[%s0 + $0xc] sm:$0x3]
  %v46 = vld [vmem:[%s0 + $0xe] sm:$0x3]
  %v47 = vpack.c.bf16 %v39, %v39
  %v48 = vpack.c.bf16 %v40, %v40
  %v49 = vpack.c.bf16 %v41, %v41
  %v50 = vpack.c.bf16 %v42, %v42
  %v51 = vpack.c.bf16 %v43, %v43
  %v52 = vpack.c.bf16 %v44, %v44
  %v53 = vpack.c.bf16 %v45, %v45
  %v54 = vpack.c.bf16 %v46, %v46
  %v55 = vld [vmem:[%s1] sm:$0xf]
  %v56 = vld [vmem:[%s1 + $0x4] sm:$0xf]
  %v57 = vld [vmem:[%s1 + $0x8] sm:$0xf]
  %v58 = vld [vmem:[%s1 + $0xc] sm:$0xf]
  %v59 = vld [vmem:[%s2] sm:$0xf]
  %v60 = vld [vmem:[%s2 + $0x4] sm:$0xf]
  %v61 = vld [vmem:[%s2 + $0x8] sm:$0xf]
  %v62 = vld [vmem:[%s2 + $0xc] sm:$0xf]
  %v63 = vld [vmem:[%s3] sm:$0xf]
  %v64 = vld [vmem:[%s3 + $0x4] sm:$0xf]
  %v65 = vld [vmem:[%s3 + $0x8] sm:$0xf]
  %v66 = vld [vmem:[%s3 + $0xc] sm:$0xf]
  %v67 = vld [vmem:[%s4] sm:$0x1]
  %v69 = vlaneseq
  %v70 = vshrl.u32 %v69, 7
  %v71 = vsub.s32 0, %v70
  %v72 = vrot.slane %v67, %v71
  %v78 = vunpack.c.l.b16 %v55
  %v79 = vunpack.c.l.b16 %v56
  %v80 = vunpack.c.l.b16 %v57
  %v81 = vunpack.c.l.b16 %v58
  %v82 = vpack.c.b16 %v79, %v78
  %v83 = vpack.c.b16 %v81, %v80
  %vm86 = vcmask 261120
  %v88 = vsel %vm86, %v47, 0
  %90 = vmatprep.subr.bf16.mxu0 0
  %91 = vmatpush1.bf16.msra.mxu0 0
  %92 = vmatprep.subr.bf16.mxu0 0
  %93 = vmatpush1.bf16.msra.mxu0 0
  %94 = vmatprep.subr.bf16.mxu0 0
  %95 = vmatpush1.bf16.msra.mxu0 0
  %96 = vmatprep.subr.bf16.mxu0 0
  %97 = vmatpush1.bf16.msra.mxu0 0
  %98 = vmatprep.subr.bf16.mxu0 0
  %99 = vmatpush1.bf16.msra.mxu0 0
  %100 = vmatprep.subr.bf16.mxu0 0
  %101 = vmatpush1.bf16.msra.mxu0 0
  %102 = vmatprep.subr.bf16.mxu0 0
  %103 = vmatpush1.bf16.msra.mxu0 %v83
  %104 = vmatprep.subr.bf16.mxu0 0
  %105 = vmatpush1.bf16.msra.mxu0 %v82
  %106 = vmatprep.subr.bf16.mxu0 0
  %107 = vmatpush2.bf16.msra.mxu0 0
  %108 = vmatprep.subr.bf16.mxu0 0
  %109 = vmatpush2.bf16.msra.mxu0 0
  %110 = vmatprep.subr.bf16.mxu0 0
  %111 = vmatpush2.bf16.msra.mxu0 0
  %112 = vmatprep.subr.bf16.mxu0 0
  %113 = vmatpush2.bf16.msra.mxu0 0
  %114 = vmatprep.subr.bf16.mxu0 0
  %115 = vmatpush2.bf16.msra.mxu0 0
  %116 = vmatprep.subr.bf16.mxu0 0
  %117 = vmatpush2.bf16.msra.mxu0 0
  %118 = vmatprep.subr.bf16.mxu0 0
  %119 = vmatpush2.bf16.msra.mxu0 0
  %120 = vmatprep.subr.bf16.mxu0 0
  %121 = vmatpush2.bf16.msra.mxu0 0
  %122 = vmatprep.mubr.bf16.mxu0 0
  %123 = vmatmul.mubr.bf16.gmra.mxu0 %v88
  %v124 = vpop.f32.mrf.mxu0
  %v125 = vadd.f32 %v72, %v124
  %v126 = vpop.f32.mrf.mxu0
  %v127 = vpop.f32.mrf.mxu0
  %v128 = vpop.f32.mrf.mxu0
  %129 = vdwg.mxu0
  %v131 = vsel %vm86, %v48, 0
  %133 = vmatprep.subr.bf16.mxu0 0
  %134 = vmatpush1.bf16.msra.mxu0 0
  %135 = vmatprep.subr.bf16.mxu0 0
  %136 = vmatpush1.bf16.msra.mxu0 0
  %137 = vmatprep.subr.bf16.mxu0 0
  %138 = vmatpush1.bf16.msra.mxu0 0
  %139 = vmatprep.subr.bf16.mxu0 0
  %140 = vmatpush1.bf16.msra.mxu0 0
  %141 = vmatprep.subr.bf16.mxu0 0
  %142 = vmatpush1.bf16.msra.mxu0 0
  %143 = vmatprep.subr.bf16.mxu0 0
  %144 = vmatpush1.bf16.msra.mxu0 0
  %145 = vmatprep.subr.bf16.mxu0 0
  %146 = vmatpush1.bf16.msra.mxu0 %v83
  %147 = vmatprep.subr.bf16.mxu0 0
  %148 = vmatpush1.bf16.msra.mxu0 %v82
  %149 = vmatprep.subr.bf16.mxu0 0
  %150 = vmatpush2.bf16.msra.mxu0 0
  %151 = vmatprep.subr.bf16.mxu0 0
  %152 = vmatpush2.bf16.msra.mxu0 0
  %153 = vmatprep.subr.bf16.mxu0 0
  %154 = vmatpush2.bf16.msra.mxu0 0
  %155 = vmatprep.subr.bf16.mxu0 0
  %156 = vmatpush2.bf16.msra.mxu0 0
  %157 = vmatprep.subr.bf16.mxu0 0
  %158 = vmatpush2.bf16.msra.mxu0 0
  %159 = vmatprep.subr.bf16.mxu0 0
  %160 = vmatpush2.bf16.msra.mxu0 0
  %161 = vmatprep.subr.bf16.mxu0 0
  %162 = vmatpush2.bf16.msra.mxu0 0
  %163 = vmatprep.subr.bf16.mxu0 0
  %164 = vmatpush2.bf16.msra.mxu0 0
  %165 = vmatprep.mubr.bf16.mxu0 0
  %166 = vmatmul.mubr.bf16.gmra.mxu0 %v131
  %v167 = vpop.f32.mrf.mxu0
  %v168 = vadd.f32 %v72, %v167
  %v169 = vpop.f32.mrf.mxu0
  %v170 = vpop.f32.mrf.mxu0
  %v171 = vpop.f32.mrf.mxu0
  %172 = vdwg.mxu0
  %v174 = vsel %vm86, %v49, 0
  %176 = vmatprep.subr.bf16.mxu0 0
  %177 = vmatpush1.bf16.msra.mxu0 0
  %178 = vmatprep.subr.bf16.mxu0 0
  %179 = vmatpush1.bf16.msra.mxu0 0
  %180 = vmatprep.subr.bf16.mxu0 0
  %181 = vmatpush1.bf16.msra.mxu0 0
  %182 = vmatprep.subr.bf16.mxu0 0
  %183 = vmatpush1.bf16.msra.mxu0 0
  %184 = vmatprep.subr.bf16.mxu0 0
  %185 = vmatpush1.bf16.msra.mxu0 0
  %186 = vmatprep.subr.bf16.mxu0 0
  %187 = vmatpush1.bf16.msra.mxu0 0
  %188 = vmatprep.subr.bf16.mxu0 0
  %189 = vmatpush1.bf16.msra.mxu0 %v83
  %190 = vmatprep.subr.bf16.mxu0 0
  %191 = vmatpush1.bf16.msra.mxu0 %v82
  %192 = vmatprep.subr.bf16.mxu0 0
  %193 = vmatpush2.bf16.msra.mxu0 0
  %194 = vmatprep.subr.bf16.mxu0 0
  %195 = vmatpush2.bf16.msra.mxu0 0
  %196 = vmatprep.subr.bf16.mxu0 0
  %197 = vmatpush2.bf16.msra.mxu0 0
  %198 = vmatprep.subr.bf16.mxu0 0
  %199 = vmatpush2.bf16.msra.mxu0 0
  %200 = vmatprep.subr.bf16.mxu0 0
  %201 = vmatpush2.bf16.msra.mxu0 0
  %202 = vmatprep.subr.bf16.mxu0 0
  %203 = vmatpush2.bf16.msra.mxu0 0
  %204 = vmatprep.subr.bf16.mxu0 0
  %205 = vmatpush2.bf16.msra.mxu0 0
  %206 = vmatprep.subr.bf16.mxu0 0
  %207 = vmatpush2.bf16.msra.mxu0 0
  %208 = vmatprep.mubr.bf16.mxu0 0
  %209 = vmatmul.mubr.bf16.gmra.mxu0 %v174
  %v210 = vpop.f32.mrf.mxu0
  %v211 = vadd.f32 %v72, %v210
  %v212 = vpop.f32.mrf.mxu0
  %v213 = vpop.f32.mrf.mxu0
  %v214 = vpop.f32.mrf.mxu0
  %215 = vdwg.mxu0
  %v217 = vsel %vm86, %v50, 0
  %219 = vmatprep.subr.bf16.mxu0 0
  %220 = vmatpush1.bf16.msra.mxu0 0
  %221 = vmatprep.subr.bf16.mxu0 0
  %222 = vmatpush1.bf16.msra.mxu0 0
  %223 = vmatprep.subr.bf16.mxu0 0
  %224 = vmatpush1.bf16.msra.mxu0 0
  %225 = vmatprep.subr.bf16.mxu0 0
  %226 = vmatpush1.bf16.msra.mxu0 0
  %227 = vmatprep.subr.bf16.mxu0 0
  %228 = vmatpush1.bf16.msra.mxu0 0
  %229 = vmatprep.subr.bf16.mxu0 0
  %230 = vmatpush1.bf16.msra.mxu0 0
  %231 = vmatprep.subr.bf16.mxu0 0
  %232 = vmatpush1.bf16.msra.mxu0 %v83
  %233 = vmatprep.subr.bf16.mxu0 0
  %234 = vmatpush1.bf16.msra.mxu0 %v82
  %235 = vmatprep.subr.bf16.mxu0 0
  %236 = vmatpush2.bf16.msra.mxu0 0
  %237 = vmatprep.subr.bf16.mxu0 0
  %238 = vmatpush2.bf16.msra.mxu0 0
  %239 = vmatprep.subr.bf16.mxu0 0
  %240 = vmatpush2.bf16.msra.mxu0 0
  %241 = vmatprep.subr.bf16.mxu0 0
  %242 = vmatpush2.bf16.msra.mxu0 0
  %243 = vmatprep.subr.bf16.mxu0 0
  %244 = vmatpush2.bf16.msra.mxu0 0
  %245 = vmatprep.subr.bf16.mxu0 0
  %246 = vmatpush2.bf16.msra.mxu0 0
  %247 = vmatprep.subr.bf16.mxu0 0
  %248 = vmatpush2.bf16.msra.mxu0 0
  %249 = vmatprep.subr.bf16.mxu0 0
  %250 = vmatpush2.bf16.msra.mxu0 0
  %251 = vmatprep.mubr.bf16.mxu0 0
  %252 = vmatmul.mubr.bf16.gmra.mxu0 %v217
  %v253 = vpop.f32.mrf.mxu0
  %v254 = vadd.f32 %v72, %v253
  %v255 = vpop.f32.mrf.mxu0
  %v256 = vpop.f32.mrf.mxu0
  %v257 = vpop.f32.mrf.mxu0
  %258 = vdwg.mxu0
  %v260 = vsel %vm86, %v51, 0
  %262 = vmatprep.subr.bf16.mxu0 0
  %263 = vmatpush1.bf16.msra.mxu0 0
  %264 = vmatprep.subr.bf16.mxu0 0
  %265 = vmatpush1.bf16.msra.mxu0 0
  %266 = vmatprep.subr.bf16.mxu0 0
  %267 = vmatpush1.bf16.msra.mxu0 0
  %268 = vmatprep.subr.bf16.mxu0 0
  %269 = vmatpush1.bf16.msra.mxu0 0
  %270 = vmatprep.subr.bf16.mxu0 0
  %271 = vmatpush1.bf16.msra.mxu0 0
  %272 = vmatprep.subr.bf16.mxu0 0
  %273 = vmatpush1.bf16.msra.mxu0 0
  %274 = vmatprep.subr.bf16.mxu0 0
  %275 = vmatpush1.bf16.msra.mxu0 %v83
  %276 = vmatprep.subr.bf16.mxu0 0
  %277 = vmatpush1.bf16.msra.mxu0 %v82
  %278 = vmatprep.subr.bf16.mxu0 0
  %279 = vmatpush2.bf16.msra.mxu0 0
  %280 = vmatprep.subr.bf16.mxu0 0
  %281 = vmatpush2.bf16.msra.mxu0 0
  %282 = vmatprep.subr.bf16.mxu0 0
  %283 = vmatpush2.bf16.msra.mxu0 0
  %284 = vmatprep.subr.bf16.mxu0 0
  %285 = vmatpush2.bf16.msra.mxu0 0
  %286 = vmatprep.subr.bf16.mxu0 0
  %287 = vmatpush2.bf16.msra.mxu0 0
  %288 = vmatprep.subr.bf16.mxu0 0
  %289 = vmatpush2.bf16.msra.mxu0 0
  %290 = vmatprep.subr.bf16.mxu0 0
  %291 = vmatpush2.bf16.msra.mxu0 0
  %292 = vmatprep.subr.bf16.mxu0 0
  %293 = vmatpush2.bf16.msra.mxu0 0
  %294 = vmatprep.mubr.bf16.mxu0 0
  %295 = vmatmul.mubr.bf16.gmra.mxu0 %v260
  %v296 = vpop.f32.mrf.mxu0
  %v297 = vadd.f32 %v72, %v296
  %v298 = vpop.f32.mrf.mxu0
  %v299 = vpop.f32.mrf.mxu0
  %v300 = vpop.f32.mrf.mxu0
  %301 = vdwg.mxu0
  %v303 = vsel %vm86, %v52, 0
  %305 = vmatprep.subr.bf16.mxu0 0
  %306 = vmatpush1.bf16.msra.mxu0 0
  %307 = vmatprep.subr.bf16.mxu0 0
  %308 = vmatpush1.bf16.msra.mxu0 0
  %309 = vmatprep.subr.bf16.mxu0 0
  %310 = vmatpush1.bf16.msra.mxu0 0
  %311 = vmatprep.subr.bf16.mxu0 0
  %312 = vmatpush1.bf16.msra.mxu0 0
  %313 = vmatprep.subr.bf16.mxu0 0
  %314 = vmatpush1.bf16.msra.mxu0 0
  %315 = vmatprep.subr.bf16.mxu0 0
  %316 = vmatpush1.bf16.msra.mxu0 0
  %317 = vmatprep.subr.bf16.mxu0 0
  %318 = vmatpush1.bf16.msra.mxu0 %v83
  %319 = vmatprep.subr.bf16.mxu0 0
  %320 = vmatpush1.bf16.msra.mxu0 %v82
  %321 = vmatprep.subr.bf16.mxu0 0
  %322 = vmatpush2.bf16.msra.mxu0 0
  %323 = vmatprep.subr.bf16.mxu0 0
  %324 = vmatpush2.bf16.msra.mxu0 0
  %325 = vmatprep.subr.bf16.mxu0 0
  %326 = vmatpush2.bf16.msra.mxu0 0
  %327 = vmatprep.subr.bf16.mxu0 0
  %328 = vmatpush2.bf16.msra.mxu0 0
  %329 = vmatprep.subr.bf16.mxu0 0
  %330 = vmatpush2.bf16.msra.mxu0 0
  %331 = vmatprep.subr.bf16.mxu0 0
  %332 = vmatpush2.bf16.msra.mxu0 0
  %333 = vmatprep.subr.bf16.mxu0 0
  %334 = vmatpush2.bf16.msra.mxu0 0
  %335 = vmatprep.subr.bf16.mxu0 0
  %336 = vmatpush2.bf16.msra.mxu0 0
  %337 = vmatprep.mubr.bf16.mxu0 0
  %338 = vmatmul.mubr.bf16.gmra.mxu0 %v303
  %v339 = vpop.f32.mrf.mxu0
  %v340 = vadd.f32 %v72, %v339
  %v341 = vpop.f32.mrf.mxu0
  %v342 = vpop.f32.mrf.mxu0
  %v343 = vpop.f32.mrf.mxu0
  %344 = vdwg.mxu0
  %v346 = vsel %vm86, %v53, 0
  %348 = vmatprep.subr.bf16.mxu0 0
  %349 = vmatpush1.bf16.msra.mxu0 0
  %350 = vmatprep.subr.bf16.mxu0 0
  %351 = vmatpush1.bf16.msra.mxu0 0
  %352 = vmatprep.subr.bf16.mxu0 0
  %353 = vmatpush1.bf16.msra.mxu0 0
  %354 = vmatprep.subr.bf16.mxu0 0
  %355 = vmatpush1.bf16.msra.mxu0 0
  %356 = vmatprep.subr.bf16.mxu0 0
  %357 = vmatpush1.bf16.msra.mxu0 0
  %358 = vmatprep.subr.bf16.mxu0 0
  %359 = vmatpush1.bf16.msra.mxu0 0
  %360 = vmatprep.subr.bf16.mxu0 0
  %361 = vmatpush1.bf16.msra.mxu0 %v83
  %362 = vmatprep.subr.bf16.mxu0 0
  %363 = vmatpush1.bf16.msra.mxu0 %v82
  %364 = vmatprep.subr.bf16.mxu0 0
  %365 = vmatpush2.bf16.msra.mxu0 0
  %366 = vmatprep.subr.bf16.mxu0 0
  %367 = vmatpush2.bf16.msra.mxu0 0
  %368 = vmatprep.subr.bf16.mxu0 0
  %369 = vmatpush2.bf16.msra.mxu0 0
  %370 = vmatprep.subr.bf16.mxu0 0
  %371 = vmatpush2.bf16.msra.mxu0 0
  %372 = vmatprep.subr.bf16.mxu0 0
  %373 = vmatpush2.bf16.msra.mxu0 0
  %374 = vmatprep.subr.bf16.mxu0 0
  %375 = vmatpush2.bf16.msra.mxu0 0
  %376 = vmatprep.subr.bf16.mxu0 0
  %377 = vmatpush2.bf16.msra.mxu0 0
  %378 = vmatprep.subr.bf16.mxu0 0
  %379 = vmatpush2.bf16.msra.mxu0 0
  %380 = vmatprep.mubr.bf16.mxu0 0
  %381 = vmatmul.mubr.bf16.gmra.mxu0 %v346
  %v382 = vpop.f32.mrf.mxu0
  %v383 = vadd.f32 %v72, %v382
  %v384 = vpop.f32.mrf.mxu0
  %v385 = vpop.f32.mrf.mxu0
  %v386 = vpop.f32.mrf.mxu0
  %387 = vdwg.mxu0
  %v389 = vsel %vm86, %v54, 0
  %391 = vmatprep.subr.bf16.mxu0 0
  %392 = vmatpush1.bf16.msra.mxu0 0
  %393 = vmatprep.subr.bf16.mxu0 0
  %394 = vmatpush1.bf16.msra.mxu0 0
  %395 = vmatprep.subr.bf16.mxu0 0
  %396 = vmatpush1.bf16.msra.mxu0 0
  %397 = vmatprep.subr.bf16.mxu0 0
  %398 = vmatpush1.bf16.msra.mxu0 0
  %399 = vmatprep.subr.bf16.mxu0 0
  %400 = vmatpush1.bf16.msra.mxu0 0
  %401 = vmatprep.subr.bf16.mxu0 0
  %402 = vmatpush1.bf16.msra.mxu0 0
  %403 = vmatprep.subr.bf16.mxu0 0
  %404 = vmatpush1.bf16.msra.mxu0 %v83
  %405 = vmatprep.subr.bf16.mxu0 0
  %406 = vmatpush1.bf16.msra.mxu0 %v82
  %407 = vmatprep.subr.bf16.mxu0 0
  %408 = vmatpush2.bf16.msra.mxu0 0
  %409 = vmatprep.subr.bf16.mxu0 0
  %410 = vmatpush2.bf16.msra.mxu0 0
  %411 = vmatprep.subr.bf16.mxu0 0
  %412 = vmatpush2.bf16.msra.mxu0 0
  %413 = vmatprep.subr.bf16.mxu0 0
  %414 = vmatpush2.bf16.msra.mxu0 0
  %415 = vmatprep.subr.bf16.mxu0 0
  %416 = vmatpush2.bf16.msra.mxu0 0
  %417 = vmatprep.subr.bf16.mxu0 0
  %418 = vmatpush2.bf16.msra.mxu0 0
  %419 = vmatprep.subr.bf16.mxu0 0
  %420 = vmatpush2.bf16.msra.mxu0 0
  %421 = vmatprep.subr.bf16.mxu0 0
  %422 = vmatpush2.bf16.msra.mxu0 0
  %423 = vmatprep.mubr.bf16.mxu0 0
  %424 = vmatmul.mubr.bf16.gmra.mxu0 %v389
  %v425 = vpop.f32.mrf.mxu0
  %v426 = vadd.f32 %v72, %v425
  %v427 = vpop.f32.mrf.mxu0
  %v428 = vpop.f32.mrf.mxu0
  %v429 = vpop.f32.mrf.mxu0
  %430 = vdwg.mxu0
  %v431 = vld [vmem:[%s5] sm:$0x1]
  %v433 = vlaneseq
  %v434 = vshrl.u32 %v433, 7
  %v435 = vsub.s32 0, %v434
  %v436 = vrot.slane %v431, %v435
  %v442 = vunpack.c.l.b16 %v59
  %v443 = vunpack.c.l.b16 %v60
  %v444 = vunpack.c.l.b16 %v61
  %v445 = vunpack.c.l.b16 %v62
  %v446 = vpack.c.b16 %v443, %v442
  %v447 = vpack.c.b16 %v445, %v444
  %450 = vmatprep.subr.bf16.mxu0 0
  %451 = vmatpush1.bf16.msra.mxu0 0
  %452 = vmatprep.subr.bf16.mxu0 0
  %453 = vmatpush1.bf16.msra.mxu0 0
  %454 = vmatprep.subr.bf16.mxu0 0
  %455 = vmatpush1.bf16.msra.mxu0 0
  %456 = vmatprep.subr.bf16.mxu0 0
  %457 = vmatpush1.bf16.msra.mxu0 0
  %458 = vmatprep.subr.bf16.mxu0 0
  %459 = vmatpush1.bf16.msra.mxu0 0
  %460 = vmatprep.subr.bf16.mxu0 0
  %461 = vmatpush1.bf16.msra.mxu0 0
  %462 = vmatprep.subr.bf16.mxu0 0
  %463 = vmatpush1.bf16.msra.mxu0 %v447
  %464 = vmatprep.subr.bf16.mxu0 0
  %465 = vmatpush1.bf16.msra.mxu0 %v446
  %466 = vmatprep.subr.bf16.mxu0 0
  %467 = vmatpush2.bf16.msra.mxu0 0
  %468 = vmatprep.subr.bf16.mxu0 0
  %469 = vmatpush2.bf16.msra.mxu0 0
  %470 = vmatprep.subr.bf16.mxu0 0
  %471 = vmatpush2.bf16.msra.mxu0 0
  %472 = vmatprep.subr.bf16.mxu0 0
  %473 = vmatpush2.bf16.msra.mxu0 0
  %474 = vmatprep.subr.bf16.mxu0 0
  %475 = vmatpush2.bf16.msra.mxu0 0
  %476 = vmatprep.subr.bf16.mxu0 0
  %477 = vmatpush2.bf16.msra.mxu0 0
  %478 = vmatprep.subr.bf16.mxu0 0
  %479 = vmatpush2.bf16.msra.mxu0 0
  %480 = vmatprep.subr.bf16.mxu0 0
  %481 = vmatpush2.bf16.msra.mxu0 0
  %482 = vmatprep.mubr.bf16.mxu0 0
  %483 = vmatmul.mubr.bf16.gmra.mxu0 %v88
  %v484 = vpop.f32.mrf.mxu0
  %v485 = vadd.f32 %v436, %v484
  %v486 = vpop.f32.mrf.mxu0
  %v487 = vpop.f32.mrf.mxu0
  %v488 = vpop.f32.mrf.mxu0
  %489 = vdwg.mxu0
  %490 = vmatprep.subr.bf16.mxu0 0
  %491 = vmatpush1.bf16.msra.mxu0 0
  %492 = vmatprep.subr.bf16.mxu0 0
  %493 = vmatpush1.bf16.msra.mxu0 0
  %494 = vmatprep.subr.bf16.mxu0 0
  %495 = vmatpush1.bf16.msra.mxu0 0
  %496 = vmatprep.subr.bf16.mxu0 0
  %497 = vmatpush1.bf16.msra.mxu0 0
  %498 = vmatprep.subr.bf16.mxu0 0
  %499 = vmatpush1.bf16.msra.mxu0 0
  %500 = vmatprep.subr.bf16.mxu0 0
  %501 = vmatpush1.bf16.msra.mxu0 0
  %502 = vmatprep.subr.bf16.mxu0 0
  %503 = vmatpush1.bf16.msra.mxu0 %v447
  %504 = vmatprep.subr.bf16.mxu0 0
  %505 = vmatpush1.bf16.msra.mxu0 %v446
  %506 = vmatprep.subr.bf16.mxu0 0
  %507 = vmatpush2.bf16.msra.mxu0 0
  %508 = vmatprep.subr.bf16.mxu0 0
  %509 = vmatpush2.bf16.msra.mxu0 0
  %510 = vmatprep.subr.bf16.mxu0 0
  %511 = vmatpush2.bf16.msra.mxu0 0
  %512 = vmatprep.subr.bf16.mxu0 0
  %513 = vmatpush2.bf16.msra.mxu0 0
  %514 = vmatprep.subr.bf16.mxu0 0
  %515 = vmatpush2.bf16.msra.mxu0 0
  %516 = vmatprep.subr.bf16.mxu0 0
  %517 = vmatpush2.bf16.msra.mxu0 0
  %518 = vmatprep.subr.bf16.mxu0 0
  %519 = vmatpush2.bf16.msra.mxu0 0
  %520 = vmatprep.subr.bf16.mxu0 0
  %521 = vmatpush2.bf16.msra.mxu0 0
  %522 = vmatprep.mubr.bf16.mxu0 0
  %523 = vmatmul.mubr.bf16.gmra.mxu0 %v131
  %v524 = vpop.f32.mrf.mxu0
  %v525 = vadd.f32 %v436, %v524
  %v526 = vpop.f32.mrf.mxu0
  %v527 = vpop.f32.mrf.mxu0
  %v528 = vpop.f32.mrf.mxu0
  %529 = vdwg.mxu0
  %530 = vmatprep.subr.bf16.mxu0 0
  %531 = vmatpush1.bf16.msra.mxu0 0
  %532 = vmatprep.subr.bf16.mxu0 0
  %533 = vmatpush1.bf16.msra.mxu0 0
  %534 = vmatprep.subr.bf16.mxu0 0
  %535 = vmatpush1.bf16.msra.mxu0 0
  %536 = vmatprep.subr.bf16.mxu0 0
  %537 = vmatpush1.bf16.msra.mxu0 0
  %538 = vmatprep.subr.bf16.mxu0 0
  %539 = vmatpush1.bf16.msra.mxu0 0
  %540 = vmatprep.subr.bf16.mxu0 0
  %541 = vmatpush1.bf16.msra.mxu0 0
  %542 = vmatprep.subr.bf16.mxu0 0
  %543 = vmatpush1.bf16.msra.mxu0 %v447
  %544 = vmatprep.subr.bf16.mxu0 0
  %545 = vmatpush1.bf16.msra.mxu0 %v446
  %546 = vmatprep.subr.bf16.mxu0 0
  %547 = vmatpush2.bf16.msra.mxu0 0
  %548 = vmatprep.subr.bf16.mxu0 0
  %549 = vmatpush2.bf16.msra.mxu0 0
  %550 = vmatprep.subr.bf16.mxu0 0
  %551 = vmatpush2.bf16.msra.mxu0 0
  %552 = vmatprep.subr.bf16.mxu0 0
  %553 = vmatpush2.bf16.msra.mxu0 0
  %554 = vmatprep.subr.bf16.mxu0 0
  %555 = vmatpush2.bf16.msra.mxu0 0
  %556 = vmatprep.subr.bf16.mxu0 0
  %557 = vmatpush2.bf16.msra.mxu0 0
  %558 = vmatprep.subr.bf16.mxu0 0
  %559 = vmatpush2.bf16.msra.mxu0 0
  %560 = vmatprep.subr.bf16.mxu0 0
  %561 = vmatpush2.bf16.msra.mxu0 0
  %562 = vmatprep.mubr.bf16.mxu0 0
  %563 = vmatmul.mubr.bf16.gmra.mxu0 %v174
  %v564 = vpop.f32.mrf.mxu0
  %v565 = vadd.f32 %v436, %v564
  %v566 = vpop.f32.mrf.mxu0
  %v567 = vpop.f32.mrf.mxu0
  %v568 = vpop.f32.mrf.mxu0
  %569 = vdwg.mxu0
  %570 = vmatprep.subr.bf16.mxu0 0
  %571 = vmatpush1.bf16.msra.mxu0 0
  %572 = vmatprep.subr.bf16.mxu0 0
  %573 = vmatpush1.bf16.msra.mxu0 0
  %574 = vmatprep.subr.bf16.mxu0 0
  %575 = vmatpush1.bf16.msra.mxu0 0
  %576 = vmatprep.subr.bf16.mxu0 0
  %577 = vmatpush1.bf16.msra.mxu0 0
  %578 = vmatprep.subr.bf16.mxu0 0
  %579 = vmatpush1.bf16.msra.mxu0 0
  %580 = vmatprep.subr.bf16.mxu0 0
  %581 = vmatpush1.bf16.msra.mxu0 0
  %582 = vmatprep.subr.bf16.mxu0 0
  %583 = vmatpush1.bf16.msra.mxu0 %v447
  %584 = vmatprep.subr.bf16.mxu0 0
  %585 = vmatpush1.bf16.msra.mxu0 %v446
  %586 = vmatprep.subr.bf16.mxu0 0
  %587 = vmatpush2.bf16.msra.mxu0 0
  %588 = vmatprep.subr.bf16.mxu0 0
  %589 = vmatpush2.bf16.msra.mxu0 0
  %590 = vmatprep.subr.bf16.mxu0 0
  %591 = vmatpush2.bf16.msra.mxu0 0
  %592 = vmatprep.subr.bf16.mxu0 0
  %593 = vmatpush2.bf16.msra.mxu0 0
  %594 = vmatprep.subr.bf16.mxu0 0
  %595 = vmatpush2.bf16.msra.mxu0 0
  %596 = vmatprep.subr.bf16.mxu0 0
  %597 = vmatpush2.bf16.msra.mxu0 0
  %598 = vmatprep.subr.bf16.mxu0 0
  %599 = vmatpush2.bf16.msra.mxu0 0
  %600 = vmatprep.subr.bf16.mxu0 0
  %601 = vmatpush2.bf16.msra.mxu0 0
  %602 = vmatprep.mubr.bf16.mxu0 0
  %603 = vmatmul.mubr.bf16.gmra.mxu0 %v217
  %v604 = vpop.f32.mrf.mxu0
  %v605 = vadd.f32 %v436, %v604
  %v606 = vpop.f32.mrf.mxu0
  %v607 = vpop.f32.mrf.mxu0
  %v608 = vpop.f32.mrf.mxu0
  %609 = vdwg.mxu0
  %610 = vmatprep.subr.bf16.mxu0 0
  %611 = vmatpush1.bf16.msra.mxu0 0
  %612 = vmatprep.subr.bf16.mxu0 0
  %613 = vmatpush1.bf16.msra.mxu0 0
  %614 = vmatprep.subr.bf16.mxu0 0
  %615 = vmatpush1.bf16.msra.mxu0 0
  %616 = vmatprep.subr.bf16.mxu0 0
  %617 = vmatpush1.bf16.msra.mxu0 0
  %618 = vmatprep.subr.bf16.mxu0 0
  %619 = vmatpush1.bf16.msra.mxu0 0
  %620 = vmatprep.subr.bf16.mxu0 0
  %621 = vmatpush1.bf16.msra.mxu0 0
  %622 = vmatprep.subr.bf16.mxu0 0
  %623 = vmatpush1.bf16.msra.mxu0 %v447
  %624 = vmatprep.subr.bf16.mxu0 0
  %625 = vmatpush1.bf16.msra.mxu0 %v446
  %626 = vmatprep.subr.bf16.mxu0 0
  %627 = vmatpush2.bf16.msra.mxu0 0
  %628 = vmatprep.subr.bf16.mxu0 0
  %629 = vmatpush2.bf16.msra.mxu0 0
  %630 = vmatprep.subr.bf16.mxu0 0
  %631 = vmatpush2.bf16.msra.mxu0 0
  %632 = vmatprep.subr.bf16.mxu0 0
  %633 = vmatpush2.bf16.msra.mxu0 0
  %634 = vmatprep.subr.bf16.mxu0 0
  %635 = vmatpush2.bf16.msra.mxu0 0
  %636 = vmatprep.subr.bf16.mxu0 0
  %637 = vmatpush2.bf16.msra.mxu0 0
  %638 = vmatprep.subr.bf16.mxu0 0
  %639 = vmatpush2.bf16.msra.mxu0 0
  %640 = vmatprep.subr.bf16.mxu0 0
  %641 = vmatpush2.bf16.msra.mxu0 0
  %642 = vmatprep.mubr.bf16.mxu0 0
  %643 = vmatmul.mubr.bf16.gmra.mxu0 %v260
  %v644 = vpop.f32.mrf.mxu0
  %v645 = vadd.f32 %v436, %v644
  %v646 = vpop.f32.mrf.mxu0
  %v647 = vpop.f32.mrf.mxu0
  %v648 = vpop.f32.mrf.mxu0
  %649 = vdwg.mxu0
  %650 = vmatprep.subr.bf16.mxu0 0
  %651 = vmatpush1.bf16.msra.mxu0 0
  %652 = vmatprep.subr.bf16.mxu0 0
  %653 = vmatpush1.bf16.msra.mxu0 0
  %654 = vmatprep.subr.bf16.mxu0 0
  %655 = vmatpush1.bf16.msra.mxu0 0
  %656 = vmatprep.subr.bf16.mxu0 0
  %657 = vmatpush1.bf16.msra.mxu0 0
  %658 = vmatprep.subr.bf16.mxu0 0
  %659 = vmatpush1.bf16.msra.mxu0 0
  %660 = vmatprep.subr.bf16.mxu0 0
  %661 = vmatpush1.bf16.msra.mxu0 0
  %662 = vmatprep.subr.bf16.mxu0 0
  %663 = vmatpush1.bf16.msra.mxu0 %v447
  %664 = vmatprep.subr.bf16.mxu0 0
  %665 = vmatpush1.bf16.msra.mxu0 %v446
  %666 = vmatprep.subr.bf16.mxu0 0
  %667 = vmatpush2.bf16.msra.mxu0 0
  %668 = vmatprep.subr.bf16.mxu0 0
  %669 = vmatpush2.bf16.msra.mxu0 0
  %670 = vmatprep.subr.bf16.mxu0 0
  %671 = vmatpush2.bf16.msra.mxu0 0
  %672 = vmatprep.subr.bf16.mxu0 0
  %673 = vmatpush2.bf16.msra.mxu0 0
  %674 = vmatprep.subr.bf16.mxu0 0
  %675 = vmatpush2.bf16.msra.mxu0 0
  %676 = vmatprep.subr.bf16.mxu0 0
  %677 = vmatpush2.bf16.msra.mxu0 0
  %678 = vmatprep.subr.bf16.mxu0 0
  %679 = vmatpush2.bf16.msra.mxu0 0
  %680 = vmatprep.subr.bf16.mxu0 0
  %681 = vmatpush2.bf16.msra.mxu0 0
  %682 = vmatprep.mubr.bf16.mxu0 0
  %683 = vmatmul.mubr.bf16.gmra.mxu0 %v303
  %v684 = vpop.f32.mrf.mxu0
  %v685 = vadd.f32 %v436, %v684
  %v686 = vpop.f32.mrf.mxu0
  %v687 = vpop.f32.mrf.mxu0
  %v688 = vpop.f32.mrf.mxu0
  %689 = vdwg.mxu0
  %690 = vmatprep.subr.bf16.mxu0 0
  %691 = vmatpush1.bf16.msra.mxu0 0
  %692 = vmatprep.subr.bf16.mxu0 0
  %693 = vmatpush1.bf16.msra.mxu0 0
  %694 = vmatprep.subr.bf16.mxu0 0
  %695 = vmatpush1.bf16.msra.mxu0 0
  %696 = vmatprep.subr.bf16.mxu0 0
  %697 = vmatpush1.bf16.msra.mxu0 0
  %698 = vmatprep.subr.bf16.mxu0 0
  %699 = vmatpush1.bf16.msra.mxu0 0
  %700 = vmatprep.subr.bf16.mxu0 0
  %701 = vmatpush1.bf16.msra.mxu0 0
  %702 = vmatprep.subr.bf16.mxu0 0
  %703 = vmatpush1.bf16.msra.mxu0 %v447
  %704 = vmatprep.subr.bf16.mxu0 0
  %705 = vmatpush1.bf16.msra.mxu0 %v446
  %706 = vmatprep.subr.bf16.mxu0 0
  %707 = vmatpush2.bf16.msra.mxu0 0
  %708 = vmatprep.subr.bf16.mxu0 0
  %709 = vmatpush2.bf16.msra.mxu0 0
  %710 = vmatprep.subr.bf16.mxu0 0
  %711 = vmatpush2.bf16.msra.mxu0 0
  %712 = vmatprep.subr.bf16.mxu0 0
  %713 = vmatpush2.bf16.msra.mxu0 0
  %714 = vmatprep.subr.bf16.mxu0 0
  %715 = vmatpush2.bf16.msra.mxu0 0
  %716 = vmatprep.subr.bf16.mxu0 0
  %717 = vmatpush2.bf16.msra.mxu0 0
  %718 = vmatprep.subr.bf16.mxu0 0
  %719 = vmatpush2.bf16.msra.mxu0 0
  %720 = vmatprep.subr.bf16.mxu0 0
  %721 = vmatpush2.bf16.msra.mxu0 0
  %722 = vmatprep.mubr.bf16.mxu0 0
  %723 = vmatmul.mubr.bf16.gmra.mxu0 %v346
  %v724 = vpop.f32.mrf.mxu0
  %v725 = vadd.f32 %v436, %v724
  %v726 = vpop.f32.mrf.mxu0
  %v727 = vpop.f32.mrf.mxu0
  %v728 = vpop.f32.mrf.mxu0
  %729 = vdwg.mxu0
  %730 = vmatprep.subr.bf16.mxu0 0
  %731 = vmatpush1.bf16.msra.mxu0 0
  %732 = vmatprep.subr.bf16.mxu0 0
  %733 = vmatpush1.bf16.msra.mxu0 0
  %734 = vmatprep.subr.bf16.mxu0 0
  %735 = vmatpush1.bf16.msra.mxu0 0
  %736 = vmatprep.subr.bf16.mxu0 0
  %737 = vmatpush1.bf16.msra.mxu0 0
  %738 = vmatprep.subr.bf16.mxu0 0
  %739 = vmatpush1.bf16.msra.mxu0 0
  %740 = vmatprep.subr.bf16.mxu0 0
  %741 = vmatpush1.bf16.msra.mxu0 0
  %742 = vmatprep.subr.bf16.mxu0 0
  %743 = vmatpush1.bf16.msra.mxu0 %v447
  %744 = vmatprep.subr.bf16.mxu0 0
  %745 = vmatpush1.bf16.msra.mxu0 %v446
  %746 = vmatprep.subr.bf16.mxu0 0
  %747 = vmatpush2.bf16.msra.mxu0 0
  %748 = vmatprep.subr.bf16.mxu0 0
  %749 = vmatpush2.bf16.msra.mxu0 0
  %750 = vmatprep.subr.bf16.mxu0 0
  %751 = vmatpush2.bf16.msra.mxu0 0
  %752 = vmatprep.subr.bf16.mxu0 0
  %753 = vmatpush2.bf16.msra.mxu0 0
  %754 = vmatprep.subr.bf16.mxu0 0
  %755 = vmatpush2.bf16.msra.mxu0 0
  %756 = vmatprep.subr.bf16.mxu0 0
  %757 = vmatpush2.bf16.msra.mxu0 0
  %758 = vmatprep.subr.bf16.mxu0 0
  %759 = vmatpush2.bf16.msra.mxu0 0
  %760 = vmatprep.subr.bf16.mxu0 0
  %761 = vmatpush2.bf16.msra.mxu0 0
  %762 = vmatprep.mubr.bf16.mxu0 0
  %763 = vmatmul.mubr.bf16.gmra.mxu0 %v389
  %v764 = vpop.f32.mrf.mxu0
  %v765 = vadd.f32 %v436, %v764
  %v766 = vpop.f32.mrf.mxu0
  %v767 = vpop.f32.mrf.mxu0
  %v768 = vpop.f32.mrf.mxu0
  %769 = vdwg.mxu0
  %v770 = vld [vmem:[%s6] sm:$0x1]
  %v772 = vlaneseq
  %v773 = vshrl.u32 %v772, 7
  %v774 = vsub.s32 0, %v773
  %v775 = vrot.slane %v770, %v774
  %v781 = vunpack.c.l.b16 %v63
  %v782 = vunpack.c.l.b16 %v64
  %v783 = vunpack.c.l.b16 %v65
  %v784 = vunpack.c.l.b16 %v66
  %v785 = vpack.c.b16 %v782, %v781
  %v786 = vpack.c.b16 %v784, %v783
  %789 = vmatprep.subr.bf16.mxu0 0
  %790 = vmatpush1.bf16.msra.mxu0 0
  %791 = vmatprep.subr.bf16.mxu0 0
  %792 = vmatpush1.bf16.msra.mxu0 0
  %793 = vmatprep.subr.bf16.mxu0 0
  %794 = vmatpush1.bf16.msra.mxu0 0
  %795 = vmatprep.subr.bf16.mxu0 0
  %796 = vmatpush1.bf16.msra.mxu0 0
  %797 = vmatprep.subr.bf16.mxu0 0
  %798 = vmatpush1.bf16.msra.mxu0 0
  %799 = vmatprep.subr.bf16.mxu0 0
  %800 = vmatpush1.bf16.msra.mxu0 0
  %801 = vmatprep.subr.bf16.mxu0 0
  %802 = vmatpush1.bf16.msra.mxu0 %v786
  %803 = vmatprep.subr.bf16.mxu0 0
  %804 = vmatpush1.bf16.msra.mxu0 %v785
  %805 = vmatprep.subr.bf16.mxu0 0
  %806 = vmatpush2.bf16.msra.mxu0 0
  %807 = vmatprep.subr.bf16.mxu0 0
  %808 = vmatpush2.bf16.msra.mxu0 0
  %809 = vmatprep.subr.bf16.mxu0 0
  %810 = vmatpush2.bf16.msra.mxu0 0
  %811 = vmatprep.subr.bf16.mxu0 0
  %812 = vmatpush2.bf16.msra.mxu0 0
  %813 = vmatprep.subr.bf16.mxu0 0
  %814 = vmatpush2.bf16.msra.mxu0 0
  %815 = vmatprep.subr.bf16.mxu0 0
  %816 = vmatpush2.bf16.msra.mxu0 0
  %817 = vmatprep.subr.bf16.mxu0 0
  %818 = vmatpush2.bf16.msra.mxu0 0
  %819 = vmatprep.subr.bf16.mxu0 0
  %820 = vmatpush2.bf16.msra.mxu0 0
  %821 = vmatprep.mubr.bf16.mxu0 0
  %822 = vmatmul.mubr.bf16.gmra.mxu0 %v88
  %v823 = vpop.f32.mrf.mxu0
  %v824 = vadd.f32 %v775, %v823
  %v825 = vpop.f32.mrf.mxu0
  %v826 = vpop.f32.mrf.mxu0
  %v827 = vpop.f32.mrf.mxu0
  %828 = vdwg.mxu0
  %829 = vmatprep.subr.bf16.mxu0 0
  %830 = vmatpush1.bf16.msra.mxu0 0
  %831 = vmatprep.subr.bf16.mxu0 0
  %832 = vmatpush1.bf16.msra.mxu0 0
  %833 = vmatprep.subr.bf16.mxu0 0
  %834 = vmatpush1.bf16.msra.mxu0 0
  %835 = vmatprep.subr.bf16.mxu0 0
  %836 = vmatpush1.bf16.msra.mxu0 0
  %837 = vmatprep.subr.bf16.mxu0 0
  %838 = vmatpush1.bf16.msra.mxu0 0
  %839 = vmatprep.subr.bf16.mxu0 0
  %840 = vmatpush1.bf16.msra.mxu0 0
  %841 = vmatprep.subr.bf16.mxu0 0
  %842 = vmatpush1.bf16.msra.mxu0 %v786
  %843 = vmatprep.subr.bf16.mxu0 0
  %844 = vmatpush1.bf16.msra.mxu0 %v785
  %845 = vmatprep.subr.bf16.mxu0 0
  %846 = vmatpush2.bf16.msra.mxu0 0
  %847 = vmatprep.subr.bf16.mxu0 0
  %848 = vmatpush2.bf16.msra.mxu0 0
  %849 = vmatprep.subr.bf16.mxu0 0
  %850 = vmatpush2.bf16.msra.mxu0 0
  %851 = vmatprep.subr.bf16.mxu0 0
  %852 = vmatpush2.bf16.msra.mxu0 0
  %853 = vmatprep.subr.bf16.mxu0 0
  %854 = vmatpush2.bf16.msra.mxu0 0
  %855 = vmatprep.subr.bf16.mxu0 0
  %856 = vmatpush2.bf16.msra.mxu0 0
  %857 = vmatprep.subr.bf16.mxu0 0
  %858 = vmatpush2.bf16.msra.mxu0 0
  %859 = vmatprep.subr.bf16.mxu0 0
  %860 = vmatpush2.bf16.msra.mxu0 0
  %861 = vmatprep.mubr.bf16.mxu0 0
  %862 = vmatmul.mubr.bf16.gmra.mxu0 %v131
  %v863 = vpop.f32.mrf.mxu0
  %v864 = vadd.f32 %v775, %v863
  %v865 = vpop.f32.mrf.mxu0
  %v866 = vpop.f32.mrf.mxu0
  %v867 = vpop.f32.mrf.mxu0
  %868 = vdwg.mxu0
  %869 = vmatprep.subr.bf16.mxu0 0
  %870 = vmatpush1.bf16.msra.mxu0 0
  %871 = vmatprep.subr.bf16.mxu0 0
  %872 = vmatpush1.bf16.msra.mxu0 0
  %873 = vmatprep.subr.bf16.mxu0 0
  %874 = vmatpush1.bf16.msra.mxu0 0
  %875 = vmatprep.subr.bf16.mxu0 0
  %876 = vmatpush1.bf16.msra.mxu0 0
  %877 = vmatprep.subr.bf16.mxu0 0
  %878 = vmatpush1.bf16.msra.mxu0 0
  %879 = vmatprep.subr.bf16.mxu0 0
  %880 = vmatpush1.bf16.msra.mxu0 0
  %881 = vmatprep.subr.bf16.mxu0 0
  %882 = vmatpush1.bf16.msra.mxu0 %v786
  %883 = vmatprep.subr.bf16.mxu0 0
  %884 = vmatpush1.bf16.msra.mxu0 %v785
  %885 = vmatprep.subr.bf16.mxu0 0
  %886 = vmatpush2.bf16.msra.mxu0 0
  %887 = vmatprep.subr.bf16.mxu0 0
  %888 = vmatpush2.bf16.msra.mxu0 0
  %889 = vmatprep.subr.bf16.mxu0 0
  %890 = vmatpush2.bf16.msra.mxu0 0
  %891 = vmatprep.subr.bf16.mxu0 0
  %892 = vmatpush2.bf16.msra.mxu0 0
  %893 = vmatprep.subr.bf16.mxu0 0
  %894 = vmatpush2.bf16.msra.mxu0 0
  %895 = vmatprep.subr.bf16.mxu0 0
  %896 = vmatpush2.bf16.msra.mxu0 0
  %897 = vmatprep.subr.bf16.mxu0 0
  %898 = vmatpush2.bf16.msra.mxu0 0
  %899 = vmatprep.subr.bf16.mxu0 0
  %900 = vmatpush2.bf16.msra.mxu0 0
  %901 = vmatprep.mubr.bf16.mxu0 0
  %902 = vmatmul.mubr.bf16.gmra.mxu0 %v174
  %v903 = vpop.f32.mrf.mxu0
  %v904 = vadd.f32 %v775, %v903
  %v905 = vpop.f32.mrf.mxu0
  %v906 = vpop.f32.mrf.mxu0
  %v907 = vpop.f32.mrf.mxu0
  %908 = vdwg.mxu0
  %909 = vmatprep.subr.bf16.mxu0 0
  %910 = vmatpush1.bf16.msra.mxu0 0
  %911 = vmatprep.subr.bf16.mxu0 0
  %912 = vmatpush1.bf16.msra.mxu0 0
  %913 = vmatprep.subr.bf16.mxu0 0
  %914 = vmatpush1.bf16.msra.mxu0 0
  %915 = vmatprep.subr.bf16.mxu0 0
  %916 = vmatpush1.bf16.msra.mxu0 0
  %917 = vmatprep.subr.bf16.mxu0 0
  %918 = vmatpush1.bf16.msra.mxu0 0
  %919 = vmatprep.subr.bf16.mxu0 0
  %920 = vmatpush1.bf16.msra.mxu0 0
  %921 = vmatprep.subr.bf16.mxu0 0
  %922 = vmatpush1.bf16.msra.mxu0 %v786
  %923 = vmatprep.subr.bf16.mxu0 0
  %924 = vmatpush1.bf16.msra.mxu0 %v785
  %925 = vmatprep.subr.bf16.mxu0 0
  %926 = vmatpush2.bf16.msra.mxu0 0
  %927 = vmatprep.subr.bf16.mxu0 0
  %928 = vmatpush2.bf16.msra.mxu0 0
  %929 = vmatprep.subr.bf16.mxu0 0
  %930 = vmatpush2.bf16.msra.mxu0 0
  %931 = vmatprep.subr.bf16.mxu0 0
  %932 = vmatpush2.bf16.msra.mxu0 0
  %933 = vmatprep.subr.bf16.mxu0 0
  %934 = vmatpush2.bf16.msra.mxu0 0
  %935 = vmatprep.subr.bf16.mxu0 0
  %936 = vmatpush2.bf16.msra.mxu0 0
  %937 = vmatprep.subr.bf16.mxu0 0
  %938 = vmatpush2.bf16.msra.mxu0 0
  %939 = vmatprep.subr.bf16.mxu0 0
  %940 = vmatpush2.bf16.msra.mxu0 0
  %941 = vmatprep.mubr.bf16.mxu0 0
  %942 = vmatmul.mubr.bf16.gmra.mxu0 %v217
  %v943 = vpop.f32.mrf.mxu0
  %v944 = vadd.f32 %v775, %v943
  %v945 = vpop.f32.mrf.mxu0
  %v946 = vpop.f32.mrf.mxu0
  %v947 = vpop.f32.mrf.mxu0
  %948 = vdwg.mxu0
  %949 = vmatprep.subr.bf16.mxu0 0
  %950 = vmatpush1.bf16.msra.mxu0 0
  %951 = vmatprep.subr.bf16.mxu0 0
  %952 = vmatpush1.bf16.msra.mxu0 0
  %953 = vmatprep.subr.bf16.mxu0 0
  %954 = vmatpush1.bf16.msra.mxu0 0
  %955 = vmatprep.subr.bf16.mxu0 0
  %956 = vmatpush1.bf16.msra.mxu0 0
  %957 = vmatprep.subr.bf16.mxu0 0
  %958 = vmatpush1.bf16.msra.mxu0 0
  %959 = vmatprep.subr.bf16.mxu0 0
  %960 = vmatpush1.bf16.msra.mxu0 0
  %961 = vmatprep.subr.bf16.mxu0 0
  %962 = vmatpush1.bf16.msra.mxu0 %v786
  %963 = vmatprep.subr.bf16.mxu0 0
  %964 = vmatpush1.bf16.msra.mxu0 %v785
  %965 = vmatprep.subr.bf16.mxu0 0
  %966 = vmatpush2.bf16.msra.mxu0 0
  %967 = vmatprep.subr.bf16.mxu0 0
  %968 = vmatpush2.bf16.msra.mxu0 0
  %969 = vmatprep.subr.bf16.mxu0 0
  %970 = vmatpush2.bf16.msra.mxu0 0
  %971 = vmatprep.subr.bf16.mxu0 0
  %972 = vmatpush2.bf16.msra.mxu0 0
  %973 = vmatprep.subr.bf16.mxu0 0
  %974 = vmatpush2.bf16.msra.mxu0 0
  %975 = vmatprep.subr.bf16.mxu0 0
  %976 = vmatpush2.bf16.msra.mxu0 0
  %977 = vmatprep.subr.bf16.mxu0 0
  %978 = vmatpush2.bf16.msra.mxu0 0
  %979 = vmatprep.subr.bf16.mxu0 0
  %980 = vmatpush2.bf16.msra.mxu0 0
  %981 = vmatprep.mubr.bf16.mxu0 0
  %982 = vmatmul.mubr.bf16.gmra.mxu0 %v260
  %v983 = vpop.f32.mrf.mxu0
  %v984 = vadd.f32 %v775, %v983
  %v985 = vpop.f32.mrf.mxu0
  %v986 = vpop.f32.mrf.mxu0
  %v987 = vpop.f32.mrf.mxu0
  %988 = vdwg.mxu0
  %989 = vmatprep.subr.bf16.mxu0 0
  %990 = vmatpush1.bf16.msra.mxu0 0
  %991 = vmatprep.subr.bf16.mxu0 0
  %992 = vmatpush1.bf16.msra.mxu0 0
  %993 = vmatprep.subr.bf16.mxu0 0
  %994 = vmatpush1.bf16.msra.mxu0 0
  %995 = vmatprep.subr.bf16.mxu0 0
  %996 = vmatpush1.bf16.msra.mxu0 0
  %997 = vmatprep.subr.bf16.mxu0 0
  %998 = vmatpush1.bf16.msra.mxu0 0
  %999 = vmatprep.subr.bf16.mxu0 0
  %1000 = vmatpush1.bf16.msra.mxu0 0
  %1001 = vmatprep.subr.bf16.mxu0 0
  %1002 = vmatpush1.bf16.msra.mxu0 %v786
  %1003 = vmatprep.subr.bf16.mxu0 0
  %1004 = vmatpush1.bf16.msra.mxu0 %v785
  %1005 = vmatprep.subr.bf16.mxu0 0
  %1006 = vmatpush2.bf16.msra.mxu0 0
  %1007 = vmatprep.subr.bf16.mxu0 0
  %1008 = vmatpush2.bf16.msra.mxu0 0
  %1009 = vmatprep.subr.bf16.mxu0 0
  %1010 = vmatpush2.bf16.msra.mxu0 0
  %1011 = vmatprep.subr.bf16.mxu0 0
  %1012 = vmatpush2.bf16.msra.mxu0 0
  %1013 = vmatprep.subr.bf16.mxu0 0
  %1014 = vmatpush2.bf16.msra.mxu0 0
  %1015 = vmatprep.subr.bf16.mxu0 0
  %1016 = vmatpush2.bf16.msra.mxu0 0
  %1017 = vmatprep.subr.bf16.mxu0 0
  %1018 = vmatpush2.bf16.msra.mxu0 0
  %1019 = vmatprep.subr.bf16.mxu0 0
  %1020 = vmatpush2.bf16.msra.mxu0 0
  %1021 = vmatprep.mubr.bf16.mxu0 0
  %1022 = vmatmul.mubr.bf16.gmra.mxu0 %v303
  %v1023 = vpop.f32.mrf.mxu0
  %v1024 = vadd.f32 %v775, %v1023
  %v1025 = vpop.f32.mrf.mxu0
  %v1026 = vpop.f32.mrf.mxu0
  %v1027 = vpop.f32.mrf.mxu0
  %1028 = vdwg.mxu0
  %1029 = vmatprep.subr.bf16.mxu0 0
  %1030 = vmatpush1.bf16.msra.mxu0 0
  %1031 = vmatprep.subr.bf16.mxu0 0
  %1032 = vmatpush1.bf16.msra.mxu0 0
  %1033 = vmatprep.subr.bf16.mxu0 0
  %1034 = vmatpush1.bf16.msra.mxu0 0
  %1035 = vmatprep.subr.bf16.mxu0 0
  %1036 = vmatpush1.bf16.msra.mxu0 0
  %1037 = vmatprep.subr.bf16.mxu0 0
  %1038 = vmatpush1.bf16.msra.mxu0 0
  %1039 = vmatprep.subr.bf16.mxu0 0
  %1040 = vmatpush1.bf16.msra.mxu0 0
  %1041 = vmatprep.subr.bf16.mxu0 0
  %1042 = vmatpush1.bf16.msra.mxu0 %v786
  %1043 = vmatprep.subr.bf16.mxu0 0
  %1044 = vmatpush1.bf16.msra.mxu0 %v785
  %1045 = vmatprep.subr.bf16.mxu0 0
  %1046 = vmatpush2.bf16.msra.mxu0 0
  %1047 = vmatprep.subr.bf16.mxu0 0
  %1048 = vmatpush2.bf16.msra.mxu0 0
  %1049 = vmatprep.subr.bf16.mxu0 0
  %1050 = vmatpush2.bf16.msra.mxu0 0
  %1051 = vmatprep.subr.bf16.mxu0 0
  %1052 = vmatpush2.bf16.msra.mxu0 0
  %1053 = vmatprep.subr.bf16.mxu0 0
  %1054 = vmatpush2.bf16.msra.mxu0 0
  %1055 = vmatprep.subr.bf16.mxu0 0
  %1056 = vmatpush2.bf16.msra.mxu0 0
  %1057 = vmatprep.subr.bf16.mxu0 0
  %1058 = vmatpush2.bf16.msra.mxu0 0
  %1059 = vmatprep.subr.bf16.mxu0 0
  %1060 = vmatpush2.bf16.msra.mxu0 0
  %1061 = vmatprep.mubr.bf16.mxu0 0
  %1062 = vmatmul.mubr.bf16.gmra.mxu0 %v346
  %v1063 = vpop.f32.mrf.mxu0
  %v1064 = vadd.f32 %v775, %v1063
  %v1065 = vpop.f32.mrf.mxu0
  %v1066 = vpop.f32.mrf.mxu0
  %v1067 = vpop.f32.mrf.mxu0
  %1068 = vdwg.mxu0
  %1069 = vmatprep.subr.bf16.mxu0 0
  %1070 = vmatpush1.bf16.msra.mxu0 0
  %1071 = vmatprep.subr.bf16.mxu0 0
  %1072 = vmatpush1.bf16.msra.mxu0 0
  %1073 = vmatprep.subr.bf16.mxu0 0
  %1074 = vmatpush1.bf16.msra.mxu0 0
  %1075 = vmatprep.subr.bf16.mxu0 0
  %1076 = vmatpush1.bf16.msra.mxu0 0
  %1077 = vmatprep.subr.bf16.mxu0 0
  %1078 = vmatpush1.bf16.msra.mxu0 0
  %1079 = vmatprep.subr.bf16.mxu0 0
  %1080 = vmatpush1.bf16.msra.mxu0 0
  %1081 = vmatprep.subr.bf16.mxu0 0
  %1082 = vmatpush1.bf16.msra.mxu0 %v786
  %1083 = vmatprep.subr.bf16.mxu0 0
  %1084 = vmatpush1.bf16.msra.mxu0 %v785
  %1085 = vmatprep.subr.bf16.mxu0 0
  %1086 = vmatpush2.bf16.msra.mxu0 0
  %1087 = vmatprep.subr.bf16.mxu0 0
  %1088 = vmatpush2.bf16.msra.mxu0 0
  %1089 = vmatprep.subr.bf16.mxu0 0
  %1090 = vmatpush2.bf16.msra.mxu0 0
  %1091 = vmatprep.subr.bf16.mxu0 0
  %1092 = vmatpush2.bf16.msra.mxu0 0
  %1093 = vmatprep.subr.bf16.mxu0 0
  %1094 = vmatpush2.bf16.msra.mxu0 0
  %1095 = vmatprep.subr.bf16.mxu0 0
  %1096 = vmatpush2.bf16.msra.mxu0 0
  %1097 = vmatprep.subr.bf16.mxu0 0
  %1098 = vmatpush2.bf16.msra.mxu0 0
  %1099 = vmatprep.subr.bf16.mxu0 0
  %1100 = vmatpush2.bf16.msra.mxu0 0
  %1101 = vmatprep.mubr.bf16.mxu0 0
  %1102 = vmatmul.mubr.bf16.gmra.mxu0 %v389
  %v1103 = vpop.f32.mrf.mxu0
  %v1104 = vadd.f32 %v775, %v1103
  %v1105 = vpop.f32.mrf.mxu0
  %v1106 = vpop.f32.mrf.mxu0
  %v1107 = vpop.f32.mrf.mxu0
  %1108 = vdwg.mxu0
  %v1109 = vpack.c.bf16 %v125, %v125
  %v1110 = vpack.c.bf16 %v168, %v168
  %v1111 = vpack.c.bf16 %v211, %v211
  %v1112 = vpack.c.bf16 %v254, %v254
  %v1113 = vpack.c.bf16 %v297, %v297
  %v1114 = vpack.c.bf16 %v340, %v340
  %v1115 = vpack.c.bf16 %v383, %v383
  %v1116 = vpack.c.bf16 %v426, %v426
  %v1117 = vpack.c.bf16 %v485, %v485
  %v1118 = vpack.c.bf16 %v525, %v525
  %v1119 = vpack.c.bf16 %v565, %v565
  %v1120 = vpack.c.bf16 %v605, %v605
  %v1121 = vpack.c.bf16 %v645, %v645
  %v1122 = vpack.c.bf16 %v685, %v685
  %v1123 = vpack.c.bf16 %v725, %v725
  %v1124 = vpack.c.bf16 %v765, %v765
  %vm1125 = vcmask 64512
  %v1127 = vsel %vm1125, %v1109, 0
  %v1130 = vsel %vm1125, %v1117, 0
  %1132 = vmatprep.subr.bf16.mxu0 0
  %1133 = vmatpush1.bf16.xpose.msra.mxu0 0
  %1134 = vmatprep.subr.bf16.mxu0 0
  %1135 = vmatpush1.bf16.xpose.msra.mxu0 0
  %1136 = vmatprep.subr.bf16.mxu0 0
  %1137 = vmatpush1.bf16.xpose.msra.mxu0 0
  %1138 = vmatprep.subr.bf16.mxu0 0
  %1139 = vmatpush1.bf16.xpose.msra.mxu0 0
  %1140 = vmatprep.subr.bf16.mxu0 0
  %1141 = vmatpush1.bf16.xpose.msra.mxu0 0
  %1142 = vmatprep.subr.bf16.mxu0 0
  %1143 = vmatpush1.bf16.xpose.msra.mxu0 0
  %1144 = vmatprep.subr.bf16.mxu0 0
  %1145 = vmatpush1.bf16.xpose.msra.mxu0 0
  %1146 = vmatprep.subr.bf16.mxu0 0
  %1147 = vmatpush1.bf16.xpose.msra.mxu0 %v1130
  %1148 = vmatprep.subr.bf16.mxu0 0
  %1149 = vmatpush2.bf16.xpose.msra.mxu0 0
  %1150 = vmatprep.subr.bf16.mxu0 0
  %1151 = vmatpush2.bf16.xpose.msra.mxu0 0
  %1152 = vmatprep.subr.bf16.mxu0 0
  %1153 = vmatpush2.bf16.xpose.msra.mxu0 0
  %1154 = vmatprep.subr.bf16.mxu0 0
  %1155 = vmatpush2.bf16.xpose.msra.mxu0 0
  %1156 = vmatprep.subr.bf16.mxu0 0
  %1157 = vmatpush2.bf16.xpose.msra.mxu0 0
  %1158 = vmatprep.subr.bf16.mxu0 0
  %1159 = vmatpush2.bf16.xpose.msra.mxu0 0
  %1160 = vmatprep.subr.bf16.mxu0 0
  %1161 = vmatpush2.bf16.xpose.msra.mxu0 0
  %1162 = vmatprep.subr.bf16.mxu0 0
  %1163 = vmatpush2.bf16.xpose.msra.mxu0 0
  %1164 = vmatprep.mubr.bf16.mxu0 0
  %1165 = vmatmul.mubr.bf16.gmra.mxu0 %v1127
  %v1166 = vpop.f32.mrf.mxu0
  %v1167 = vadd.f32 0.0, %v1166
  %v1168 = vpop.f32.mrf.mxu0
  %v1169 = vpop.f32.mrf.mxu0
  %v1170 = vpop.f32.mrf.mxu0
  %1171 = vdwg.mxu0
  %v1173 = vsel %vm1125, %v1110, 0
  %v1176 = vsel %vm1125, %v1118, 0
  %1178 = vmatprep.subr.bf16.mxu0 0
  %1179 = vmatpush1.bf16.xpose.msra.mxu0 0
  %1180 = vmatprep.subr.bf16.mxu0 0
  %1181 = vmatpush1.bf16.xpose.msra.mxu0 0
  %1182 = vmatprep.subr.bf16.mxu0 0
  %1183 = vmatpush1.bf16.xpose.msra.mxu0 0
  %1184 = vmatprep.subr.bf16.mxu0 0
  %1185 = vmatpush1.bf16.xpose.msra.mxu0 0
  %1186 = vmatprep.subr.bf16.mxu0 0
  %1187 = vmatpush1.bf16.xpose.msra.mxu0 0
  %1188 = vmatprep.subr.bf16.mxu0 0
  %1189 = vmatpush1.bf16.xpose.msra.mxu0 0
  %1190 = vmatprep.subr.bf16.mxu0 0
  %1191 = vmatpush1.bf16.xpose.msra.mxu0 0
  %1192 = vmatprep.subr.bf16.mxu0 0
  %1193 = vmatpush1.bf16.xpose.msra.mxu0 %v1176
  %1194 = vmatprep.subr.bf16.mxu0 0
  %1195 = vmatpush2.bf16.xpose.msra.mxu0 0
  %1196 = vmatprep.subr.bf16.mxu0 0
  %1197 = vmatpush2.bf16.xpose.msra.mxu0 0
  %1198 = vmatprep.subr.bf16.mxu0 0
  %1199 = vmatpush2.bf16.xpose.msra.mxu0 0
  %1200 = vmatprep.subr.bf16.mxu0 0
  %1201 = vmatpush2.bf16.xpose.msra.mxu0 0
  %1202 = vmatprep.subr.bf16.mxu0 0
  %1203 = vmatpush2.bf16.xpose.msra.mxu0 0
  %1204 = vmatprep.subr.bf16.mxu0 0
  %1205 = vmatpush2.bf16.xpose.msra.mxu0 0
  %1206 = vmatprep.subr.bf16.mxu0 0
  %1207 = vmatpush2.bf16.xpose.msra.mxu0 0
  %1208 = vmatprep.subr.bf16.mxu0 0
  %1209 = vmatpush2.bf16.xpose.msra.mxu0 0
  %1210 = vmatprep.mubr.bf16.mxu0 0
  %1211 = vmatmul.mubr.bf16.gmra.mxu0 %v1173
  %v1212 = vpop.f32.mrf.mxu0
  %v1213 = vadd.f32 0.0, %v1212
  %v1214 = vpop.f32.mrf.mxu0
  %v1215 = vpop.f32.mrf.mxu0
  %v1216 = vpop.f32.mrf.mxu0
  %1217 = vdwg.mxu0
  %v1219 = vsel %vm1125, %v1111, 0
  %v1222 = vsel %vm1125, %v1119, 0
  %1224 = vmatprep.subr.bf16.mxu0 0
  %1225 = vmatpush1.bf16.xpose.msra.mxu0 0
  %1226 = vmatprep.subr.bf16.mxu0 0
  %1227 = vmatpush1.bf16.xpose.msra.mxu0 0
  %1228 = vmatprep.subr.bf16.mxu0 0
  %1229 = vmatpush1.bf16.xpose.msra.mxu0 0
  %1230 = vmatprep.subr.bf16.mxu0 0
  %1231 = vmatpush1.bf16.xpose.msra.mxu0 0
  %1232 = vmatprep.subr.bf16.mxu0 0
  %1233 = vmatpush1.bf16.xpose.msra.mxu0 0
  %1234 = vmatprep.subr.bf16.mxu0 0
  %1235 = vmatpush1.bf16.xpose.msra.mxu0 0
  %1236 = vmatprep.subr.bf16.mxu0 0
  %1237 = vmatpush1.bf16.xpose.msra.mxu0 0
  %1238 = vmatprep.subr.bf16.mxu0 0
  %1239 = vmatpush1.bf16.xpose.msra.mxu0 %v1222
  %1240 = vmatprep.subr.bf16.mxu0 0
  %1241 = vmatpush2.bf16.xpose.msra.mxu0 0
  %1242 = vmatprep.subr.bf16.mxu0 0
  %1243 = vmatpush2.bf16.xpose.msra.mxu0 0
  %1244 = vmatprep.subr.bf16.mxu0 0
  %1245 = vmatpush2.bf16.xpose.msra.mxu0 0
  %1246 = vmatprep.subr.bf16.mxu0 0
  %1247 = vmatpush2.bf16.xpose.msra.mxu0 0
  %1248 = vmatprep.subr.bf16.mxu0 0
  %1249 = vmatpush2.bf16.xpose.msra.mxu0 0
  %1250 = vmatprep.subr.bf16.mxu0 0
  %1251 = vmatpush2.bf16.xpose.msra.mxu0 0
  %1252 = vmatprep.subr.bf16.mxu0 0
  %1253 = vmatpush2.bf16.xpose.msra.mxu0 0
  %1254 = vmatprep.subr.bf16.mxu0 0
  %1255 = vmatpush2.bf16.xpose.msra.mxu0 0
  %1256 = vmatprep.mubr.bf16.mxu0 0
  %1257 = vmatmul.mubr.bf16.gmra.mxu0 %v1219
  %v1258 = vpop.f32.mrf.mxu0
  %v1259 = vadd.f32 0.0, %v1258
  %v1260 = vpop.f32.mrf.mxu0
  %v1261 = vpop.f32.mrf.mxu0
  %v1262 = vpop.f32.mrf.mxu0
  %1263 = vdwg.mxu0
  %v1265 = vsel %vm1125, %v1112, 0
  %v1268 = vsel %vm1125, %v1120, 0
  %1270 = vmatprep.subr.bf16.mxu0 0
  %1271 = vmatpush1.bf16.xpose.msra.mxu0 0
  %1272 = vmatprep.subr.bf16.mxu0 0
  %1273 = vmatpush1.bf16.xpose.msra.mxu0 0
  %1274 = vmatprep.subr.bf16.mxu0 0
  %1275 = vmatpush1.bf16.xpose.msra.mxu0 0
  %1276 = vmatprep.subr.bf16.mxu0 0
  %1277 = vmatpush1.bf16.xpose.msra.mxu0 0
  %1278 = vmatprep.subr.bf16.mxu0 0
  %1279 = vmatpush1.bf16.xpose.msra.mxu0 0
  %1280 = vmatprep.subr.bf16.mxu0 0
  %1281 = vmatpush1.bf16.xpose.msra.mxu0 0
  %1282 = vmatprep.subr.bf16.mxu0 0
  %1283 = vmatpush1.bf16.xpose.msra.mxu0 0
  %1284 = vmatprep.subr.bf16.mxu0 0
  %1285 = vmatpush1.bf16.xpose.msra.mxu0 %v1268
  %1286 = vmatprep.subr.bf16.mxu0 0
  %1287 = vmatpush2.bf16.xpose.msra.mxu0 0
  %1288 = vmatprep.subr.bf16.mxu0 0
  %1289 = vmatpush2.bf16.xpose.msra.mxu0 0
  %1290 = vmatprep.subr.bf16.mxu0 0
  %1291 = vmatpush2.bf16.xpose.msra.mxu0 0
  %1292 = vmatprep.subr.bf16.mxu0 0
  %1293 = vmatpush2.bf16.xpose.msra.mxu0 0
  %1294 = vmatprep.subr.bf16.mxu0 0
  %1295 = vmatpush2.bf16.xpose.msra.mxu0 0
  %1296 = vmatprep.subr.bf16.mxu0 0
  %1297 = vmatpush2.bf16.xpose.msra.mxu0 0
  %1298 = vmatprep.subr.bf16.mxu0 0
  %1299 = vmatpush2.bf16.xpose.msra.mxu0 0
  %1300 = vmatprep.subr.bf16.mxu0 0
  %1301 = vmatpush2.bf16.xpose.msra.mxu0 0
  %1302 = vmatprep.mubr.bf16.mxu0 0
  %1303 = vmatmul.mubr.bf16.gmra.mxu0 %v1265
  %v1304 = vpop.f32.mrf.mxu0
  %v1305 = vadd.f32 0.0, %v1304
  %v1306 = vpop.f32.mrf.mxu0
  %v1307 = vpop.f32.mrf.mxu0
  %v1308 = vpop.f32.mrf.mxu0
  %1309 = vdwg.mxu0
  %v1311 = vsel %vm1125, %v1113, 0
  %v1314 = vsel %vm1125, %v1121, 0
  %1316 = vmatprep.subr.bf16.mxu0 0
  %1317 = vmatpush1.bf16.xpose.msra.mxu0 0
  %1318 = vmatprep.subr.bf16.mxu0 0
  %1319 = vmatpush1.bf16.xpose.msra.mxu0 0
  %1320 = vmatprep.subr.bf16.mxu0 0
  %1321 = vmatpush1.bf16.xpose.msra.mxu0 0
  %1322 = vmatprep.subr.bf16.mxu0 0
  %1323 = vmatpush1.bf16.xpose.msra.mxu0 0
  %1324 = vmatprep.subr.bf16.mxu0 0
  %1325 = vmatpush1.bf16.xpose.msra.mxu0 0
  %1326 = vmatprep.subr.bf16.mxu0 0
  %1327 = vmatpush1.bf16.xpose.msra.mxu0 0
  %1328 = vmatprep.subr.bf16.mxu0 0
  %1329 = vmatpush1.bf16.xpose.msra.mxu0 0
  %1330 = vmatprep.subr.bf16.mxu0 0
  %1331 = vmatpush1.bf16.xpose.msra.mxu0 %v1314
  %1332 = vmatprep.subr.bf16.mxu0 0
  %1333 = vmatpush2.bf16.xpose.msra.mxu0 0
  %1334 = vmatprep.subr.bf16.mxu0 0
  %1335 = vmatpush2.bf16.xpose.msra.mxu0 0
  %1336 = vmatprep.subr.bf16.mxu0 0
  %1337 = vmatpush2.bf16.xpose.msra.mxu0 0
  %1338 = vmatprep.subr.bf16.mxu0 0
  %1339 = vmatpush2.bf16.xpose.msra.mxu0 0
  %1340 = vmatprep.subr.bf16.mxu0 0
  %1341 = vmatpush2.bf16.xpose.msra.mxu0 0
  %1342 = vmatprep.subr.bf16.mxu0 0
  %1343 = vmatpush2.bf16.xpose.msra.mxu0 0
  %1344 = vmatprep.subr.bf16.mxu0 0
  %1345 = vmatpush2.bf16.xpose.msra.mxu0 0
  %1346 = vmatprep.subr.bf16.mxu0 0
  %1347 = vmatpush2.bf16.xpose.msra.mxu0 0
  %1348 = vmatprep.mubr.bf16.mxu0 0
  %1349 = vmatmul.mubr.bf16.gmra.mxu0 %v1311
  %v1350 = vpop.f32.mrf.mxu0
  %v1351 = vadd.f32 0.0, %v1350
  %v1352 = vpop.f32.mrf.mxu0
  %v1353 = vpop.f32.mrf.mxu0
  %v1354 = vpop.f32.mrf.mxu0
  %1355 = vdwg.mxu0
  %v1357 = vsel %vm1125, %v1114, 0
  %v1360 = vsel %vm1125, %v1122, 0
  %1362 = vmatprep.subr.bf16.mxu0 0
  %1363 = vmatpush1.bf16.xpose.msra.mxu0 0
  %1364 = vmatprep.subr.bf16.mxu0 0
  %1365 = vmatpush1.bf16.xpose.msra.mxu0 0
  %1366 = vmatprep.subr.bf16.mxu0 0
  %1367 = vmatpush1.bf16.xpose.msra.mxu0 0
  %1368 = vmatprep.subr.bf16.mxu0 0
  %1369 = vmatpush1.bf16.xpose.msra.mxu0 0
  %1370 = vmatprep.subr.bf16.mxu0 0
  %1371 = vmatpush1.bf16.xpose.msra.mxu0 0
  %1372 = vmatprep.subr.bf16.mxu0 0
  %1373 = vmatpush1.bf16.xpose.msra.mxu0 0
  %1374 = vmatprep.subr.bf16.mxu0 0
  %1375 = vmatpush1.bf16.xpose.msra.mxu0 0
  %1376 = vmatprep.subr.bf16.mxu0 0
  %1377 = vmatpush1.bf16.xpose.msra.mxu0 %v1360
  %1378 = vmatprep.subr.bf16.mxu0 0
  %1379 = vmatpush2.bf16.xpose.msra.mxu0 0
  %1380 = vmatprep.subr.bf16.mxu0 0
  %1381 = vmatpush2.bf16.xpose.msra.mxu0 0
  %1382 = vmatprep.subr.bf16.mxu0 0
  %1383 = vmatpush2.bf16.xpose.msra.mxu0 0
  %1384 = vmatprep.subr.bf16.mxu0 0
  %1385 = vmatpush2.bf16.xpose.msra.mxu0 0
  %1386 = vmatprep.subr.bf16.mxu0 0
  %1387 = vmatpush2.bf16.xpose.msra.mxu0 0
  %1388 = vmatprep.subr.bf16.mxu0 0
  %1389 = vmatpush2.bf16.xpose.msra.mxu0 0
  %1390 = vmatprep.subr.bf16.mxu0 0
  %1391 = vmatpush2.bf16.xpose.msra.mxu0 0
  %1392 = vmatprep.subr.bf16.mxu0 0
  %1393 = vmatpush2.bf16.xpose.msra.mxu0 0
  %1394 = vmatprep.mubr.bf16.mxu0 0
  %1395 = vmatmul.mubr.bf16.gmra.mxu0 %v1357
  %v1396 = vpop.f32.mrf.mxu0
  %v1397 = vadd.f32 0.0, %v1396
  %v1398 = vpop.f32.mrf.mxu0
  %v1399 = vpop.f32.mrf.mxu0
  %v1400 = vpop.f32.mrf.mxu0
  %1401 = vdwg.mxu0
  %v1403 = vsel %vm1125, %v1115, 0
  %v1406 = vsel %vm1125, %v1123, 0
  %1408 = vmatprep.subr.bf16.mxu0 0
  %1409 = vmatpush1.bf16.xpose.msra.mxu0 0
  %1410 = vmatprep.subr.bf16.mxu0 0
  %1411 = vmatpush1.bf16.xpose.msra.mxu0 0
  %1412 = vmatprep.subr.bf16.mxu0 0
  %1413 = vmatpush1.bf16.xpose.msra.mxu0 0
  %1414 = vmatprep.subr.bf16.mxu0 0
  %1415 = vmatpush1.bf16.xpose.msra.mxu0 0
  %1416 = vmatprep.subr.bf16.mxu0 0
  %1417 = vmatpush1.bf16.xpose.msra.mxu0 0
  %1418 = vmatprep.subr.bf16.mxu0 0
  %1419 = vmatpush1.bf16.xpose.msra.mxu0 0
  %1420 = vmatprep.subr.bf16.mxu0 0
  %1421 = vmatpush1.bf16.xpose.msra.mxu0 0
  %1422 = vmatprep.subr.bf16.mxu0 0
  %1423 = vmatpush1.bf16.xpose.msra.mxu0 %v1406
  %1424 = vmatprep.subr.bf16.mxu0 0
  %1425 = vmatpush2.bf16.xpose.msra.mxu0 0
  %1426 = vmatprep.subr.bf16.mxu0 0
  %1427 = vmatpush2.bf16.xpose.msra.mxu0 0
  %1428 = vmatprep.subr.bf16.mxu0 0
  %1429 = vmatpush2.bf16.xpose.msra.mxu0 0
  %1430 = vmatprep.subr.bf16.mxu0 0
  %1431 = vmatpush2.bf16.xpose.msra.mxu0 0
  %1432 = vmatprep.subr.bf16.mxu0 0
  %1433 = vmatpush2.bf16.xpose.msra.mxu0 0
  %1434 = vmatprep.subr.bf16.mxu0 0
  %1435 = vmatpush2.bf16.xpose.msra.mxu0 0
  %1436 = vmatprep.subr.bf16.mxu0 0
  %1437 = vmatpush2.bf16.xpose.msra.mxu0 0
  %1438 = vmatprep.subr.bf16.mxu0 0
  %1439 = vmatpush2.bf16.xpose.msra.mxu0 0
  %1440 = vmatprep.mubr.bf16.mxu0 0
  %1441 = vmatmul.mubr.bf16.gmra.mxu0 %v1403
  %v1442 = vpop.f32.mrf.mxu0
  %v1443 = vadd.f32 0.0, %v1442
  %v1444 = vpop.f32.mrf.mxu0
  %v1445 = vpop.f32.mrf.mxu0
  %v1446 = vpop.f32.mrf.mxu0
  %1447 = vdwg.mxu0
  %v1449 = vsel %vm1125, %v1116, 0
  %v1452 = vsel %vm1125, %v1124, 0
  %1454 = vmatprep.subr.bf16.mxu0 0
  %1455 = vmatpush1.bf16.xpose.msra.mxu0 0
  %1456 = vmatprep.subr.bf16.mxu0 0
  %1457 = vmatpush1.bf16.xpose.msra.mxu0 0
  %1458 = vmatprep.subr.bf16.mxu0 0
  %1459 = vmatpush1.bf16.xpose.msra.mxu0 0
  %1460 = vmatprep.subr.bf16.mxu0 0
  %1461 = vmatpush1.bf16.xpose.msra.mxu0 0
  %1462 = vmatprep.subr.bf16.mxu0 0
  %1463 = vmatpush1.bf16.xpose.msra.mxu0 0
  %1464 = vmatprep.subr.bf16.mxu0 0
  %1465 = vmatpush1.bf16.xpose.msra.mxu0 0
  %1466 = vmatprep.subr.bf16.mxu0 0
  %1467 = vmatpush1.bf16.xpose.msra.mxu0 0
  %1468 = vmatprep.subr.bf16.mxu0 0
  %1469 = vmatpush1.bf16.xpose.msra.mxu0 %v1452
  %1470 = vmatprep.subr.bf16.mxu0 0
  %1471 = vmatpush2.bf16.xpose.msra.mxu0 0
  %1472 = vmatprep.subr.bf16.mxu0 0
  %1473 = vmatpush2.bf16.xpose.msra.mxu0 0
  %1474 = vmatprep.subr.bf16.mxu0 0
  %1475 = vmatpush2.bf16.xpose.msra.mxu0 0
  %1476 = vmatprep.subr.bf16.mxu0 0
  %1477 = vmatpush2.bf16.xpose.msra.mxu0 0
  %1478 = vmatprep.subr.bf16.mxu0 0
  %1479 = vmatpush2.bf16.xpose.msra.mxu0 0
  %1480 = vmatprep.subr.bf16.mxu0 0
  %1481 = vmatpush2.bf16.xpose.msra.mxu0 0
  %1482 = vmatprep.subr.bf16.mxu0 0
  %1483 = vmatpush2.bf16.xpose.msra.mxu0 0
  %1484 = vmatprep.subr.bf16.mxu0 0
  %1485 = vmatpush2.bf16.xpose.msra.mxu0 0
  %1486 = vmatprep.mubr.bf16.mxu0 0
  %1487 = vmatmul.mubr.bf16.gmra.mxu0 %v1449
  %v1488 = vpop.f32.mrf.mxu0
  %v1489 = vadd.f32 0.0, %v1488
  %v1490 = vpop.f32.mrf.mxu0
  %v1491 = vpop.f32.mrf.mxu0
  %v1492 = vpop.f32.mrf.mxu0
  %1493 = vdwg.mxu0
  %v1494 = vmul.f32 %v1167, 0.35355338
  %v1495 = vmul.f32 %v1213, 0.35355338
  %v1496 = vmul.f32 %v1259, 0.35355338
  %v1497 = vmul.f32 %v1305, 0.35355338
  %v1498 = vmul.f32 %v1351, 0.35355338
  %v1499 = vmul.f32 %v1397, 0.35355338
  %v1500 = vmul.f32 %v1443, 0.35355338
  %v1501 = vmul.f32 %v1489, 0.35355338
  %vm1502 = vcmask 9216
  %v1503 = vsel %vm1502, %v1494, -inf
  %1504 = vmax.xlane.f32.xlu0 %v1503
  %v1505 = vpop.xlane.xlu0 %1504
  %v1506 = vsel %vm1502, %v1495, -inf
  %1507 = vmax.xlane.f32.xlu0 %v1506
  %v1508 = vpop.xlane.xlu0 %1507
  %v1509 = vsel %vm1502, %v1496, -inf
  %1510 = vmax.xlane.f32.xlu0 %v1509
  %v1511 = vpop.xlane.xlu0 %1510
  %v1512 = vsel %vm1502, %v1497, -inf
  %1513 = vmax.xlane.f32.xlu0 %v1512
  %v1514 = vpop.xlane.xlu0 %1513
  %v1515 = vsel %vm1502, %v1498, -inf
  %1516 = vmax.xlane.f32.xlu0 %v1515
  %v1517 = vpop.xlane.xlu0 %1516
  %v1518 = vsel %vm1502, %v1499, -inf
  %1519 = vmax.xlane.f32.xlu0 %v1518
  %v1520 = vpop.xlane.xlu0 %1519
  %v1521 = vsel %vm1502, %v1500, -inf
  %1522 = vmax.xlane.f32.xlu0 %v1521
  %v1523 = vpop.xlane.xlu0 %1522
  %v1524 = vsel %vm1502, %v1501, -inf
  %1525 = vmax.xlane.f32.xlu0 %v1524
  %v1526 = vpop.xlane.xlu0 %1525
  %v1527 = vsub.f32 %v1494, %v1505
  %v1528 = vsub.f32 %v1495, %v1508
  %v1529 = vsub.f32 %v1496, %v1511
  %v1530 = vsub.f32 %v1497, %v1514
  %v1531 = vsub.f32 %v1498, %v1517
  %v1532 = vsub.f32 %v1499, %v1520
  %v1533 = vsub.f32 %v1500, %v1523
  %v1534 = vsub.f32 %v1501, %v1526
  %v1535 = vmul.f32 %v1527, 1.442695
  %v1536 = vpow.pop %v1535
  %v1537 = vmul.f32 %v1528, 1.442695
  %v1538 = vpow.pop %v1537
  %v1539 = vmul.f32 %v1529, 1.442695
  %v1540 = vpow.pop %v1539
  %v1541 = vmul.f32 %v1530, 1.442695
  %v1542 = vpow.pop %v1541
  %v1543 = vmul.f32 %v1531, 1.442695
  %v1544 = vpow.pop %v1543
  %v1545 = vmul.f32 %v1532, 1.442695
  %v1546 = vpow.pop %v1545
  %v1547 = vmul.f32 %v1533, 1.442695
  %v1548 = vpow.pop %v1547
  %v1549 = vmul.f32 %v1534, 1.442695
  %v1550 = vpow.pop %v1549
  %v1551 = vsel %vm1502, %v1536, 0.0
  %1552 = vadd.xlane.f32.xlu0 %v1551
  %v1553 = vpop.xlane.xlu0 %1552
  %v1554 = vsel %vm1502, %v1538, 0.0
  %1555 = vadd.xlane.f32.xlu0 %v1554
  %v1556 = vpop.xlane.xlu0 %1555
  %v1557 = vsel %vm1502, %v1540, 0.0
  %1558 = vadd.xlane.f32.xlu0 %v1557
  %v1559 = vpop.xlane.xlu0 %1558
  %v1560 = vsel %vm1502, %v1542, 0.0
  %1561 = vadd.xlane.f32.xlu0 %v1560
  %v1562 = vpop.xlane.xlu0 %1561
  %v1563 = vsel %vm1502, %v1544, 0.0
  %1564 = vadd.xlane.f32.xlu0 %v1563
  %v1565 = vpop.xlane.xlu0 %1564
  %v1566 = vsel %vm1502, %v1546, 0.0
  %1567 = vadd.xlane.f32.xlu0 %v1566
  %v1568 = vpop.xlane.xlu0 %1567
  %v1569 = vsel %vm1502, %v1548, 0.0
  %1570 = vadd.xlane.f32.xlu0 %v1569
  %v1571 = vpop.xlane.xlu0 %1570
  %v1572 = vsel %vm1502, %v1550, 0.0
  %1573 = vadd.xlane.f32.xlu0 %v1572
  %v1574 = vpop.xlane.xlu0 %1573
  %v1575 = vrcp.pop %v1553
  %v1576 = vrcp.pop %v1556
  %v1577 = vrcp.pop %v1559
  %v1578 = vrcp.pop %v1562
  %v1579 = vrcp.pop %v1565
  %v1580 = vrcp.pop %v1568
  %v1581 = vrcp.pop %v1571
  %v1582 = vrcp.pop %v1574
  %v1583 = vmul.f32 %v1536, %v1575
  %v1584 = vmul.f32 %v1538, %v1576
  %v1585 = vmul.f32 %v1540, %v1577
  %v1586 = vmul.f32 %v1542, %v1578
  %v1587 = vmul.f32 %v1544, %v1579
  %v1588 = vmul.f32 %v1546, %v1580
  %v1589 = vmul.f32 %v1548, %v1581
  %v1590 = vmul.f32 %v1550, %v1582
  %v1591 = vpack.c.bf16 %v1583, %v1583
  %v1592 = vpack.c.bf16 %v1584, %v1584
  %v1593 = vpack.c.bf16 %v1585, %v1585
  %v1594 = vpack.c.bf16 %v1586, %v1586
  %v1595 = vpack.c.bf16 %v1587, %v1587
  %v1596 = vpack.c.bf16 %v1588, %v1588
  %v1597 = vpack.c.bf16 %v1589, %v1589
  %v1598 = vpack.c.bf16 %v1590, %v1590
  %v1599 = vpack.c.bf16 %v824, %v824
  %v1600 = vpack.c.bf16 %v864, %v864
  %v1601 = vpack.c.bf16 %v904, %v904
  %v1602 = vpack.c.bf16 %v944, %v944
  %v1603 = vpack.c.bf16 %v984, %v984
  %v1604 = vpack.c.bf16 %v1024, %v1024
  %v1605 = vpack.c.bf16 %v1064, %v1064
  %v1606 = vpack.c.bf16 %v1104, %v1104
  %vm1607 = vcmask 15360
  %v1609 = vsel %vm1607, %v1591, 0
  %vm1611 = vcmask 1040384
  %v1613 = vsel %vm1611, %v1599, 0
  %1615 = vmatprep.subr.bf16.mxu0 0
  %1616 = vmatpush1.bf16.msra.mxu0 0
  %1617 = vmatprep.subr.bf16.mxu0 0
  %1618 = vmatpush1.bf16.msra.mxu0 0
  %1619 = vmatprep.subr.bf16.mxu0 0
  %1620 = vmatpush1.bf16.msra.mxu0 0
  %1621 = vmatprep.subr.bf16.mxu0 0
  %1622 = vmatpush1.bf16.msra.mxu0 0
  %1623 = vmatprep.subr.bf16.mxu0 0
  %1624 = vmatpush1.bf16.msra.mxu0 0
  %1625 = vmatprep.subr.bf16.mxu0 0
  %1626 = vmatpush1.bf16.msra.mxu0 0
  %1627 = vmatprep.subr.bf16.mxu0 0
  %1628 = vmatpush1.bf16.msra.mxu0 0
  %1629 = vmatprep.subr.bf16.mxu0 0
  %1630 = vmatpush1.bf16.msra.mxu0 %v1613
  %1631 = vmatprep.subr.bf16.mxu0 0
  %1632 = vmatpush2.bf16.msra.mxu0 0
  %1633 = vmatprep.subr.bf16.mxu0 0
  %1634 = vmatpush2.bf16.msra.mxu0 0
  %1635 = vmatprep.subr.bf16.mxu0 0
  %1636 = vmatpush2.bf16.msra.mxu0 0
  %1637 = vmatprep.subr.bf16.mxu0 0
  %1638 = vmatpush2.bf16.msra.mxu0 0
  %1639 = vmatprep.subr.bf16.mxu0 0
  %1640 = vmatpush2.bf16.msra.mxu0 0
  %1641 = vmatprep.subr.bf16.mxu0 0
  %1642 = vmatpush2.bf16.msra.mxu0 0
  %1643 = vmatprep.subr.bf16.mxu0 0
  %1644 = vmatpush2.bf16.msra.mxu0 0
  %1645 = vmatprep.subr.bf16.mxu0 0
  %1646 = vmatpush2.bf16.msra.mxu0 0
  %1647 = vmatprep.mubr.bf16.mxu0 0
  %1648 = vmatmul.mubr.bf16.gmra.mxu0 %v1609
  %v1649 = vpop.f32.mrf.mxu0
  %v1650 = vadd.f32 0.0, %v1649
  %v1651 = vpop.f32.mrf.mxu0
  %v1652 = vpop.f32.mrf.mxu0
  %v1653 = vpop.f32.mrf.mxu0
  %1654 = vdwg.mxu0
  %v1656 = vsel %vm1607, %v1592, 0
  %v1659 = vsel %vm1611, %v1600, 0
  %1661 = vmatprep.subr.bf16.mxu0 0
  %1662 = vmatpush1.bf16.msra.mxu0 0
  %1663 = vmatprep.subr.bf16.mxu0 0
  %1664 = vmatpush1.bf16.msra.mxu0 0
  %1665 = vmatprep.subr.bf16.mxu0 0
  %1666 = vmatpush1.bf16.msra.mxu0 0
  %1667 = vmatprep.subr.bf16.mxu0 0
  %1668 = vmatpush1.bf16.msra.mxu0 0
  %1669 = vmatprep.subr.bf16.mxu0 0
  %1670 = vmatpush1.bf16.msra.mxu0 0
  %1671 = vmatprep.subr.bf16.mxu0 0
  %1672 = vmatpush1.bf16.msra.mxu0 0
  %1673 = vmatprep.subr.bf16.mxu0 0
  %1674 = vmatpush1.bf16.msra.mxu0 0
  %1675 = vmatprep.subr.bf16.mxu0 0
  %1676 = vmatpush1.bf16.msra.mxu0 %v1659
  %1677 = vmatprep.subr.bf16.mxu0 0
  %1678 = vmatpush2.bf16.msra.mxu0 0
  %1679 = vmatprep.subr.bf16.mxu0 0
  %1680 = vmatpush2.bf16.msra.mxu0 0
  %1681 = vmatprep.subr.bf16.mxu0 0
  %1682 = vmatpush2.bf16.msra.mxu0 0
  %1683 = vmatprep.subr.bf16.mxu0 0
  %1684 = vmatpush2.bf16.msra.mxu0 0
  %1685 = vmatprep.subr.bf16.mxu0 0
  %1686 = vmatpush2.bf16.msra.mxu0 0
  %1687 = vmatprep.subr.bf16.mxu0 0
  %1688 = vmatpush2.bf16.msra.mxu0 0
  %1689 = vmatprep.subr.bf16.mxu0 0
  %1690 = vmatpush2.bf16.msra.mxu0 0
  %1691 = vmatprep.subr.bf16.mxu0 0
  %1692 = vmatpush2.bf16.msra.mxu0 0
  %1693 = vmatprep.mubr.bf16.mxu0 0
  %1694 = vmatmul.mubr.bf16.gmra.mxu0 %v1656
  %v1695 = vpop.f32.mrf.mxu0
  %v1696 = vadd.f32 0.0, %v1695
  %v1697 = vpop.f32.mrf.mxu0
  %v1698 = vpop.f32.mrf.mxu0
  %v1699 = vpop.f32.mrf.mxu0
  %1700 = vdwg.mxu0
  %v1702 = vsel %vm1607, %v1593, 0
  %v1705 = vsel %vm1611, %v1601, 0
  %1707 = vmatprep.subr.bf16.mxu0 0
  %1708 = vmatpush1.bf16.msra.mxu0 0
  %1709 = vmatprep.subr.bf16.mxu0 0
  %1710 = vmatpush1.bf16.msra.mxu0 0
  %1711 = vmatprep.subr.bf16.mxu0 0
  %1712 = vmatpush1.bf16.msra.mxu0 0
  %1713 = vmatprep.subr.bf16.mxu0 0
  %1714 = vmatpush1.bf16.msra.mxu0 0
  %1715 = vmatprep.subr.bf16.mxu0 0
  %1716 = vmatpush1.bf16.msra.mxu0 0
  %1717 = vmatprep.subr.bf16.mxu0 0
  %1718 = vmatpush1.bf16.msra.mxu0 0
  %1719 = vmatprep.subr.bf16.mxu0 0
  %1720 = vmatpush1.bf16.msra.mxu0 0
  %1721 = vmatprep.subr.bf16.mxu0 0
  %1722 = vmatpush1.bf16.msra.mxu0 %v1705
  %1723 = vmatprep.subr.bf16.mxu0 0
  %1724 = vmatpush2.bf16.msra.mxu0 0
  %1725 = vmatprep.subr.bf16.mxu0 0
  %1726 = vmatpush2.bf16.msra.mxu0 0
  %1727 = vmatprep.subr.bf16.mxu0 0
  %1728 = vmatpush2.bf16.msra.mxu0 0
  %1729 = vmatprep.subr.bf16.mxu0 0
  %1730 = vmatpush2.bf16.msra.mxu0 0
  %1731 = vmatprep.subr.bf16.mxu0 0
  %1732 = vmatpush2.bf16.msra.mxu0 0
  %1733 = vmatprep.subr.bf16.mxu0 0
  %1734 = vmatpush2.bf16.msra.mxu0 0
  %1735 = vmatprep.subr.bf16.mxu0 0
  %1736 = vmatpush2.bf16.msra.mxu0 0
  %1737 = vmatprep.subr.bf16.mxu0 0
  %1738 = vmatpush2.bf16.msra.mxu0 0
  %1739 = vmatprep.mubr.bf16.mxu0 0
  %1740 = vmatmul.mubr.bf16.gmra.mxu0 %v1702
  %v1741 = vpop.f32.mrf.mxu0
  %v1742 = vadd.f32 0.0, %v1741
  %v1743 = vpop.f32.mrf.mxu0
  %v1744 = vpop.f32.mrf.mxu0
  %v1745 = vpop.f32.mrf.mxu0
  %1746 = vdwg.mxu0
  %v1748 = vsel %vm1607, %v1594, 0
  %v1751 = vsel %vm1611, %v1602, 0
  %1753 = vmatprep.subr.bf16.mxu0 0
  %1754 = vmatpush1.bf16.msra.mxu0 0
  %1755 = vmatprep.subr.bf16.mxu0 0
  %1756 = vmatpush1.bf16.msra.mxu0 0
  %1757 = vmatprep.subr.bf16.mxu0 0
  %1758 = vmatpush1.bf16.msra.mxu0 0
  %1759 = vmatprep.subr.bf16.mxu0 0
  %1760 = vmatpush1.bf16.msra.mxu0 0
  %1761 = vmatprep.subr.bf16.mxu0 0
  %1762 = vmatpush1.bf16.msra.mxu0 0
  %1763 = vmatprep.subr.bf16.mxu0 0
  %1764 = vmatpush1.bf16.msra.mxu0 0
  %1765 = vmatprep.subr.bf16.mxu0 0
  %1766 = vmatpush1.bf16.msra.mxu0 0
  %1767 = vmatprep.subr.bf16.mxu0 0
  %1768 = vmatpush1.bf16.msra.mxu0 %v1751
  %1769 = vmatprep.subr.bf16.mxu0 0
  %1770 = vmatpush2.bf16.msra.mxu0 0
  %1771 = vmatprep.subr.bf16.mxu0 0
  %1772 = vmatpush2.bf16.msra.mxu0 0
  %1773 = vmatprep.subr.bf16.mxu0 0
  %1774 = vmatpush2.bf16.msra.mxu0 0
  %1775 = vmatprep.subr.bf16.mxu0 0
  %1776 = vmatpush2.bf16.msra.mxu0 0
  %1777 = vmatprep.subr.bf16.mxu0 0
  %1778 = vmatpush2.bf16.msra.mxu0 0
  %1779 = vmatprep.subr.bf16.mxu0 0
  %1780 = vmatpush2.bf16.msra.mxu0 0
  %1781 = vmatprep.subr.bf16.mxu0 0
  %1782 = vmatpush2.bf16.msra.mxu0 0
  %1783 = vmatprep.subr.bf16.mxu0 0
  %1784 = vmatpush2.bf16.msra.mxu0 0
  %1785 = vmatprep.mubr.bf16.mxu0 0
  %1786 = vmatmul.mubr.bf16.gmra.mxu0 %v1748
  %v1787 = vpop.f32.mrf.mxu0
  %v1788 = vadd.f32 0.0, %v1787
  %v1789 = vpop.f32.mrf.mxu0
  %v1790 = vpop.f32.mrf.mxu0
  %v1791 = vpop.f32.mrf.mxu0
  %1792 = vdwg.mxu0
  %v1794 = vsel %vm1607, %v1595, 0
  %v1797 = vsel %vm1611, %v1603, 0
  %1799 = vmatprep.subr.bf16.mxu0 0
  %1800 = vmatpush1.bf16.msra.mxu0 0
  %1801 = vmatprep.subr.bf16.mxu0 0
  %1802 = vmatpush1.bf16.msra.mxu0 0
  %1803 = vmatprep.subr.bf16.mxu0 0
  %1804 = vmatpush1.bf16.msra.mxu0 0
  %1805 = vmatprep.subr.bf16.mxu0 0
  %1806 = vmatpush1.bf16.msra.mxu0 0
  %1807 = vmatprep.subr.bf16.mxu0 0
  %1808 = vmatpush1.bf16.msra.mxu0 0
  %1809 = vmatprep.subr.bf16.mxu0 0
  %1810 = vmatpush1.bf16.msra.mxu0 0
  %1811 = vmatprep.subr.bf16.mxu0 0
  %1812 = vmatpush1.bf16.msra.mxu0 0
  %1813 = vmatprep.subr.bf16.mxu0 0
  %1814 = vmatpush1.bf16.msra.mxu0 %v1797
  %1815 = vmatprep.subr.bf16.mxu0 0
  %1816 = vmatpush2.bf16.msra.mxu0 0
  %1817 = vmatprep.subr.bf16.mxu0 0
  %1818 = vmatpush2.bf16.msra.mxu0 0
  %1819 = vmatprep.subr.bf16.mxu0 0
  %1820 = vmatpush2.bf16.msra.mxu0 0
  %1821 = vmatprep.subr.bf16.mxu0 0
  %1822 = vmatpush2.bf16.msra.mxu0 0
  %1823 = vmatprep.subr.bf16.mxu0 0
  %1824 = vmatpush2.bf16.msra.mxu0 0
  %1825 = vmatprep.subr.bf16.mxu0 0
  %1826 = vmatpush2.bf16.msra.mxu0 0
  %1827 = vmatprep.subr.bf16.mxu0 0
  %1828 = vmatpush2.bf16.msra.mxu0 0
  %1829 = vmatprep.subr.bf16.mxu0 0
  %1830 = vmatpush2.bf16.msra.mxu0 0
  %1831 = vmatprep.mubr.bf16.mxu0 0
  %1832 = vmatmul.mubr.bf16.gmra.mxu0 %v1794
  %v1833 = vpop.f32.mrf.mxu0
  %v1834 = vadd.f32 0.0, %v1833
  %v1835 = vpop.f32.mrf.mxu0
  %v1836 = vpop.f32.mrf.mxu0
  %v1837 = vpop.f32.mrf.mxu0
  %1838 = vdwg.mxu0
  %v1840 = vsel %vm1607, %v1596, 0
  %v1843 = vsel %vm1611, %v1604, 0
  %1845 = vmatprep.subr.bf16.mxu0 0
  %1846 = vmatpush1.bf16.msra.mxu0 0
  %1847 = vmatprep.subr.bf16.mxu0 0
  %1848 = vmatpush1.bf16.msra.mxu0 0
  %1849 = vmatprep.subr.bf16.mxu0 0
  %1850 = vmatpush1.bf16.msra.mxu0 0
  %1851 = vmatprep.subr.bf16.mxu0 0
  %1852 = vmatpush1.bf16.msra.mxu0 0
  %1853 = vmatprep.subr.bf16.mxu0 0
  %1854 = vmatpush1.bf16.msra.mxu0 0
  %1855 = vmatprep.subr.bf16.mxu0 0
  %1856 = vmatpush1.bf16.msra.mxu0 0
  %1857 = vmatprep.subr.bf16.mxu0 0
  %1858 = vmatpush1.bf16.msra.mxu0 0
  %1859 = vmatprep.subr.bf16.mxu0 0
  %1860 = vmatpush1.bf16.msra.mxu0 %v1843
  %1861 = vmatprep.subr.bf16.mxu0 0
  %1862 = vmatpush2.bf16.msra.mxu0 0
  %1863 = vmatprep.subr.bf16.mxu0 0
  %1864 = vmatpush2.bf16.msra.mxu0 0
  %1865 = vmatprep.subr.bf16.mxu0 0
  %1866 = vmatpush2.bf16.msra.mxu0 0
  %1867 = vmatprep.subr.bf16.mxu0 0
  %1868 = vmatpush2.bf16.msra.mxu0 0
  %1869 = vmatprep.subr.bf16.mxu0 0
  %1870 = vmatpush2.bf16.msra.mxu0 0
  %1871 = vmatprep.subr.bf16.mxu0 0
  %1872 = vmatpush2.bf16.msra.mxu0 0
  %1873 = vmatprep.subr.bf16.mxu0 0
  %1874 = vmatpush2.bf16.msra.mxu0 0
  %1875 = vmatprep.subr.bf16.mxu0 0
  %1876 = vmatpush2.bf16.msra.mxu0 0
  %1877 = vmatprep.mubr.bf16.mxu0 0
  %1878 = vmatmul.mubr.bf16.gmra.mxu0 %v1840
  %v1879 = vpop.f32.mrf.mxu0
  %v1880 = vadd.f32 0.0, %v1879
  %v1881 = vpop.f32.mrf.mxu0
  %v1882 = vpop.f32.mrf.mxu0
  %v1883 = vpop.f32.mrf.mxu0
  %1884 = vdwg.mxu0
  %v1886 = vsel %vm1607, %v1597, 0
  %v1889 = vsel %vm1611, %v1605, 0
  %1891 = vmatprep.subr.bf16.mxu0 0
  %1892 = vmatpush1.bf16.msra.mxu0 0
  %1893 = vmatprep.subr.bf16.mxu0 0
  %1894 = vmatpush1.bf16.msra.mxu0 0
  %1895 = vmatprep.subr.bf16.mxu0 0
  %1896 = vmatpush1.bf16.msra.mxu0 0
  %1897 = vmatprep.subr.bf16.mxu0 0
  %1898 = vmatpush1.bf16.msra.mxu0 0
  %1899 = vmatprep.subr.bf16.mxu0 0
  %1900 = vmatpush1.bf16.msra.mxu0 0
  %1901 = vmatprep.subr.bf16.mxu0 0
  %1902 = vmatpush1.bf16.msra.mxu0 0
  %1903 = vmatprep.subr.bf16.mxu0 0
  %1904 = vmatpush1.bf16.msra.mxu0 0
  %1905 = vmatprep.subr.bf16.mxu0 0
  %1906 = vmatpush1.bf16.msra.mxu0 %v1889
  %1907 = vmatprep.subr.bf16.mxu0 0
  %1908 = vmatpush2.bf16.msra.mxu0 0
  %1909 = vmatprep.subr.bf16.mxu0 0
  %1910 = vmatpush2.bf16.msra.mxu0 0
  %1911 = vmatprep.subr.bf16.mxu0 0
  %1912 = vmatpush2.bf16.msra.mxu0 0
  %1913 = vmatprep.subr.bf16.mxu0 0
  %1914 = vmatpush2.bf16.msra.mxu0 0
  %1915 = vmatprep.subr.bf16.mxu0 0
  %1916 = vmatpush2.bf16.msra.mxu0 0
  %1917 = vmatprep.subr.bf16.mxu0 0
  %1918 = vmatpush2.bf16.msra.mxu0 0
  %1919 = vmatprep.subr.bf16.mxu0 0
  %1920 = vmatpush2.bf16.msra.mxu0 0
  %1921 = vmatprep.subr.bf16.mxu0 0
  %1922 = vmatpush2.bf16.msra.mxu0 0
  %1923 = vmatprep.mubr.bf16.mxu0 0
  %1924 = vmatmul.mubr.bf16.gmra.mxu0 %v1886
  %v1925 = vpop.f32.mrf.mxu0
  %v1926 = vadd.f32 0.0, %v1925
  %v1927 = vpop.f32.mrf.mxu0
  %v1928 = vpop.f32.mrf.mxu0
  %v1929 = vpop.f32.mrf.mxu0
  %1930 = vdwg.mxu0
  %v1932 = vsel %vm1607, %v1598, 0
  %v1935 = vsel %vm1611, %v1606, 0
  %1937 = vmatprep.subr.bf16.mxu0 0
  %1938 = vmatpush1.bf16.msra.mxu0 0
  %1939 = vmatprep.subr.bf16.mxu0 0
  %1940 = vmatpush1.bf16.msra.mxu0 0
  %1941 = vmatprep.subr.bf16.mxu0 0
  %1942 = vmatpush1.bf16.msra.mxu0 0
  %1943 = vmatprep.subr.bf16.mxu0 0
  %1944 = vmatpush1.bf16.msra.mxu0 0
  %1945 = vmatprep.subr.bf16.mxu0 0
  %1946 = vmatpush1.bf16.msra.mxu0 0
  %1947 = vmatprep.subr.bf16.mxu0 0
  %1948 = vmatpush1.bf16.msra.mxu0 0
  %1949 = vmatprep.subr.bf16.mxu0 0
  %1950 = vmatpush1.bf16.msra.mxu0 0
  %1951 = vmatprep.subr.bf16.mxu0 0
  %1952 = vmatpush1.bf16.msra.mxu0 %v1935
  %1953 = vmatprep.subr.bf16.mxu0 0
  %1954 = vmatpush2.bf16.msra.mxu0 0
  %1955 = vmatprep.subr.bf16.mxu0 0
  %1956 = vmatpush2.bf16.msra.mxu0 0
  %1957 = vmatprep.subr.bf16.mxu0 0
  %1958 = vmatpush2.bf16.msra.mxu0 0
  %1959 = vmatprep.subr.bf16.mxu0 0
  %1960 = vmatpush2.bf16.msra.mxu0 0
  %1961 = vmatprep.subr.bf16.mxu0 0
  %1962 = vmatpush2.bf16.msra.mxu0 0
  %1963 = vmatprep.subr.bf16.mxu0 0
  %1964 = vmatpush2.bf16.msra.mxu0 0
  %1965 = vmatprep.subr.bf16.mxu0 0
  %1966 = vmatpush2.bf16.msra.mxu0 0
  %1967 = vmatprep.subr.bf16.mxu0 0
  %1968 = vmatpush2.bf16.msra.mxu0 0
  %1969 = vmatprep.mubr.bf16.mxu0 0
  %1970 = vmatmul.mubr.bf16.gmra.mxu0 %v1932
  %v1971 = vpop.f32.mrf.mxu0
  %v1972 = vadd.f32 0.0, %v1971
  %v1973 = vpop.f32.mrf.mxu0
  %v1974 = vpop.f32.mrf.mxu0
  %v1975 = vpop.f32.mrf.mxu0
  %1976 = vdwg.mxu0
  %v1977 = vld [vmem:[%s7] sm:$0xf]
  %v1978 = vpack.c.bf16 %v1650, %v1650
  %v1979 = vpack.c.bf16 %v1696, %v1696
  %v1980 = vpack.c.bf16 %v1742, %v1742
  %v1981 = vpack.c.bf16 %v1788, %v1788
  %v1982 = vpack.c.bf16 %v1834, %v1834
  %v1983 = vpack.c.bf16 %v1880, %v1880
  %v1984 = vpack.c.bf16 %v1926, %v1926
  %v1985 = vpack.c.bf16 %v1972, %v1972
  %s1986 = scalar_lea.vmem %s1, 16
  %v1987 = vld [vmem:[%s1986] sm:$0xf]
  %v1988 = vld [vmem:[%s1986 + $0x4] sm:$0xf]
  %v1989 = vld [vmem:[%s1986 + $0x8] sm:$0xf]
  %v1990 = vld [vmem:[%s1986 + $0xc] sm:$0xf]
  %s1991 = scalar_lea.vmem %s2, 16
  %v1992 = vld [vmem:[%s1991] sm:$0xf]
  %v1993 = vld [vmem:[%s1991 + $0x4] sm:$0xf]
  %v1994 = vld [vmem:[%s1991 + $0x8] sm:$0xf]
  %v1995 = vld [vmem:[%s1991 + $0xc] sm:$0xf]
  %s1996 = scalar_lea.vmem %s3, 16
  %v1997 = vld [vmem:[%s1996] sm:$0xf]
  %v1998 = vld [vmem:[%s1996 + $0x4] sm:$0xf]
  %v1999 = vld [vmem:[%s1996 + $0x8] sm:$0xf]
  %v2000 = vld [vmem:[%s1996 + $0xc] sm:$0xf]
  %s2001 = scalar_lea.vmem %s4, 1
  %v2002 = vld [vmem:[%s2001] sm:$0x1]
  %v2004 = vlaneseq
  %v2005 = vshrl.u32 %v2004, 7
  %v2006 = vsub.s32 0, %v2005
  %v2007 = vrot.slane %v2002, %v2006
  %v2013 = vunpack.c.l.b16 %v1987
  %v2014 = vunpack.c.l.b16 %v1988
  %v2015 = vunpack.c.l.b16 %v1989
  %v2016 = vunpack.c.l.b16 %v1990
  %v2017 = vpack.c.b16 %v2014, %v2013
  %v2018 = vpack.c.b16 %v2016, %v2015
  %2021 = vmatprep.subr.bf16.mxu0 0
  %2022 = vmatpush1.bf16.msra.mxu0 0
  %2023 = vmatprep.subr.bf16.mxu0 0
  %2024 = vmatpush1.bf16.msra.mxu0 0
  %2025 = vmatprep.subr.bf16.mxu0 0
  %2026 = vmatpush1.bf16.msra.mxu0 0
  %2027 = vmatprep.subr.bf16.mxu0 0
  %2028 = vmatpush1.bf16.msra.mxu0 0
  %2029 = vmatprep.subr.bf16.mxu0 0
  %2030 = vmatpush1.bf16.msra.mxu0 0
  %2031 = vmatprep.subr.bf16.mxu0 0
  %2032 = vmatpush1.bf16.msra.mxu0 0
  %2033 = vmatprep.subr.bf16.mxu0 0
  %2034 = vmatpush1.bf16.msra.mxu0 %v2018
  %2035 = vmatprep.subr.bf16.mxu0 0
  %2036 = vmatpush1.bf16.msra.mxu0 %v2017
  %2037 = vmatprep.subr.bf16.mxu0 0
  %2038 = vmatpush2.bf16.msra.mxu0 0
  %2039 = vmatprep.subr.bf16.mxu0 0
  %2040 = vmatpush2.bf16.msra.mxu0 0
  %2041 = vmatprep.subr.bf16.mxu0 0
  %2042 = vmatpush2.bf16.msra.mxu0 0
  %2043 = vmatprep.subr.bf16.mxu0 0
  %2044 = vmatpush2.bf16.msra.mxu0 0
  %2045 = vmatprep.subr.bf16.mxu0 0
  %2046 = vmatpush2.bf16.msra.mxu0 0
  %2047 = vmatprep.subr.bf16.mxu0 0
  %2048 = vmatpush2.bf16.msra.mxu0 0
  %2049 = vmatprep.subr.bf16.mxu0 0
  %2050 = vmatpush2.bf16.msra.mxu0 0
  %2051 = vmatprep.subr.bf16.mxu0 0
  %2052 = vmatpush2.bf16.msra.mxu0 0
  %2053 = vmatprep.mubr.bf16.mxu0 0
  %2054 = vmatmul.mubr.bf16.gmra.mxu0 %v88
  %v2055 = vpop.f32.mrf.mxu0
  %v2056 = vadd.f32 %v2007, %v2055
  %v2057 = vpop.f32.mrf.mxu0
  %v2058 = vpop.f32.mrf.mxu0
  %v2059 = vpop.f32.mrf.mxu0
  %2060 = vdwg.mxu0
  %2061 = vmatprep.subr.bf16.mxu0 0
  %2062 = vmatpush1.bf16.msra.mxu0 0
  %2063 = vmatprep.subr.bf16.mxu0 0
  %2064 = vmatpush1.bf16.msra.mxu0 0
  %2065 = vmatprep.subr.bf16.mxu0 0
  %2066 = vmatpush1.bf16.msra.mxu0 0
  %2067 = vmatprep.subr.bf16.mxu0 0
  %2068 = vmatpush1.bf16.msra.mxu0 0
  %2069 = vmatprep.subr.bf16.mxu0 0
  %2070 = vmatpush1.bf16.msra.mxu0 0
  %2071 = vmatprep.subr.bf16.mxu0 0
  %2072 = vmatpush1.bf16.msra.mxu0 0
  %2073 = vmatprep.subr.bf16.mxu0 0
  %2074 = vmatpush1.bf16.msra.mxu0 %v2018
  %2075 = vmatprep.subr.bf16.mxu0 0
  %2076 = vmatpush1.bf16.msra.mxu0 %v2017
  %2077 = vmatprep.subr.bf16.mxu0 0
  %2078 = vmatpush2.bf16.msra.mxu0 0
  %2079 = vmatprep.subr.bf16.mxu0 0
  %2080 = vmatpush2.bf16.msra.mxu0 0
  %2081 = vmatprep.subr.bf16.mxu0 0
  %2082 = vmatpush2.bf16.msra.mxu0 0
  %2083 = vmatprep.subr.bf16.mxu0 0
  %2084 = vmatpush2.bf16.msra.mxu0 0
  %2085 = vmatprep.subr.bf16.mxu0 0
  %2086 = vmatpush2.bf16.msra.mxu0 0
  %2087 = vmatprep.subr.bf16.mxu0 0
  %2088 = vmatpush2.bf16.msra.mxu0 0
  %2089 = vmatprep.subr.bf16.mxu0 0
  %2090 = vmatpush2.bf16.msra.mxu0 0
  %2091 = vmatprep.subr.bf16.mxu0 0
  %2092 = vmatpush2.bf16.msra.mxu0 0
  %2093 = vmatprep.mubr.bf16.mxu0 0
  %2094 = vmatmul.mubr.bf16.gmra.mxu0 %v131
  %v2095 = vpop.f32.mrf.mxu0
  %v2096 = vadd.f32 %v2007, %v2095
  %v2097 = vpop.f32.mrf.mxu0
  %v2098 = vpop.f32.mrf.mxu0
  %v2099 = vpop.f32.mrf.mxu0
  %2100 = vdwg.mxu0
  %2101 = vmatprep.subr.bf16.mxu0 0
  %2102 = vmatpush1.bf16.msra.mxu0 0
  %2103 = vmatprep.subr.bf16.mxu0 0
  %2104 = vmatpush1.bf16.msra.mxu0 0
  %2105 = vmatprep.subr.bf16.mxu0 0
  %2106 = vmatpush1.bf16.msra.mxu0 0
  %2107 = vmatprep.subr.bf16.mxu0 0
  %2108 = vmatpush1.bf16.msra.mxu0 0
  %2109 = vmatprep.subr.bf16.mxu0 0
  %2110 = vmatpush1.bf16.msra.mxu0 0
  %2111 = vmatprep.subr.bf16.mxu0 0
  %2112 = vmatpush1.bf16.msra.mxu0 0
  %2113 = vmatprep.subr.bf16.mxu0 0
  %2114 = vmatpush1.bf16.msra.mxu0 %v2018
  %2115 = vmatprep.subr.bf16.mxu0 0
  %2116 = vmatpush1.bf16.msra.mxu0 %v2017
  %2117 = vmatprep.subr.bf16.mxu0 0
  %2118 = vmatpush2.bf16.msra.mxu0 0
  %2119 = vmatprep.subr.bf16.mxu0 0
  %2120 = vmatpush2.bf16.msra.mxu0 0
  %2121 = vmatprep.subr.bf16.mxu0 0
  %2122 = vmatpush2.bf16.msra.mxu0 0
  %2123 = vmatprep.subr.bf16.mxu0 0
  %2124 = vmatpush2.bf16.msra.mxu0 0
  %2125 = vmatprep.subr.bf16.mxu0 0
  %2126 = vmatpush2.bf16.msra.mxu0 0
  %2127 = vmatprep.subr.bf16.mxu0 0
  %2128 = vmatpush2.bf16.msra.mxu0 0
  %2129 = vmatprep.subr.bf16.mxu0 0
  %2130 = vmatpush2.bf16.msra.mxu0 0
  %2131 = vmatprep.subr.bf16.mxu0 0
  %2132 = vmatpush2.bf16.msra.mxu0 0
  %2133 = vmatprep.mubr.bf16.mxu0 0
  %2134 = vmatmul.mubr.bf16.gmra.mxu0 %v174
  %v2135 = vpop.f32.mrf.mxu0
  %v2136 = vadd.f32 %v2007, %v2135
  %v2137 = vpop.f32.mrf.mxu0
  %v2138 = vpop.f32.mrf.mxu0
  %v2139 = vpop.f32.mrf.mxu0
  %2140 = vdwg.mxu0
  %2141 = vmatprep.subr.bf16.mxu0 0
  %2142 = vmatpush1.bf16.msra.mxu0 0
  %2143 = vmatprep.subr.bf16.mxu0 0
  %2144 = vmatpush1.bf16.msra.mxu0 0
  %2145 = vmatprep.subr.bf16.mxu0 0
  %2146 = vmatpush1.bf16.msra.mxu0 0
  %2147 = vmatprep.subr.bf16.mxu0 0
  %2148 = vmatpush1.bf16.msra.mxu0 0
  %2149 = vmatprep.subr.bf16.mxu0 0
  %2150 = vmatpush1.bf16.msra.mxu0 0
  %2151 = vmatprep.subr.bf16.mxu0 0
  %2152 = vmatpush1.bf16.msra.mxu0 0
  %2153 = vmatprep.subr.bf16.mxu0 0
  %2154 = vmatpush1.bf16.msra.mxu0 %v2018
  %2155 = vmatprep.subr.bf16.mxu0 0
  %2156 = vmatpush1.bf16.msra.mxu0 %v2017
  %2157 = vmatprep.subr.bf16.mxu0 0
  %2158 = vmatpush2.bf16.msra.mxu0 0
  %2159 = vmatprep.subr.bf16.mxu0 0
  %2160 = vmatpush2.bf16.msra.mxu0 0
  %2161 = vmatprep.subr.bf16.mxu0 0
  %2162 = vmatpush2.bf16.msra.mxu0 0
  %2163 = vmatprep.subr.bf16.mxu0 0
  %2164 = vmatpush2.bf16.msra.mxu0 0
  %2165 = vmatprep.subr.bf16.mxu0 0
  %2166 = vmatpush2.bf16.msra.mxu0 0
  %2167 = vmatprep.subr.bf16.mxu0 0
  %2168 = vmatpush2.bf16.msra.mxu0 0
  %2169 = vmatprep.subr.bf16.mxu0 0
  %2170 = vmatpush2.bf16.msra.mxu0 0
  %2171 = vmatprep.subr.bf16.mxu0 0
  %2172 = vmatpush2.bf16.msra.mxu0 0
  %2173 = vmatprep.mubr.bf16.mxu0 0
  %2174 = vmatmul.mubr.bf16.gmra.mxu0 %v217
  %v2175 = vpop.f32.mrf.mxu0
  %v2176 = vadd.f32 %v2007, %v2175
  %v2177 = vpop.f32.mrf.mxu0
  %v2178 = vpop.f32.mrf.mxu0
  %v2179 = vpop.f32.mrf.mxu0
  %2180 = vdwg.mxu0
  %2181 = vmatprep.subr.bf16.mxu0 0
  %2182 = vmatpush1.bf16.msra.mxu0 0
  %2183 = vmatprep.subr.bf16.mxu0 0
  %2184 = vmatpush1.bf16.msra.mxu0 0
  %2185 = vmatprep.subr.bf16.mxu0 0
  %2186 = vmatpush1.bf16.msra.mxu0 0
  %2187 = vmatprep.subr.bf16.mxu0 0
  %2188 = vmatpush1.bf16.msra.mxu0 0
  %2189 = vmatprep.subr.bf16.mxu0 0
  %2190 = vmatpush1.bf16.msra.mxu0 0
  %2191 = vmatprep.subr.bf16.mxu0 0
  %2192 = vmatpush1.bf16.msra.mxu0 0
  %2193 = vmatprep.subr.bf16.mxu0 0
  %2194 = vmatpush1.bf16.msra.mxu0 %v2018
  %2195 = vmatprep.subr.bf16.mxu0 0
  %2196 = vmatpush1.bf16.msra.mxu0 %v2017
  %2197 = vmatprep.subr.bf16.mxu0 0
  %2198 = vmatpush2.bf16.msra.mxu0 0
  %2199 = vmatprep.subr.bf16.mxu0 0
  %2200 = vmatpush2.bf16.msra.mxu0 0
  %2201 = vmatprep.subr.bf16.mxu0 0
  %2202 = vmatpush2.bf16.msra.mxu0 0
  %2203 = vmatprep.subr.bf16.mxu0 0
  %2204 = vmatpush2.bf16.msra.mxu0 0
  %2205 = vmatprep.subr.bf16.mxu0 0
  %2206 = vmatpush2.bf16.msra.mxu0 0
  %2207 = vmatprep.subr.bf16.mxu0 0
  %2208 = vmatpush2.bf16.msra.mxu0 0
  %2209 = vmatprep.subr.bf16.mxu0 0
  %2210 = vmatpush2.bf16.msra.mxu0 0
  %2211 = vmatprep.subr.bf16.mxu0 0
  %2212 = vmatpush2.bf16.msra.mxu0 0
  %2213 = vmatprep.mubr.bf16.mxu0 0
  %2214 = vmatmul.mubr.bf16.gmra.mxu0 %v260
  %v2215 = vpop.f32.mrf.mxu0
  %v2216 = vadd.f32 %v2007, %v2215
  %v2217 = vpop.f32.mrf.mxu0
  %v2218 = vpop.f32.mrf.mxu0
  %v2219 = vpop.f32.mrf.mxu0
  %2220 = vdwg.mxu0
  %2221 = vmatprep.subr.bf16.mxu0 0
  %2222 = vmatpush1.bf16.msra.mxu0 0
  %2223 = vmatprep.subr.bf16.mxu0 0
  %2224 = vmatpush1.bf16.msra.mxu0 0
  %2225 = vmatprep.subr.bf16.mxu0 0
  %2226 = vmatpush1.bf16.msra.mxu0 0
  %2227 = vmatprep.subr.bf16.mxu0 0
  %2228 = vmatpush1.bf16.msra.mxu0 0
  %2229 = vmatprep.subr.bf16.mxu0 0
  %2230 = vmatpush1.bf16.msra.mxu0 0
  %2231 = vmatprep.subr.bf16.mxu0 0
  %2232 = vmatpush1.bf16.msra.mxu0 0
  %2233 = vmatprep.subr.bf16.mxu0 0
  %2234 = vmatpush1.bf16.msra.mxu0 %v2018
  %2235 = vmatprep.subr.bf16.mxu0 0
  %2236 = vmatpush1.bf16.msra.mxu0 %v2017
  %2237 = vmatprep.subr.bf16.mxu0 0
  %2238 = vmatpush2.bf16.msra.mxu0 0
  %2239 = vmatprep.subr.bf16.mxu0 0
  %2240 = vmatpush2.bf16.msra.mxu0 0
  %2241 = vmatprep.subr.bf16.mxu0 0
  %2242 = vmatpush2.bf16.msra.mxu0 0
  %2243 = vmatprep.subr.bf16.mxu0 0
  %2244 = vmatpush2.bf16.msra.mxu0 0
  %2245 = vmatprep.subr.bf16.mxu0 0
  %2246 = vmatpush2.bf16.msra.mxu0 0
  %2247 = vmatprep.subr.bf16.mxu0 0
  %2248 = vmatpush2.bf16.msra.mxu0 0
  %2249 = vmatprep.subr.bf16.mxu0 0
  %2250 = vmatpush2.bf16.msra.mxu0 0
  %2251 = vmatprep.subr.bf16.mxu0 0
  %2252 = vmatpush2.bf16.msra.mxu0 0
  %2253 = vmatprep.mubr.bf16.mxu0 0
  %2254 = vmatmul.mubr.bf16.gmra.mxu0 %v303
  %v2255 = vpop.f32.mrf.mxu0
  %v2256 = vadd.f32 %v2007, %v2255
  %v2257 = vpop.f32.mrf.mxu0
  %v2258 = vpop.f32.mrf.mxu0
  %v2259 = vpop.f32.mrf.mxu0
  %2260 = vdwg.mxu0
  %2261 = vmatprep.subr.bf16.mxu0 0
  %2262 = vmatpush1.bf16.msra.mxu0 0
  %2263 = vmatprep.subr.bf16.mxu0 0
  %2264 = vmatpush1.bf16.msra.mxu0 0
  %2265 = vmatprep.subr.bf16.mxu0 0
  %2266 = vmatpush1.bf16.msra.mxu0 0
  %2267 = vmatprep.subr.bf16.mxu0 0
  %2268 = vmatpush1.bf16.msra.mxu0 0
  %2269 = vmatprep.subr.bf16.mxu0 0
  %2270 = vmatpush1.bf16.msra.mxu0 0
  %2271 = vmatprep.subr.bf16.mxu0 0
  %2272 = vmatpush1.bf16.msra.mxu0 0
  %2273 = vmatprep.subr.bf16.mxu0 0
  %2274 = vmatpush1.bf16.msra.mxu0 %v2018
  %2275 = vmatprep.subr.bf16.mxu0 0
  %2276 = vmatpush1.bf16.msra.mxu0 %v2017
  %2277 = vmatprep.subr.bf16.mxu0 0
  %2278 = vmatpush2.bf16.msra.mxu0 0
  %2279 = vmatprep.subr.bf16.mxu0 0
  %2280 = vmatpush2.bf16.msra.mxu0 0
  %2281 = vmatprep.subr.bf16.mxu0 0
  %2282 = vmatpush2.bf16.msra.mxu0 0
  %2283 = vmatprep.subr.bf16.mxu0 0
  %2284 = vmatpush2.bf16.msra.mxu0 0
  %2285 = vmatprep.subr.bf16.mxu0 0
  %2286 = vmatpush2.bf16.msra.mxu0 0
  %2287 = vmatprep.subr.bf16.mxu0 0
  %2288 = vmatpush2.bf16.msra.mxu0 0
  %2289 = vmatprep.subr.bf16.mxu0 0
  %2290 = vmatpush2.bf16.msra.mxu0 0
  %2291 = vmatprep.subr.bf16.mxu0 0
  %2292 = vmatpush2.bf16.msra.mxu0 0
  %2293 = vmatprep.mubr.bf16.mxu0 0
  %2294 = vmatmul.mubr.bf16.gmra.mxu0 %v346
  %v2295 = vpop.f32.mrf.mxu0
  %v2296 = vadd.f32 %v2007, %v2295
  %v2297 = vpop.f32.mrf.mxu0
  %v2298 = vpop.f32.mrf.mxu0
  %v2299 = vpop.f32.mrf.mxu0
  %2300 = vdwg.mxu0
  %2301 = vmatprep.subr.bf16.mxu0 0
  %2302 = vmatpush1.bf16.msra.mxu0 0
  %2303 = vmatprep.subr.bf16.mxu0 0
  %2304 = vmatpush1.bf16.msra.mxu0 0
  %2305 = vmatprep.subr.bf16.mxu0 0
  %2306 = vmatpush1.bf16.msra.mxu0 0
  %2307 = vmatprep.subr.bf16.mxu0 0
  %2308 = vmatpush1.bf16.msra.mxu0 0
  %2309 = vmatprep.subr.bf16.mxu0 0
  %2310 = vmatpush1.bf16.msra.mxu0 0
  %2311 = vmatprep.subr.bf16.mxu0 0
  %2312 = vmatpush1.bf16.msra.mxu0 0
  %2313 = vmatprep.subr.bf16.mxu0 0
  %2314 = vmatpush1.bf16.msra.mxu0 %v2018
  %2315 = vmatprep.subr.bf16.mxu0 0
  %2316 = vmatpush1.bf16.msra.mxu0 %v2017
  %2317 = vmatprep.subr.bf16.mxu0 0
  %2318 = vmatpush2.bf16.msra.mxu0 0
  %2319 = vmatprep.subr.bf16.mxu0 0
  %2320 = vmatpush2.bf16.msra.mxu0 0
  %2321 = vmatprep.subr.bf16.mxu0 0
  %2322 = vmatpush2.bf16.msra.mxu0 0
  %2323 = vmatprep.subr.bf16.mxu0 0
  %2324 = vmatpush2.bf16.msra.mxu0 0
  %2325 = vmatprep.subr.bf16.mxu0 0
  %2326 = vmatpush2.bf16.msra.mxu0 0
  %2327 = vmatprep.subr.bf16.mxu0 0
  %2328 = vmatpush2.bf16.msra.mxu0 0
  %2329 = vmatprep.subr.bf16.mxu0 0
  %2330 = vmatpush2.bf16.msra.mxu0 0
  %2331 = vmatprep.subr.bf16.mxu0 0
  %2332 = vmatpush2.bf16.msra.mxu0 0
  %2333 = vmatprep.mubr.bf16.mxu0 0
  %2334 = vmatmul.mubr.bf16.gmra.mxu0 %v389
  %v2335 = vpop.f32.mrf.mxu0
  %v2336 = vadd.f32 %v2007, %v2335
  %v2337 = vpop.f32.mrf.mxu0
  %v2338 = vpop.f32.mrf.mxu0
  %v2339 = vpop.f32.mrf.mxu0
  %2340 = vdwg.mxu0
  %s2341 = scalar_lea.vmem %s5, 1
  %v2342 = vld [vmem:[%s2341] sm:$0x1]
  %v2344 = vlaneseq
  %v2345 = vshrl.u32 %v2344, 7
  %v2346 = vsub.s32 0, %v2345
  %v2347 = vrot.slane %v2342, %v2346
  %v2353 = vunpack.c.l.b16 %v1992
  %v2354 = vunpack.c.l.b16 %v1993
  %v2355 = vunpack.c.l.b16 %v1994
  %v2356 = vunpack.c.l.b16 %v1995
  %v2357 = vpack.c.b16 %v2354, %v2353
  %v2358 = vpack.c.b16 %v2356, %v2355
  %2361 = vmatprep.subr.bf16.mxu0 0
  %2362 = vmatpush1.bf16.msra.mxu0 0
  %2363 = vmatprep.subr.bf16.mxu0 0
  %2364 = vmatpush1.bf16.msra.mxu0 0
  %2365 = vmatprep.subr.bf16.mxu0 0
  %2366 = vmatpush1.bf16.msra.mxu0 0
  %2367 = vmatprep.subr.bf16.mxu0 0
  %2368 = vmatpush1.bf16.msra.mxu0 0
  %2369 = vmatprep.subr.bf16.mxu0 0
  %2370 = vmatpush1.bf16.msra.mxu0 0
  %2371 = vmatprep.subr.bf16.mxu0 0
  %2372 = vmatpush1.bf16.msra.mxu0 0
  %2373 = vmatprep.subr.bf16.mxu0 0
  %2374 = vmatpush1.bf16.msra.mxu0 %v2358
  %2375 = vmatprep.subr.bf16.mxu0 0
  %2376 = vmatpush1.bf16.msra.mxu0 %v2357
  %2377 = vmatprep.subr.bf16.mxu0 0
  %2378 = vmatpush2.bf16.msra.mxu0 0
  %2379 = vmatprep.subr.bf16.mxu0 0
  %2380 = vmatpush2.bf16.msra.mxu0 0
  %2381 = vmatprep.subr.bf16.mxu0 0
  %2382 = vmatpush2.bf16.msra.mxu0 0
  %2383 = vmatprep.subr.bf16.mxu0 0
  %2384 = vmatpush2.bf16.msra.mxu0 0
  %2385 = vmatprep.subr.bf16.mxu0 0
  %2386 = vmatpush2.bf16.msra.mxu0 0
  %2387 = vmatprep.subr.bf16.mxu0 0
  %2388 = vmatpush2.bf16.msra.mxu0 0
  %2389 = vmatprep.subr.bf16.mxu0 0
  %2390 = vmatpush2.bf16.msra.mxu0 0
  %2391 = vmatprep.subr.bf16.mxu0 0
  %2392 = vmatpush2.bf16.msra.mxu0 0
  %2393 = vmatprep.mubr.bf16.mxu0 0
  %2394 = vmatmul.mubr.bf16.gmra.mxu0 %v88
  %v2395 = vpop.f32.mrf.mxu0
  %v2396 = vadd.f32 %v2347, %v2395
  %v2397 = vpop.f32.mrf.mxu0
  %v2398 = vpop.f32.mrf.mxu0
  %v2399 = vpop.f32.mrf.mxu0
  %2400 = vdwg.mxu0
  %2401 = vmatprep.subr.bf16.mxu0 0
  %2402 = vmatpush1.bf16.msra.mxu0 0
  %2403 = vmatprep.subr.bf16.mxu0 0
  %2404 = vmatpush1.bf16.msra.mxu0 0
  %2405 = vmatprep.subr.bf16.mxu0 0
  %2406 = vmatpush1.bf16.msra.mxu0 0
  %2407 = vmatprep.subr.bf16.mxu0 0
  %2408 = vmatpush1.bf16.msra.mxu0 0
  %2409 = vmatprep.subr.bf16.mxu0 0
  %2410 = vmatpush1.bf16.msra.mxu0 0
  %2411 = vmatprep.subr.bf16.mxu0 0
  %2412 = vmatpush1.bf16.msra.mxu0 0
  %2413 = vmatprep.subr.bf16.mxu0 0
  %2414 = vmatpush1.bf16.msra.mxu0 %v2358
  %2415 = vmatprep.subr.bf16.mxu0 0
  %2416 = vmatpush1.bf16.msra.mxu0 %v2357
  %2417 = vmatprep.subr.bf16.mxu0 0
  %2418 = vmatpush2.bf16.msra.mxu0 0
  %2419 = vmatprep.subr.bf16.mxu0 0
  %2420 = vmatpush2.bf16.msra.mxu0 0
  %2421 = vmatprep.subr.bf16.mxu0 0
  %2422 = vmatpush2.bf16.msra.mxu0 0
  %2423 = vmatprep.subr.bf16.mxu0 0
  %2424 = vmatpush2.bf16.msra.mxu0 0
  %2425 = vmatprep.subr.bf16.mxu0 0
  %2426 = vmatpush2.bf16.msra.mxu0 0
  %2427 = vmatprep.subr.bf16.mxu0 0
  %2428 = vmatpush2.bf16.msra.mxu0 0
  %2429 = vmatprep.subr.bf16.mxu0 0
  %2430 = vmatpush2.bf16.msra.mxu0 0
  %2431 = vmatprep.subr.bf16.mxu0 0
  %2432 = vmatpush2.bf16.msra.mxu0 0
  %2433 = vmatprep.mubr.bf16.mxu0 0
  %2434 = vmatmul.mubr.bf16.gmra.mxu0 %v131
  %v2435 = vpop.f32.mrf.mxu0
  %v2436 = vadd.f32 %v2347, %v2435
  %v2437 = vpop.f32.mrf.mxu0
  %v2438 = vpop.f32.mrf.mxu0
  %v2439 = vpop.f32.mrf.mxu0
  %2440 = vdwg.mxu0
  %2441 = vmatprep.subr.bf16.mxu0 0
  %2442 = vmatpush1.bf16.msra.mxu0 0
  %2443 = vmatprep.subr.bf16.mxu0 0
  %2444 = vmatpush1.bf16.msra.mxu0 0
  %2445 = vmatprep.subr.bf16.mxu0 0
  %2446 = vmatpush1.bf16.msra.mxu0 0
  %2447 = vmatprep.subr.bf16.mxu0 0
  %2448 = vmatpush1.bf16.msra.mxu0 0
  %2449 = vmatprep.subr.bf16.mxu0 0
  %2450 = vmatpush1.bf16.msra.mxu0 0
  %2451 = vmatprep.subr.bf16.mxu0 0
  %2452 = vmatpush1.bf16.msra.mxu0 0
  %2453 = vmatprep.subr.bf16.mxu0 0
  %2454 = vmatpush1.bf16.msra.mxu0 %v2358
  %2455 = vmatprep.subr.bf16.mxu0 0
  %2456 = vmatpush1.bf16.msra.mxu0 %v2357
  %2457 = vmatprep.subr.bf16.mxu0 0
  %2458 = vmatpush2.bf16.msra.mxu0 0
  %2459 = vmatprep.subr.bf16.mxu0 0
  %2460 = vmatpush2.bf16.msra.mxu0 0
  %2461 = vmatprep.subr.bf16.mxu0 0
  %2462 = vmatpush2.bf16.msra.mxu0 0
  %2463 = vmatprep.subr.bf16.mxu0 0
  %2464 = vmatpush2.bf16.msra.mxu0 0
  %2465 = vmatprep.subr.bf16.mxu0 0
  %2466 = vmatpush2.bf16.msra.mxu0 0
  %2467 = vmatprep.subr.bf16.mxu0 0
  %2468 = vmatpush2.bf16.msra.mxu0 0
  %2469 = vmatprep.subr.bf16.mxu0 0
  %2470 = vmatpush2.bf16.msra.mxu0 0
  %2471 = vmatprep.subr.bf16.mxu0 0
  %2472 = vmatpush2.bf16.msra.mxu0 0
  %2473 = vmatprep.mubr.bf16.mxu0 0
  %2474 = vmatmul.mubr.bf16.gmra.mxu0 %v174
  %v2475 = vpop.f32.mrf.mxu0
  %v2476 = vadd.f32 %v2347, %v2475
  %v2477 = vpop.f32.mrf.mxu0
  %v2478 = vpop.f32.mrf.mxu0
  %v2479 = vpop.f32.mrf.mxu0
  %2480 = vdwg.mxu0
  %2481 = vmatprep.subr.bf16.mxu0 0
  %2482 = vmatpush1.bf16.msra.mxu0 0
  %2483 = vmatprep.subr.bf16.mxu0 0
  %2484 = vmatpush1.bf16.msra.mxu0 0
  %2485 = vmatprep.subr.bf16.mxu0 0
  %2486 = vmatpush1.bf16.msra.mxu0 0
  %2487 = vmatprep.subr.bf16.mxu0 0
  %2488 = vmatpush1.bf16.msra.mxu0 0
  %2489 = vmatprep.subr.bf16.mxu0 0
  %2490 = vmatpush1.bf16.msra.mxu0 0
  %2491 = vmatprep.subr.bf16.mxu0 0
  %2492 = vmatpush1.bf16.msra.mxu0 0
  %2493 = vmatprep.subr.bf16.mxu0 0
  %2494 = vmatpush1.bf16.msra.mxu0 %v2358
  %2495 = vmatprep.subr.bf16.mxu0 0
  %2496 = vmatpush1.bf16.msra.mxu0 %v2357
  %2497 = vmatprep.subr.bf16.mxu0 0
  %2498 = vmatpush2.bf16.msra.mxu0 0
  %2499 = vmatprep.subr.bf16.mxu0 0
  %2500 = vmatpush2.bf16.msra.mxu0 0
  %2501 = vmatprep.subr.bf16.mxu0 0
  %2502 = vmatpush2.bf16.msra.mxu0 0
  %2503 = vmatprep.subr.bf16.mxu0 0
  %2504 = vmatpush2.bf16.msra.mxu0 0
  %2505 = vmatprep.subr.bf16.mxu0 0
  %2506 = vmatpush2.bf16.msra.mxu0 0
  %2507 = vmatprep.subr.bf16.mxu0 0
  %2508 = vmatpush2.bf16.msra.mxu0 0
  %2509 = vmatprep.subr.bf16.mxu0 0
  %2510 = vmatpush2.bf16.msra.mxu0 0
  %2511 = vmatprep.subr.bf16.mxu0 0
  %2512 = vmatpush2.bf16.msra.mxu0 0
  %2513 = vmatprep.mubr.bf16.mxu0 0
  %2514 = vmatmul.mubr.bf16.gmra.mxu0 %v217
  %v2515 = vpop.f32.mrf.mxu0
  %v2516 = vadd.f32 %v2347, %v2515
  %v2517 = vpop.f32.mrf.mxu0
  %v2518 = vpop.f32.mrf.mxu0
  %v2519 = vpop.f32.mrf.mxu0
  %2520 = vdwg.mxu0
  %2521 = vmatprep.subr.bf16.mxu0 0
  %2522 = vmatpush1.bf16.msra.mxu0 0
  %2523 = vmatprep.subr.bf16.mxu0 0
  %2524 = vmatpush1.bf16.msra.mxu0 0
  %2525 = vmatprep.subr.bf16.mxu0 0
  %2526 = vmatpush1.bf16.msra.mxu0 0
  %2527 = vmatprep.subr.bf16.mxu0 0
  %2528 = vmatpush1.bf16.msra.mxu0 0
  %2529 = vmatprep.subr.bf16.mxu0 0
  %2530 = vmatpush1.bf16.msra.mxu0 0
  %2531 = vmatprep.subr.bf16.mxu0 0
  %2532 = vmatpush1.bf16.msra.mxu0 0
  %2533 = vmatprep.subr.bf16.mxu0 0
  %2534 = vmatpush1.bf16.msra.mxu0 %v2358
  %2535 = vmatprep.subr.bf16.mxu0 0
  %2536 = vmatpush1.bf16.msra.mxu0 %v2357
  %2537 = vmatprep.subr.bf16.mxu0 0
  %2538 = vmatpush2.bf16.msra.mxu0 0
  %2539 = vmatprep.subr.bf16.mxu0 0
  %2540 = vmatpush2.bf16.msra.mxu0 0
  %2541 = vmatprep.subr.bf16.mxu0 0
  %2542 = vmatpush2.bf16.msra.mxu0 0
  %2543 = vmatprep.subr.bf16.mxu0 0
  %2544 = vmatpush2.bf16.msra.mxu0 0
  %2545 = vmatprep.subr.bf16.mxu0 0
  %2546 = vmatpush2.bf16.msra.mxu0 0
  %2547 = vmatprep.subr.bf16.mxu0 0
  %2548 = vmatpush2.bf16.msra.mxu0 0
  %2549 = vmatprep.subr.bf16.mxu0 0
  %2550 = vmatpush2.bf16.msra.mxu0 0
  %2551 = vmatprep.subr.bf16.mxu0 0
  %2552 = vmatpush2.bf16.msra.mxu0 0
  %2553 = vmatprep.mubr.bf16.mxu0 0
  %2554 = vmatmul.mubr.bf16.gmra.mxu0 %v260
  %v2555 = vpop.f32.mrf.mxu0
  %v2556 = vadd.f32 %v2347, %v2555
  %v2557 = vpop.f32.mrf.mxu0
  %v2558 = vpop.f32.mrf.mxu0
  %v2559 = vpop.f32.mrf.mxu0
  %2560 = vdwg.mxu0
  %2561 = vmatprep.subr.bf16.mxu0 0
  %2562 = vmatpush1.bf16.msra.mxu0 0
  %2563 = vmatprep.subr.bf16.mxu0 0
  %2564 = vmatpush1.bf16.msra.mxu0 0
  %2565 = vmatprep.subr.bf16.mxu0 0
  %2566 = vmatpush1.bf16.msra.mxu0 0
  %2567 = vmatprep.subr.bf16.mxu0 0
  %2568 = vmatpush1.bf16.msra.mxu0 0
  %2569 = vmatprep.subr.bf16.mxu0 0
  %2570 = vmatpush1.bf16.msra.mxu0 0
  %2571 = vmatprep.subr.bf16.mxu0 0
  %2572 = vmatpush1.bf16.msra.mxu0 0
  %2573 = vmatprep.subr.bf16.mxu0 0
  %2574 = vmatpush1.bf16.msra.mxu0 %v2358
  %2575 = vmatprep.subr.bf16.mxu0 0
  %2576 = vmatpush1.bf16.msra.mxu0 %v2357
  %2577 = vmatprep.subr.bf16.mxu0 0
  %2578 = vmatpush2.bf16.msra.mxu0 0
  %2579 = vmatprep.subr.bf16.mxu0 0
  %2580 = vmatpush2.bf16.msra.mxu0 0
  %2581 = vmatprep.subr.bf16.mxu0 0
  %2582 = vmatpush2.bf16.msra.mxu0 0
  %2583 = vmatprep.subr.bf16.mxu0 0
  %2584 = vmatpush2.bf16.msra.mxu0 0
  %2585 = vmatprep.subr.bf16.mxu0 0
  %2586 = vmatpush2.bf16.msra.mxu0 0
  %2587 = vmatprep.subr.bf16.mxu0 0
  %2588 = vmatpush2.bf16.msra.mxu0 0
  %2589 = vmatprep.subr.bf16.mxu0 0
  %2590 = vmatpush2.bf16.msra.mxu0 0
  %2591 = vmatprep.subr.bf16.mxu0 0
  %2592 = vmatpush2.bf16.msra.mxu0 0
  %2593 = vmatprep.mubr.bf16.mxu0 0
  %2594 = vmatmul.mubr.bf16.gmra.mxu0 %v303
  %v2595 = vpop.f32.mrf.mxu0
  %v2596 = vadd.f32 %v2347, %v2595
  %v2597 = vpop.f32.mrf.mxu0
  %v2598 = vpop.f32.mrf.mxu0
  %v2599 = vpop.f32.mrf.mxu0
  %2600 = vdwg.mxu0
  %2601 = vmatprep.subr.bf16.mxu0 0
  %2602 = vmatpush1.bf16.msra.mxu0 0
  %2603 = vmatprep.subr.bf16.mxu0 0
  %2604 = vmatpush1.bf16.msra.mxu0 0
  %2605 = vmatprep.subr.bf16.mxu0 0
  %2606 = vmatpush1.bf16.msra.mxu0 0
  %2607 = vmatprep.subr.bf16.mxu0 0
  %2608 = vmatpush1.bf16.msra.mxu0 0
  %2609 = vmatprep.subr.bf16.mxu0 0
  %2610 = vmatpush1.bf16.msra.mxu0 0
  %2611 = vmatprep.subr.bf16.mxu0 0
  %2612 = vmatpush1.bf16.msra.mxu0 0
  %2613 = vmatprep.subr.bf16.mxu0 0
  %2614 = vmatpush1.bf16.msra.mxu0 %v2358
  %2615 = vmatprep.subr.bf16.mxu0 0
  %2616 = vmatpush1.bf16.msra.mxu0 %v2357
  %2617 = vmatprep.subr.bf16.mxu0 0
  %2618 = vmatpush2.bf16.msra.mxu0 0
  %2619 = vmatprep.subr.bf16.mxu0 0
  %2620 = vmatpush2.bf16.msra.mxu0 0
  %2621 = vmatprep.subr.bf16.mxu0 0
  %2622 = vmatpush2.bf16.msra.mxu0 0
  %2623 = vmatprep.subr.bf16.mxu0 0
  %2624 = vmatpush2.bf16.msra.mxu0 0
  %2625 = vmatprep.subr.bf16.mxu0 0
  %2626 = vmatpush2.bf16.msra.mxu0 0
  %2627 = vmatprep.subr.bf16.mxu0 0
  %2628 = vmatpush2.bf16.msra.mxu0 0
  %2629 = vmatprep.subr.bf16.mxu0 0
  %2630 = vmatpush2.bf16.msra.mxu0 0
  %2631 = vmatprep.subr.bf16.mxu0 0
  %2632 = vmatpush2.bf16.msra.mxu0 0
  %2633 = vmatprep.mubr.bf16.mxu0 0
  %2634 = vmatmul.mubr.bf16.gmra.mxu0 %v346
  %v2635 = vpop.f32.mrf.mxu0
  %v2636 = vadd.f32 %v2347, %v2635
  %v2637 = vpop.f32.mrf.mxu0
  %v2638 = vpop.f32.mrf.mxu0
  %v2639 = vpop.f32.mrf.mxu0
  %2640 = vdwg.mxu0
  %2641 = vmatprep.subr.bf16.mxu0 0
  %2642 = vmatpush1.bf16.msra.mxu0 0
  %2643 = vmatprep.subr.bf16.mxu0 0
  %2644 = vmatpush1.bf16.msra.mxu0 0
  %2645 = vmatprep.subr.bf16.mxu0 0
  %2646 = vmatpush1.bf16.msra.mxu0 0
  %2647 = vmatprep.subr.bf16.mxu0 0
  %2648 = vmatpush1.bf16.msra.mxu0 0
  %2649 = vmatprep.subr.bf16.mxu0 0
  %2650 = vmatpush1.bf16.msra.mxu0 0
  %2651 = vmatprep.subr.bf16.mxu0 0
  %2652 = vmatpush1.bf16.msra.mxu0 0
  %2653 = vmatprep.subr.bf16.mxu0 0
  %2654 = vmatpush1.bf16.msra.mxu0 %v2358
  %2655 = vmatprep.subr.bf16.mxu0 0
  %2656 = vmatpush1.bf16.msra.mxu0 %v2357
  %2657 = vmatprep.subr.bf16.mxu0 0
  %2658 = vmatpush2.bf16.msra.mxu0 0
  %2659 = vmatprep.subr.bf16.mxu0 0
  %2660 = vmatpush2.bf16.msra.mxu0 0
  %2661 = vmatprep.subr.bf16.mxu0 0
  %2662 = vmatpush2.bf16.msra.mxu0 0
  %2663 = vmatprep.subr.bf16.mxu0 0
  %2664 = vmatpush2.bf16.msra.mxu0 0
  %2665 = vmatprep.subr.bf16.mxu0 0
  %2666 = vmatpush2.bf16.msra.mxu0 0
  %2667 = vmatprep.subr.bf16.mxu0 0
  %2668 = vmatpush2.bf16.msra.mxu0 0
  %2669 = vmatprep.subr.bf16.mxu0 0
  %2670 = vmatpush2.bf16.msra.mxu0 0
  %2671 = vmatprep.subr.bf16.mxu0 0
  %2672 = vmatpush2.bf16.msra.mxu0 0
  %2673 = vmatprep.mubr.bf16.mxu0 0
  %2674 = vmatmul.mubr.bf16.gmra.mxu0 %v389
  %v2675 = vpop.f32.mrf.mxu0
  %v2676 = vadd.f32 %v2347, %v2675
  %v2677 = vpop.f32.mrf.mxu0
  %v2678 = vpop.f32.mrf.mxu0
  %v2679 = vpop.f32.mrf.mxu0
  %2680 = vdwg.mxu0
  %s2681 = scalar_lea.vmem %s6, 1
  %v2682 = vld [vmem:[%s2681] sm:$0x1]
  %v2684 = vlaneseq
  %v2685 = vshrl.u32 %v2684, 7
  %v2686 = vsub.s32 0, %v2685
  %v2687 = vrot.slane %v2682, %v2686
  %v2693 = vunpack.c.l.b16 %v1997
  %v2694 = vunpack.c.l.b16 %v1998
  %v2695 = vunpack.c.l.b16 %v1999
  %v2696 = vunpack.c.l.b16 %v2000
  %v2697 = vpack.c.b16 %v2694, %v2693
  %v2698 = vpack.c.b16 %v2696, %v2695
  %2701 = vmatprep.subr.bf16.mxu0 0
  %2702 = vmatpush1.bf16.msra.mxu0 0
  %2703 = vmatprep.subr.bf16.mxu0 0
  %2704 = vmatpush1.bf16.msra.mxu0 0
  %2705 = vmatprep.subr.bf16.mxu0 0
  %2706 = vmatpush1.bf16.msra.mxu0 0
  %2707 = vmatprep.subr.bf16.mxu0 0
  %2708 = vmatpush1.bf16.msra.mxu0 0
  %2709 = vmatprep.subr.bf16.mxu0 0
  %2710 = vmatpush1.bf16.msra.mxu0 0
  %2711 = vmatprep.subr.bf16.mxu0 0
  %2712 = vmatpush1.bf16.msra.mxu0 0
  %2713 = vmatprep.subr.bf16.mxu0 0
  %2714 = vmatpush1.bf16.msra.mxu0 %v2698
  %2715 = vmatprep.subr.bf16.mxu0 0
  %2716 = vmatpush1.bf16.msra.mxu0 %v2697
  %2717 = vmatprep.subr.bf16.mxu0 0
  %2718 = vmatpush2.bf16.msra.mxu0 0
  %2719 = vmatprep.subr.bf16.mxu0 0
  %2720 = vmatpush2.bf16.msra.mxu0 0
  %2721 = vmatprep.subr.bf16.mxu0 0
  %2722 = vmatpush2.bf16.msra.mxu0 0
  %2723 = vmatprep.subr.bf16.mxu0 0
  %2724 = vmatpush2.bf16.msra.mxu0 0
  %2725 = vmatprep.subr.bf16.mxu0 0
  %2726 = vmatpush2.bf16.msra.mxu0 0
  %2727 = vmatprep.subr.bf16.mxu0 0
  %2728 = vmatpush2.bf16.msra.mxu0 0
  %2729 = vmatprep.subr.bf16.mxu0 0
  %2730 = vmatpush2.bf16.msra.mxu0 0
  %2731 = vmatprep.subr.bf16.mxu0 0
  %2732 = vmatpush2.bf16.msra.mxu0 0
  %2733 = vmatprep.mubr.bf16.mxu0 0
  %2734 = vmatmul.mubr.bf16.gmra.mxu0 %v88
  %v2735 = vpop.f32.mrf.mxu0
  %v2736 = vadd.f32 %v2687, %v2735
  %v2737 = vpop.f32.mrf.mxu0
  %v2738 = vpop.f32.mrf.mxu0
  %v2739 = vpop.f32.mrf.mxu0
  %2740 = vdwg.mxu0
  %2741 = vmatprep.subr.bf16.mxu0 0
  %2742 = vmatpush1.bf16.msra.mxu0 0
  %2743 = vmatprep.subr.bf16.mxu0 0
  %2744 = vmatpush1.bf16.msra.mxu0 0
  %2745 = vmatprep.subr.bf16.mxu0 0
  %2746 = vmatpush1.bf16.msra.mxu0 0
  %2747 = vmatprep.subr.bf16.mxu0 0
  %2748 = vmatpush1.bf16.msra.mxu0 0
  %2749 = vmatprep.subr.bf16.mxu0 0
  %2750 = vmatpush1.bf16.msra.mxu0 0
  %2751 = vmatprep.subr.bf16.mxu0 0
  %2752 = vmatpush1.bf16.msra.mxu0 0
  %2753 = vmatprep.subr.bf16.mxu0 0
  %2754 = vmatpush1.bf16.msra.mxu0 %v2698
  %2755 = vmatprep.subr.bf16.mxu0 0
  %2756 = vmatpush1.bf16.msra.mxu0 %v2697
  %2757 = vmatprep.subr.bf16.mxu0 0
  %2758 = vmatpush2.bf16.msra.mxu0 0
  %2759 = vmatprep.subr.bf16.mxu0 0
  %2760 = vmatpush2.bf16.msra.mxu0 0
  %2761 = vmatprep.subr.bf16.mxu0 0
  %2762 = vmatpush2.bf16.msra.mxu0 0
  %2763 = vmatprep.subr.bf16.mxu0 0
  %2764 = vmatpush2.bf16.msra.mxu0 0
  %2765 = vmatprep.subr.bf16.mxu0 0
  %2766 = vmatpush2.bf16.msra.mxu0 0
  %2767 = vmatprep.subr.bf16.mxu0 0
  %2768 = vmatpush2.bf16.msra.mxu0 0
  %2769 = vmatprep.subr.bf16.mxu0 0
  %2770 = vmatpush2.bf16.msra.mxu0 0
  %2771 = vmatprep.subr.bf16.mxu0 0
  %2772 = vmatpush2.bf16.msra.mxu0 0
  %2773 = vmatprep.mubr.bf16.mxu0 0
  %2774 = vmatmul.mubr.bf16.gmra.mxu0 %v131
  %v2775 = vpop.f32.mrf.mxu0
  %v2776 = vadd.f32 %v2687, %v2775
  %v2777 = vpop.f32.mrf.mxu0
  %v2778 = vpop.f32.mrf.mxu0
  %v2779 = vpop.f32.mrf.mxu0
  %2780 = vdwg.mxu0
  %2781 = vmatprep.subr.bf16.mxu0 0
  %2782 = vmatpush1.bf16.msra.mxu0 0
  %2783 = vmatprep.subr.bf16.mxu0 0
  %2784 = vmatpush1.bf16.msra.mxu0 0
  %2785 = vmatprep.subr.bf16.mxu0 0
  %2786 = vmatpush1.bf16.msra.mxu0 0
  %2787 = vmatprep.subr.bf16.mxu0 0
  %2788 = vmatpush1.bf16.msra.mxu0 0
  %2789 = vmatprep.subr.bf16.mxu0 0
  %2790 = vmatpush1.bf16.msra.mxu0 0
  %2791 = vmatprep.subr.bf16.mxu0 0
  %2792 = vmatpush1.bf16.msra.mxu0 0
  %2793 = vmatprep.subr.bf16.mxu0 0
  %2794 = vmatpush1.bf16.msra.mxu0 %v2698
  %2795 = vmatprep.subr.bf16.mxu0 0
  %2796 = vmatpush1.bf16.msra.mxu0 %v2697
  %2797 = vmatprep.subr.bf16.mxu0 0
  %2798 = vmatpush2.bf16.msra.mxu0 0
  %2799 = vmatprep.subr.bf16.mxu0 0
  %2800 = vmatpush2.bf16.msra.mxu0 0
  %2801 = vmatprep.subr.bf16.mxu0 0
  %2802 = vmatpush2.bf16.msra.mxu0 0
  %2803 = vmatprep.subr.bf16.mxu0 0
  %2804 = vmatpush2.bf16.msra.mxu0 0
  %2805 = vmatprep.subr.bf16.mxu0 0
  %2806 = vmatpush2.bf16.msra.mxu0 0
  %2807 = vmatprep.subr.bf16.mxu0 0
  %2808 = vmatpush2.bf16.msra.mxu0 0
  %2809 = vmatprep.subr.bf16.mxu0 0
  %2810 = vmatpush2.bf16.msra.mxu0 0
  %2811 = vmatprep.subr.bf16.mxu0 0
  %2812 = vmatpush2.bf16.msra.mxu0 0
  %2813 = vmatprep.mubr.bf16.mxu0 0
  %2814 = vmatmul.mubr.bf16.gmra.mxu0 %v174
  %v2815 = vpop.f32.mrf.mxu0
  %v2816 = vadd.f32 %v2687, %v2815
  %v2817 = vpop.f32.mrf.mxu0
  %v2818 = vpop.f32.mrf.mxu0
  %v2819 = vpop.f32.mrf.mxu0
  %2820 = vdwg.mxu0
  %2821 = vmatprep.subr.bf16.mxu0 0
  %2822 = vmatpush1.bf16.msra.mxu0 0
  %2823 = vmatprep.subr.bf16.mxu0 0
  %2824 = vmatpush1.bf16.msra.mxu0 0
  %2825 = vmatprep.subr.bf16.mxu0 0
  %2826 = vmatpush1.bf16.msra.mxu0 0
  %2827 = vmatprep.subr.bf16.mxu0 0
  %2828 = vmatpush1.bf16.msra.mxu0 0
  %2829 = vmatprep.subr.bf16.mxu0 0
  %2830 = vmatpush1.bf16.msra.mxu0 0
  %2831 = vmatprep.subr.bf16.mxu0 0
  %2832 = vmatpush1.bf16.msra.mxu0 0
  %2833 = vmatprep.subr.bf16.mxu0 0
  %2834 = vmatpush1.bf16.msra.mxu0 %v2698
  %2835 = vmatprep.subr.bf16.mxu0 0
  %2836 = vmatpush1.bf16.msra.mxu0 %v2697
  %2837 = vmatprep.subr.bf16.mxu0 0
  %2838 = vmatpush2.bf16.msra.mxu0 0
  %2839 = vmatprep.subr.bf16.mxu0 0
  %2840 = vmatpush2.bf16.msra.mxu0 0
  %2841 = vmatprep.subr.bf16.mxu0 0
  %2842 = vmatpush2.bf16.msra.mxu0 0
  %2843 = vmatprep.subr.bf16.mxu0 0
  %2844 = vmatpush2.bf16.msra.mxu0 0
  %2845 = vmatprep.subr.bf16.mxu0 0
  %2846 = vmatpush2.bf16.msra.mxu0 0
  %2847 = vmatprep.subr.bf16.mxu0 0
  %2848 = vmatpush2.bf16.msra.mxu0 0
  %2849 = vmatprep.subr.bf16.mxu0 0
  %2850 = vmatpush2.bf16.msra.mxu0 0
  %2851 = vmatprep.subr.bf16.mxu0 0
  %2852 = vmatpush2.bf16.msra.mxu0 0
  %2853 = vmatprep.mubr.bf16.mxu0 0
  %2854 = vmatmul.mubr.bf16.gmra.mxu0 %v217
  %v2855 = vpop.f32.mrf.mxu0
  %v2856 = vadd.f32 %v2687, %v2855
  %v2857 = vpop.f32.mrf.mxu0
  %v2858 = vpop.f32.mrf.mxu0
  %v2859 = vpop.f32.mrf.mxu0
  %2860 = vdwg.mxu0
  %2861 = vmatprep.subr.bf16.mxu0 0
  %2862 = vmatpush1.bf16.msra.mxu0 0
  %2863 = vmatprep.subr.bf16.mxu0 0
  %2864 = vmatpush1.bf16.msra.mxu0 0
  %2865 = vmatprep.subr.bf16.mxu0 0
  %2866 = vmatpush1.bf16.msra.mxu0 0
  %2867 = vmatprep.subr.bf16.mxu0 0
  %2868 = vmatpush1.bf16.msra.mxu0 0
  %2869 = vmatprep.subr.bf16.mxu0 0
  %2870 = vmatpush1.bf16.msra.mxu0 0
  %2871 = vmatprep.subr.bf16.mxu0 0
  %2872 = vmatpush1.bf16.msra.mxu0 0
  %2873 = vmatprep.subr.bf16.mxu0 0
  %2874 = vmatpush1.bf16.msra.mxu0 %v2698
  %2875 = vmatprep.subr.bf16.mxu0 0
  %2876 = vmatpush1.bf16.msra.mxu0 %v2697
  %2877 = vmatprep.subr.bf16.mxu0 0
  %2878 = vmatpush2.bf16.msra.mxu0 0
  %2879 = vmatprep.subr.bf16.mxu0 0
  %2880 = vmatpush2.bf16.msra.mxu0 0
  %2881 = vmatprep.subr.bf16.mxu0 0
  %2882 = vmatpush2.bf16.msra.mxu0 0
  %2883 = vmatprep.subr.bf16.mxu0 0
  %2884 = vmatpush2.bf16.msra.mxu0 0
  %2885 = vmatprep.subr.bf16.mxu0 0
  %2886 = vmatpush2.bf16.msra.mxu0 0
  %2887 = vmatprep.subr.bf16.mxu0 0
  %2888 = vmatpush2.bf16.msra.mxu0 0
  %2889 = vmatprep.subr.bf16.mxu0 0
  %2890 = vmatpush2.bf16.msra.mxu0 0
  %2891 = vmatprep.subr.bf16.mxu0 0
  %2892 = vmatpush2.bf16.msra.mxu0 0
  %2893 = vmatprep.mubr.bf16.mxu0 0
  %2894 = vmatmul.mubr.bf16.gmra.mxu0 %v260
  %v2895 = vpop.f32.mrf.mxu0
  %v2896 = vadd.f32 %v2687, %v2895
  %v2897 = vpop.f32.mrf.mxu0
  %v2898 = vpop.f32.mrf.mxu0
  %v2899 = vpop.f32.mrf.mxu0
  %2900 = vdwg.mxu0
  %2901 = vmatprep.subr.bf16.mxu0 0
  %2902 = vmatpush1.bf16.msra.mxu0 0
  %2903 = vmatprep.subr.bf16.mxu0 0
  %2904 = vmatpush1.bf16.msra.mxu0 0
  %2905 = vmatprep.subr.bf16.mxu0 0
  %2906 = vmatpush1.bf16.msra.mxu0 0
  %2907 = vmatprep.subr.bf16.mxu0 0
  %2908 = vmatpush1.bf16.msra.mxu0 0
  %2909 = vmatprep.subr.bf16.mxu0 0
  %2910 = vmatpush1.bf16.msra.mxu0 0
  %2911 = vmatprep.subr.bf16.mxu0 0
  %2912 = vmatpush1.bf16.msra.mxu0 0
  %2913 = vmatprep.subr.bf16.mxu0 0
  %2914 = vmatpush1.bf16.msra.mxu0 %v2698
  %2915 = vmatprep.subr.bf16.mxu0 0
  %2916 = vmatpush1.bf16.msra.mxu0 %v2697
  %2917 = vmatprep.subr.bf16.mxu0 0
  %2918 = vmatpush2.bf16.msra.mxu0 0
  %2919 = vmatprep.subr.bf16.mxu0 0
  %2920 = vmatpush2.bf16.msra.mxu0 0
  %2921 = vmatprep.subr.bf16.mxu0 0
  %2922 = vmatpush2.bf16.msra.mxu0 0
  %2923 = vmatprep.subr.bf16.mxu0 0
  %2924 = vmatpush2.bf16.msra.mxu0 0
  %2925 = vmatprep.subr.bf16.mxu0 0
  %2926 = vmatpush2.bf16.msra.mxu0 0
  %2927 = vmatprep.subr.bf16.mxu0 0
  %2928 = vmatpush2.bf16.msra.mxu0 0
  %2929 = vmatprep.subr.bf16.mxu0 0
  %2930 = vmatpush2.bf16.msra.mxu0 0
  %2931 = vmatprep.subr.bf16.mxu0 0
  %2932 = vmatpush2.bf16.msra.mxu0 0
  %2933 = vmatprep.mubr.bf16.mxu0 0
  %2934 = vmatmul.mubr.bf16.gmra.mxu0 %v303
  %v2935 = vpop.f32.mrf.mxu0
  %v2936 = vadd.f32 %v2687, %v2935
  %v2937 = vpop.f32.mrf.mxu0
  %v2938 = vpop.f32.mrf.mxu0
  %v2939 = vpop.f32.mrf.mxu0
  %2940 = vdwg.mxu0
  %2941 = vmatprep.subr.bf16.mxu0 0
  %2942 = vmatpush1.bf16.msra.mxu0 0
  %2943 = vmatprep.subr.bf16.mxu0 0
  %2944 = vmatpush1.bf16.msra.mxu0 0
  %2945 = vmatprep.subr.bf16.mxu0 0
  %2946 = vmatpush1.bf16.msra.mxu0 0
  %2947 = vmatprep.subr.bf16.mxu0 0
  %2948 = vmatpush1.bf16.msra.mxu0 0
  %2949 = vmatprep.subr.bf16.mxu0 0
  %2950 = vmatpush1.bf16.msra.mxu0 0
  %2951 = vmatprep.subr.bf16.mxu0 0
  %2952 = vmatpush1.bf16.msra.mxu0 0
  %2953 = vmatprep.subr.bf16.mxu0 0
  %2954 = vmatpush1.bf16.msra.mxu0 %v2698
  %2955 = vmatprep.subr.bf16.mxu0 0
  %2956 = vmatpush1.bf16.msra.mxu0 %v2697
  %2957 = vmatprep.subr.bf16.mxu0 0
  %2958 = vmatpush2.bf16.msra.mxu0 0
  %2959 = vmatprep.subr.bf16.mxu0 0
  %2960 = vmatpush2.bf16.msra.mxu0 0
  %2961 = vmatprep.subr.bf16.mxu0 0
  %2962 = vmatpush2.bf16.msra.mxu0 0
  %2963 = vmatprep.subr.bf16.mxu0 0
  %2964 = vmatpush2.bf16.msra.mxu0 0
  %2965 = vmatprep.subr.bf16.mxu0 0
  %2966 = vmatpush2.bf16.msra.mxu0 0
  %2967 = vmatprep.subr.bf16.mxu0 0
  %2968 = vmatpush2.bf16.msra.mxu0 0
  %2969 = vmatprep.subr.bf16.mxu0 0
  %2970 = vmatpush2.bf16.msra.mxu0 0
  %2971 = vmatprep.subr.bf16.mxu0 0
  %2972 = vmatpush2.bf16.msra.mxu0 0
  %2973 = vmatprep.mubr.bf16.mxu0 0
  %2974 = vmatmul.mubr.bf16.gmra.mxu0 %v346
  %v2975 = vpop.f32.mrf.mxu0
  %v2976 = vadd.f32 %v2687, %v2975
  %v2977 = vpop.f32.mrf.mxu0
  %v2978 = vpop.f32.mrf.mxu0
  %v2979 = vpop.f32.mrf.mxu0
  %2980 = vdwg.mxu0
  %2981 = vmatprep.subr.bf16.mxu0 0
  %2982 = vmatpush1.bf16.msra.mxu0 0
  %2983 = vmatprep.subr.bf16.mxu0 0
  %2984 = vmatpush1.bf16.msra.mxu0 0
  %2985 = vmatprep.subr.bf16.mxu0 0
  %2986 = vmatpush1.bf16.msra.mxu0 0
  %2987 = vmatprep.subr.bf16.mxu0 0
  %2988 = vmatpush1.bf16.msra.mxu0 0
  %2989 = vmatprep.subr.bf16.mxu0 0
  %2990 = vmatpush1.bf16.msra.mxu0 0
  %2991 = vmatprep.subr.bf16.mxu0 0
  %2992 = vmatpush1.bf16.msra.mxu0 0
  %2993 = vmatprep.subr.bf16.mxu0 0
  %2994 = vmatpush1.bf16.msra.mxu0 %v2698
  %2995 = vmatprep.subr.bf16.mxu0 0
  %2996 = vmatpush1.bf16.msra.mxu0 %v2697
  %2997 = vmatprep.subr.bf16.mxu0 0
  %2998 = vmatpush2.bf16.msra.mxu0 0
  %2999 = vmatprep.subr.bf16.mxu0 0
  %3000 = vmatpush2.bf16.msra.mxu0 0
  %3001 = vmatprep.subr.bf16.mxu0 0
  %3002 = vmatpush2.bf16.msra.mxu0 0
  %3003 = vmatprep.subr.bf16.mxu0 0
  %3004 = vmatpush2.bf16.msra.mxu0 0
  %3005 = vmatprep.subr.bf16.mxu0 0
  %3006 = vmatpush2.bf16.msra.mxu0 0
  %3007 = vmatprep.subr.bf16.mxu0 0
  %3008 = vmatpush2.bf16.msra.mxu0 0
  %3009 = vmatprep.subr.bf16.mxu0 0
  %3010 = vmatpush2.bf16.msra.mxu0 0
  %3011 = vmatprep.subr.bf16.mxu0 0
  %3012 = vmatpush2.bf16.msra.mxu0 0
  %3013 = vmatprep.mubr.bf16.mxu0 0
  %3014 = vmatmul.mubr.bf16.gmra.mxu0 %v389
  %v3015 = vpop.f32.mrf.mxu0
  %v3016 = vadd.f32 %v2687, %v3015
  %v3017 = vpop.f32.mrf.mxu0
  %v3018 = vpop.f32.mrf.mxu0
  %v3019 = vpop.f32.mrf.mxu0
  %3020 = vdwg.mxu0
  %v3021 = vpack.c.bf16 %v2056, %v2056
  %v3022 = vpack.c.bf16 %v2096, %v2096
  %v3023 = vpack.c.bf16 %v2136, %v2136
  %v3024 = vpack.c.bf16 %v2176, %v2176
  %v3025 = vpack.c.bf16 %v2216, %v2216
  %v3026 = vpack.c.bf16 %v2256, %v2256
  %v3027 = vpack.c.bf16 %v2296, %v2296
  %v3028 = vpack.c.bf16 %v2336, %v2336
  %v3029 = vpack.c.bf16 %v2396, %v2396
  %v3030 = vpack.c.bf16 %v2436, %v2436
  %v3031 = vpack.c.bf16 %v2476, %v2476
  %v3032 = vpack.c.bf16 %v2516, %v2516
  %v3033 = vpack.c.bf16 %v2556, %v2556
  %v3034 = vpack.c.bf16 %v2596, %v2596
  %v3035 = vpack.c.bf16 %v2636, %v2636
  %v3036 = vpack.c.bf16 %v2676, %v2676
  %v3038 = vsel %vm1125, %v3021, 0
  %v3041 = vsel %vm1125, %v3029, 0
  %3043 = vmatprep.subr.bf16.mxu0 0
  %3044 = vmatpush1.bf16.xpose.msra.mxu0 0
  %3045 = vmatprep.subr.bf16.mxu0 0
  %3046 = vmatpush1.bf16.xpose.msra.mxu0 0
  %3047 = vmatprep.subr.bf16.mxu0 0
  %3048 = vmatpush1.bf16.xpose.msra.mxu0 0
  %3049 = vmatprep.subr.bf16.mxu0 0
  %3050 = vmatpush1.bf16.xpose.msra.mxu0 0
  %3051 = vmatprep.subr.bf16.mxu0 0
  %3052 = vmatpush1.bf16.xpose.msra.mxu0 0
  %3053 = vmatprep.subr.bf16.mxu0 0
  %3054 = vmatpush1.bf16.xpose.msra.mxu0 0
  %3055 = vmatprep.subr.bf16.mxu0 0
  %3056 = vmatpush1.bf16.xpose.msra.mxu0 0
  %3057 = vmatprep.subr.bf16.mxu0 0
  %3058 = vmatpush1.bf16.xpose.msra.mxu0 %v3041
  %3059 = vmatprep.subr.bf16.mxu0 0
  %3060 = vmatpush2.bf16.xpose.msra.mxu0 0
  %3061 = vmatprep.subr.bf16.mxu0 0
  %3062 = vmatpush2.bf16.xpose.msra.mxu0 0
  %3063 = vmatprep.subr.bf16.mxu0 0
  %3064 = vmatpush2.bf16.xpose.msra.mxu0 0
  %3065 = vmatprep.subr.bf16.mxu0 0
  %3066 = vmatpush2.bf16.xpose.msra.mxu0 0
  %3067 = vmatprep.subr.bf16.mxu0 0
  %3068 = vmatpush2.bf16.xpose.msra.mxu0 0
  %3069 = vmatprep.subr.bf16.mxu0 0
  %3070 = vmatpush2.bf16.xpose.msra.mxu0 0
  %3071 = vmatprep.subr.bf16.mxu0 0
  %3072 = vmatpush2.bf16.xpose.msra.mxu0 0
  %3073 = vmatprep.subr.bf16.mxu0 0
  %3074 = vmatpush2.bf16.xpose.msra.mxu0 0
  %3075 = vmatprep.mubr.bf16.mxu0 0
  %3076 = vmatmul.mubr.bf16.gmra.mxu0 %v3038
  %v3077 = vpop.f32.mrf.mxu0
  %v3078 = vadd.f32 0.0, %v3077
  %v3079 = vpop.f32.mrf.mxu0
  %v3080 = vpop.f32.mrf.mxu0
  %v3081 = vpop.f32.mrf.mxu0
  %3082 = vdwg.mxu0
  %v3084 = vsel %vm1125, %v3022, 0
  %v3087 = vsel %vm1125, %v3030, 0
  %3089 = vmatprep.subr.bf16.mxu0 0
  %3090 = vmatpush1.bf16.xpose.msra.mxu0 0
  %3091 = vmatprep.subr.bf16.mxu0 0
  %3092 = vmatpush1.bf16.xpose.msra.mxu0 0
  %3093 = vmatprep.subr.bf16.mxu0 0
  %3094 = vmatpush1.bf16.xpose.msra.mxu0 0
  %3095 = vmatprep.subr.bf16.mxu0 0
  %3096 = vmatpush1.bf16.xpose.msra.mxu0 0
  %3097 = vmatprep.subr.bf16.mxu0 0
  %3098 = vmatpush1.bf16.xpose.msra.mxu0 0
  %3099 = vmatprep.subr.bf16.mxu0 0
  %3100 = vmatpush1.bf16.xpose.msra.mxu0 0
  %3101 = vmatprep.subr.bf16.mxu0 0
  %3102 = vmatpush1.bf16.xpose.msra.mxu0 0
  %3103 = vmatprep.subr.bf16.mxu0 0
  %3104 = vmatpush1.bf16.xpose.msra.mxu0 %v3087
  %3105 = vmatprep.subr.bf16.mxu0 0
  %3106 = vmatpush2.bf16.xpose.msra.mxu0 0
  %3107 = vmatprep.subr.bf16.mxu0 0
  %3108 = vmatpush2.bf16.xpose.msra.mxu0 0
  %3109 = vmatprep.subr.bf16.mxu0 0
  %3110 = vmatpush2.bf16.xpose.msra.mxu0 0
  %3111 = vmatprep.subr.bf16.mxu0 0
  %3112 = vmatpush2.bf16.xpose.msra.mxu0 0
  %3113 = vmatprep.subr.bf16.mxu0 0
  %3114 = vmatpush2.bf16.xpose.msra.mxu0 0
  %3115 = vmatprep.subr.bf16.mxu0 0
  %3116 = vmatpush2.bf16.xpose.msra.mxu0 0
  %3117 = vmatprep.subr.bf16.mxu0 0
  %3118 = vmatpush2.bf16.xpose.msra.mxu0 0
  %3119 = vmatprep.subr.bf16.mxu0 0
  %3120 = vmatpush2.bf16.xpose.msra.mxu0 0
  %3121 = vmatprep.mubr.bf16.mxu0 0
  %3122 = vmatmul.mubr.bf16.gmra.mxu0 %v3084
  %v3123 = vpop.f32.mrf.mxu0
  %v3124 = vadd.f32 0.0, %v3123
  %v3125 = vpop.f32.mrf.mxu0
  %v3126 = vpop.f32.mrf.mxu0
  %v3127 = vpop.f32.mrf.mxu0
  %3128 = vdwg.mxu0
  %v3130 = vsel %vm1125, %v3023, 0
  %v3133 = vsel %vm1125, %v3031, 0
  %3135 = vmatprep.subr.bf16.mxu0 0
  %3136 = vmatpush1.bf16.xpose.msra.mxu0 0
  %3137 = vmatprep.subr.bf16.mxu0 0
  %3138 = vmatpush1.bf16.xpose.msra.mxu0 0
  %3139 = vmatprep.subr.bf16.mxu0 0
  %3140 = vmatpush1.bf16.xpose.msra.mxu0 0
  %3141 = vmatprep.subr.bf16.mxu0 0
  %3142 = vmatpush1.bf16.xpose.msra.mxu0 0
  %3143 = vmatprep.subr.bf16.mxu0 0
  %3144 = vmatpush1.bf16.xpose.msra.mxu0 0
  %3145 = vmatprep.subr.bf16.mxu0 0
  %3146 = vmatpush1.bf16.xpose.msra.mxu0 0
  %3147 = vmatprep.subr.bf16.mxu0 0
  %3148 = vmatpush1.bf16.xpose.msra.mxu0 0
  %3149 = vmatprep.subr.bf16.mxu0 0
  %3150 = vmatpush1.bf16.xpose.msra.mxu0 %v3133
  %3151 = vmatprep.subr.bf16.mxu0 0
  %3152 = vmatpush2.bf16.xpose.msra.mxu0 0
  %3153 = vmatprep.subr.bf16.mxu0 0
  %3154 = vmatpush2.bf16.xpose.msra.mxu0 0
  %3155 = vmatprep.subr.bf16.mxu0 0
  %3156 = vmatpush2.bf16.xpose.msra.mxu0 0
  %3157 = vmatprep.subr.bf16.mxu0 0
  %3158 = vmatpush2.bf16.xpose.msra.mxu0 0
  %3159 = vmatprep.subr.bf16.mxu0 0
  %3160 = vmatpush2.bf16.xpose.msra.mxu0 0
  %3161 = vmatprep.subr.bf16.mxu0 0
  %3162 = vmatpush2.bf16.xpose.msra.mxu0 0
  %3163 = vmatprep.subr.bf16.mxu0 0
  %3164 = vmatpush2.bf16.xpose.msra.mxu0 0
  %3165 = vmatprep.subr.bf16.mxu0 0
  %3166 = vmatpush2.bf16.xpose.msra.mxu0 0
  %3167 = vmatprep.mubr.bf16.mxu0 0
  %3168 = vmatmul.mubr.bf16.gmra.mxu0 %v3130
  %v3169 = vpop.f32.mrf.mxu0
  %v3170 = vadd.f32 0.0, %v3169
  %v3171 = vpop.f32.mrf.mxu0
  %v3172 = vpop.f32.mrf.mxu0
  %v3173 = vpop.f32.mrf.mxu0
  %3174 = vdwg.mxu0
  %v3176 = vsel %vm1125, %v3024, 0
  %v3179 = vsel %vm1125, %v3032, 0
  %3181 = vmatprep.subr.bf16.mxu0 0
  %3182 = vmatpush1.bf16.xpose.msra.mxu0 0
  %3183 = vmatprep.subr.bf16.mxu0 0
  %3184 = vmatpush1.bf16.xpose.msra.mxu0 0
  %3185 = vmatprep.subr.bf16.mxu0 0
  %3186 = vmatpush1.bf16.xpose.msra.mxu0 0
  %3187 = vmatprep.subr.bf16.mxu0 0
  %3188 = vmatpush1.bf16.xpose.msra.mxu0 0
  %3189 = vmatprep.subr.bf16.mxu0 0
  %3190 = vmatpush1.bf16.xpose.msra.mxu0 0
  %3191 = vmatprep.subr.bf16.mxu0 0
  %3192 = vmatpush1.bf16.xpose.msra.mxu0 0
  %3193 = vmatprep.subr.bf16.mxu0 0
  %3194 = vmatpush1.bf16.xpose.msra.mxu0 0
  %3195 = vmatprep.subr.bf16.mxu0 0
  %3196 = vmatpush1.bf16.xpose.msra.mxu0 %v3179
  %3197 = vmatprep.subr.bf16.mxu0 0
  %3198 = vmatpush2.bf16.xpose.msra.mxu0 0
  %3199 = vmatprep.subr.bf16.mxu0 0
  %3200 = vmatpush2.bf16.xpose.msra.mxu0 0
  %3201 = vmatprep.subr.bf16.mxu0 0
  %3202 = vmatpush2.bf16.xpose.msra.mxu0 0
  %3203 = vmatprep.subr.bf16.mxu0 0
  %3204 = vmatpush2.bf16.xpose.msra.mxu0 0
  %3205 = vmatprep.subr.bf16.mxu0 0
  %3206 = vmatpush2.bf16.xpose.msra.mxu0 0
  %3207 = vmatprep.subr.bf16.mxu0 0
  %3208 = vmatpush2.bf16.xpose.msra.mxu0 0
  %3209 = vmatprep.subr.bf16.mxu0 0
  %3210 = vmatpush2.bf16.xpose.msra.mxu0 0
  %3211 = vmatprep.subr.bf16.mxu0 0
  %3212 = vmatpush2.bf16.xpose.msra.mxu0 0
  %3213 = vmatprep.mubr.bf16.mxu0 0
  %3214 = vmatmul.mubr.bf16.gmra.mxu0 %v3176
  %v3215 = vpop.f32.mrf.mxu0
  %v3216 = vadd.f32 0.0, %v3215
  %v3217 = vpop.f32.mrf.mxu0
  %v3218 = vpop.f32.mrf.mxu0
  %v3219 = vpop.f32.mrf.mxu0
  %3220 = vdwg.mxu0
  %v3222 = vsel %vm1125, %v3025, 0
  %v3225 = vsel %vm1125, %v3033, 0
  %3227 = vmatprep.subr.bf16.mxu0 0
  %3228 = vmatpush1.bf16.xpose.msra.mxu0 0
  %3229 = vmatprep.subr.bf16.mxu0 0
  %3230 = vmatpush1.bf16.xpose.msra.mxu0 0
  %3231 = vmatprep.subr.bf16.mxu0 0
  %3232 = vmatpush1.bf16.xpose.msra.mxu0 0
  %3233 = vmatprep.subr.bf16.mxu0 0
  %3234 = vmatpush1.bf16.xpose.msra.mxu0 0
  %3235 = vmatprep.subr.bf16.mxu0 0
  %3236 = vmatpush1.bf16.xpose.msra.mxu0 0
  %3237 = vmatprep.subr.bf16.mxu0 0
  %3238 = vmatpush1.bf16.xpose.msra.mxu0 0
  %3239 = vmatprep.subr.bf16.mxu0 0
  %3240 = vmatpush1.bf16.xpose.msra.mxu0 0
  %3241 = vmatprep.subr.bf16.mxu0 0
  %3242 = vmatpush1.bf16.xpose.msra.mxu0 %v3225
  %3243 = vmatprep.subr.bf16.mxu0 0
  %3244 = vmatpush2.bf16.xpose.msra.mxu0 0
  %3245 = vmatprep.subr.bf16.mxu0 0
  %3246 = vmatpush2.bf16.xpose.msra.mxu0 0
  %3247 = vmatprep.subr.bf16.mxu0 0
  %3248 = vmatpush2.bf16.xpose.msra.mxu0 0
  %3249 = vmatprep.subr.bf16.mxu0 0
  %3250 = vmatpush2.bf16.xpose.msra.mxu0 0
  %3251 = vmatprep.subr.bf16.mxu0 0
  %3252 = vmatpush2.bf16.xpose.msra.mxu0 0
  %3253 = vmatprep.subr.bf16.mxu0 0
  %3254 = vmatpush2.bf16.xpose.msra.mxu0 0
  %3255 = vmatprep.subr.bf16.mxu0 0
  %3256 = vmatpush2.bf16.xpose.msra.mxu0 0
  %3257 = vmatprep.subr.bf16.mxu0 0
  %3258 = vmatpush2.bf16.xpose.msra.mxu0 0
  %3259 = vmatprep.mubr.bf16.mxu0 0
  %3260 = vmatmul.mubr.bf16.gmra.mxu0 %v3222
  %v3261 = vpop.f32.mrf.mxu0
  %v3262 = vadd.f32 0.0, %v3261
  %v3263 = vpop.f32.mrf.mxu0
  %v3264 = vpop.f32.mrf.mxu0
  %v3265 = vpop.f32.mrf.mxu0
  %3266 = vdwg.mxu0
  %v3268 = vsel %vm1125, %v3026, 0
  %v3271 = vsel %vm1125, %v3034, 0
  %3273 = vmatprep.subr.bf16.mxu0 0
  %3274 = vmatpush1.bf16.xpose.msra.mxu0 0
  %3275 = vmatprep.subr.bf16.mxu0 0
  %3276 = vmatpush1.bf16.xpose.msra.mxu0 0
  %3277 = vmatprep.subr.bf16.mxu0 0
  %3278 = vmatpush1.bf16.xpose.msra.mxu0 0
  %3279 = vmatprep.subr.bf16.mxu0 0
  %3280 = vmatpush1.bf16.xpose.msra.mxu0 0
  %3281 = vmatprep.subr.bf16.mxu0 0
  %3282 = vmatpush1.bf16.xpose.msra.mxu0 0
  %3283 = vmatprep.subr.bf16.mxu0 0
  %3284 = vmatpush1.bf16.xpose.msra.mxu0 0
  %3285 = vmatprep.subr.bf16.mxu0 0
  %3286 = vmatpush1.bf16.xpose.msra.mxu0 0
  %3287 = vmatprep.subr.bf16.mxu0 0
  %3288 = vmatpush1.bf16.xpose.msra.mxu0 %v3271
  %3289 = vmatprep.subr.bf16.mxu0 0
  %3290 = vmatpush2.bf16.xpose.msra.mxu0 0
  %3291 = vmatprep.subr.bf16.mxu0 0
  %3292 = vmatpush2.bf16.xpose.msra.mxu0 0
  %3293 = vmatprep.subr.bf16.mxu0 0
  %3294 = vmatpush2.bf16.xpose.msra.mxu0 0
  %3295 = vmatprep.subr.bf16.mxu0 0
  %3296 = vmatpush2.bf16.xpose.msra.mxu0 0
  %3297 = vmatprep.subr.bf16.mxu0 0
  %3298 = vmatpush2.bf16.xpose.msra.mxu0 0
  %3299 = vmatprep.subr.bf16.mxu0 0
  %3300 = vmatpush2.bf16.xpose.msra.mxu0 0
  %3301 = vmatprep.subr.bf16.mxu0 0
  %3302 = vmatpush2.bf16.xpose.msra.mxu0 0
  %3303 = vmatprep.subr.bf16.mxu0 0
  %3304 = vmatpush2.bf16.xpose.msra.mxu0 0
  %3305 = vmatprep.mubr.bf16.mxu0 0
  %3306 = vmatmul.mubr.bf16.gmra.mxu0 %v3268
  %v3307 = vpop.f32.mrf.mxu0
  %v3308 = vadd.f32 0.0, %v3307
  %v3309 = vpop.f32.mrf.mxu0
  %v3310 = vpop.f32.mrf.mxu0
  %v3311 = vpop.f32.mrf.mxu0
  %3312 = vdwg.mxu0
  %v3314 = vsel %vm1125, %v3027, 0
  %v3317 = vsel %vm1125, %v3035, 0
  %3319 = vmatprep.subr.bf16.mxu0 0
  %3320 = vmatpush1.bf16.xpose.msra.mxu0 0
  %3321 = vmatprep.subr.bf16.mxu0 0
  %3322 = vmatpush1.bf16.xpose.msra.mxu0 0
  %3323 = vmatprep.subr.bf16.mxu0 0
  %3324 = vmatpush1.bf16.xpose.msra.mxu0 0
  %3325 = vmatprep.subr.bf16.mxu0 0
  %3326 = vmatpush1.bf16.xpose.msra.mxu0 0
  %3327 = vmatprep.subr.bf16.mxu0 0
  %3328 = vmatpush1.bf16.xpose.msra.mxu0 0
  %3329 = vmatprep.subr.bf16.mxu0 0
  %3330 = vmatpush1.bf16.xpose.msra.mxu0 0
  %3331 = vmatprep.subr.bf16.mxu0 0
  %3332 = vmatpush1.bf16.xpose.msra.mxu0 0
  %3333 = vmatprep.subr.bf16.mxu0 0
  %3334 = vmatpush1.bf16.xpose.msra.mxu0 %v3317
  %3335 = vmatprep.subr.bf16.mxu0 0
  %3336 = vmatpush2.bf16.xpose.msra.mxu0 0
  %3337 = vmatprep.subr.bf16.mxu0 0
  %3338 = vmatpush2.bf16.xpose.msra.mxu0 0
  %3339 = vmatprep.subr.bf16.mxu0 0
  %3340 = vmatpush2.bf16.xpose.msra.mxu0 0
  %3341 = vmatprep.subr.bf16.mxu0 0
  %3342 = vmatpush2.bf16.xpose.msra.mxu0 0
  %3343 = vmatprep.subr.bf16.mxu0 0
  %3344 = vmatpush2.bf16.xpose.msra.mxu0 0
  %3345 = vmatprep.subr.bf16.mxu0 0
  %3346 = vmatpush2.bf16.xpose.msra.mxu0 0
  %3347 = vmatprep.subr.bf16.mxu0 0
  %3348 = vmatpush2.bf16.xpose.msra.mxu0 0
  %3349 = vmatprep.subr.bf16.mxu0 0
  %3350 = vmatpush2.bf16.xpose.msra.mxu0 0
  %3351 = vmatprep.mubr.bf16.mxu0 0
  %3352 = vmatmul.mubr.bf16.gmra.mxu0 %v3314
  %v3353 = vpop.f32.mrf.mxu0
  %v3354 = vadd.f32 0.0, %v3353
  %v3355 = vpop.f32.mrf.mxu0
  %v3356 = vpop.f32.mrf.mxu0
  %v3357 = vpop.f32.mrf.mxu0
  %3358 = vdwg.mxu0
  %v3360 = vsel %vm1125, %v3028, 0
  %v3363 = vsel %vm1125, %v3036, 0
  %3365 = vmatprep.subr.bf16.mxu0 0
  %3366 = vmatpush1.bf16.xpose.msra.mxu0 0
  %3367 = vmatprep.subr.bf16.mxu0 0
  %3368 = vmatpush1.bf16.xpose.msra.mxu0 0
  %3369 = vmatprep.subr.bf16.mxu0 0
  %3370 = vmatpush1.bf16.xpose.msra.mxu0 0
  %3371 = vmatprep.subr.bf16.mxu0 0
  %3372 = vmatpush1.bf16.xpose.msra.mxu0 0
  %3373 = vmatprep.subr.bf16.mxu0 0
  %3374 = vmatpush1.bf16.xpose.msra.mxu0 0
  %3375 = vmatprep.subr.bf16.mxu0 0
  %3376 = vmatpush1.bf16.xpose.msra.mxu0 0
  %3377 = vmatprep.subr.bf16.mxu0 0
  %3378 = vmatpush1.bf16.xpose.msra.mxu0 0
  %3379 = vmatprep.subr.bf16.mxu0 0
  %3380 = vmatpush1.bf16.xpose.msra.mxu0 %v3363
  %3381 = vmatprep.subr.bf16.mxu0 0
  %3382 = vmatpush2.bf16.xpose.msra.mxu0 0
  %3383 = vmatprep.subr.bf16.mxu0 0
  %3384 = vmatpush2.bf16.xpose.msra.mxu0 0
  %3385 = vmatprep.subr.bf16.mxu0 0
  %3386 = vmatpush2.bf16.xpose.msra.mxu0 0
  %3387 = vmatprep.subr.bf16.mxu0 0
  %3388 = vmatpush2.bf16.xpose.msra.mxu0 0
  %3389 = vmatprep.subr.bf16.mxu0 0
  %3390 = vmatpush2.bf16.xpose.msra.mxu0 0
  %3391 = vmatprep.subr.bf16.mxu0 0
  %3392 = vmatpush2.bf16.xpose.msra.mxu0 0
  %3393 = vmatprep.subr.bf16.mxu0 0
  %3394 = vmatpush2.bf16.xpose.msra.mxu0 0
  %3395 = vmatprep.subr.bf16.mxu0 0
  %3396 = vmatpush2.bf16.xpose.msra.mxu0 0
  %3397 = vmatprep.mubr.bf16.mxu0 0
  %3398 = vmatmul.mubr.bf16.gmra.mxu0 %v3360
  %v3399 = vpop.f32.mrf.mxu0
  %v3400 = vadd.f32 0.0, %v3399
  %v3401 = vpop.f32.mrf.mxu0
  %v3402 = vpop.f32.mrf.mxu0
  %v3403 = vpop.f32.mrf.mxu0
  %3404 = vdwg.mxu0
  %v3405 = vmul.f32 %v3078, 0.35355338
  %v3406 = vmul.f32 %v3124, 0.35355338
  %v3407 = vmul.f32 %v3170, 0.35355338
  %v3408 = vmul.f32 %v3216, 0.35355338
  %v3409 = vmul.f32 %v3262, 0.35355338
  %v3410 = vmul.f32 %v3308, 0.35355338
  %v3411 = vmul.f32 %v3354, 0.35355338
  %v3412 = vmul.f32 %v3400, 0.35355338
  %v3413 = vsel %vm1502, %v3405, -inf
  %3414 = vmax.xlane.f32.xlu0 %v3413
  %v3415 = vpop.xlane.xlu0 %3414
  %v3416 = vsel %vm1502, %v3406, -inf
  %3417 = vmax.xlane.f32.xlu0 %v3416
  %v3418 = vpop.xlane.xlu0 %3417
  %v3419 = vsel %vm1502, %v3407, -inf
  %3420 = vmax.xlane.f32.xlu0 %v3419
  %v3421 = vpop.xlane.xlu0 %3420
  %v3422 = vsel %vm1502, %v3408, -inf
  %3423 = vmax.xlane.f32.xlu0 %v3422
  %v3424 = vpop.xlane.xlu0 %3423
  %v3425 = vsel %vm1502, %v3409, -inf
  %3426 = vmax.xlane.f32.xlu0 %v3425
  %v3427 = vpop.xlane.xlu0 %3426
  %v3428 = vsel %vm1502, %v3410, -inf
  %3429 = vmax.xlane.f32.xlu0 %v3428
  %v3430 = vpop.xlane.xlu0 %3429
  %v3431 = vsel %vm1502, %v3411, -inf
  %3432 = vmax.xlane.f32.xlu0 %v3431
  %v3433 = vpop.xlane.xlu0 %3432
  %v3434 = vsel %vm1502, %v3412, -inf
  %3435 = vmax.xlane.f32.xlu0 %v3434
  %v3436 = vpop.xlane.xlu0 %3435
  %v3437 = vsub.f32 %v3405, %v3415
  %v3438 = vsub.f32 %v3406, %v3418
  %v3439 = vsub.f32 %v3407, %v3421
  %v3440 = vsub.f32 %v3408, %v3424
  %v3441 = vsub.f32 %v3409, %v3427
  %v3442 = vsub.f32 %v3410, %v3430
  %v3443 = vsub.f32 %v3411, %v3433
  %v3444 = vsub.f32 %v3412, %v3436
  %v3445 = vmul.f32 %v3437, 1.442695
  %v3446 = vpow.pop %v3445
  %v3447 = vmul.f32 %v3438, 1.442695
  %v3448 = vpow.pop %v3447
  %v3449 = vmul.f32 %v3439, 1.442695
  %v3450 = vpow.pop %v3449
  %v3451 = vmul.f32 %v3440, 1.442695
  %v3452 = vpow.pop %v3451
  %v3453 = vmul.f32 %v3441, 1.442695
  %v3454 = vpow.pop %v3453
  %v3455 = vmul.f32 %v3442, 1.442695
  %v3456 = vpow.pop %v3455
  %v3457 = vmul.f32 %v3443, 1.442695
  %v3458 = vpow.pop %v3457
  %v3459 = vmul.f32 %v3444, 1.442695
  %v3460 = vpow.pop %v3459
  %v3461 = vsel %vm1502, %v3446, 0.0
  %3462 = vadd.xlane.f32.xlu0 %v3461
  %v3463 = vpop.xlane.xlu0 %3462
  %v3464 = vsel %vm1502, %v3448, 0.0
  %3465 = vadd.xlane.f32.xlu0 %v3464
  %v3466 = vpop.xlane.xlu0 %3465
  %v3467 = vsel %vm1502, %v3450, 0.0
  %3468 = vadd.xlane.f32.xlu0 %v3467
  %v3469 = vpop.xlane.xlu0 %3468
  %v3470 = vsel %vm1502, %v3452, 0.0
  %3471 = vadd.xlane.f32.xlu0 %v3470
  %v3472 = vpop.xlane.xlu0 %3471
  %v3473 = vsel %vm1502, %v3454, 0.0
  %3474 = vadd.xlane.f32.xlu0 %v3473
  %v3475 = vpop.xlane.xlu0 %3474
  %v3476 = vsel %vm1502, %v3456, 0.0
  %3477 = vadd.xlane.f32.xlu0 %v3476
  %v3478 = vpop.xlane.xlu0 %3477
  %v3479 = vsel %vm1502, %v3458, 0.0
  %3480 = vadd.xlane.f32.xlu0 %v3479
  %v3481 = vpop.xlane.xlu0 %3480
  %v3482 = vsel %vm1502, %v3460, 0.0
  %3483 = vadd.xlane.f32.xlu0 %v3482
  %v3484 = vpop.xlane.xlu0 %3483
  %v3485 = vrcp.pop %v3463
  %v3486 = vrcp.pop %v3466
  %v3487 = vrcp.pop %v3469
  %v3488 = vrcp.pop %v3472
  %v3489 = vrcp.pop %v3475
  %v3490 = vrcp.pop %v3478
  %v3491 = vrcp.pop %v3481
  %v3492 = vrcp.pop %v3484
  %v3493 = vmul.f32 %v3446, %v3485
  %v3494 = vmul.f32 %v3448, %v3486
  %v3495 = vmul.f32 %v3450, %v3487
  %v3496 = vmul.f32 %v3452, %v3488
  %v3497 = vmul.f32 %v3454, %v3489
  %v3498 = vmul.f32 %v3456, %v3490
  %v3499 = vmul.f32 %v3458, %v3491
  %v3500 = vmul.f32 %v3460, %v3492
  %v3501 = vpack.c.bf16 %v3493, %v3493
  %v3502 = vpack.c.bf16 %v3494, %v3494
  %v3503 = vpack.c.bf16 %v3495, %v3495
  %v3504 = vpack.c.bf16 %v3496, %v3496
  %v3505 = vpack.c.bf16 %v3497, %v3497
  %v3506 = vpack.c.bf16 %v3498, %v3498
  %v3507 = vpack.c.bf16 %v3499, %v3499
  %v3508 = vpack.c.bf16 %v3500, %v3500
  %v3509 = vpack.c.bf16 %v2736, %v2736
  %v3510 = vpack.c.bf16 %v2776, %v2776
  %v3511 = vpack.c.bf16 %v2816, %v2816
  %v3512 = vpack.c.bf16 %v2856, %v2856
  %v3513 = vpack.c.bf16 %v2896, %v2896
  %v3514 = vpack.c.bf16 %v2936, %v2936
  %v3515 = vpack.c.bf16 %v2976, %v2976
  %v3516 = vpack.c.bf16 %v3016, %v3016
  %v3518 = vsel %vm1607, %v3501, 0
  %v3521 = vsel %vm1611, %v3509, 0
  %3523 = vmatprep.subr.bf16.mxu0 0
  %3524 = vmatpush1.bf16.msra.mxu0 0
  %3525 = vmatprep.subr.bf16.mxu0 0
  %3526 = vmatpush1.bf16.msra.mxu0 0
  %3527 = vmatprep.subr.bf16.mxu0 0
  %3528 = vmatpush1.bf16.msra.mxu0 0
  %3529 = vmatprep.subr.bf16.mxu0 0
  %3530 = vmatpush1.bf16.msra.mxu0 0
  %3531 = vmatprep.subr.bf16.mxu0 0
  %3532 = vmatpush1.bf16.msra.mxu0 0
  %3533 = vmatprep.subr.bf16.mxu0 0
  %3534 = vmatpush1.bf16.msra.mxu0 0
  %3535 = vmatprep.subr.bf16.mxu0 0
  %3536 = vmatpush1.bf16.msra.mxu0 0
  %3537 = vmatprep.subr.bf16.mxu0 0
  %3538 = vmatpush1.bf16.msra.mxu0 %v3521
  %3539 = vmatprep.subr.bf16.mxu0 0
  %3540 = vmatpush2.bf16.msra.mxu0 0
  %3541 = vmatprep.subr.bf16.mxu0 0
  %3542 = vmatpush2.bf16.msra.mxu0 0
  %3543 = vmatprep.subr.bf16.mxu0 0
  %3544 = vmatpush2.bf16.msra.mxu0 0
  %3545 = vmatprep.subr.bf16.mxu0 0
  %3546 = vmatpush2.bf16.msra.mxu0 0
  %3547 = vmatprep.subr.bf16.mxu0 0
  %3548 = vmatpush2.bf16.msra.mxu0 0
  %3549 = vmatprep.subr.bf16.mxu0 0
  %3550 = vmatpush2.bf16.msra.mxu0 0
  %3551 = vmatprep.subr.bf16.mxu0 0
  %3552 = vmatpush2.bf16.msra.mxu0 0
  %3553 = vmatprep.subr.bf16.mxu0 0
  %3554 = vmatpush2.bf16.msra.mxu0 0
  %3555 = vmatprep.mubr.bf16.mxu0 0
  %3556 = vmatmul.mubr.bf16.gmra.mxu0 %v3518
  %v3557 = vpop.f32.mrf.mxu0
  %v3558 = vadd.f32 0.0, %v3557
  %v3559 = vpop.f32.mrf.mxu0
  %v3560 = vpop.f32.mrf.mxu0
  %v3561 = vpop.f32.mrf.mxu0
  %3562 = vdwg.mxu0
  %v3564 = vsel %vm1607, %v3502, 0
  %v3567 = vsel %vm1611, %v3510, 0
  %3569 = vmatprep.subr.bf16.mxu0 0
  %3570 = vmatpush1.bf16.msra.mxu0 0
  %3571 = vmatprep.subr.bf16.mxu0 0
  %3572 = vmatpush1.bf16.msra.mxu0 0
  %3573 = vmatprep.subr.bf16.mxu0 0
  %3574 = vmatpush1.bf16.msra.mxu0 0
  %3575 = vmatprep.subr.bf16.mxu0 0
  %3576 = vmatpush1.bf16.msra.mxu0 0
  %3577 = vmatprep.subr.bf16.mxu0 0
  %3578 = vmatpush1.bf16.msra.mxu0 0
  %3579 = vmatprep.subr.bf16.mxu0 0
  %3580 = vmatpush1.bf16.msra.mxu0 0
  %3581 = vmatprep.subr.bf16.mxu0 0
  %3582 = vmatpush1.bf16.msra.mxu0 0
  %3583 = vmatprep.subr.bf16.mxu0 0
  %3584 = vmatpush1.bf16.msra.mxu0 %v3567
  %3585 = vmatprep.subr.bf16.mxu0 0
  %3586 = vmatpush2.bf16.msra.mxu0 0
  %3587 = vmatprep.subr.bf16.mxu0 0
  %3588 = vmatpush2.bf16.msra.mxu0 0
  %3589 = vmatprep.subr.bf16.mxu0 0
  %3590 = vmatpush2.bf16.msra.mxu0 0
  %3591 = vmatprep.subr.bf16.mxu0 0
  %3592 = vmatpush2.bf16.msra.mxu0 0
  %3593 = vmatprep.subr.bf16.mxu0 0
  %3594 = vmatpush2.bf16.msra.mxu0 0
  %3595 = vmatprep.subr.bf16.mxu0 0
  %3596 = vmatpush2.bf16.msra.mxu0 0
  %3597 = vmatprep.subr.bf16.mxu0 0
  %3598 = vmatpush2.bf16.msra.mxu0 0
  %3599 = vmatprep.subr.bf16.mxu0 0
  %3600 = vmatpush2.bf16.msra.mxu0 0
  %3601 = vmatprep.mubr.bf16.mxu0 0
  %3602 = vmatmul.mubr.bf16.gmra.mxu0 %v3564
  %v3603 = vpop.f32.mrf.mxu0
  %v3604 = vadd.f32 0.0, %v3603
  %v3605 = vpop.f32.mrf.mxu0
  %v3606 = vpop.f32.mrf.mxu0
  %v3607 = vpop.f32.mrf.mxu0
  %3608 = vdwg.mxu0
  %v3610 = vsel %vm1607, %v3503, 0
  %v3613 = vsel %vm1611, %v3511, 0
  %3615 = vmatprep.subr.bf16.mxu0 0
  %3616 = vmatpush1.bf16.msra.mxu0 0
  %3617 = vmatprep.subr.bf16.mxu0 0
  %3618 = vmatpush1.bf16.msra.mxu0 0
  %3619 = vmatprep.subr.bf16.mxu0 0
  %3620 = vmatpush1.bf16.msra.mxu0 0
  %3621 = vmatprep.subr.bf16.mxu0 0
  %3622 = vmatpush1.bf16.msra.mxu0 0
  %3623 = vmatprep.subr.bf16.mxu0 0
  %3624 = vmatpush1.bf16.msra.mxu0 0
  %3625 = vmatprep.subr.bf16.mxu0 0
  %3626 = vmatpush1.bf16.msra.mxu0 0
  %3627 = vmatprep.subr.bf16.mxu0 0
  %3628 = vmatpush1.bf16.msra.mxu0 0
  %3629 = vmatprep.subr.bf16.mxu0 0
  %3630 = vmatpush1.bf16.msra.mxu0 %v3613
  %3631 = vmatprep.subr.bf16.mxu0 0
  %3632 = vmatpush2.bf16.msra.mxu0 0
  %3633 = vmatprep.subr.bf16.mxu0 0
  %3634 = vmatpush2.bf16.msra.mxu0 0
  %3635 = vmatprep.subr.bf16.mxu0 0
  %3636 = vmatpush2.bf16.msra.mxu0 0
  %3637 = vmatprep.subr.bf16.mxu0 0
  %3638 = vmatpush2.bf16.msra.mxu0 0
  %3639 = vmatprep.subr.bf16.mxu0 0
  %3640 = vmatpush2.bf16.msra.mxu0 0
  %3641 = vmatprep.subr.bf16.mxu0 0
  %3642 = vmatpush2.bf16.msra.mxu0 0
  %3643 = vmatprep.subr.bf16.mxu0 0
  %3644 = vmatpush2.bf16.msra.mxu0 0
  %3645 = vmatprep.subr.bf16.mxu0 0
  %3646 = vmatpush2.bf16.msra.mxu0 0
  %3647 = vmatprep.mubr.bf16.mxu0 0
  %3648 = vmatmul.mubr.bf16.gmra.mxu0 %v3610
  %v3649 = vpop.f32.mrf.mxu0
  %v3650 = vadd.f32 0.0, %v3649
  %v3651 = vpop.f32.mrf.mxu0
  %v3652 = vpop.f32.mrf.mxu0
  %v3653 = vpop.f32.mrf.mxu0
  %3654 = vdwg.mxu0
  %v3656 = vsel %vm1607, %v3504, 0
  %v3659 = vsel %vm1611, %v3512, 0
  %3661 = vmatprep.subr.bf16.mxu0 0
  %3662 = vmatpush1.bf16.msra.mxu0 0
  %3663 = vmatprep.subr.bf16.mxu0 0
  %3664 = vmatpush1.bf16.msra.mxu0 0
  %3665 = vmatprep.subr.bf16.mxu0 0
  %3666 = vmatpush1.bf16.msra.mxu0 0
  %3667 = vmatprep.subr.bf16.mxu0 0
  %3668 = vmatpush1.bf16.msra.mxu0 0
  %3669 = vmatprep.subr.bf16.mxu0 0
  %3670 = vmatpush1.bf16.msra.mxu0 0
  %3671 = vmatprep.subr.bf16.mxu0 0
  %3672 = vmatpush1.bf16.msra.mxu0 0
  %3673 = vmatprep.subr.bf16.mxu0 0
  %3674 = vmatpush1.bf16.msra.mxu0 0
  %3675 = vmatprep.subr.bf16.mxu0 0
  %3676 = vmatpush1.bf16.msra.mxu0 %v3659
  %3677 = vmatprep.subr.bf16.mxu0 0
  %3678 = vmatpush2.bf16.msra.mxu0 0
  %3679 = vmatprep.subr.bf16.mxu0 0
  %3680 = vmatpush2.bf16.msra.mxu0 0
  %3681 = vmatprep.subr.bf16.mxu0 0
  %3682 = vmatpush2.bf16.msra.mxu0 0
  %3683 = vmatprep.subr.bf16.mxu0 0
  %3684 = vmatpush2.bf16.msra.mxu0 0
  %3685 = vmatprep.subr.bf16.mxu0 0
  %3686 = vmatpush2.bf16.msra.mxu0 0
  %3687 = vmatprep.subr.bf16.mxu0 0
  %3688 = vmatpush2.bf16.msra.mxu0 0
  %3689 = vmatprep.subr.bf16.mxu0 0
  %3690 = vmatpush2.bf16.msra.mxu0 0
  %3691 = vmatprep.subr.bf16.mxu0 0
  %3692 = vmatpush2.bf16.msra.mxu0 0
  %3693 = vmatprep.mubr.bf16.mxu0 0
  %3694 = vmatmul.mubr.bf16.gmra.mxu0 %v3656
  %v3695 = vpop.f32.mrf.mxu0
  %v3696 = vadd.f32 0.0, %v3695
  %v3697 = vpop.f32.mrf.mxu0
  %v3698 = vpop.f32.mrf.mxu0
  %v3699 = vpop.f32.mrf.mxu0
  %3700 = vdwg.mxu0
  %v3702 = vsel %vm1607, %v3505, 0
  %v3705 = vsel %vm1611, %v3513, 0
  %3707 = vmatprep.subr.bf16.mxu0 0
  %3708 = vmatpush1.bf16.msra.mxu0 0
  %3709 = vmatprep.subr.bf16.mxu0 0
  %3710 = vmatpush1.bf16.msra.mxu0 0
  %3711 = vmatprep.subr.bf16.mxu0 0
  %3712 = vmatpush1.bf16.msra.mxu0 0
  %3713 = vmatprep.subr.bf16.mxu0 0
  %3714 = vmatpush1.bf16.msra.mxu0 0
  %3715 = vmatprep.subr.bf16.mxu0 0
  %3716 = vmatpush1.bf16.msra.mxu0 0
  %3717 = vmatprep.subr.bf16.mxu0 0
  %3718 = vmatpush1.bf16.msra.mxu0 0
  %3719 = vmatprep.subr.bf16.mxu0 0
  %3720 = vmatpush1.bf16.msra.mxu0 0
  %3721 = vmatprep.subr.bf16.mxu0 0
  %3722 = vmatpush1.bf16.msra.mxu0 %v3705
  %3723 = vmatprep.subr.bf16.mxu0 0
  %3724 = vmatpush2.bf16.msra.mxu0 0
  %3725 = vmatprep.subr.bf16.mxu0 0
  %3726 = vmatpush2.bf16.msra.mxu0 0
  %3727 = vmatprep.subr.bf16.mxu0 0
  %3728 = vmatpush2.bf16.msra.mxu0 0
  %3729 = vmatprep.subr.bf16.mxu0 0
  %3730 = vmatpush2.bf16.msra.mxu0 0
  %3731 = vmatprep.subr.bf16.mxu0 0
  %3732 = vmatpush2.bf16.msra.mxu0 0
  %3733 = vmatprep.subr.bf16.mxu0 0
  %3734 = vmatpush2.bf16.msra.mxu0 0
  %3735 = vmatprep.subr.bf16.mxu0 0
  %3736 = vmatpush2.bf16.msra.mxu0 0
  %3737 = vmatprep.subr.bf16.mxu0 0
  %3738 = vmatpush2.bf16.msra.mxu0 0
  %3739 = vmatprep.mubr.bf16.mxu0 0
  %3740 = vmatmul.mubr.bf16.gmra.mxu0 %v3702
  %v3741 = vpop.f32.mrf.mxu0
  %v3742 = vadd.f32 0.0, %v3741
  %v3743 = vpop.f32.mrf.mxu0
  %v3744 = vpop.f32.mrf.mxu0
  %v3745 = vpop.f32.mrf.mxu0
  %3746 = vdwg.mxu0
  %v3748 = vsel %vm1607, %v3506, 0
  %v3751 = vsel %vm1611, %v3514, 0
  %3753 = vmatprep.subr.bf16.mxu0 0
  %3754 = vmatpush1.bf16.msra.mxu0 0
  %3755 = vmatprep.subr.bf16.mxu0 0
  %3756 = vmatpush1.bf16.msra.mxu0 0
  %3757 = vmatprep.subr.bf16.mxu0 0
  %3758 = vmatpush1.bf16.msra.mxu0 0
  %3759 = vmatprep.subr.bf16.mxu0 0
  %3760 = vmatpush1.bf16.msra.mxu0 0
  %3761 = vmatprep.subr.bf16.mxu0 0
  %3762 = vmatpush1.bf16.msra.mxu0 0
  %3763 = vmatprep.subr.bf16.mxu0 0
  %3764 = vmatpush1.bf16.msra.mxu0 0
  %3765 = vmatprep.subr.bf16.mxu0 0
  %3766 = vmatpush1.bf16.msra.mxu0 0
  %3767 = vmatprep.subr.bf16.mxu0 0
  %3768 = vmatpush1.bf16.msra.mxu0 %v3751
  %3769 = vmatprep.subr.bf16.mxu0 0
  %3770 = vmatpush2.bf16.msra.mxu0 0
  %3771 = vmatprep.subr.bf16.mxu0 0
  %3772 = vmatpush2.bf16.msra.mxu0 0
  %3773 = vmatprep.subr.bf16.mxu0 0
  %3774 = vmatpush2.bf16.msra.mxu0 0
  %3775 = vmatprep.subr.bf16.mxu0 0
  %3776 = vmatpush2.bf16.msra.mxu0 0
  %3777 = vmatprep.subr.bf16.mxu0 0
  %3778 = vmatpush2.bf16.msra.mxu0 0
  %3779 = vmatprep.subr.bf16.mxu0 0
  %3780 = vmatpush2.bf16.msra.mxu0 0
  %3781 = vmatprep.subr.bf16.mxu0 0
  %3782 = vmatpush2.bf16.msra.mxu0 0
  %3783 = vmatprep.subr.bf16.mxu0 0
  %3784 = vmatpush2.bf16.msra.mxu0 0
  %3785 = vmatprep.mubr.bf16.mxu0 0
  %3786 = vmatmul.mubr.bf16.gmra.mxu0 %v3748
  %v3787 = vpop.f32.mrf.mxu0
  %v3788 = vadd.f32 0.0, %v3787
  %v3789 = vpop.f32.mrf.mxu0
  %v3790 = vpop.f32.mrf.mxu0
  %v3791 = vpop.f32.mrf.mxu0
  %3792 = vdwg.mxu0
  %v3794 = vsel %vm1607, %v3507, 0
  %v3797 = vsel %vm1611, %v3515, 0
  %3799 = vmatprep.subr.bf16.mxu0 0
  %3800 = vmatpush1.bf16.msra.mxu0 0
  %3801 = vmatprep.subr.bf16.mxu0 0
  %3802 = vmatpush1.bf16.msra.mxu0 0
  %3803 = vmatprep.subr.bf16.mxu0 0
  %3804 = vmatpush1.bf16.msra.mxu0 0
  %3805 = vmatprep.subr.bf16.mxu0 0
  %3806 = vmatpush1.bf16.msra.mxu0 0
  %3807 = vmatprep.subr.bf16.mxu0 0
  %3808 = vmatpush1.bf16.msra.mxu0 0
  %3809 = vmatprep.subr.bf16.mxu0 0
  %3810 = vmatpush1.bf16.msra.mxu0 0
  %3811 = vmatprep.subr.bf16.mxu0 0
  %3812 = vmatpush1.bf16.msra.mxu0 0
  %3813 = vmatprep.subr.bf16.mxu0 0
  %3814 = vmatpush1.bf16.msra.mxu0 %v3797
  %3815 = vmatprep.subr.bf16.mxu0 0
  %3816 = vmatpush2.bf16.msra.mxu0 0
  %3817 = vmatprep.subr.bf16.mxu0 0
  %3818 = vmatpush2.bf16.msra.mxu0 0
  %3819 = vmatprep.subr.bf16.mxu0 0
  %3820 = vmatpush2.bf16.msra.mxu0 0
  %3821 = vmatprep.subr.bf16.mxu0 0
  %3822 = vmatpush2.bf16.msra.mxu0 0
  %3823 = vmatprep.subr.bf16.mxu0 0
  %3824 = vmatpush2.bf16.msra.mxu0 0
  %3825 = vmatprep.subr.bf16.mxu0 0
  %3826 = vmatpush2.bf16.msra.mxu0 0
  %3827 = vmatprep.subr.bf16.mxu0 0
  %3828 = vmatpush2.bf16.msra.mxu0 0
  %3829 = vmatprep.subr.bf16.mxu0 0
  %3830 = vmatpush2.bf16.msra.mxu0 0
  %3831 = vmatprep.mubr.bf16.mxu0 0
  %3832 = vmatmul.mubr.bf16.gmra.mxu0 %v3794
  %v3833 = vpop.f32.mrf.mxu0
  %v3834 = vadd.f32 0.0, %v3833
  %v3835 = vpop.f32.mrf.mxu0
  %v3836 = vpop.f32.mrf.mxu0
  %v3837 = vpop.f32.mrf.mxu0
  %3838 = vdwg.mxu0
  %v3840 = vsel %vm1607, %v3508, 0
  %v3843 = vsel %vm1611, %v3516, 0
  %3845 = vmatprep.subr.bf16.mxu0 0
  %3846 = vmatpush1.bf16.msra.mxu0 0
  %3847 = vmatprep.subr.bf16.mxu0 0
  %3848 = vmatpush1.bf16.msra.mxu0 0
  %3849 = vmatprep.subr.bf16.mxu0 0
  %3850 = vmatpush1.bf16.msra.mxu0 0
  %3851 = vmatprep.subr.bf16.mxu0 0
  %3852 = vmatpush1.bf16.msra.mxu0 0
  %3853 = vmatprep.subr.bf16.mxu0 0
  %3854 = vmatpush1.bf16.msra.mxu0 0
  %3855 = vmatprep.subr.bf16.mxu0 0
  %3856 = vmatpush1.bf16.msra.mxu0 0
  %3857 = vmatprep.subr.bf16.mxu0 0
  %3858 = vmatpush1.bf16.msra.mxu0 0
  %3859 = vmatprep.subr.bf16.mxu0 0
  %3860 = vmatpush1.bf16.msra.mxu0 %v3843
  %3861 = vmatprep.subr.bf16.mxu0 0
  %3862 = vmatpush2.bf16.msra.mxu0 0
  %3863 = vmatprep.subr.bf16.mxu0 0
  %3864 = vmatpush2.bf16.msra.mxu0 0
  %3865 = vmatprep.subr.bf16.mxu0 0
  %3866 = vmatpush2.bf16.msra.mxu0 0
  %3867 = vmatprep.subr.bf16.mxu0 0
  %3868 = vmatpush2.bf16.msra.mxu0 0
  %3869 = vmatprep.subr.bf16.mxu0 0
  %3870 = vmatpush2.bf16.msra.mxu0 0
  %3871 = vmatprep.subr.bf16.mxu0 0
  %3872 = vmatpush2.bf16.msra.mxu0 0
  %3873 = vmatprep.subr.bf16.mxu0 0
  %3874 = vmatpush2.bf16.msra.mxu0 0
  %3875 = vmatprep.subr.bf16.mxu0 0
  %3876 = vmatpush2.bf16.msra.mxu0 0
  %3877 = vmatprep.mubr.bf16.mxu0 0
  %3878 = vmatmul.mubr.bf16.gmra.mxu0 %v3840
  %v3879 = vpop.f32.mrf.mxu0
  %v3880 = vadd.f32 0.0, %v3879
  %v3881 = vpop.f32.mrf.mxu0
  %v3882 = vpop.f32.mrf.mxu0
  %v3883 = vpop.f32.mrf.mxu0
  %3884 = vdwg.mxu0
  %s3885 = scalar_lea.vmem %s7, 4
  %v3886 = vld [vmem:[%s3885] sm:$0xf]
  %v3887 = vpack.c.bf16 %v3558, %v3558
  %v3888 = vpack.c.bf16 %v3604, %v3604
  %v3889 = vpack.c.bf16 %v3650, %v3650
  %v3890 = vpack.c.bf16 %v3696, %v3696
  %v3891 = vpack.c.bf16 %v3742, %v3742
  %v3892 = vpack.c.bf16 %v3788, %v3788
  %v3893 = vpack.c.bf16 %v3834, %v3834
  %v3894 = vpack.c.bf16 %v3880, %v3880
  %v3896 = vsel %vm1125, %v3887, 0
  %vm3898 = vcmask 1043456
  %v3900 = vsel %vm3898, %v3886, 0
  %3902 = vmatprep.subr.bf16.mxu0 0
  %3903 = vmatpush1.bf16.msra.mxu0 0
  %3904 = vmatprep.subr.bf16.mxu0 0
  %3905 = vmatpush1.bf16.msra.mxu0 0
  %3906 = vmatprep.subr.bf16.mxu0 0
  %3907 = vmatpush1.bf16.msra.mxu0 0
  %3908 = vmatprep.subr.bf16.mxu0 0
  %3909 = vmatpush1.bf16.msra.mxu0 0
  %3910 = vmatprep.subr.bf16.mxu0 0
  %3911 = vmatpush1.bf16.msra.mxu0 0
  %3912 = vmatprep.subr.bf16.mxu0 0
  %3913 = vmatpush1.bf16.msra.mxu0 0
  %3914 = vmatprep.subr.bf16.mxu0 0
  %3915 = vmatpush1.bf16.msra.mxu0 0
  %3916 = vmatprep.subr.bf16.mxu0 0
  %3917 = vmatpush1.bf16.msra.mxu0 %v3900
  %3918 = vmatprep.subr.bf16.mxu0 0
  %3919 = vmatpush2.bf16.msra.mxu0 0
  %3920 = vmatprep.subr.bf16.mxu0 0
  %3921 = vmatpush2.bf16.msra.mxu0 0
  %3922 = vmatprep.subr.bf16.mxu0 0
  %3923 = vmatpush2.bf16.msra.mxu0 0
  %3924 = vmatprep.subr.bf16.mxu0 0
  %3925 = vmatpush2.bf16.msra.mxu0 0
  %3926 = vmatprep.subr.bf16.mxu0 0
  %3927 = vmatpush2.bf16.msra.mxu0 0
  %3928 = vmatprep.subr.bf16.mxu0 0
  %3929 = vmatpush2.bf16.msra.mxu0 0
  %3930 = vmatprep.subr.bf16.mxu0 0
  %3931 = vmatpush2.bf16.msra.mxu0 0
  %3932 = vmatprep.subr.bf16.mxu0 0
  %3933 = vmatpush2.bf16.msra.mxu0 0
  %3934 = vmatprep.mubr.bf16.mxu0 0
  %3935 = vmatmul.mubr.bf16.gmra.mxu0 %v3896
  %v3936 = vpop.f32.mrf.mxu0
  %v3937 = vadd.f32 0.0, %v3936
  %v3938 = vpop.f32.mrf.mxu0
  %v3939 = vpop.f32.mrf.mxu0
  %v3940 = vpop.f32.mrf.mxu0
  %3941 = vdwg.mxu0
  %v3943 = vsel %vm1125, %v3888, 0
  %3945 = vmatprep.subr.bf16.mxu0 0
  %3946 = vmatpush1.bf16.msra.mxu0 0
  %3947 = vmatprep.subr.bf16.mxu0 0
  %3948 = vmatpush1.bf16.msra.mxu0 0
  %3949 = vmatprep.subr.bf16.mxu0 0
  %3950 = vmatpush1.bf16.msra.mxu0 0
  %3951 = vmatprep.subr.bf16.mxu0 0
  %3952 = vmatpush1.bf16.msra.mxu0 0
  %3953 = vmatprep.subr.bf16.mxu0 0
  %3954 = vmatpush1.bf16.msra.mxu0 0
  %3955 = vmatprep.subr.bf16.mxu0 0
  %3956 = vmatpush1.bf16.msra.mxu0 0
  %3957 = vmatprep.subr.bf16.mxu0 0
  %3958 = vmatpush1.bf16.msra.mxu0 0
  %3959 = vmatprep.subr.bf16.mxu0 0
  %3960 = vmatpush1.bf16.msra.mxu0 %v3900
  %3961 = vmatprep.subr.bf16.mxu0 0
  %3962 = vmatpush2.bf16.msra.mxu0 0
  %3963 = vmatprep.subr.bf16.mxu0 0
  %3964 = vmatpush2.bf16.msra.mxu0 0
  %3965 = vmatprep.subr.bf16.mxu0 0
  %3966 = vmatpush2.bf16.msra.mxu0 0
  %3967 = vmatprep.subr.bf16.mxu0 0
  %3968 = vmatpush2.bf16.msra.mxu0 0
  %3969 = vmatprep.subr.bf16.mxu0 0
  %3970 = vmatpush2.bf16.msra.mxu0 0
  %3971 = vmatprep.subr.bf16.mxu0 0
  %3972 = vmatpush2.bf16.msra.mxu0 0
  %3973 = vmatprep.subr.bf16.mxu0 0
  %3974 = vmatpush2.bf16.msra.mxu0 0
  %3975 = vmatprep.subr.bf16.mxu0 0
  %3976 = vmatpush2.bf16.msra.mxu0 0
  %3977 = vmatprep.mubr.bf16.mxu0 0
  %3978 = vmatmul.mubr.bf16.gmra.mxu0 %v3943
  %v3979 = vpop.f32.mrf.mxu0
  %v3980 = vadd.f32 0.0, %v3979
  %v3981 = vpop.f32.mrf.mxu0
  %v3982 = vpop.f32.mrf.mxu0
  %v3983 = vpop.f32.mrf.mxu0
  %3984 = vdwg.mxu0
  %v3986 = vsel %vm1125, %v3889, 0
  %3988 = vmatprep.subr.bf16.mxu0 0
  %3989 = vmatpush1.bf16.msra.mxu0 0
  %3990 = vmatprep.subr.bf16.mxu0 0
  %3991 = vmatpush1.bf16.msra.mxu0 0
  %3992 = vmatprep.subr.bf16.mxu0 0
  %3993 = vmatpush1.bf16.msra.mxu0 0
  %3994 = vmatprep.subr.bf16.mxu0 0
  %3995 = vmatpush1.bf16.msra.mxu0 0
  %3996 = vmatprep.subr.bf16.mxu0 0
  %3997 = vmatpush1.bf16.msra.mxu0 0
  %3998 = vmatprep.subr.bf16.mxu0 0
  %3999 = vmatpush1.bf16.msra.mxu0 0
  %4000 = vmatprep.subr.bf16.mxu0 0
  %4001 = vmatpush1.bf16.msra.mxu0 0
  %4002 = vmatprep.subr.bf16.mxu0 0
  %4003 = vmatpush1.bf16.msra.mxu0 %v3900
  %4004 = vmatprep.subr.bf16.mxu0 0
  %4005 = vmatpush2.bf16.msra.mxu0 0
  %4006 = vmatprep.subr.bf16.mxu0 0
  %4007 = vmatpush2.bf16.msra.mxu0 0
  %4008 = vmatprep.subr.bf16.mxu0 0
  %4009 = vmatpush2.bf16.msra.mxu0 0
  %4010 = vmatprep.subr.bf16.mxu0 0
  %4011 = vmatpush2.bf16.msra.mxu0 0
  %4012 = vmatprep.subr.bf16.mxu0 0
  %4013 = vmatpush2.bf16.msra.mxu0 0
  %4014 = vmatprep.subr.bf16.mxu0 0
  %4015 = vmatpush2.bf16.msra.mxu0 0
  %4016 = vmatprep.subr.bf16.mxu0 0
  %4017 = vmatpush2.bf16.msra.mxu0 0
  %4018 = vmatprep.subr.bf16.mxu0 0
  %4019 = vmatpush2.bf16.msra.mxu0 0
  %4020 = vmatprep.mubr.bf16.mxu0 0
  %4021 = vmatmul.mubr.bf16.gmra.mxu0 %v3986
  %v4022 = vpop.f32.mrf.mxu0
  %v4023 = vadd.f32 0.0, %v4022
  %v4024 = vpop.f32.mrf.mxu0
  %v4025 = vpop.f32.mrf.mxu0
  %v4026 = vpop.f32.mrf.mxu0
  %4027 = vdwg.mxu0
  %v4029 = vsel %vm1125, %v3890, 0
  %4031 = vmatprep.subr.bf16.mxu0 0
  %4032 = vmatpush1.bf16.msra.mxu0 0
  %4033 = vmatprep.subr.bf16.mxu0 0
  %4034 = vmatpush1.bf16.msra.mxu0 0
  %4035 = vmatprep.subr.bf16.mxu0 0
  %4036 = vmatpush1.bf16.msra.mxu0 0
  %4037 = vmatprep.subr.bf16.mxu0 0
  %4038 = vmatpush1.bf16.msra.mxu0 0
  %4039 = vmatprep.subr.bf16.mxu0 0
  %4040 = vmatpush1.bf16.msra.mxu0 0
  %4041 = vmatprep.subr.bf16.mxu0 0
  %4042 = vmatpush1.bf16.msra.mxu0 0
  %4043 = vmatprep.subr.bf16.mxu0 0
  %4044 = vmatpush1.bf16.msra.mxu0 0
  %4045 = vmatprep.subr.bf16.mxu0 0
  %4046 = vmatpush1.bf16.msra.mxu0 %v3900
  %4047 = vmatprep.subr.bf16.mxu0 0
  %4048 = vmatpush2.bf16.msra.mxu0 0
  %4049 = vmatprep.subr.bf16.mxu0 0
  %4050 = vmatpush2.bf16.msra.mxu0 0
  %4051 = vmatprep.subr.bf16.mxu0 0
  %4052 = vmatpush2.bf16.msra.mxu0 0
  %4053 = vmatprep.subr.bf16.mxu0 0
  %4054 = vmatpush2.bf16.msra.mxu0 0
  %4055 = vmatprep.subr.bf16.mxu0 0
  %4056 = vmatpush2.bf16.msra.mxu0 0
  %4057 = vmatprep.subr.bf16.mxu0 0
  %4058 = vmatpush2.bf16.msra.mxu0 0
  %4059 = vmatprep.subr.bf16.mxu0 0
  %4060 = vmatpush2.bf16.msra.mxu0 0
  %4061 = vmatprep.subr.bf16.mxu0 0
  %4062 = vmatpush2.bf16.msra.mxu0 0
  %4063 = vmatprep.mubr.bf16.mxu0 0
  %4064 = vmatmul.mubr.bf16.gmra.mxu0 %v4029
  %v4065 = vpop.f32.mrf.mxu0
  %v4066 = vadd.f32 0.0, %v4065
  %v4067 = vpop.f32.mrf.mxu0
  %v4068 = vpop.f32.mrf.mxu0
  %v4069 = vpop.f32.mrf.mxu0
  %4070 = vdwg.mxu0
  %v4072 = vsel %vm1125, %v3891, 0
  %4074 = vmatprep.subr.bf16.mxu0 0
  %4075 = vmatpush1.bf16.msra.mxu0 0
  %4076 = vmatprep.subr.bf16.mxu0 0
  %4077 = vmatpush1.bf16.msra.mxu0 0
  %4078 = vmatprep.subr.bf16.mxu0 0
  %4079 = vmatpush1.bf16.msra.mxu0 0
  %4080 = vmatprep.subr.bf16.mxu0 0
  %4081 = vmatpush1.bf16.msra.mxu0 0
  %4082 = vmatprep.subr.bf16.mxu0 0
  %4083 = vmatpush1.bf16.msra.mxu0 0
  %4084 = vmatprep.subr.bf16.mxu0 0
  %4085 = vmatpush1.bf16.msra.mxu0 0
  %4086 = vmatprep.subr.bf16.mxu0 0
  %4087 = vmatpush1.bf16.msra.mxu0 0
  %4088 = vmatprep.subr.bf16.mxu0 0
  %4089 = vmatpush1.bf16.msra.mxu0 %v3900
  %4090 = vmatprep.subr.bf16.mxu0 0
  %4091 = vmatpush2.bf16.msra.mxu0 0
  %4092 = vmatprep.subr.bf16.mxu0 0
  %4093 = vmatpush2.bf16.msra.mxu0 0
  %4094 = vmatprep.subr.bf16.mxu0 0
  %4095 = vmatpush2.bf16.msra.mxu0 0
  %4096 = vmatprep.subr.bf16.mxu0 0
  %4097 = vmatpush2.bf16.msra.mxu0 0
  %4098 = vmatprep.subr.bf16.mxu0 0
  %4099 = vmatpush2.bf16.msra.mxu0 0
  %4100 = vmatprep.subr.bf16.mxu0 0
  %4101 = vmatpush2.bf16.msra.mxu0 0
  %4102 = vmatprep.subr.bf16.mxu0 0
  %4103 = vmatpush2.bf16.msra.mxu0 0
  %4104 = vmatprep.subr.bf16.mxu0 0
  %4105 = vmatpush2.bf16.msra.mxu0 0
  %4106 = vmatprep.mubr.bf16.mxu0 0
  %4107 = vmatmul.mubr.bf16.gmra.mxu0 %v4072
  %v4108 = vpop.f32.mrf.mxu0
  %v4109 = vadd.f32 0.0, %v4108
  %v4110 = vpop.f32.mrf.mxu0
  %v4111 = vpop.f32.mrf.mxu0
  %v4112 = vpop.f32.mrf.mxu0
  %4113 = vdwg.mxu0
  %v4115 = vsel %vm1125, %v3892, 0
  %4117 = vmatprep.subr.bf16.mxu0 0
  %4118 = vmatpush1.bf16.msra.mxu0 0
  %4119 = vmatprep.subr.bf16.mxu0 0
  %4120 = vmatpush1.bf16.msra.mxu0 0
  %4121 = vmatprep.subr.bf16.mxu0 0
  %4122 = vmatpush1.bf16.msra.mxu0 0
  %4123 = vmatprep.subr.bf16.mxu0 0
  %4124 = vmatpush1.bf16.msra.mxu0 0
  %4125 = vmatprep.subr.bf16.mxu0 0
  %4126 = vmatpush1.bf16.msra.mxu0 0
  %4127 = vmatprep.subr.bf16.mxu0 0
  %4128 = vmatpush1.bf16.msra.mxu0 0
  %4129 = vmatprep.subr.bf16.mxu0 0
  %4130 = vmatpush1.bf16.msra.mxu0 0
  %4131 = vmatprep.subr.bf16.mxu0 0
  %4132 = vmatpush1.bf16.msra.mxu0 %v3900
  %4133 = vmatprep.subr.bf16.mxu0 0
  %4134 = vmatpush2.bf16.msra.mxu0 0
  %4135 = vmatprep.subr.bf16.mxu0 0
  %4136 = vmatpush2.bf16.msra.mxu0 0
  %4137 = vmatprep.subr.bf16.mxu0 0
  %4138 = vmatpush2.bf16.msra.mxu0 0
  %4139 = vmatprep.subr.bf16.mxu0 0
  %4140 = vmatpush2.bf16.msra.mxu0 0
  %4141 = vmatprep.subr.bf16.mxu0 0
  %4142 = vmatpush2.bf16.msra.mxu0 0
  %4143 = vmatprep.subr.bf16.mxu0 0
  %4144 = vmatpush2.bf16.msra.mxu0 0
  %4145 = vmatprep.subr.bf16.mxu0 0
  %4146 = vmatpush2.bf16.msra.mxu0 0
  %4147 = vmatprep.subr.bf16.mxu0 0
  %4148 = vmatpush2.bf16.msra.mxu0 0
  %4149 = vmatprep.mubr.bf16.mxu0 0
  %4150 = vmatmul.mubr.bf16.gmra.mxu0 %v4115
  %v4151 = vpop.f32.mrf.mxu0
  %v4152 = vadd.f32 0.0, %v4151
  %v4153 = vpop.f32.mrf.mxu0
  %v4154 = vpop.f32.mrf.mxu0
  %v4155 = vpop.f32.mrf.mxu0
  %4156 = vdwg.mxu0
  %v4158 = vsel %vm1125, %v3893, 0
  %4160 = vmatprep.subr.bf16.mxu0 0
  %4161 = vmatpush1.bf16.msra.mxu0 0
  %4162 = vmatprep.subr.bf16.mxu0 0
  %4163 = vmatpush1.bf16.msra.mxu0 0
  %4164 = vmatprep.subr.bf16.mxu0 0
  %4165 = vmatpush1.bf16.msra.mxu0 0
  %4166 = vmatprep.subr.bf16.mxu0 0
  %4167 = vmatpush1.bf16.msra.mxu0 0
  %4168 = vmatprep.subr.bf16.mxu0 0
  %4169 = vmatpush1.bf16.msra.mxu0 0
  %4170 = vmatprep.subr.bf16.mxu0 0
  %4171 = vmatpush1.bf16.msra.mxu0 0
  %4172 = vmatprep.subr.bf16.mxu0 0
  %4173 = vmatpush1.bf16.msra.mxu0 0
  %4174 = vmatprep.subr.bf16.mxu0 0
  %4175 = vmatpush1.bf16.msra.mxu0 %v3900
  %4176 = vmatprep.subr.bf16.mxu0 0
  %4177 = vmatpush2.bf16.msra.mxu0 0
  %4178 = vmatprep.subr.bf16.mxu0 0
  %4179 = vmatpush2.bf16.msra.mxu0 0
  %4180 = vmatprep.subr.bf16.mxu0 0
  %4181 = vmatpush2.bf16.msra.mxu0 0
  %4182 = vmatprep.subr.bf16.mxu0 0
  %4183 = vmatpush2.bf16.msra.mxu0 0
  %4184 = vmatprep.subr.bf16.mxu0 0
  %4185 = vmatpush2.bf16.msra.mxu0 0
  %4186 = vmatprep.subr.bf16.mxu0 0
  %4187 = vmatpush2.bf16.msra.mxu0 0
  %4188 = vmatprep.subr.bf16.mxu0 0
  %4189 = vmatpush2.bf16.msra.mxu0 0
  %4190 = vmatprep.subr.bf16.mxu0 0
  %4191 = vmatpush2.bf16.msra.mxu0 0
  %4192 = vmatprep.mubr.bf16.mxu0 0
  %4193 = vmatmul.mubr.bf16.gmra.mxu0 %v4158
  %v4194 = vpop.f32.mrf.mxu0
  %v4195 = vadd.f32 0.0, %v4194
  %v4196 = vpop.f32.mrf.mxu0
  %v4197 = vpop.f32.mrf.mxu0
  %v4198 = vpop.f32.mrf.mxu0
  %4199 = vdwg.mxu0
  %v4201 = vsel %vm1125, %v3894, 0
  %4203 = vmatprep.subr.bf16.mxu0 0
  %4204 = vmatpush1.bf16.msra.mxu0 0
  %4205 = vmatprep.subr.bf16.mxu0 0
  %4206 = vmatpush1.bf16.msra.mxu0 0
  %4207 = vmatprep.subr.bf16.mxu0 0
  %4208 = vmatpush1.bf16.msra.mxu0 0
  %4209 = vmatprep.subr.bf16.mxu0 0
  %4210 = vmatpush1.bf16.msra.mxu0 0
  %4211 = vmatprep.subr.bf16.mxu0 0
  %4212 = vmatpush1.bf16.msra.mxu0 0
  %4213 = vmatprep.subr.bf16.mxu0 0
  %4214 = vmatpush1.bf16.msra.mxu0 0
  %4215 = vmatprep.subr.bf16.mxu0 0
  %4216 = vmatpush1.bf16.msra.mxu0 0
  %4217 = vmatprep.subr.bf16.mxu0 0
  %4218 = vmatpush1.bf16.msra.mxu0 %v3900
  %4219 = vmatprep.subr.bf16.mxu0 0
  %4220 = vmatpush2.bf16.msra.mxu0 0
  %4221 = vmatprep.subr.bf16.mxu0 0
  %4222 = vmatpush2.bf16.msra.mxu0 0
  %4223 = vmatprep.subr.bf16.mxu0 0
  %4224 = vmatpush2.bf16.msra.mxu0 0
  %4225 = vmatprep.subr.bf16.mxu0 0
  %4226 = vmatpush2.bf16.msra.mxu0 0
  %4227 = vmatprep.subr.bf16.mxu0 0
  %4228 = vmatpush2.bf16.msra.mxu0 0
  %4229 = vmatprep.subr.bf16.mxu0 0
  %4230 = vmatpush2.bf16.msra.mxu0 0
  %4231 = vmatprep.subr.bf16.mxu0 0
  %4232 = vmatpush2.bf16.msra.mxu0 0
  %4233 = vmatprep.subr.bf16.mxu0 0
  %4234 = vmatpush2.bf16.msra.mxu0 0
  %4235 = vmatprep.mubr.bf16.mxu0 0
  %4236 = vmatmul.mubr.bf16.gmra.mxu0 %v4201
  %v4237 = vpop.f32.mrf.mxu0
  %v4238 = vadd.f32 0.0, %v4237
  %v4239 = vpop.f32.mrf.mxu0
  %v4240 = vpop.f32.mrf.mxu0
  %v4241 = vpop.f32.mrf.mxu0
  %4242 = vdwg.mxu0
  %v4244 = vsel %vm1125, %v1978, 0
  %v4247 = vsel %vm3898, %v1977, 0
  %4249 = vmatprep.subr.bf16.mxu0 0
  %4250 = vmatpush1.bf16.msra.mxu0 0
  %4251 = vmatprep.subr.bf16.mxu0 0
  %4252 = vmatpush1.bf16.msra.mxu0 0
  %4253 = vmatprep.subr.bf16.mxu0 0
  %4254 = vmatpush1.bf16.msra.mxu0 0
  %4255 = vmatprep.subr.bf16.mxu0 0
  %4256 = vmatpush1.bf16.msra.mxu0 0
  %4257 = vmatprep.subr.bf16.mxu0 0
  %4258 = vmatpush1.bf16.msra.mxu0 0
  %4259 = vmatprep.subr.bf16.mxu0 0
  %4260 = vmatpush1.bf16.msra.mxu0 0
  %4261 = vmatprep.subr.bf16.mxu0 0
  %4262 = vmatpush1.bf16.msra.mxu0 0
  %4263 = vmatprep.subr.bf16.mxu0 0
  %4264 = vmatpush1.bf16.msra.mxu0 %v4247
  %4265 = vmatprep.subr.bf16.mxu0 0
  %4266 = vmatpush2.bf16.msra.mxu0 0
  %4267 = vmatprep.subr.bf16.mxu0 0
  %4268 = vmatpush2.bf16.msra.mxu0 0
  %4269 = vmatprep.subr.bf16.mxu0 0
  %4270 = vmatpush2.bf16.msra.mxu0 0
  %4271 = vmatprep.subr.bf16.mxu0 0
  %4272 = vmatpush2.bf16.msra.mxu0 0
  %4273 = vmatprep.subr.bf16.mxu0 0
  %4274 = vmatpush2.bf16.msra.mxu0 0
  %4275 = vmatprep.subr.bf16.mxu0 0
  %4276 = vmatpush2.bf16.msra.mxu0 0
  %4277 = vmatprep.subr.bf16.mxu0 0
  %4278 = vmatpush2.bf16.msra.mxu0 0
  %4279 = vmatprep.subr.bf16.mxu0 0
  %4280 = vmatpush2.bf16.msra.mxu0 0
  %4281 = vmatprep.mubr.bf16.mxu0 0
  %4282 = vmatmul.mubr.bf16.gmra.mxu0 %v4244
  %v4283 = vpop.f32.mrf.mxu0
  %v4284 = vadd.f32 %v3937, %v4283
  %v4285 = vpop.f32.mrf.mxu0
  %v4286 = vpop.f32.mrf.mxu0
  %v4287 = vpop.f32.mrf.mxu0
  %4288 = vdwg.mxu0
  %v4290 = vsel %vm1125, %v1979, 0
  %4292 = vmatprep.subr.bf16.mxu0 0
  %4293 = vmatpush1.bf16.msra.mxu0 0
  %4294 = vmatprep.subr.bf16.mxu0 0
  %4295 = vmatpush1.bf16.msra.mxu0 0
  %4296 = vmatprep.subr.bf16.mxu0 0
  %4297 = vmatpush1.bf16.msra.mxu0 0
  %4298 = vmatprep.subr.bf16.mxu0 0
  %4299 = vmatpush1.bf16.msra.mxu0 0
  %4300 = vmatprep.subr.bf16.mxu0 0
  %4301 = vmatpush1.bf16.msra.mxu0 0
  %4302 = vmatprep.subr.bf16.mxu0 0
  %4303 = vmatpush1.bf16.msra.mxu0 0
  %4304 = vmatprep.subr.bf16.mxu0 0
  %4305 = vmatpush1.bf16.msra.mxu0 0
  %4306 = vmatprep.subr.bf16.mxu0 0
  %4307 = vmatpush1.bf16.msra.mxu0 %v4247
  %4308 = vmatprep.subr.bf16.mxu0 0
  %4309 = vmatpush2.bf16.msra.mxu0 0
  %4310 = vmatprep.subr.bf16.mxu0 0
  %4311 = vmatpush2.bf16.msra.mxu0 0
  %4312 = vmatprep.subr.bf16.mxu0 0
  %4313 = vmatpush2.bf16.msra.mxu0 0
  %4314 = vmatprep.subr.bf16.mxu0 0
  %4315 = vmatpush2.bf16.msra.mxu0 0
  %4316 = vmatprep.subr.bf16.mxu0 0
  %4317 = vmatpush2.bf16.msra.mxu0 0
  %4318 = vmatprep.subr.bf16.mxu0 0
  %4319 = vmatpush2.bf16.msra.mxu0 0
  %4320 = vmatprep.subr.bf16.mxu0 0
  %4321 = vmatpush2.bf16.msra.mxu0 0
  %4322 = vmatprep.subr.bf16.mxu0 0
  %4323 = vmatpush2.bf16.msra.mxu0 0
  %4324 = vmatprep.mubr.bf16.mxu0 0
  %4325 = vmatmul.mubr.bf16.gmra.mxu0 %v4290
  %v4326 = vpop.f32.mrf.mxu0
  %v4327 = vadd.f32 %v3980, %v4326
  %v4328 = vpop.f32.mrf.mxu0
  %v4329 = vpop.f32.mrf.mxu0
  %v4330 = vpop.f32.mrf.mxu0
  %4331 = vdwg.mxu0
  %v4333 = vsel %vm1125, %v1980, 0
  %4335 = vmatprep.subr.bf16.mxu0 0
  %4336 = vmatpush1.bf16.msra.mxu0 0
  %4337 = vmatprep.subr.bf16.mxu0 0
  %4338 = vmatpush1.bf16.msra.mxu0 0
  %4339 = vmatprep.subr.bf16.mxu0 0
  %4340 = vmatpush1.bf16.msra.mxu0 0
  %4341 = vmatprep.subr.bf16.mxu0 0
  %4342 = vmatpush1.bf16.msra.mxu0 0
  %4343 = vmatprep.subr.bf16.mxu0 0
  %4344 = vmatpush1.bf16.msra.mxu0 0
  %4345 = vmatprep.subr.bf16.mxu0 0
  %4346 = vmatpush1.bf16.msra.mxu0 0
  %4347 = vmatprep.subr.bf16.mxu0 0
  %4348 = vmatpush1.bf16.msra.mxu0 0
  %4349 = vmatprep.subr.bf16.mxu0 0
  %4350 = vmatpush1.bf16.msra.mxu0 %v4247
  %4351 = vmatprep.subr.bf16.mxu0 0
  %4352 = vmatpush2.bf16.msra.mxu0 0
  %4353 = vmatprep.subr.bf16.mxu0 0
  %4354 = vmatpush2.bf16.msra.mxu0 0
  %4355 = vmatprep.subr.bf16.mxu0 0
  %4356 = vmatpush2.bf16.msra.mxu0 0
  %4357 = vmatprep.subr.bf16.mxu0 0
  %4358 = vmatpush2.bf16.msra.mxu0 0
  %4359 = vmatprep.subr.bf16.mxu0 0
  %4360 = vmatpush2.bf16.msra.mxu0 0
  %4361 = vmatprep.subr.bf16.mxu0 0
  %4362 = vmatpush2.bf16.msra.mxu0 0
  %4363 = vmatprep.subr.bf16.mxu0 0
  %4364 = vmatpush2.bf16.msra.mxu0 0
  %4365 = vmatprep.subr.bf16.mxu0 0
  %4366 = vmatpush2.bf16.msra.mxu0 0
  %4367 = vmatprep.mubr.bf16.mxu0 0
  %4368 = vmatmul.mubr.bf16.gmra.mxu0 %v4333
  %v4369 = vpop.f32.mrf.mxu0
  %v4370 = vadd.f32 %v4023, %v4369
  %v4371 = vpop.f32.mrf.mxu0
  %v4372 = vpop.f32.mrf.mxu0
  %v4373 = vpop.f32.mrf.mxu0
  %4374 = vdwg.mxu0
  %v4376 = vsel %vm1125, %v1981, 0
  %4378 = vmatprep.subr.bf16.mxu0 0
  %4379 = vmatpush1.bf16.msra.mxu0 0
  %4380 = vmatprep.subr.bf16.mxu0 0
  %4381 = vmatpush1.bf16.msra.mxu0 0
  %4382 = vmatprep.subr.bf16.mxu0 0
  %4383 = vmatpush1.bf16.msra.mxu0 0
  %4384 = vmatprep.subr.bf16.mxu0 0
  %4385 = vmatpush1.bf16.msra.mxu0 0
  %4386 = vmatprep.subr.bf16.mxu0 0
  %4387 = vmatpush1.bf16.msra.mxu0 0
  %4388 = vmatprep.subr.bf16.mxu0 0
  %4389 = vmatpush1.bf16.msra.mxu0 0
  %4390 = vmatprep.subr.bf16.mxu0 0
  %4391 = vmatpush1.bf16.msra.mxu0 0
  %4392 = vmatprep.subr.bf16.mxu0 0
  %4393 = vmatpush1.bf16.msra.mxu0 %v4247
  %4394 = vmatprep.subr.bf16.mxu0 0
  %4395 = vmatpush2.bf16.msra.mxu0 0
  %4396 = vmatprep.subr.bf16.mxu0 0
  %4397 = vmatpush2.bf16.msra.mxu0 0
  %4398 = vmatprep.subr.bf16.mxu0 0
  %4399 = vmatpush2.bf16.msra.mxu0 0
  %4400 = vmatprep.subr.bf16.mxu0 0
  %4401 = vmatpush2.bf16.msra.mxu0 0
  %4402 = vmatprep.subr.bf16.mxu0 0
  %4403 = vmatpush2.bf16.msra.mxu0 0
  %4404 = vmatprep.subr.bf16.mxu0 0
  %4405 = vmatpush2.bf16.msra.mxu0 0
  %4406 = vmatprep.subr.bf16.mxu0 0
  %4407 = vmatpush2.bf16.msra.mxu0 0
  %4408 = vmatprep.subr.bf16.mxu0 0
  %4409 = vmatpush2.bf16.msra.mxu0 0
  %4410 = vmatprep.mubr.bf16.mxu0 0
  %4411 = vmatmul.mubr.bf16.gmra.mxu0 %v4376
  %v4412 = vpop.f32.mrf.mxu0
  %v4413 = vadd.f32 %v4066, %v4412
  %v4414 = vpop.f32.mrf.mxu0
  %v4415 = vpop.f32.mrf.mxu0
  %v4416 = vpop.f32.mrf.mxu0
  %4417 = vdwg.mxu0
  %v4419 = vsel %vm1125, %v1982, 0
  %4421 = vmatprep.subr.bf16.mxu0 0
  %4422 = vmatpush1.bf16.msra.mxu0 0
  %4423 = vmatprep.subr.bf16.mxu0 0
  %4424 = vmatpush1.bf16.msra.mxu0 0
  %4425 = vmatprep.subr.bf16.mxu0 0
  %4426 = vmatpush1.bf16.msra.mxu0 0
  %4427 = vmatprep.subr.bf16.mxu0 0
  %4428 = vmatpush1.bf16.msra.mxu0 0
  %4429 = vmatprep.subr.bf16.mxu0 0
  %4430 = vmatpush1.bf16.msra.mxu0 0
  %4431 = vmatprep.subr.bf16.mxu0 0
  %4432 = vmatpush1.bf16.msra.mxu0 0
  %4433 = vmatprep.subr.bf16.mxu0 0
  %4434 = vmatpush1.bf16.msra.mxu0 0
  %4435 = vmatprep.subr.bf16.mxu0 0
  %4436 = vmatpush1.bf16.msra.mxu0 %v4247
  %4437 = vmatprep.subr.bf16.mxu0 0
  %4438 = vmatpush2.bf16.msra.mxu0 0
  %4439 = vmatprep.subr.bf16.mxu0 0
  %4440 = vmatpush2.bf16.msra.mxu0 0
  %4441 = vmatprep.subr.bf16.mxu0 0
  %4442 = vmatpush2.bf16.msra.mxu0 0
  %4443 = vmatprep.subr.bf16.mxu0 0
  %4444 = vmatpush2.bf16.msra.mxu0 0
  %4445 = vmatprep.subr.bf16.mxu0 0
  %4446 = vmatpush2.bf16.msra.mxu0 0
  %4447 = vmatprep.subr.bf16.mxu0 0
  %4448 = vmatpush2.bf16.msra.mxu0 0
  %4449 = vmatprep.subr.bf16.mxu0 0
  %4450 = vmatpush2.bf16.msra.mxu0 0
  %4451 = vmatprep.subr.bf16.mxu0 0
  %4452 = vmatpush2.bf16.msra.mxu0 0
  %4453 = vmatprep.mubr.bf16.mxu0 0
  %4454 = vmatmul.mubr.bf16.gmra.mxu0 %v4419
  %v4455 = vpop.f32.mrf.mxu0
  %v4456 = vadd.f32 %v4109, %v4455
  %v4457 = vpop.f32.mrf.mxu0
  %v4458 = vpop.f32.mrf.mxu0
  %v4459 = vpop.f32.mrf.mxu0
  %4460 = vdwg.mxu0
  %v4462 = vsel %vm1125, %v1983, 0
  %4464 = vmatprep.subr.bf16.mxu0 0
  %4465 = vmatpush1.bf16.msra.mxu0 0
  %4466 = vmatprep.subr.bf16.mxu0 0
  %4467 = vmatpush1.bf16.msra.mxu0 0
  %4468 = vmatprep.subr.bf16.mxu0 0
  %4469 = vmatpush1.bf16.msra.mxu0 0
  %4470 = vmatprep.subr.bf16.mxu0 0
  %4471 = vmatpush1.bf16.msra.mxu0 0
  %4472 = vmatprep.subr.bf16.mxu0 0
  %4473 = vmatpush1.bf16.msra.mxu0 0
  %4474 = vmatprep.subr.bf16.mxu0 0
  %4475 = vmatpush1.bf16.msra.mxu0 0
  %4476 = vmatprep.subr.bf16.mxu0 0
  %4477 = vmatpush1.bf16.msra.mxu0 0
  %4478 = vmatprep.subr.bf16.mxu0 0
  %4479 = vmatpush1.bf16.msra.mxu0 %v4247
  %4480 = vmatprep.subr.bf16.mxu0 0
  %4481 = vmatpush2.bf16.msra.mxu0 0
  %4482 = vmatprep.subr.bf16.mxu0 0
  %4483 = vmatpush2.bf16.msra.mxu0 0
  %4484 = vmatprep.subr.bf16.mxu0 0
  %4485 = vmatpush2.bf16.msra.mxu0 0
  %4486 = vmatprep.subr.bf16.mxu0 0
  %4487 = vmatpush2.bf16.msra.mxu0 0
  %4488 = vmatprep.subr.bf16.mxu0 0
  %4489 = vmatpush2.bf16.msra.mxu0 0
  %4490 = vmatprep.subr.bf16.mxu0 0
  %4491 = vmatpush2.bf16.msra.mxu0 0
  %4492 = vmatprep.subr.bf16.mxu0 0
  %4493 = vmatpush2.bf16.msra.mxu0 0
  %4494 = vmatprep.subr.bf16.mxu0 0
  %4495 = vmatpush2.bf16.msra.mxu0 0
  %4496 = vmatprep.mubr.bf16.mxu0 0
  %4497 = vmatmul.mubr.bf16.gmra.mxu0 %v4462
  %v4498 = vpop.f32.mrf.mxu0
  %v4499 = vadd.f32 %v4152, %v4498
  %v4500 = vpop.f32.mrf.mxu0
  %v4501 = vpop.f32.mrf.mxu0
  %v4502 = vpop.f32.mrf.mxu0
  %4503 = vdwg.mxu0
  %v4505 = vsel %vm1125, %v1984, 0
  %4507 = vmatprep.subr.bf16.mxu0 0
  %4508 = vmatpush1.bf16.msra.mxu0 0
  %4509 = vmatprep.subr.bf16.mxu0 0
  %4510 = vmatpush1.bf16.msra.mxu0 0
  %4511 = vmatprep.subr.bf16.mxu0 0
  %4512 = vmatpush1.bf16.msra.mxu0 0
  %4513 = vmatprep.subr.bf16.mxu0 0
  %4514 = vmatpush1.bf16.msra.mxu0 0
  %4515 = vmatprep.subr.bf16.mxu0 0
  %4516 = vmatpush1.bf16.msra.mxu0 0
  %4517 = vmatprep.subr.bf16.mxu0 0
  %4518 = vmatpush1.bf16.msra.mxu0 0
  %4519 = vmatprep.subr.bf16.mxu0 0
  %4520 = vmatpush1.bf16.msra.mxu0 0
  %4521 = vmatprep.subr.bf16.mxu0 0
  %4522 = vmatpush1.bf16.msra.mxu0 %v4247
  %4523 = vmatprep.subr.bf16.mxu0 0
  %4524 = vmatpush2.bf16.msra.mxu0 0
  %4525 = vmatprep.subr.bf16.mxu0 0
  %4526 = vmatpush2.bf16.msra.mxu0 0
  %4527 = vmatprep.subr.bf16.mxu0 0
  %4528 = vmatpush2.bf16.msra.mxu0 0
  %4529 = vmatprep.subr.bf16.mxu0 0
  %4530 = vmatpush2.bf16.msra.mxu0 0
  %4531 = vmatprep.subr.bf16.mxu0 0
  %4532 = vmatpush2.bf16.msra.mxu0 0
  %4533 = vmatprep.subr.bf16.mxu0 0
  %4534 = vmatpush2.bf16.msra.mxu0 0
  %4535 = vmatprep.subr.bf16.mxu0 0
  %4536 = vmatpush2.bf16.msra.mxu0 0
  %4537 = vmatprep.subr.bf16.mxu0 0
  %4538 = vmatpush2.bf16.msra.mxu0 0
  %4539 = vmatprep.mubr.bf16.mxu0 0
  %4540 = vmatmul.mubr.bf16.gmra.mxu0 %v4505
  %v4541 = vpop.f32.mrf.mxu0
  %v4542 = vadd.f32 %v4195, %v4541
  %v4543 = vpop.f32.mrf.mxu0
  %v4544 = vpop.f32.mrf.mxu0
  %v4545 = vpop.f32.mrf.mxu0
  %4546 = vdwg.mxu0
  %v4548 = vsel %vm1125, %v1985, 0
  %4550 = vmatprep.subr.bf16.mxu0 0
  %4551 = vmatpush1.bf16.msra.mxu0 0
  %4552 = vmatprep.subr.bf16.mxu0 0
  %4553 = vmatpush1.bf16.msra.mxu0 0
  %4554 = vmatprep.subr.bf16.mxu0 0
  %4555 = vmatpush1.bf16.msra.mxu0 0
  %4556 = vmatprep.subr.bf16.mxu0 0
  %4557 = vmatpush1.bf16.msra.mxu0 0
  %4558 = vmatprep.subr.bf16.mxu0 0
  %4559 = vmatpush1.bf16.msra.mxu0 0
  %4560 = vmatprep.subr.bf16.mxu0 0
  %4561 = vmatpush1.bf16.msra.mxu0 0
  %4562 = vmatprep.subr.bf16.mxu0 0
  %4563 = vmatpush1.bf16.msra.mxu0 0
  %4564 = vmatprep.subr.bf16.mxu0 0
  %4565 = vmatpush1.bf16.msra.mxu0 %v4247
  %4566 = vmatprep.subr.bf16.mxu0 0
  %4567 = vmatpush2.bf16.msra.mxu0 0
  %4568 = vmatprep.subr.bf16.mxu0 0
  %4569 = vmatpush2.bf16.msra.mxu0 0
  %4570 = vmatprep.subr.bf16.mxu0 0
  %4571 = vmatpush2.bf16.msra.mxu0 0
  %4572 = vmatprep.subr.bf16.mxu0 0
  %4573 = vmatpush2.bf16.msra.mxu0 0
  %4574 = vmatprep.subr.bf16.mxu0 0
  %4575 = vmatpush2.bf16.msra.mxu0 0
  %4576 = vmatprep.subr.bf16.mxu0 0
  %4577 = vmatpush2.bf16.msra.mxu0 0
  %4578 = vmatprep.subr.bf16.mxu0 0
  %4579 = vmatpush2.bf16.msra.mxu0 0
  %4580 = vmatprep.subr.bf16.mxu0 0
  %4581 = vmatpush2.bf16.msra.mxu0 0
  %4582 = vmatprep.mubr.bf16.mxu0 0
  %4583 = vmatmul.mubr.bf16.gmra.mxu0 %v4548
  %v4584 = vpop.f32.mrf.mxu0
  %v4585 = vadd.f32 %v4238, %v4584
  %v4586 = vpop.f32.mrf.mxu0
  %v4587 = vpop.f32.mrf.mxu0
  %v4588 = vpop.f32.mrf.mxu0
  %4589 = vdwg.mxu0
  %s4590 = scalar_lea.vmem %s1, 32
  %v4591 = vld [vmem:[%s4590] sm:$0xf]
  %v4592 = vld [vmem:[%s4590 + $0x4] sm:$0xf]
  %v4593 = vld [vmem:[%s4590 + $0x8] sm:$0xf]
  %v4594 = vld [vmem:[%s4590 + $0xc] sm:$0xf]
  %s4595 = scalar_lea.vmem %s2, 32
  %v4596 = vld [vmem:[%s4595] sm:$0xf]
  %v4597 = vld [vmem:[%s4595 + $0x4] sm:$0xf]
  %v4598 = vld [vmem:[%s4595 + $0x8] sm:$0xf]
  %v4599 = vld [vmem:[%s4595 + $0xc] sm:$0xf]
  %s4600 = scalar_lea.vmem %s3, 32
  %v4601 = vld [vmem:[%s4600] sm:$0xf]
  %v4602 = vld [vmem:[%s4600 + $0x4] sm:$0xf]
  %v4603 = vld [vmem:[%s4600 + $0x8] sm:$0xf]
  %v4604 = vld [vmem:[%s4600 + $0xc] sm:$0xf]
  %s4605 = scalar_lea.vmem %s4, 2
  %v4606 = vld [vmem:[%s4605] sm:$0x1]
  %v4608 = vlaneseq
  %v4609 = vshrl.u32 %v4608, 7
  %v4610 = vsub.s32 0, %v4609
  %v4611 = vrot.slane %v4606, %v4610
  %v4617 = vunpack.c.l.b16 %v4591
  %v4618 = vunpack.c.l.b16 %v4592
  %v4619 = vunpack.c.l.b16 %v4593
  %v4620 = vunpack.c.l.b16 %v4594
  %v4621 = vpack.c.b16 %v4618, %v4617
  %v4622 = vpack.c.b16 %v4620, %v4619
  %4625 = vmatprep.subr.bf16.mxu0 0
  %4626 = vmatpush1.bf16.msra.mxu0 0
  %4627 = vmatprep.subr.bf16.mxu0 0
  %4628 = vmatpush1.bf16.msra.mxu0 0
  %4629 = vmatprep.subr.bf16.mxu0 0
  %4630 = vmatpush1.bf16.msra.mxu0 0
  %4631 = vmatprep.subr.bf16.mxu0 0
  %4632 = vmatpush1.bf16.msra.mxu0 0
  %4633 = vmatprep.subr.bf16.mxu0 0
  %4634 = vmatpush1.bf16.msra.mxu0 0
  %4635 = vmatprep.subr.bf16.mxu0 0
  %4636 = vmatpush1.bf16.msra.mxu0 0
  %4637 = vmatprep.subr.bf16.mxu0 0
  %4638 = vmatpush1.bf16.msra.mxu0 %v4622
  %4639 = vmatprep.subr.bf16.mxu0 0
  %4640 = vmatpush1.bf16.msra.mxu0 %v4621
  %4641 = vmatprep.subr.bf16.mxu0 0
  %4642 = vmatpush2.bf16.msra.mxu0 0
  %4643 = vmatprep.subr.bf16.mxu0 0
  %4644 = vmatpush2.bf16.msra.mxu0 0
  %4645 = vmatprep.subr.bf16.mxu0 0
  %4646 = vmatpush2.bf16.msra.mxu0 0
  %4647 = vmatprep.subr.bf16.mxu0 0
  %4648 = vmatpush2.bf16.msra.mxu0 0
  %4649 = vmatprep.subr.bf16.mxu0 0
  %4650 = vmatpush2.bf16.msra.mxu0 0
  %4651 = vmatprep.subr.bf16.mxu0 0
  %4652 = vmatpush2.bf16.msra.mxu0 0
  %4653 = vmatprep.subr.bf16.mxu0 0
  %4654 = vmatpush2.bf16.msra.mxu0 0
  %4655 = vmatprep.subr.bf16.mxu0 0
  %4656 = vmatpush2.bf16.msra.mxu0 0
  %4657 = vmatprep.mubr.bf16.mxu0 0
  %4658 = vmatmul.mubr.bf16.gmra.mxu0 %v88
  %v4659 = vpop.f32.mrf.mxu0
  %v4660 = vadd.f32 %v4611, %v4659
  %v4661 = vpop.f32.mrf.mxu0
  %v4662 = vpop.f32.mrf.mxu0
  %v4663 = vpop.f32.mrf.mxu0
  %4664 = vdwg.mxu0
  %4665 = vmatprep.subr.bf16.mxu0 0
  %4666 = vmatpush1.bf16.msra.mxu0 0
  %4667 = vmatprep.subr.bf16.mxu0 0
  %4668 = vmatpush1.bf16.msra.mxu0 0
  %4669 = vmatprep.subr.bf16.mxu0 0
  %4670 = vmatpush1.bf16.msra.mxu0 0
  %4671 = vmatprep.subr.bf16.mxu0 0
  %4672 = vmatpush1.bf16.msra.mxu0 0
  %4673 = vmatprep.subr.bf16.mxu0 0
  %4674 = vmatpush1.bf16.msra.mxu0 0
  %4675 = vmatprep.subr.bf16.mxu0 0
  %4676 = vmatpush1.bf16.msra.mxu0 0
  %4677 = vmatprep.subr.bf16.mxu0 0
  %4678 = vmatpush1.bf16.msra.mxu0 %v4622
  %4679 = vmatprep.subr.bf16.mxu0 0
  %4680 = vmatpush1.bf16.msra.mxu0 %v4621
  %4681 = vmatprep.subr.bf16.mxu0 0
  %4682 = vmatpush2.bf16.msra.mxu0 0
  %4683 = vmatprep.subr.bf16.mxu0 0
  %4684 = vmatpush2.bf16.msra.mxu0 0
  %4685 = vmatprep.subr.bf16.mxu0 0
  %4686 = vmatpush2.bf16.msra.mxu0 0
  %4687 = vmatprep.subr.bf16.mxu0 0
  %4688 = vmatpush2.bf16.msra.mxu0 0
  %4689 = vmatprep.subr.bf16.mxu0 0
  %4690 = vmatpush2.bf16.msra.mxu0 0
  %4691 = vmatprep.subr.bf16.mxu0 0
  %4692 = vmatpush2.bf16.msra.mxu0 0
  %4693 = vmatprep.subr.bf16.mxu0 0
  %4694 = vmatpush2.bf16.msra.mxu0 0
  %4695 = vmatprep.subr.bf16.mxu0 0
  %4696 = vmatpush2.bf16.msra.mxu0 0
  %4697 = vmatprep.mubr.bf16.mxu0 0
  %4698 = vmatmul.mubr.bf16.gmra.mxu0 %v131
  %v4699 = vpop.f32.mrf.mxu0
  %v4700 = vadd.f32 %v4611, %v4699
  %v4701 = vpop.f32.mrf.mxu0
  %v4702 = vpop.f32.mrf.mxu0
  %v4703 = vpop.f32.mrf.mxu0
  %4704 = vdwg.mxu0
  %4705 = vmatprep.subr.bf16.mxu0 0
  %4706 = vmatpush1.bf16.msra.mxu0 0
  %4707 = vmatprep.subr.bf16.mxu0 0
  %4708 = vmatpush1.bf16.msra.mxu0 0
  %4709 = vmatprep.subr.bf16.mxu0 0
  %4710 = vmatpush1.bf16.msra.mxu0 0
  %4711 = vmatprep.subr.bf16.mxu0 0
  %4712 = vmatpush1.bf16.msra.mxu0 0
  %4713 = vmatprep.subr.bf16.mxu0 0
  %4714 = vmatpush1.bf16.msra.mxu0 0
  %4715 = vmatprep.subr.bf16.mxu0 0
  %4716 = vmatpush1.bf16.msra.mxu0 0
  %4717 = vmatprep.subr.bf16.mxu0 0
  %4718 = vmatpush1.bf16.msra.mxu0 %v4622
  %4719 = vmatprep.subr.bf16.mxu0 0
  %4720 = vmatpush1.bf16.msra.mxu0 %v4621
  %4721 = vmatprep.subr.bf16.mxu0 0
  %4722 = vmatpush2.bf16.msra.mxu0 0
  %4723 = vmatprep.subr.bf16.mxu0 0
  %4724 = vmatpush2.bf16.msra.mxu0 0
  %4725 = vmatprep.subr.bf16.mxu0 0
  %4726 = vmatpush2.bf16.msra.mxu0 0
  %4727 = vmatprep.subr.bf16.mxu0 0
  %4728 = vmatpush2.bf16.msra.mxu0 0
  %4729 = vmatprep.subr.bf16.mxu0 0
  %4730 = vmatpush2.bf16.msra.mxu0 0
  %4731 = vmatprep.subr.bf16.mxu0 0
  %4732 = vmatpush2.bf16.msra.mxu0 0
  %4733 = vmatprep.subr.bf16.mxu0 0
  %4734 = vmatpush2.bf16.msra.mxu0 0
  %4735 = vmatprep.subr.bf16.mxu0 0
  %4736 = vmatpush2.bf16.msra.mxu0 0
  %4737 = vmatprep.mubr.bf16.mxu0 0
  %4738 = vmatmul.mubr.bf16.gmra.mxu0 %v174
  %v4739 = vpop.f32.mrf.mxu0
  %v4740 = vadd.f32 %v4611, %v4739
  %v4741 = vpop.f32.mrf.mxu0
  %v4742 = vpop.f32.mrf.mxu0
  %v4743 = vpop.f32.mrf.mxu0
  %4744 = vdwg.mxu0
  %4745 = vmatprep.subr.bf16.mxu0 0
  %4746 = vmatpush1.bf16.msra.mxu0 0
  %4747 = vmatprep.subr.bf16.mxu0 0
  %4748 = vmatpush1.bf16.msra.mxu0 0
  %4749 = vmatprep.subr.bf16.mxu0 0
  %4750 = vmatpush1.bf16.msra.mxu0 0
  %4751 = vmatprep.subr.bf16.mxu0 0
  %4752 = vmatpush1.bf16.msra.mxu0 0
  %4753 = vmatprep.subr.bf16.mxu0 0
  %4754 = vmatpush1.bf16.msra.mxu0 0
  %4755 = vmatprep.subr.bf16.mxu0 0
  %4756 = vmatpush1.bf16.msra.mxu0 0
  %4757 = vmatprep.subr.bf16.mxu0 0
  %4758 = vmatpush1.bf16.msra.mxu0 %v4622
  %4759 = vmatprep.subr.bf16.mxu0 0
  %4760 = vmatpush1.bf16.msra.mxu0 %v4621
  %4761 = vmatprep.subr.bf16.mxu0 0
  %4762 = vmatpush2.bf16.msra.mxu0 0
  %4763 = vmatprep.subr.bf16.mxu0 0
  %4764 = vmatpush2.bf16.msra.mxu0 0
  %4765 = vmatprep.subr.bf16.mxu0 0
  %4766 = vmatpush2.bf16.msra.mxu0 0
  %4767 = vmatprep.subr.bf16.mxu0 0
  %4768 = vmatpush2.bf16.msra.mxu0 0
  %4769 = vmatprep.subr.bf16.mxu0 0
  %4770 = vmatpush2.bf16.msra.mxu0 0
  %4771 = vmatprep.subr.bf16.mxu0 0
  %4772 = vmatpush2.bf16.msra.mxu0 0
  %4773 = vmatprep.subr.bf16.mxu0 0
  %4774 = vmatpush2.bf16.msra.mxu0 0
  %4775 = vmatprep.subr.bf16.mxu0 0
  %4776 = vmatpush2.bf16.msra.mxu0 0
  %4777 = vmatprep.mubr.bf16.mxu0 0
  %4778 = vmatmul.mubr.bf16.gmra.mxu0 %v217
  %v4779 = vpop.f32.mrf.mxu0
  %v4780 = vadd.f32 %v4611, %v4779
  %v4781 = vpop.f32.mrf.mxu0
  %v4782 = vpop.f32.mrf.mxu0
  %v4783 = vpop.f32.mrf.mxu0
  %4784 = vdwg.mxu0
  %4785 = vmatprep.subr.bf16.mxu0 0
  %4786 = vmatpush1.bf16.msra.mxu0 0
  %4787 = vmatprep.subr.bf16.mxu0 0
  %4788 = vmatpush1.bf16.msra.mxu0 0
  %4789 = vmatprep.subr.bf16.mxu0 0
  %4790 = vmatpush1.bf16.msra.mxu0 0
  %4791 = vmatprep.subr.bf16.mxu0 0
  %4792 = vmatpush1.bf16.msra.mxu0 0
  %4793 = vmatprep.subr.bf16.mxu0 0
  %4794 = vmatpush1.bf16.msra.mxu0 0
  %4795 = vmatprep.subr.bf16.mxu0 0
  %4796 = vmatpush1.bf16.msra.mxu0 0
  %4797 = vmatprep.subr.bf16.mxu0 0
  %4798 = vmatpush1.bf16.msra.mxu0 %v4622
  %4799 = vmatprep.subr.bf16.mxu0 0
  %4800 = vmatpush1.bf16.msra.mxu0 %v4621
  %4801 = vmatprep.subr.bf16.mxu0 0
  %4802 = vmatpush2.bf16.msra.mxu0 0
  %4803 = vmatprep.subr.bf16.mxu0 0
  %4804 = vmatpush2.bf16.msra.mxu0 0
  %4805 = vmatprep.subr.bf16.mxu0 0
  %4806 = vmatpush2.bf16.msra.mxu0 0
  %4807 = vmatprep.subr.bf16.mxu0 0
  %4808 = vmatpush2.bf16.msra.mxu0 0
  %4809 = vmatprep.subr.bf16.mxu0 0
  %4810 = vmatpush2.bf16.msra.mxu0 0
  %4811 = vmatprep.subr.bf16.mxu0 0
  %4812 = vmatpush2.bf16.msra.mxu0 0
  %4813 = vmatprep.subr.bf16.mxu0 0
  %4814 = vmatpush2.bf16.msra.mxu0 0
  %4815 = vmatprep.subr.bf16.mxu0 0
  %4816 = vmatpush2.bf16.msra.mxu0 0
  %4817 = vmatprep.mubr.bf16.mxu0 0
  %4818 = vmatmul.mubr.bf16.gmra.mxu0 %v260
  %v4819 = vpop.f32.mrf.mxu0
  %v4820 = vadd.f32 %v4611, %v4819
  %v4821 = vpop.f32.mrf.mxu0
  %v4822 = vpop.f32.mrf.mxu0
  %v4823 = vpop.f32.mrf.mxu0
  %4824 = vdwg.mxu0
  %4825 = vmatprep.subr.bf16.mxu0 0
  %4826 = vmatpush1.bf16.msra.mxu0 0
  %4827 = vmatprep.subr.bf16.mxu0 0
  %4828 = vmatpush1.bf16.msra.mxu0 0
  %4829 = vmatprep.subr.bf16.mxu0 0
  %4830 = vmatpush1.bf16.msra.mxu0 0
  %4831 = vmatprep.subr.bf16.mxu0 0
  %4832 = vmatpush1.bf16.msra.mxu0 0
  %4833 = vmatprep.subr.bf16.mxu0 0
  %4834 = vmatpush1.bf16.msra.mxu0 0
  %4835 = vmatprep.subr.bf16.mxu0 0
  %4836 = vmatpush1.bf16.msra.mxu0 0
  %4837 = vmatprep.subr.bf16.mxu0 0
  %4838 = vmatpush1.bf16.msra.mxu0 %v4622
  %4839 = vmatprep.subr.bf16.mxu0 0
  %4840 = vmatpush1.bf16.msra.mxu0 %v4621
  %4841 = vmatprep.subr.bf16.mxu0 0
  %4842 = vmatpush2.bf16.msra.mxu0 0
  %4843 = vmatprep.subr.bf16.mxu0 0
  %4844 = vmatpush2.bf16.msra.mxu0 0
  %4845 = vmatprep.subr.bf16.mxu0 0
  %4846 = vmatpush2.bf16.msra.mxu0 0
  %4847 = vmatprep.subr.bf16.mxu0 0
  %4848 = vmatpush2.bf16.msra.mxu0 0
  %4849 = vmatprep.subr.bf16.mxu0 0
  %4850 = vmatpush2.bf16.msra.mxu0 0
  %4851 = vmatprep.subr.bf16.mxu0 0
  %4852 = vmatpush2.bf16.msra.mxu0 0
  %4853 = vmatprep.subr.bf16.mxu0 0
  %4854 = vmatpush2.bf16.msra.mxu0 0
  %4855 = vmatprep.subr.bf16.mxu0 0
  %4856 = vmatpush2.bf16.msra.mxu0 0
  %4857 = vmatprep.mubr.bf16.mxu0 0
  %4858 = vmatmul.mubr.bf16.gmra.mxu0 %v303
  %v4859 = vpop.f32.mrf.mxu0
  %v4860 = vadd.f32 %v4611, %v4859
  %v4861 = vpop.f32.mrf.mxu0
  %v4862 = vpop.f32.mrf.mxu0
  %v4863 = vpop.f32.mrf.mxu0
  %4864 = vdwg.mxu0
  %4865 = vmatprep.subr.bf16.mxu0 0
  %4866 = vmatpush1.bf16.msra.mxu0 0
  %4867 = vmatprep.subr.bf16.mxu0 0
  %4868 = vmatpush1.bf16.msra.mxu0 0
  %4869 = vmatprep.subr.bf16.mxu0 0
  %4870 = vmatpush1.bf16.msra.mxu0 0
  %4871 = vmatprep.subr.bf16.mxu0 0
  %4872 = vmatpush1.bf16.msra.mxu0 0
  %4873 = vmatprep.subr.bf16.mxu0 0
  %4874 = vmatpush1.bf16.msra.mxu0 0
  %4875 = vmatprep.subr.bf16.mxu0 0
  %4876 = vmatpush1.bf16.msra.mxu0 0
  %4877 = vmatprep.subr.bf16.mxu0 0
  %4878 = vmatpush1.bf16.msra.mxu0 %v4622
  %4879 = vmatprep.subr.bf16.mxu0 0
  %4880 = vmatpush1.bf16.msra.mxu0 %v4621
  %4881 = vmatprep.subr.bf16.mxu0 0
  %4882 = vmatpush2.bf16.msra.mxu0 0
  %4883 = vmatprep.subr.bf16.mxu0 0
  %4884 = vmatpush2.bf16.msra.mxu0 0
  %4885 = vmatprep.subr.bf16.mxu0 0
  %4886 = vmatpush2.bf16.msra.mxu0 0
  %4887 = vmatprep.subr.bf16.mxu0 0
  %4888 = vmatpush2.bf16.msra.mxu0 0
  %4889 = vmatprep.subr.bf16.mxu0 0
  %4890 = vmatpush2.bf16.msra.mxu0 0
  %4891 = vmatprep.subr.bf16.mxu0 0
  %4892 = vmatpush2.bf16.msra.mxu0 0
  %4893 = vmatprep.subr.bf16.mxu0 0
  %4894 = vmatpush2.bf16.msra.mxu0 0
  %4895 = vmatprep.subr.bf16.mxu0 0
  %4896 = vmatpush2.bf16.msra.mxu0 0
  %4897 = vmatprep.mubr.bf16.mxu0 0
  %4898 = vmatmul.mubr.bf16.gmra.mxu0 %v346
  %v4899 = vpop.f32.mrf.mxu0
  %v4900 = vadd.f32 %v4611, %v4899
  %v4901 = vpop.f32.mrf.mxu0
  %v4902 = vpop.f32.mrf.mxu0
  %v4903 = vpop.f32.mrf.mxu0
  %4904 = vdwg.mxu0
  %4905 = vmatprep.subr.bf16.mxu0 0
  %4906 = vmatpush1.bf16.msra.mxu0 0
  %4907 = vmatprep.subr.bf16.mxu0 0
  %4908 = vmatpush1.bf16.msra.mxu0 0
  %4909 = vmatprep.subr.bf16.mxu0 0
  %4910 = vmatpush1.bf16.msra.mxu0 0
  %4911 = vmatprep.subr.bf16.mxu0 0
  %4912 = vmatpush1.bf16.msra.mxu0 0
  %4913 = vmatprep.subr.bf16.mxu0 0
  %4914 = vmatpush1.bf16.msra.mxu0 0
  %4915 = vmatprep.subr.bf16.mxu0 0
  %4916 = vmatpush1.bf16.msra.mxu0 0
  %4917 = vmatprep.subr.bf16.mxu0 0
  %4918 = vmatpush1.bf16.msra.mxu0 %v4622
  %4919 = vmatprep.subr.bf16.mxu0 0
  %4920 = vmatpush1.bf16.msra.mxu0 %v4621
  %4921 = vmatprep.subr.bf16.mxu0 0
  %4922 = vmatpush2.bf16.msra.mxu0 0
  %4923 = vmatprep.subr.bf16.mxu0 0
  %4924 = vmatpush2.bf16.msra.mxu0 0
  %4925 = vmatprep.subr.bf16.mxu0 0
  %4926 = vmatpush2.bf16.msra.mxu0 0
  %4927 = vmatprep.subr.bf16.mxu0 0
  %4928 = vmatpush2.bf16.msra.mxu0 0
  %4929 = vmatprep.subr.bf16.mxu0 0
  %4930 = vmatpush2.bf16.msra.mxu0 0
  %4931 = vmatprep.subr.bf16.mxu0 0
  %4932 = vmatpush2.bf16.msra.mxu0 0
  %4933 = vmatprep.subr.bf16.mxu0 0
  %4934 = vmatpush2.bf16.msra.mxu0 0
  %4935 = vmatprep.subr.bf16.mxu0 0
  %4936 = vmatpush2.bf16.msra.mxu0 0
  %4937 = vmatprep.mubr.bf16.mxu0 0
  %4938 = vmatmul.mubr.bf16.gmra.mxu0 %v389
  %v4939 = vpop.f32.mrf.mxu0
  %v4940 = vadd.f32 %v4611, %v4939
  %v4941 = vpop.f32.mrf.mxu0
  %v4942 = vpop.f32.mrf.mxu0
  %v4943 = vpop.f32.mrf.mxu0
  %4944 = vdwg.mxu0
  %s4945 = scalar_lea.vmem %s5, 2
  %v4946 = vld [vmem:[%s4945] sm:$0x1]
  %v4948 = vlaneseq
  %v4949 = vshrl.u32 %v4948, 7
  %v4950 = vsub.s32 0, %v4949
  %v4951 = vrot.slane %v4946, %v4950
  %v4957 = vunpack.c.l.b16 %v4596
  %v4958 = vunpack.c.l.b16 %v4597
  %v4959 = vunpack.c.l.b16 %v4598
  %v4960 = vunpack.c.l.b16 %v4599
  %v4961 = vpack.c.b16 %v4958, %v4957
  %v4962 = vpack.c.b16 %v4960, %v4959
  %4965 = vmatprep.subr.bf16.mxu0 0
  %4966 = vmatpush1.bf16.msra.mxu0 0
  %4967 = vmatprep.subr.bf16.mxu0 0
  %4968 = vmatpush1.bf16.msra.mxu0 0
  %4969 = vmatprep.subr.bf16.mxu0 0
  %4970 = vmatpush1.bf16.msra.mxu0 0
  %4971 = vmatprep.subr.bf16.mxu0 0
  %4972 = vmatpush1.bf16.msra.mxu0 0
  %4973 = vmatprep.subr.bf16.mxu0 0
  %4974 = vmatpush1.bf16.msra.mxu0 0
  %4975 = vmatprep.subr.bf16.mxu0 0
  %4976 = vmatpush1.bf16.msra.mxu0 0
  %4977 = vmatprep.subr.bf16.mxu0 0
  %4978 = vmatpush1.bf16.msra.mxu0 %v4962
  %4979 = vmatprep.subr.bf16.mxu0 0
  %4980 = vmatpush1.bf16.msra.mxu0 %v4961
  %4981 = vmatprep.subr.bf16.mxu0 0
  %4982 = vmatpush2.bf16.msra.mxu0 0
  %4983 = vmatprep.subr.bf16.mxu0 0
  %4984 = vmatpush2.bf16.msra.mxu0 0
  %4985 = vmatprep.subr.bf16.mxu0 0
  %4986 = vmatpush2.bf16.msra.mxu0 0
  %4987 = vmatprep.subr.bf16.mxu0 0
  %4988 = vmatpush2.bf16.msra.mxu0 0
  %4989 = vmatprep.subr.bf16.mxu0 0
  %4990 = vmatpush2.bf16.msra.mxu0 0
  %4991 = vmatprep.subr.bf16.mxu0 0
  %4992 = vmatpush2.bf16.msra.mxu0 0
  %4993 = vmatprep.subr.bf16.mxu0 0
  %4994 = vmatpush2.bf16.msra.mxu0 0
  %4995 = vmatprep.subr.bf16.mxu0 0
  %4996 = vmatpush2.bf16.msra.mxu0 0
  %4997 = vmatprep.mubr.bf16.mxu0 0
  %4998 = vmatmul.mubr.bf16.gmra.mxu0 %v88
  %v4999 = vpop.f32.mrf.mxu0
  %v5000 = vadd.f32 %v4951, %v4999
  %v5001 = vpop.f32.mrf.mxu0
  %v5002 = vpop.f32.mrf.mxu0
  %v5003 = vpop.f32.mrf.mxu0
  %5004 = vdwg.mxu0
  %5005 = vmatprep.subr.bf16.mxu0 0
  %5006 = vmatpush1.bf16.msra.mxu0 0
  %5007 = vmatprep.subr.bf16.mxu0 0
  %5008 = vmatpush1.bf16.msra.mxu0 0
  %5009 = vmatprep.subr.bf16.mxu0 0
  %5010 = vmatpush1.bf16.msra.mxu0 0
  %5011 = vmatprep.subr.bf16.mxu0 0
  %5012 = vmatpush1.bf16.msra.mxu0 0
  %5013 = vmatprep.subr.bf16.mxu0 0
  %5014 = vmatpush1.bf16.msra.mxu0 0
  %5015 = vmatprep.subr.bf16.mxu0 0
  %5016 = vmatpush1.bf16.msra.mxu0 0
  %5017 = vmatprep.subr.bf16.mxu0 0
  %5018 = vmatpush1.bf16.msra.mxu0 %v4962
  %5019 = vmatprep.subr.bf16.mxu0 0
  %5020 = vmatpush1.bf16.msra.mxu0 %v4961
  %5021 = vmatprep.subr.bf16.mxu0 0
  %5022 = vmatpush2.bf16.msra.mxu0 0
  %5023 = vmatprep.subr.bf16.mxu0 0
  %5024 = vmatpush2.bf16.msra.mxu0 0
  %5025 = vmatprep.subr.bf16.mxu0 0
  %5026 = vmatpush2.bf16.msra.mxu0 0
  %5027 = vmatprep.subr.bf16.mxu0 0
  %5028 = vmatpush2.bf16.msra.mxu0 0
  %5029 = vmatprep.subr.bf16.mxu0 0
  %5030 = vmatpush2.bf16.msra.mxu0 0
  %5031 = vmatprep.subr.bf16.mxu0 0
  %5032 = vmatpush2.bf16.msra.mxu0 0
  %5033 = vmatprep.subr.bf16.mxu0 0
  %5034 = vmatpush2.bf16.msra.mxu0 0
  %5035 = vmatprep.subr.bf16.mxu0 0
  %5036 = vmatpush2.bf16.msra.mxu0 0
  %5037 = vmatprep.mubr.bf16.mxu0 0
  %5038 = vmatmul.mubr.bf16.gmra.mxu0 %v131
  %v5039 = vpop.f32.mrf.mxu0
  %v5040 = vadd.f32 %v4951, %v5039
  %v5041 = vpop.f32.mrf.mxu0
  %v5042 = vpop.f32.mrf.mxu0
  %v5043 = vpop.f32.mrf.mxu0
  %5044 = vdwg.mxu0
  %5045 = vmatprep.subr.bf16.mxu0 0
  %5046 = vmatpush1.bf16.msra.mxu0 0
  %5047 = vmatprep.subr.bf16.mxu0 0
  %5048 = vmatpush1.bf16.msra.mxu0 0
  %5049 = vmatprep.subr.bf16.mxu0 0
  %5050 = vmatpush1.bf16.msra.mxu0 0
  %5051 = vmatprep.subr.bf16.mxu0 0
  %5052 = vmatpush1.bf16.msra.mxu0 0
  %5053 = vmatprep.subr.bf16.mxu0 0
  %5054 = vmatpush1.bf16.msra.mxu0 0
  %5055 = vmatprep.subr.bf16.mxu0 0
  %5056 = vmatpush1.bf16.msra.mxu0 0
  %5057 = vmatprep.subr.bf16.mxu0 0
  %5058 = vmatpush1.bf16.msra.mxu0 %v4962
  %5059 = vmatprep.subr.bf16.mxu0 0
  %5060 = vmatpush1.bf16.msra.mxu0 %v4961
  %5061 = vmatprep.subr.bf16.mxu0 0
  %5062 = vmatpush2.bf16.msra.mxu0 0
  %5063 = vmatprep.subr.bf16.mxu0 0
  %5064 = vmatpush2.bf16.msra.mxu0 0
  %5065 = vmatprep.subr.bf16.mxu0 0
  %5066 = vmatpush2.bf16.msra.mxu0 0
  %5067 = vmatprep.subr.bf16.mxu0 0
  %5068 = vmatpush2.bf16.msra.mxu0 0
  %5069 = vmatprep.subr.bf16.mxu0 0
  %5070 = vmatpush2.bf16.msra.mxu0 0
  %5071 = vmatprep.subr.bf16.mxu0 0
  %5072 = vmatpush2.bf16.msra.mxu0 0
  %5073 = vmatprep.subr.bf16.mxu0 0
  %5074 = vmatpush2.bf16.msra.mxu0 0
  %5075 = vmatprep.subr.bf16.mxu0 0
  %5076 = vmatpush2.bf16.msra.mxu0 0
  %5077 = vmatprep.mubr.bf16.mxu0 0
  %5078 = vmatmul.mubr.bf16.gmra.mxu0 %v174
  %v5079 = vpop.f32.mrf.mxu0
  %v5080 = vadd.f32 %v4951, %v5079
  %v5081 = vpop.f32.mrf.mxu0
  %v5082 = vpop.f32.mrf.mxu0
  %v5083 = vpop.f32.mrf.mxu0
  %5084 = vdwg.mxu0
  %5085 = vmatprep.subr.bf16.mxu0 0
  %5086 = vmatpush1.bf16.msra.mxu0 0
  %5087 = vmatprep.subr.bf16.mxu0 0
  %5088 = vmatpush1.bf16.msra.mxu0 0
  %5089 = vmatprep.subr.bf16.mxu0 0
  %5090 = vmatpush1.bf16.msra.mxu0 0
  %5091 = vmatprep.subr.bf16.mxu0 0
  %5092 = vmatpush1.bf16.msra.mxu0 0
  %5093 = vmatprep.subr.bf16.mxu0 0
  %5094 = vmatpush1.bf16.msra.mxu0 0
  %5095 = vmatprep.subr.bf16.mxu0 0
  %5096 = vmatpush1.bf16.msra.mxu0 0
  %5097 = vmatprep.subr.bf16.mxu0 0
  %5098 = vmatpush1.bf16.msra.mxu0 %v4962
  %5099 = vmatprep.subr.bf16.mxu0 0
  %5100 = vmatpush1.bf16.msra.mxu0 %v4961
  %5101 = vmatprep.subr.bf16.mxu0 0
  %5102 = vmatpush2.bf16.msra.mxu0 0
  %5103 = vmatprep.subr.bf16.mxu0 0
  %5104 = vmatpush2.bf16.msra.mxu0 0
  %5105 = vmatprep.subr.bf16.mxu0 0
  %5106 = vmatpush2.bf16.msra.mxu0 0
  %5107 = vmatprep.subr.bf16.mxu0 0
  %5108 = vmatpush2.bf16.msra.mxu0 0
  %5109 = vmatprep.subr.bf16.mxu0 0
  %5110 = vmatpush2.bf16.msra.mxu0 0
  %5111 = vmatprep.subr.bf16.mxu0 0
  %5112 = vmatpush2.bf16.msra.mxu0 0
  %5113 = vmatprep.subr.bf16.mxu0 0
  %5114 = vmatpush2.bf16.msra.mxu0 0
  %5115 = vmatprep.subr.bf16.mxu0 0
  %5116 = vmatpush2.bf16.msra.mxu0 0
  %5117 = vmatprep.mubr.bf16.mxu0 0
  %5118 = vmatmul.mubr.bf16.gmra.mxu0 %v217
  %v5119 = vpop.f32.mrf.mxu0
  %v5120 = vadd.f32 %v4951, %v5119
  %v5121 = vpop.f32.mrf.mxu0
  %v5122 = vpop.f32.mrf.mxu0
  %v5123 = vpop.f32.mrf.mxu0
  %5124 = vdwg.mxu0
  %5125 = vmatprep.subr.bf16.mxu0 0
  %5126 = vmatpush1.bf16.msra.mxu0 0
  %5127 = vmatprep.subr.bf16.mxu0 0
  %5128 = vmatpush1.bf16.msra.mxu0 0
  %5129 = vmatprep.subr.bf16.mxu0 0
  %5130 = vmatpush1.bf16.msra.mxu0 0
  %5131 = vmatprep.subr.bf16.mxu0 0
  %5132 = vmatpush1.bf16.msra.mxu0 0
  %5133 = vmatprep.subr.bf16.mxu0 0
  %5134 = vmatpush1.bf16.msra.mxu0 0
  %5135 = vmatprep.subr.bf16.mxu0 0
  %5136 = vmatpush1.bf16.msra.mxu0 0
  %5137 = vmatprep.subr.bf16.mxu0 0
  %5138 = vmatpush1.bf16.msra.mxu0 %v4962
  %5139 = vmatprep.subr.bf16.mxu0 0
  %5140 = vmatpush1.bf16.msra.mxu0 %v4961
  %5141 = vmatprep.subr.bf16.mxu0 0
  %5142 = vmatpush2.bf16.msra.mxu0 0
  %5143 = vmatprep.subr.bf16.mxu0 0
  %5144 = vmatpush2.bf16.msra.mxu0 0
  %5145 = vmatprep.subr.bf16.mxu0 0
  %5146 = vmatpush2.bf16.msra.mxu0 0
  %5147 = vmatprep.subr.bf16.mxu0 0
  %5148 = vmatpush2.bf16.msra.mxu0 0
  %5149 = vmatprep.subr.bf16.mxu0 0
  %5150 = vmatpush2.bf16.msra.mxu0 0
  %5151 = vmatprep.subr.bf16.mxu0 0
  %5152 = vmatpush2.bf16.msra.mxu0 0
  %5153 = vmatprep.subr.bf16.mxu0 0
  %5154 = vmatpush2.bf16.msra.mxu0 0
  %5155 = vmatprep.subr.bf16.mxu0 0
  %5156 = vmatpush2.bf16.msra.mxu0 0
  %5157 = vmatprep.mubr.bf16.mxu0 0
  %5158 = vmatmul.mubr.bf16.gmra.mxu0 %v260
  %v5159 = vpop.f32.mrf.mxu0
  %v5160 = vadd.f32 %v4951, %v5159
  %v5161 = vpop.f32.mrf.mxu0
  %v5162 = vpop.f32.mrf.mxu0
  %v5163 = vpop.f32.mrf.mxu0
  %5164 = vdwg.mxu0
  %5165 = vmatprep.subr.bf16.mxu0 0
  %5166 = vmatpush1.bf16.msra.mxu0 0
  %5167 = vmatprep.subr.bf16.mxu0 0
  %5168 = vmatpush1.bf16.msra.mxu0 0
  %5169 = vmatprep.subr.bf16.mxu0 0
  %5170 = vmatpush1.bf16.msra.mxu0 0
  %5171 = vmatprep.subr.bf16.mxu0 0
  %5172 = vmatpush1.bf16.msra.mxu0 0
  %5173 = vmatprep.subr.bf16.mxu0 0
  %5174 = vmatpush1.bf16.msra.mxu0 0
  %5175 = vmatprep.subr.bf16.mxu0 0
  %5176 = vmatpush1.bf16.msra.mxu0 0
  %5177 = vmatprep.subr.bf16.mxu0 0
  %5178 = vmatpush1.bf16.msra.mxu0 %v4962
  %5179 = vmatprep.subr.bf16.mxu0 0
  %5180 = vmatpush1.bf16.msra.mxu0 %v4961
  %5181 = vmatprep.subr.bf16.mxu0 0
  %5182 = vmatpush2.bf16.msra.mxu0 0
  %5183 = vmatprep.subr.bf16.mxu0 0
  %5184 = vmatpush2.bf16.msra.mxu0 0
  %5185 = vmatprep.subr.bf16.mxu0 0
  %5186 = vmatpush2.bf16.msra.mxu0 0
  %5187 = vmatprep.subr.bf16.mxu0 0
  %5188 = vmatpush2.bf16.msra.mxu0 0
  %5189 = vmatprep.subr.bf16.mxu0 0
  %5190 = vmatpush2.bf16.msra.mxu0 0
  %5191 = vmatprep.subr.bf16.mxu0 0
  %5192 = vmatpush2.bf16.msra.mxu0 0
  %5193 = vmatprep.subr.bf16.mxu0 0
  %5194 = vmatpush2.bf16.msra.mxu0 0
  %5195 = vmatprep.subr.bf16.mxu0 0
  %5196 = vmatpush2.bf16.msra.mxu0 0
  %5197 = vmatprep.mubr.bf16.mxu0 0
  %5198 = vmatmul.mubr.bf16.gmra.mxu0 %v303
  %v5199 = vpop.f32.mrf.mxu0
  %v5200 = vadd.f32 %v4951, %v5199
  %v5201 = vpop.f32.mrf.mxu0
  %v5202 = vpop.f32.mrf.mxu0
  %v5203 = vpop.f32.mrf.mxu0
  %5204 = vdwg.mxu0
  %5205 = vmatprep.subr.bf16.mxu0 0
  %5206 = vmatpush1.bf16.msra.mxu0 0
  %5207 = vmatprep.subr.bf16.mxu0 0
  %5208 = vmatpush1.bf16.msra.mxu0 0
  %5209 = vmatprep.subr.bf16.mxu0 0
  %5210 = vmatpush1.bf16.msra.mxu0 0
  %5211 = vmatprep.subr.bf16.mxu0 0
  %5212 = vmatpush1.bf16.msra.mxu0 0
  %5213 = vmatprep.subr.bf16.mxu0 0
  %5214 = vmatpush1.bf16.msra.mxu0 0
  %5215 = vmatprep.subr.bf16.mxu0 0
  %5216 = vmatpush1.bf16.msra.mxu0 0
  %5217 = vmatprep.subr.bf16.mxu0 0
  %5218 = vmatpush1.bf16.msra.mxu0 %v4962
  %5219 = vmatprep.subr.bf16.mxu0 0
  %5220 = vmatpush1.bf16.msra.mxu0 %v4961
  %5221 = vmatprep.subr.bf16.mxu0 0
  %5222 = vmatpush2.bf16.msra.mxu0 0
  %5223 = vmatprep.subr.bf16.mxu0 0
  %5224 = vmatpush2.bf16.msra.mxu0 0
  %5225 = vmatprep.subr.bf16.mxu0 0
  %5226 = vmatpush2.bf16.msra.mxu0 0
  %5227 = vmatprep.subr.bf16.mxu0 0
  %5228 = vmatpush2.bf16.msra.mxu0 0
  %5229 = vmatprep.subr.bf16.mxu0 0
  %5230 = vmatpush2.bf16.msra.mxu0 0
  %5231 = vmatprep.subr.bf16.mxu0 0
  %5232 = vmatpush2.bf16.msra.mxu0 0
  %5233 = vmatprep.subr.bf16.mxu0 0
  %5234 = vmatpush2.bf16.msra.mxu0 0
  %5235 = vmatprep.subr.bf16.mxu0 0
  %5236 = vmatpush2.bf16.msra.mxu0 0
  %5237 = vmatprep.mubr.bf16.mxu0 0
  %5238 = vmatmul.mubr.bf16.gmra.mxu0 %v346
  %v5239 = vpop.f32.mrf.mxu0
  %v5240 = vadd.f32 %v4951, %v5239
  %v5241 = vpop.f32.mrf.mxu0
  %v5242 = vpop.f32.mrf.mxu0
  %v5243 = vpop.f32.mrf.mxu0
  %5244 = vdwg.mxu0
  %5245 = vmatprep.subr.bf16.mxu0 0
  %5246 = vmatpush1.bf16.msra.mxu0 0
  %5247 = vmatprep.subr.bf16.mxu0 0
  %5248 = vmatpush1.bf16.msra.mxu0 0
  %5249 = vmatprep.subr.bf16.mxu0 0
  %5250 = vmatpush1.bf16.msra.mxu0 0
  %5251 = vmatprep.subr.bf16.mxu0 0
  %5252 = vmatpush1.bf16.msra.mxu0 0
  %5253 = vmatprep.subr.bf16.mxu0 0
  %5254 = vmatpush1.bf16.msra.mxu0 0
  %5255 = vmatprep.subr.bf16.mxu0 0
  %5256 = vmatpush1.bf16.msra.mxu0 0
  %5257 = vmatprep.subr.bf16.mxu0 0
  %5258 = vmatpush1.bf16.msra.mxu0 %v4962
  %5259 = vmatprep.subr.bf16.mxu0 0
  %5260 = vmatpush1.bf16.msra.mxu0 %v4961
  %5261 = vmatprep.subr.bf16.mxu0 0
  %5262 = vmatpush2.bf16.msra.mxu0 0
  %5263 = vmatprep.subr.bf16.mxu0 0
  %5264 = vmatpush2.bf16.msra.mxu0 0
  %5265 = vmatprep.subr.bf16.mxu0 0
  %5266 = vmatpush2.bf16.msra.mxu0 0
  %5267 = vmatprep.subr.bf16.mxu0 0
  %5268 = vmatpush2.bf16.msra.mxu0 0
  %5269 = vmatprep.subr.bf16.mxu0 0
  %5270 = vmatpush2.bf16.msra.mxu0 0
  %5271 = vmatprep.subr.bf16.mxu0 0
  %5272 = vmatpush2.bf16.msra.mxu0 0
  %5273 = vmatprep.subr.bf16.mxu0 0
  %5274 = vmatpush2.bf16.msra.mxu0 0
  %5275 = vmatprep.subr.bf16.mxu0 0
  %5276 = vmatpush2.bf16.msra.mxu0 0
  %5277 = vmatprep.mubr.bf16.mxu0 0
  %5278 = vmatmul.mubr.bf16.gmra.mxu0 %v389
  %v5279 = vpop.f32.mrf.mxu0
  %v5280 = vadd.f32 %v4951, %v5279
  %v5281 = vpop.f32.mrf.mxu0
  %v5282 = vpop.f32.mrf.mxu0
  %v5283 = vpop.f32.mrf.mxu0
  %5284 = vdwg.mxu0
  %s5285 = scalar_lea.vmem %s6, 2
  %v5286 = vld [vmem:[%s5285] sm:$0x1]
  %v5288 = vlaneseq
  %v5289 = vshrl.u32 %v5288, 7
  %v5290 = vsub.s32 0, %v5289
  %v5291 = vrot.slane %v5286, %v5290
  %v5297 = vunpack.c.l.b16 %v4601
  %v5298 = vunpack.c.l.b16 %v4602
  %v5299 = vunpack.c.l.b16 %v4603
  %v5300 = vunpack.c.l.b16 %v4604
  %v5301 = vpack.c.b16 %v5298, %v5297
  %v5302 = vpack.c.b16 %v5300, %v5299
  %5305 = vmatprep.subr.bf16.mxu0 0
  %5306 = vmatpush1.bf16.msra.mxu0 0
  %5307 = vmatprep.subr.bf16.mxu0 0
  %5308 = vmatpush1.bf16.msra.mxu0 0
  %5309 = vmatprep.subr.bf16.mxu0 0
  %5310 = vmatpush1.bf16.msra.mxu0 0
  %5311 = vmatprep.subr.bf16.mxu0 0
  %5312 = vmatpush1.bf16.msra.mxu0 0
  %5313 = vmatprep.subr.bf16.mxu0 0
  %5314 = vmatpush1.bf16.msra.mxu0 0
  %5315 = vmatprep.subr.bf16.mxu0 0
  %5316 = vmatpush1.bf16.msra.mxu0 0
  %5317 = vmatprep.subr.bf16.mxu0 0
  %5318 = vmatpush1.bf16.msra.mxu0 %v5302
  %5319 = vmatprep.subr.bf16.mxu0 0
  %5320 = vmatpush1.bf16.msra.mxu0 %v5301
  %5321 = vmatprep.subr.bf16.mxu0 0
  %5322 = vmatpush2.bf16.msra.mxu0 0
  %5323 = vmatprep.subr.bf16.mxu0 0
  %5324 = vmatpush2.bf16.msra.mxu0 0
  %5325 = vmatprep.subr.bf16.mxu0 0
  %5326 = vmatpush2.bf16.msra.mxu0 0
  %5327 = vmatprep.subr.bf16.mxu0 0
  %5328 = vmatpush2.bf16.msra.mxu0 0
  %5329 = vmatprep.subr.bf16.mxu0 0
  %5330 = vmatpush2.bf16.msra.mxu0 0
  %5331 = vmatprep.subr.bf16.mxu0 0
  %5332 = vmatpush2.bf16.msra.mxu0 0
  %5333 = vmatprep.subr.bf16.mxu0 0
  %5334 = vmatpush2.bf16.msra.mxu0 0
  %5335 = vmatprep.subr.bf16.mxu0 0
  %5336 = vmatpush2.bf16.msra.mxu0 0
  %5337 = vmatprep.mubr.bf16.mxu0 0
  %5338 = vmatmul.mubr.bf16.gmra.mxu0 %v88
  %v5339 = vpop.f32.mrf.mxu0
  %v5340 = vadd.f32 %v5291, %v5339
  %v5341 = vpop.f32.mrf.mxu0
  %v5342 = vpop.f32.mrf.mxu0
  %v5343 = vpop.f32.mrf.mxu0
  %5344 = vdwg.mxu0
  %5345 = vmatprep.subr.bf16.mxu0 0
  %5346 = vmatpush1.bf16.msra.mxu0 0
  %5347 = vmatprep.subr.bf16.mxu0 0
  %5348 = vmatpush1.bf16.msra.mxu0 0
  %5349 = vmatprep.subr.bf16.mxu0 0
  %5350 = vmatpush1.bf16.msra.mxu0 0
  %5351 = vmatprep.subr.bf16.mxu0 0
  %5352 = vmatpush1.bf16.msra.mxu0 0
  %5353 = vmatprep.subr.bf16.mxu0 0
  %5354 = vmatpush1.bf16.msra.mxu0 0
  %5355 = vmatprep.subr.bf16.mxu0 0
  %5356 = vmatpush1.bf16.msra.mxu0 0
  %5357 = vmatprep.subr.bf16.mxu0 0
  %5358 = vmatpush1.bf16.msra.mxu0 %v5302
  %5359 = vmatprep.subr.bf16.mxu0 0
  %5360 = vmatpush1.bf16.msra.mxu0 %v5301
  %5361 = vmatprep.subr.bf16.mxu0 0
  %5362 = vmatpush2.bf16.msra.mxu0 0
  %5363 = vmatprep.subr.bf16.mxu0 0
  %5364 = vmatpush2.bf16.msra.mxu0 0
  %5365 = vmatprep.subr.bf16.mxu0 0
  %5366 = vmatpush2.bf16.msra.mxu0 0
  %5367 = vmatprep.subr.bf16.mxu0 0
  %5368 = vmatpush2.bf16.msra.mxu0 0
  %5369 = vmatprep.subr.bf16.mxu0 0
  %5370 = vmatpush2.bf16.msra.mxu0 0
  %5371 = vmatprep.subr.bf16.mxu0 0
  %5372 = vmatpush2.bf16.msra.mxu0 0
  %5373 = vmatprep.subr.bf16.mxu0 0
  %5374 = vmatpush2.bf16.msra.mxu0 0
  %5375 = vmatprep.subr.bf16.mxu0 0
  %5376 = vmatpush2.bf16.msra.mxu0 0
  %5377 = vmatprep.mubr.bf16.mxu0 0
  %5378 = vmatmul.mubr.bf16.gmra.mxu0 %v131
  %v5379 = vpop.f32.mrf.mxu0
  %v5380 = vadd.f32 %v5291, %v5379
  %v5381 = vpop.f32.mrf.mxu0
  %v5382 = vpop.f32.mrf.mxu0
  %v5383 = vpop.f32.mrf.mxu0
  %5384 = vdwg.mxu0
  %5385 = vmatprep.subr.bf16.mxu0 0
  %5386 = vmatpush1.bf16.msra.mxu0 0
  %5387 = vmatprep.subr.bf16.mxu0 0
  %5388 = vmatpush1.bf16.msra.mxu0 0
  %5389 = vmatprep.subr.bf16.mxu0 0
  %5390 = vmatpush1.bf16.msra.mxu0 0
  %5391 = vmatprep.subr.bf16.mxu0 0
  %5392 = vmatpush1.bf16.msra.mxu0 0
  %5393 = vmatprep.subr.bf16.mxu0 0
  %5394 = vmatpush1.bf16.msra.mxu0 0
  %5395 = vmatprep.subr.bf16.mxu0 0
  %5396 = vmatpush1.bf16.msra.mxu0 0
  %5397 = vmatprep.subr.bf16.mxu0 0
  %5398 = vmatpush1.bf16.msra.mxu0 %v5302
  %5399 = vmatprep.subr.bf16.mxu0 0
  %5400 = vmatpush1.bf16.msra.mxu0 %v5301
  %5401 = vmatprep.subr.bf16.mxu0 0
  %5402 = vmatpush2.bf16.msra.mxu0 0
  %5403 = vmatprep.subr.bf16.mxu0 0
  %5404 = vmatpush2.bf16.msra.mxu0 0
  %5405 = vmatprep.subr.bf16.mxu0 0
  %5406 = vmatpush2.bf16.msra.mxu0 0
  %5407 = vmatprep.subr.bf16.mxu0 0
  %5408 = vmatpush2.bf16.msra.mxu0 0
  %5409 = vmatprep.subr.bf16.mxu0 0
  %5410 = vmatpush2.bf16.msra.mxu0 0
  %5411 = vmatprep.subr.bf16.mxu0 0
  %5412 = vmatpush2.bf16.msra.mxu0 0
  %5413 = vmatprep.subr.bf16.mxu0 0
  %5414 = vmatpush2.bf16.msra.mxu0 0
  %5415 = vmatprep.subr.bf16.mxu0 0
  %5416 = vmatpush2.bf16.msra.mxu0 0
  %5417 = vmatprep.mubr.bf16.mxu0 0
  %5418 = vmatmul.mubr.bf16.gmra.mxu0 %v174
  %v5419 = vpop.f32.mrf.mxu0
  %v5420 = vadd.f32 %v5291, %v5419
  %v5421 = vpop.f32.mrf.mxu0
  %v5422 = vpop.f32.mrf.mxu0
  %v5423 = vpop.f32.mrf.mxu0
  %5424 = vdwg.mxu0
  %5425 = vmatprep.subr.bf16.mxu0 0
  %5426 = vmatpush1.bf16.msra.mxu0 0
  %5427 = vmatprep.subr.bf16.mxu0 0
  %5428 = vmatpush1.bf16.msra.mxu0 0
  %5429 = vmatprep.subr.bf16.mxu0 0
  %5430 = vmatpush1.bf16.msra.mxu0 0
  %5431 = vmatprep.subr.bf16.mxu0 0
  %5432 = vmatpush1.bf16.msra.mxu0 0
  %5433 = vmatprep.subr.bf16.mxu0 0
  %5434 = vmatpush1.bf16.msra.mxu0 0
  %5435 = vmatprep.subr.bf16.mxu0 0
  %5436 = vmatpush1.bf16.msra.mxu0 0
  %5437 = vmatprep.subr.bf16.mxu0 0
  %5438 = vmatpush1.bf16.msra.mxu0 %v5302
  %5439 = vmatprep.subr.bf16.mxu0 0
  %5440 = vmatpush1.bf16.msra.mxu0 %v5301
  %5441 = vmatprep.subr.bf16.mxu0 0
  %5442 = vmatpush2.bf16.msra.mxu0 0
  %5443 = vmatprep.subr.bf16.mxu0 0
  %5444 = vmatpush2.bf16.msra.mxu0 0
  %5445 = vmatprep.subr.bf16.mxu0 0
  %5446 = vmatpush2.bf16.msra.mxu0 0
  %5447 = vmatprep.subr.bf16.mxu0 0
  %5448 = vmatpush2.bf16.msra.mxu0 0
  %5449 = vmatprep.subr.bf16.mxu0 0
  %5450 = vmatpush2.bf16.msra.mxu0 0
  %5451 = vmatprep.subr.bf16.mxu0 0
  %5452 = vmatpush2.bf16.msra.mxu0 0
  %5453 = vmatprep.subr.bf16.mxu0 0
  %5454 = vmatpush2.bf16.msra.mxu0 0
  %5455 = vmatprep.subr.bf16.mxu0 0
  %5456 = vmatpush2.bf16.msra.mxu0 0
  %5457 = vmatprep.mubr.bf16.mxu0 0
  %5458 = vmatmul.mubr.bf16.gmra.mxu0 %v217
  %v5459 = vpop.f32.mrf.mxu0
  %v5460 = vadd.f32 %v5291, %v5459
  %v5461 = vpop.f32.mrf.mxu0
  %v5462 = vpop.f32.mrf.mxu0
  %v5463 = vpop.f32.mrf.mxu0
  %5464 = vdwg.mxu0
  %5465 = vmatprep.subr.bf16.mxu0 0
  %5466 = vmatpush1.bf16.msra.mxu0 0
  %5467 = vmatprep.subr.bf16.mxu0 0
  %5468 = vmatpush1.bf16.msra.mxu0 0
  %5469 = vmatprep.subr.bf16.mxu0 0
  %5470 = vmatpush1.bf16.msra.mxu0 0
  %5471 = vmatprep.subr.bf16.mxu0 0
  %5472 = vmatpush1.bf16.msra.mxu0 0
  %5473 = vmatprep.subr.bf16.mxu0 0
  %5474 = vmatpush1.bf16.msra.mxu0 0
  %5475 = vmatprep.subr.bf16.mxu0 0
  %5476 = vmatpush1.bf16.msra.mxu0 0
  %5477 = vmatprep.subr.bf16.mxu0 0
  %5478 = vmatpush1.bf16.msra.mxu0 %v5302
  %5479 = vmatprep.subr.bf16.mxu0 0
  %5480 = vmatpush1.bf16.msra.mxu0 %v5301
  %5481 = vmatprep.subr.bf16.mxu0 0
  %5482 = vmatpush2.bf16.msra.mxu0 0
  %5483 = vmatprep.subr.bf16.mxu0 0
  %5484 = vmatpush2.bf16.msra.mxu0 0
  %5485 = vmatprep.subr.bf16.mxu0 0
  %5486 = vmatpush2.bf16.msra.mxu0 0
  %5487 = vmatprep.subr.bf16.mxu0 0
  %5488 = vmatpush2.bf16.msra.mxu0 0
  %5489 = vmatprep.subr.bf16.mxu0 0
  %5490 = vmatpush2.bf16.msra.mxu0 0
  %5491 = vmatprep.subr.bf16.mxu0 0
  %5492 = vmatpush2.bf16.msra.mxu0 0
  %5493 = vmatprep.subr.bf16.mxu0 0
  %5494 = vmatpush2.bf16.msra.mxu0 0
  %5495 = vmatprep.subr.bf16.mxu0 0
  %5496 = vmatpush2.bf16.msra.mxu0 0
  %5497 = vmatprep.mubr.bf16.mxu0 0
  %5498 = vmatmul.mubr.bf16.gmra.mxu0 %v260
  %v5499 = vpop.f32.mrf.mxu0
  %v5500 = vadd.f32 %v5291, %v5499
  %v5501 = vpop.f32.mrf.mxu0
  %v5502 = vpop.f32.mrf.mxu0
  %v5503 = vpop.f32.mrf.mxu0
  %5504 = vdwg.mxu0
  %5505 = vmatprep.subr.bf16.mxu0 0
  %5506 = vmatpush1.bf16.msra.mxu0 0
  %5507 = vmatprep.subr.bf16.mxu0 0
  %5508 = vmatpush1.bf16.msra.mxu0 0
  %5509 = vmatprep.subr.bf16.mxu0 0
  %5510 = vmatpush1.bf16.msra.mxu0 0
  %5511 = vmatprep.subr.bf16.mxu0 0
  %5512 = vmatpush1.bf16.msra.mxu0 0
  %5513 = vmatprep.subr.bf16.mxu0 0
  %5514 = vmatpush1.bf16.msra.mxu0 0
  %5515 = vmatprep.subr.bf16.mxu0 0
  %5516 = vmatpush1.bf16.msra.mxu0 0
  %5517 = vmatprep.subr.bf16.mxu0 0
  %5518 = vmatpush1.bf16.msra.mxu0 %v5302
  %5519 = vmatprep.subr.bf16.mxu0 0
  %5520 = vmatpush1.bf16.msra.mxu0 %v5301
  %5521 = vmatprep.subr.bf16.mxu0 0
  %5522 = vmatpush2.bf16.msra.mxu0 0
  %5523 = vmatprep.subr.bf16.mxu0 0
  %5524 = vmatpush2.bf16.msra.mxu0 0
  %5525 = vmatprep.subr.bf16.mxu0 0
  %5526 = vmatpush2.bf16.msra.mxu0 0
  %5527 = vmatprep.subr.bf16.mxu0 0
  %5528 = vmatpush2.bf16.msra.mxu0 0
  %5529 = vmatprep.subr.bf16.mxu0 0
  %5530 = vmatpush2.bf16.msra.mxu0 0
  %5531 = vmatprep.subr.bf16.mxu0 0
  %5532 = vmatpush2.bf16.msra.mxu0 0
  %5533 = vmatprep.subr.bf16.mxu0 0
  %5534 = vmatpush2.bf16.msra.mxu0 0
  %5535 = vmatprep.subr.bf16.mxu0 0
  %5536 = vmatpush2.bf16.msra.mxu0 0
  %5537 = vmatprep.mubr.bf16.mxu0 0
  %5538 = vmatmul.mubr.bf16.gmra.mxu0 %v303
  %v5539 = vpop.f32.mrf.mxu0
  %v5540 = vadd.f32 %v5291, %v5539
  %v5541 = vpop.f32.mrf.mxu0
  %v5542 = vpop.f32.mrf.mxu0
  %v5543 = vpop.f32.mrf.mxu0
  %5544 = vdwg.mxu0
  %5545 = vmatprep.subr.bf16.mxu0 0
  %5546 = vmatpush1.bf16.msra.mxu0 0
  %5547 = vmatprep.subr.bf16.mxu0 0
  %5548 = vmatpush1.bf16.msra.mxu0 0
  %5549 = vmatprep.subr.bf16.mxu0 0
  %5550 = vmatpush1.bf16.msra.mxu0 0
  %5551 = vmatprep.subr.bf16.mxu0 0
  %5552 = vmatpush1.bf16.msra.mxu0 0
  %5553 = vmatprep.subr.bf16.mxu0 0
  %5554 = vmatpush1.bf16.msra.mxu0 0
  %5555 = vmatprep.subr.bf16.mxu0 0
  %5556 = vmatpush1.bf16.msra.mxu0 0
  %5557 = vmatprep.subr.bf16.mxu0 0
  %5558 = vmatpush1.bf16.msra.mxu0 %v5302
  %5559 = vmatprep.subr.bf16.mxu0 0
  %5560 = vmatpush1.bf16.msra.mxu0 %v5301
  %5561 = vmatprep.subr.bf16.mxu0 0
  %5562 = vmatpush2.bf16.msra.mxu0 0
  %5563 = vmatprep.subr.bf16.mxu0 0
  %5564 = vmatpush2.bf16.msra.mxu0 0
  %5565 = vmatprep.subr.bf16.mxu0 0
  %5566 = vmatpush2.bf16.msra.mxu0 0
  %5567 = vmatprep.subr.bf16.mxu0 0
  %5568 = vmatpush2.bf16.msra.mxu0 0
  %5569 = vmatprep.subr.bf16.mxu0 0
  %5570 = vmatpush2.bf16.msra.mxu0 0
  %5571 = vmatprep.subr.bf16.mxu0 0
  %5572 = vmatpush2.bf16.msra.mxu0 0
  %5573 = vmatprep.subr.bf16.mxu0 0
  %5574 = vmatpush2.bf16.msra.mxu0 0
  %5575 = vmatprep.subr.bf16.mxu0 0
  %5576 = vmatpush2.bf16.msra.mxu0 0
  %5577 = vmatprep.mubr.bf16.mxu0 0
  %5578 = vmatmul.mubr.bf16.gmra.mxu0 %v346
  %v5579 = vpop.f32.mrf.mxu0
  %v5580 = vadd.f32 %v5291, %v5579
  %v5581 = vpop.f32.mrf.mxu0
  %v5582 = vpop.f32.mrf.mxu0
  %v5583 = vpop.f32.mrf.mxu0
  %5584 = vdwg.mxu0
  %5585 = vmatprep.subr.bf16.mxu0 0
  %5586 = vmatpush1.bf16.msra.mxu0 0
  %5587 = vmatprep.subr.bf16.mxu0 0
  %5588 = vmatpush1.bf16.msra.mxu0 0
  %5589 = vmatprep.subr.bf16.mxu0 0
  %5590 = vmatpush1.bf16.msra.mxu0 0
  %5591 = vmatprep.subr.bf16.mxu0 0
  %5592 = vmatpush1.bf16.msra.mxu0 0
  %5593 = vmatprep.subr.bf16.mxu0 0
  %5594 = vmatpush1.bf16.msra.mxu0 0
  %5595 = vmatprep.subr.bf16.mxu0 0
  %5596 = vmatpush1.bf16.msra.mxu0 0
  %5597 = vmatprep.subr.bf16.mxu0 0
  %5598 = vmatpush1.bf16.msra.mxu0 %v5302
  %5599 = vmatprep.subr.bf16.mxu0 0
  %5600 = vmatpush1.bf16.msra.mxu0 %v5301
  %5601 = vmatprep.subr.bf16.mxu0 0
  %5602 = vmatpush2.bf16.msra.mxu0 0
  %5603 = vmatprep.subr.bf16.mxu0 0
  %5604 = vmatpush2.bf16.msra.mxu0 0
  %5605 = vmatprep.subr.bf16.mxu0 0
  %5606 = vmatpush2.bf16.msra.mxu0 0
  %5607 = vmatprep.subr.bf16.mxu0 0
  %5608 = vmatpush2.bf16.msra.mxu0 0
  %5609 = vmatprep.subr.bf16.mxu0 0
  %5610 = vmatpush2.bf16.msra.mxu0 0
  %5611 = vmatprep.subr.bf16.mxu0 0
  %5612 = vmatpush2.bf16.msra.mxu0 0
  %5613 = vmatprep.subr.bf16.mxu0 0
  %5614 = vmatpush2.bf16.msra.mxu0 0
  %5615 = vmatprep.subr.bf16.mxu0 0
  %5616 = vmatpush2.bf16.msra.mxu0 0
  %5617 = vmatprep.mubr.bf16.mxu0 0
  %5618 = vmatmul.mubr.bf16.gmra.mxu0 %v389
  %v5619 = vpop.f32.mrf.mxu0
  %v5620 = vadd.f32 %v5291, %v5619
  %v5621 = vpop.f32.mrf.mxu0
  %v5622 = vpop.f32.mrf.mxu0
  %v5623 = vpop.f32.mrf.mxu0
  %5624 = vdwg.mxu0
  %v5625 = vpack.c.bf16 %v4660, %v4660
  %v5626 = vpack.c.bf16 %v4700, %v4700
  %v5627 = vpack.c.bf16 %v4740, %v4740
  %v5628 = vpack.c.bf16 %v4780, %v4780
  %v5629 = vpack.c.bf16 %v4820, %v4820
  %v5630 = vpack.c.bf16 %v4860, %v4860
  %v5631 = vpack.c.bf16 %v4900, %v4900
  %v5632 = vpack.c.bf16 %v4940, %v4940
  %v5633 = vpack.c.bf16 %v5000, %v5000
  %v5634 = vpack.c.bf16 %v5040, %v5040
  %v5635 = vpack.c.bf16 %v5080, %v5080
  %v5636 = vpack.c.bf16 %v5120, %v5120
  %v5637 = vpack.c.bf16 %v5160, %v5160
  %v5638 = vpack.c.bf16 %v5200, %v5200
  %v5639 = vpack.c.bf16 %v5240, %v5240
  %v5640 = vpack.c.bf16 %v5280, %v5280
  %v5642 = vsel %vm1125, %v5625, 0
  %v5645 = vsel %vm1125, %v5633, 0
  %5647 = vmatprep.subr.bf16.mxu0 0
  %5648 = vmatpush1.bf16.xpose.msra.mxu0 0
  %5649 = vmatprep.subr.bf16.mxu0 0
  %5650 = vmatpush1.bf16.xpose.msra.mxu0 0
  %5651 = vmatprep.subr.bf16.mxu0 0
  %5652 = vmatpush1.bf16.xpose.msra.mxu0 0
  %5653 = vmatprep.subr.bf16.mxu0 0
  %5654 = vmatpush1.bf16.xpose.msra.mxu0 0
  %5655 = vmatprep.subr.bf16.mxu0 0
  %5656 = vmatpush1.bf16.xpose.msra.mxu0 0
  %5657 = vmatprep.subr.bf16.mxu0 0
  %5658 = vmatpush1.bf16.xpose.msra.mxu0 0
  %5659 = vmatprep.subr.bf16.mxu0 0
  %5660 = vmatpush1.bf16.xpose.msra.mxu0 0
  %5661 = vmatprep.subr.bf16.mxu0 0
  %5662 = vmatpush1.bf16.xpose.msra.mxu0 %v5645
  %5663 = vmatprep.subr.bf16.mxu0 0
  %5664 = vmatpush2.bf16.xpose.msra.mxu0 0
  %5665 = vmatprep.subr.bf16.mxu0 0
  %5666 = vmatpush2.bf16.xpose.msra.mxu0 0
  %5667 = vmatprep.subr.bf16.mxu0 0
  %5668 = vmatpush2.bf16.xpose.msra.mxu0 0
  %5669 = vmatprep.subr.bf16.mxu0 0
  %5670 = vmatpush2.bf16.xpose.msra.mxu0 0
  %5671 = vmatprep.subr.bf16.mxu0 0
  %5672 = vmatpush2.bf16.xpose.msra.mxu0 0
  %5673 = vmatprep.subr.bf16.mxu0 0
  %5674 = vmatpush2.bf16.xpose.msra.mxu0 0
  %5675 = vmatprep.subr.bf16.mxu0 0
  %5676 = vmatpush2.bf16.xpose.msra.mxu0 0
  %5677 = vmatprep.subr.bf16.mxu0 0
  %5678 = vmatpush2.bf16.xpose.msra.mxu0 0
  %5679 = vmatprep.mubr.bf16.mxu0 0
  %5680 = vmatmul.mubr.bf16.gmra.mxu0 %v5642
  %v5681 = vpop.f32.mrf.mxu0
  %v5682 = vadd.f32 0.0, %v5681
  %v5683 = vpop.f32.mrf.mxu0
  %v5684 = vpop.f32.mrf.mxu0
  %v5685 = vpop.f32.mrf.mxu0
  %5686 = vdwg.mxu0
  %v5688 = vsel %vm1125, %v5626, 0
  %v5691 = vsel %vm1125, %v5634, 0
  %5693 = vmatprep.subr.bf16.mxu0 0
  %5694 = vmatpush1.bf16.xpose.msra.mxu0 0
  %5695 = vmatprep.subr.bf16.mxu0 0
  %5696 = vmatpush1.bf16.xpose.msra.mxu0 0
  %5697 = vmatprep.subr.bf16.mxu0 0
  %5698 = vmatpush1.bf16.xpose.msra.mxu0 0
  %5699 = vmatprep.subr.bf16.mxu0 0
  %5700 = vmatpush1.bf16.xpose.msra.mxu0 0
  %5701 = vmatprep.subr.bf16.mxu0 0
  %5702 = vmatpush1.bf16.xpose.msra.mxu0 0
  %5703 = vmatprep.subr.bf16.mxu0 0
  %5704 = vmatpush1.bf16.xpose.msra.mxu0 0
  %5705 = vmatprep.subr.bf16.mxu0 0
  %5706 = vmatpush1.bf16.xpose.msra.mxu0 0
  %5707 = vmatprep.subr.bf16.mxu0 0
  %5708 = vmatpush1.bf16.xpose.msra.mxu0 %v5691
  %5709 = vmatprep.subr.bf16.mxu0 0
  %5710 = vmatpush2.bf16.xpose.msra.mxu0 0
  %5711 = vmatprep.subr.bf16.mxu0 0
  %5712 = vmatpush2.bf16.xpose.msra.mxu0 0
  %5713 = vmatprep.subr.bf16.mxu0 0
  %5714 = vmatpush2.bf16.xpose.msra.mxu0 0
  %5715 = vmatprep.subr.bf16.mxu0 0
  %5716 = vmatpush2.bf16.xpose.msra.mxu0 0
  %5717 = vmatprep.subr.bf16.mxu0 0
  %5718 = vmatpush2.bf16.xpose.msra.mxu0 0
  %5719 = vmatprep.subr.bf16.mxu0 0
  %5720 = vmatpush2.bf16.xpose.msra.mxu0 0
  %5721 = vmatprep.subr.bf16.mxu0 0
  %5722 = vmatpush2.bf16.xpose.msra.mxu0 0
  %5723 = vmatprep.subr.bf16.mxu0 0
  %5724 = vmatpush2.bf16.xpose.msra.mxu0 0
  %5725 = vmatprep.mubr.bf16.mxu0 0
  %5726 = vmatmul.mubr.bf16.gmra.mxu0 %v5688
  %v5727 = vpop.f32.mrf.mxu0
  %v5728 = vadd.f32 0.0, %v5727
  %v5729 = vpop.f32.mrf.mxu0
  %v5730 = vpop.f32.mrf.mxu0
  %v5731 = vpop.f32.mrf.mxu0
  %5732 = vdwg.mxu0
  %v5734 = vsel %vm1125, %v5627, 0
  %v5737 = vsel %vm1125, %v5635, 0
  %5739 = vmatprep.subr.bf16.mxu0 0
  %5740 = vmatpush1.bf16.xpose.msra.mxu0 0
  %5741 = vmatprep.subr.bf16.mxu0 0
  %5742 = vmatpush1.bf16.xpose.msra.mxu0 0
  %5743 = vmatprep.subr.bf16.mxu0 0
  %5744 = vmatpush1.bf16.xpose.msra.mxu0 0
  %5745 = vmatprep.subr.bf16.mxu0 0
  %5746 = vmatpush1.bf16.xpose.msra.mxu0 0
  %5747 = vmatprep.subr.bf16.mxu0 0
  %5748 = vmatpush1.bf16.xpose.msra.mxu0 0
  %5749 = vmatprep.subr.bf16.mxu0 0
  %5750 = vmatpush1.bf16.xpose.msra.mxu0 0
  %5751 = vmatprep.subr.bf16.mxu0 0
  %5752 = vmatpush1.bf16.xpose.msra.mxu0 0
  %5753 = vmatprep.subr.bf16.mxu0 0
  %5754 = vmatpush1.bf16.xpose.msra.mxu0 %v5737
  %5755 = vmatprep.subr.bf16.mxu0 0
  %5756 = vmatpush2.bf16.xpose.msra.mxu0 0
  %5757 = vmatprep.subr.bf16.mxu0 0
  %5758 = vmatpush2.bf16.xpose.msra.mxu0 0
  %5759 = vmatprep.subr.bf16.mxu0 0
  %5760 = vmatpush2.bf16.xpose.msra.mxu0 0
  %5761 = vmatprep.subr.bf16.mxu0 0
  %5762 = vmatpush2.bf16.xpose.msra.mxu0 0
  %5763 = vmatprep.subr.bf16.mxu0 0
  %5764 = vmatpush2.bf16.xpose.msra.mxu0 0
  %5765 = vmatprep.subr.bf16.mxu0 0
  %5766 = vmatpush2.bf16.xpose.msra.mxu0 0
  %5767 = vmatprep.subr.bf16.mxu0 0
  %5768 = vmatpush2.bf16.xpose.msra.mxu0 0
  %5769 = vmatprep.subr.bf16.mxu0 0
  %5770 = vmatpush2.bf16.xpose.msra.mxu0 0
  %5771 = vmatprep.mubr.bf16.mxu0 0
  %5772 = vmatmul.mubr.bf16.gmra.mxu0 %v5734
  %v5773 = vpop.f32.mrf.mxu0
  %v5774 = vadd.f32 0.0, %v5773
  %v5775 = vpop.f32.mrf.mxu0
  %v5776 = vpop.f32.mrf.mxu0
  %v5777 = vpop.f32.mrf.mxu0
  %5778 = vdwg.mxu0
  %v5780 = vsel %vm1125, %v5628, 0
  %v5783 = vsel %vm1125, %v5636, 0
  %5785 = vmatprep.subr.bf16.mxu0 0
  %5786 = vmatpush1.bf16.xpose.msra.mxu0 0
  %5787 = vmatprep.subr.bf16.mxu0 0
  %5788 = vmatpush1.bf16.xpose.msra.mxu0 0
  %5789 = vmatprep.subr.bf16.mxu0 0
  %5790 = vmatpush1.bf16.xpose.msra.mxu0 0
  %5791 = vmatprep.subr.bf16.mxu0 0
  %5792 = vmatpush1.bf16.xpose.msra.mxu0 0
  %5793 = vmatprep.subr.bf16.mxu0 0
  %5794 = vmatpush1.bf16.xpose.msra.mxu0 0
  %5795 = vmatprep.subr.bf16.mxu0 0
  %5796 = vmatpush1.bf16.xpose.msra.mxu0 0
  %5797 = vmatprep.subr.bf16.mxu0 0
  %5798 = vmatpush1.bf16.xpose.msra.mxu0 0
  %5799 = vmatprep.subr.bf16.mxu0 0
  %5800 = vmatpush1.bf16.xpose.msra.mxu0 %v5783
  %5801 = vmatprep.subr.bf16.mxu0 0
  %5802 = vmatpush2.bf16.xpose.msra.mxu0 0
  %5803 = vmatprep.subr.bf16.mxu0 0
  %5804 = vmatpush2.bf16.xpose.msra.mxu0 0
  %5805 = vmatprep.subr.bf16.mxu0 0
  %5806 = vmatpush2.bf16.xpose.msra.mxu0 0
  %5807 = vmatprep.subr.bf16.mxu0 0
  %5808 = vmatpush2.bf16.xpose.msra.mxu0 0
  %5809 = vmatprep.subr.bf16.mxu0 0
  %5810 = vmatpush2.bf16.xpose.msra.mxu0 0
  %5811 = vmatprep.subr.bf16.mxu0 0
  %5812 = vmatpush2.bf16.xpose.msra.mxu0 0
  %5813 = vmatprep.subr.bf16.mxu0 0
  %5814 = vmatpush2.bf16.xpose.msra.mxu0 0
  %5815 = vmatprep.subr.bf16.mxu0 0
  %5816 = vmatpush2.bf16.xpose.msra.mxu0 0
  %5817 = vmatprep.mubr.bf16.mxu0 0
  %5818 = vmatmul.mubr.bf16.gmra.mxu0 %v5780
  %v5819 = vpop.f32.mrf.mxu0
  %v5820 = vadd.f32 0.0, %v5819
  %v5821 = vpop.f32.mrf.mxu0
  %v5822 = vpop.f32.mrf.mxu0
  %v5823 = vpop.f32.mrf.mxu0
  %5824 = vdwg.mxu0
  %v5826 = vsel %vm1125, %v5629, 0
  %v5829 = vsel %vm1125, %v5637, 0
  %5831 = vmatprep.subr.bf16.mxu0 0
  %5832 = vmatpush1.bf16.xpose.msra.mxu0 0
  %5833 = vmatprep.subr.bf16.mxu0 0
  %5834 = vmatpush1.bf16.xpose.msra.mxu0 0
  %5835 = vmatprep.subr.bf16.mxu0 0
  %5836 = vmatpush1.bf16.xpose.msra.mxu0 0
  %5837 = vmatprep.subr.bf16.mxu0 0
  %5838 = vmatpush1.bf16.xpose.msra.mxu0 0
  %5839 = vmatprep.subr.bf16.mxu0 0
  %5840 = vmatpush1.bf16.xpose.msra.mxu0 0
  %5841 = vmatprep.subr.bf16.mxu0 0
  %5842 = vmatpush1.bf16.xpose.msra.mxu0 0
  %5843 = vmatprep.subr.bf16.mxu0 0
  %5844 = vmatpush1.bf16.xpose.msra.mxu0 0
  %5845 = vmatprep.subr.bf16.mxu0 0
  %5846 = vmatpush1.bf16.xpose.msra.mxu0 %v5829
  %5847 = vmatprep.subr.bf16.mxu0 0
  %5848 = vmatpush2.bf16.xpose.msra.mxu0 0
  %5849 = vmatprep.subr.bf16.mxu0 0
  %5850 = vmatpush2.bf16.xpose.msra.mxu0 0
  %5851 = vmatprep.subr.bf16.mxu0 0
  %5852 = vmatpush2.bf16.xpose.msra.mxu0 0
  %5853 = vmatprep.subr.bf16.mxu0 0
  %5854 = vmatpush2.bf16.xpose.msra.mxu0 0
  %5855 = vmatprep.subr.bf16.mxu0 0
  %5856 = vmatpush2.bf16.xpose.msra.mxu0 0
  %5857 = vmatprep.subr.bf16.mxu0 0
  %5858 = vmatpush2.bf16.xpose.msra.mxu0 0
  %5859 = vmatprep.subr.bf16.mxu0 0
  %5860 = vmatpush2.bf16.xpose.msra.mxu0 0
  %5861 = vmatprep.subr.bf16.mxu0 0
  %5862 = vmatpush2.bf16.xpose.msra.mxu0 0
  %5863 = vmatprep.mubr.bf16.mxu0 0
  %5864 = vmatmul.mubr.bf16.gmra.mxu0 %v5826
  %v5865 = vpop.f32.mrf.mxu0
  %v5866 = vadd.f32 0.0, %v5865
  %v5867 = vpop.f32.mrf.mxu0
  %v5868 = vpop.f32.mrf.mxu0
  %v5869 = vpop.f32.mrf.mxu0
  %5870 = vdwg.mxu0
  %v5872 = vsel %vm1125, %v5630, 0
  %v5875 = vsel %vm1125, %v5638, 0
  %5877 = vmatprep.subr.bf16.mxu0 0
  %5878 = vmatpush1.bf16.xpose.msra.mxu0 0
  %5879 = vmatprep.subr.bf16.mxu0 0
  %5880 = vmatpush1.bf16.xpose.msra.mxu0 0
  %5881 = vmatprep.subr.bf16.mxu0 0
  %5882 = vmatpush1.bf16.xpose.msra.mxu0 0
  %5883 = vmatprep.subr.bf16.mxu0 0
  %5884 = vmatpush1.bf16.xpose.msra.mxu0 0
  %5885 = vmatprep.subr.bf16.mxu0 0
  %5886 = vmatpush1.bf16.xpose.msra.mxu0 0
  %5887 = vmatprep.subr.bf16.mxu0 0
  %5888 = vmatpush1.bf16.xpose.msra.mxu0 0
  %5889 = vmatprep.subr.bf16.mxu0 0
  %5890 = vmatpush1.bf16.xpose.msra.mxu0 0
  %5891 = vmatprep.subr.bf16.mxu0 0
  %5892 = vmatpush1.bf16.xpose.msra.mxu0 %v5875
  %5893 = vmatprep.subr.bf16.mxu0 0
  %5894 = vmatpush2.bf16.xpose.msra.mxu0 0
  %5895 = vmatprep.subr.bf16.mxu0 0
  %5896 = vmatpush2.bf16.xpose.msra.mxu0 0
  %5897 = vmatprep.subr.bf16.mxu0 0
  %5898 = vmatpush2.bf16.xpose.msra.mxu0 0
  %5899 = vmatprep.subr.bf16.mxu0 0
  %5900 = vmatpush2.bf16.xpose.msra.mxu0 0
  %5901 = vmatprep.subr.bf16.mxu0 0
  %5902 = vmatpush2.bf16.xpose.msra.mxu0 0
  %5903 = vmatprep.subr.bf16.mxu0 0
  %5904 = vmatpush2.bf16.xpose.msra.mxu0 0
  %5905 = vmatprep.subr.bf16.mxu0 0
  %5906 = vmatpush2.bf16.xpose.msra.mxu0 0
  %5907 = vmatprep.subr.bf16.mxu0 0
  %5908 = vmatpush2.bf16.xpose.msra.mxu0 0
  %5909 = vmatprep.mubr.bf16.mxu0 0
  %5910 = vmatmul.mubr.bf16.gmra.mxu0 %v5872
  %v5911 = vpop.f32.mrf.mxu0
  %v5912 = vadd.f32 0.0, %v5911
  %v5913 = vpop.f32.mrf.mxu0
  %v5914 = vpop.f32.mrf.mxu0
  %v5915 = vpop.f32.mrf.mxu0
  %5916 = vdwg.mxu0
  %v5918 = vsel %vm1125, %v5631, 0
  %v5921 = vsel %vm1125, %v5639, 0
  %5923 = vmatprep.subr.bf16.mxu0 0
  %5924 = vmatpush1.bf16.xpose.msra.mxu0 0
  %5925 = vmatprep.subr.bf16.mxu0 0
  %5926 = vmatpush1.bf16.xpose.msra.mxu0 0
  %5927 = vmatprep.subr.bf16.mxu0 0
  %5928 = vmatpush1.bf16.xpose.msra.mxu0 0
  %5929 = vmatprep.subr.bf16.mxu0 0
  %5930 = vmatpush1.bf16.xpose.msra.mxu0 0
  %5931 = vmatprep.subr.bf16.mxu0 0
  %5932 = vmatpush1.bf16.xpose.msra.mxu0 0
  %5933 = vmatprep.subr.bf16.mxu0 0
  %5934 = vmatpush1.bf16.xpose.msra.mxu0 0
  %5935 = vmatprep.subr.bf16.mxu0 0
  %5936 = vmatpush1.bf16.xpose.msra.mxu0 0
  %5937 = vmatprep.subr.bf16.mxu0 0
  %5938 = vmatpush1.bf16.xpose.msra.mxu0 %v5921
  %5939 = vmatprep.subr.bf16.mxu0 0
  %5940 = vmatpush2.bf16.xpose.msra.mxu0 0
  %5941 = vmatprep.subr.bf16.mxu0 0
  %5942 = vmatpush2.bf16.xpose.msra.mxu0 0
  %5943 = vmatprep.subr.bf16.mxu0 0
  %5944 = vmatpush2.bf16.xpose.msra.mxu0 0
  %5945 = vmatprep.subr.bf16.mxu0 0
  %5946 = vmatpush2.bf16.xpose.msra.mxu0 0
  %5947 = vmatprep.subr.bf16.mxu0 0
  %5948 = vmatpush2.bf16.xpose.msra.mxu0 0
  %5949 = vmatprep.subr.bf16.mxu0 0
  %5950 = vmatpush2.bf16.xpose.msra.mxu0 0
  %5951 = vmatprep.subr.bf16.mxu0 0
  %5952 = vmatpush2.bf16.xpose.msra.mxu0 0
  %5953 = vmatprep.subr.bf16.mxu0 0
  %5954 = vmatpush2.bf16.xpose.msra.mxu0 0
  %5955 = vmatprep.mubr.bf16.mxu0 0
  %5956 = vmatmul.mubr.bf16.gmra.mxu0 %v5918
  %v5957 = vpop.f32.mrf.mxu0
  %v5958 = vadd.f32 0.0, %v5957
  %v5959 = vpop.f32.mrf.mxu0
  %v5960 = vpop.f32.mrf.mxu0
  %v5961 = vpop.f32.mrf.mxu0
  %5962 = vdwg.mxu0
  %v5964 = vsel %vm1125, %v5632, 0
  %v5967 = vsel %vm1125, %v5640, 0
  %5969 = vmatprep.subr.bf16.mxu0 0
  %5970 = vmatpush1.bf16.xpose.msra.mxu0 0
  %5971 = vmatprep.subr.bf16.mxu0 0
  %5972 = vmatpush1.bf16.xpose.msra.mxu0 0
  %5973 = vmatprep.subr.bf16.mxu0 0
  %5974 = vmatpush1.bf16.xpose.msra.mxu0 0
  %5975 = vmatprep.subr.bf16.mxu0 0
  %5976 = vmatpush1.bf16.xpose.msra.mxu0 0
  %5977 = vmatprep.subr.bf16.mxu0 0
  %5978 = vmatpush1.bf16.xpose.msra.mxu0 0
  %5979 = vmatprep.subr.bf16.mxu0 0
  %5980 = vmatpush1.bf16.xpose.msra.mxu0 0
  %5981 = vmatprep.subr.bf16.mxu0 0
  %5982 = vmatpush1.bf16.xpose.msra.mxu0 0
  %5983 = vmatprep.subr.bf16.mxu0 0
  %5984 = vmatpush1.bf16.xpose.msra.mxu0 %v5967
  %5985 = vmatprep.subr.bf16.mxu0 0
  %5986 = vmatpush2.bf16.xpose.msra.mxu0 0
  %5987 = vmatprep.subr.bf16.mxu0 0
  %5988 = vmatpush2.bf16.xpose.msra.mxu0 0
  %5989 = vmatprep.subr.bf16.mxu0 0
  %5990 = vmatpush2.bf16.xpose.msra.mxu0 0
  %5991 = vmatprep.subr.bf16.mxu0 0
  %5992 = vmatpush2.bf16.xpose.msra.mxu0 0
  %5993 = vmatprep.subr.bf16.mxu0 0
  %5994 = vmatpush2.bf16.xpose.msra.mxu0 0
  %5995 = vmatprep.subr.bf16.mxu0 0
  %5996 = vmatpush2.bf16.xpose.msra.mxu0 0
  %5997 = vmatprep.subr.bf16.mxu0 0
  %5998 = vmatpush2.bf16.xpose.msra.mxu0 0
  %5999 = vmatprep.subr.bf16.mxu0 0
  %6000 = vmatpush2.bf16.xpose.msra.mxu0 0
  %6001 = vmatprep.mubr.bf16.mxu0 0
  %6002 = vmatmul.mubr.bf16.gmra.mxu0 %v5964
  %v6003 = vpop.f32.mrf.mxu0
  %v6004 = vadd.f32 0.0, %v6003
  %v6005 = vpop.f32.mrf.mxu0
  %v6006 = vpop.f32.mrf.mxu0
  %v6007 = vpop.f32.mrf.mxu0
  %6008 = vdwg.mxu0
  %v6009 = vmul.f32 %v5682, 0.35355338
  %v6010 = vmul.f32 %v5728, 0.35355338
  %v6011 = vmul.f32 %v5774, 0.35355338
  %v6012 = vmul.f32 %v5820, 0.35355338
  %v6013 = vmul.f32 %v5866, 0.35355338
  %v6014 = vmul.f32 %v5912, 0.35355338
  %v6015 = vmul.f32 %v5958, 0.35355338
  %v6016 = vmul.f32 %v6004, 0.35355338
  %v6017 = vsel %vm1502, %v6009, -inf
  %6018 = vmax.xlane.f32.xlu0 %v6017
  %v6019 = vpop.xlane.xlu0 %6018
  %v6020 = vsel %vm1502, %v6010, -inf
  %6021 = vmax.xlane.f32.xlu0 %v6020
  %v6022 = vpop.xlane.xlu0 %6021
  %v6023 = vsel %vm1502, %v6011, -inf
  %6024 = vmax.xlane.f32.xlu0 %v6023
  %v6025 = vpop.xlane.xlu0 %6024
  %v6026 = vsel %vm1502, %v6012, -inf
  %6027 = vmax.xlane.f32.xlu0 %v6026
  %v6028 = vpop.xlane.xlu0 %6027
  %v6029 = vsel %vm1502, %v6013, -inf
  %6030 = vmax.xlane.f32.xlu0 %v6029
  %v6031 = vpop.xlane.xlu0 %6030
  %v6032 = vsel %vm1502, %v6014, -inf
  %6033 = vmax.xlane.f32.xlu0 %v6032
  %v6034 = vpop.xlane.xlu0 %6033
  %v6035 = vsel %vm1502, %v6015, -inf
  %6036 = vmax.xlane.f32.xlu0 %v6035
  %v6037 = vpop.xlane.xlu0 %6036
  %v6038 = vsel %vm1502, %v6016, -inf
  %6039 = vmax.xlane.f32.xlu0 %v6038
  %v6040 = vpop.xlane.xlu0 %6039
  %v6041 = vsub.f32 %v6009, %v6019
  %v6042 = vsub.f32 %v6010, %v6022
  %v6043 = vsub.f32 %v6011, %v6025
  %v6044 = vsub.f32 %v6012, %v6028
  %v6045 = vsub.f32 %v6013, %v6031
  %v6046 = vsub.f32 %v6014, %v6034
  %v6047 = vsub.f32 %v6015, %v6037
  %v6048 = vsub.f32 %v6016, %v6040
  %v6049 = vmul.f32 %v6041, 1.442695
  %v6050 = vpow.pop %v6049
  %v6051 = vmul.f32 %v6042, 1.442695
  %v6052 = vpow.pop %v6051
  %v6053 = vmul.f32 %v6043, 1.442695
  %v6054 = vpow.pop %v6053
  %v6055 = vmul.f32 %v6044, 1.442695
  %v6056 = vpow.pop %v6055
  %v6057 = vmul.f32 %v6045, 1.442695
  %v6058 = vpow.pop %v6057
  %v6059 = vmul.f32 %v6046, 1.442695
  %v6060 = vpow.pop %v6059
  %v6061 = vmul.f32 %v6047, 1.442695
  %v6062 = vpow.pop %v6061
  %v6063 = vmul.f32 %v6048, 1.442695
  %v6064 = vpow.pop %v6063
  %v6065 = vsel %vm1502, %v6050, 0.0
  %6066 = vadd.xlane.f32.xlu0 %v6065
  %v6067 = vpop.xlane.xlu0 %6066
  %v6068 = vsel %vm1502, %v6052, 0.0
  %6069 = vadd.xlane.f32.xlu0 %v6068
  %v6070 = vpop.xlane.xlu0 %6069
  %v6071 = vsel %vm1502, %v6054, 0.0
  %6072 = vadd.xlane.f32.xlu0 %v6071
  %v6073 = vpop.xlane.xlu0 %6072
  %v6074 = vsel %vm1502, %v6056, 0.0
  %6075 = vadd.xlane.f32.xlu0 %v6074
  %v6076 = vpop.xlane.xlu0 %6075
  %v6077 = vsel %vm1502, %v6058, 0.0
  %6078 = vadd.xlane.f32.xlu0 %v6077
  %v6079 = vpop.xlane.xlu0 %6078
  %v6080 = vsel %vm1502, %v6060, 0.0
  %6081 = vadd.xlane.f32.xlu0 %v6080
  %v6082 = vpop.xlane.xlu0 %6081
  %v6083 = vsel %vm1502, %v6062, 0.0
  %6084 = vadd.xlane.f32.xlu0 %v6083
  %v6085 = vpop.xlane.xlu0 %6084
  %v6086 = vsel %vm1502, %v6064, 0.0
  %6087 = vadd.xlane.f32.xlu0 %v6086
  %v6088 = vpop.xlane.xlu0 %6087
  %v6089 = vrcp.pop %v6067
  %v6090 = vrcp.pop %v6070
  %v6091 = vrcp.pop %v6073
  %v6092 = vrcp.pop %v6076
  %v6093 = vrcp.pop %v6079
  %v6094 = vrcp.pop %v6082
  %v6095 = vrcp.pop %v6085
  %v6096 = vrcp.pop %v6088
  %v6097 = vmul.f32 %v6050, %v6089
  %v6098 = vmul.f32 %v6052, %v6090
  %v6099 = vmul.f32 %v6054, %v6091
  %v6100 = vmul.f32 %v6056, %v6092
  %v6101 = vmul.f32 %v6058, %v6093
  %v6102 = vmul.f32 %v6060, %v6094
  %v6103 = vmul.f32 %v6062, %v6095
  %v6104 = vmul.f32 %v6064, %v6096
  %v6105 = vpack.c.bf16 %v6097, %v6097
  %v6106 = vpack.c.bf16 %v6098, %v6098
  %v6107 = vpack.c.bf16 %v6099, %v6099
  %v6108 = vpack.c.bf16 %v6100, %v6100
  %v6109 = vpack.c.bf16 %v6101, %v6101
  %v6110 = vpack.c.bf16 %v6102, %v6102
  %v6111 = vpack.c.bf16 %v6103, %v6103
  %v6112 = vpack.c.bf16 %v6104, %v6104
  %v6113 = vpack.c.bf16 %v5340, %v5340
  %v6114 = vpack.c.bf16 %v5380, %v5380
  %v6115 = vpack.c.bf16 %v5420, %v5420
  %v6116 = vpack.c.bf16 %v5460, %v5460
  %v6117 = vpack.c.bf16 %v5500, %v5500
  %v6118 = vpack.c.bf16 %v5540, %v5540
  %v6119 = vpack.c.bf16 %v5580, %v5580
  %v6120 = vpack.c.bf16 %v5620, %v5620
  %v6122 = vsel %vm1607, %v6105, 0
  %v6125 = vsel %vm1611, %v6113, 0
  %6127 = vmatprep.subr.bf16.mxu0 0
  %6128 = vmatpush1.bf16.msra.mxu0 0
  %6129 = vmatprep.subr.bf16.mxu0 0
  %6130 = vmatpush1.bf16.msra.mxu0 0
  %6131 = vmatprep.subr.bf16.mxu0 0
  %6132 = vmatpush1.bf16.msra.mxu0 0
  %6133 = vmatprep.subr.bf16.mxu0 0
  %6134 = vmatpush1.bf16.msra.mxu0 0
  %6135 = vmatprep.subr.bf16.mxu0 0
  %6136 = vmatpush1.bf16.msra.mxu0 0
  %6137 = vmatprep.subr.bf16.mxu0 0
  %6138 = vmatpush1.bf16.msra.mxu0 0
  %6139 = vmatprep.subr.bf16.mxu0 0
  %6140 = vmatpush1.bf16.msra.mxu0 0
  %6141 = vmatprep.subr.bf16.mxu0 0
  %6142 = vmatpush1.bf16.msra.mxu0 %v6125
  %6143 = vmatprep.subr.bf16.mxu0 0
  %6144 = vmatpush2.bf16.msra.mxu0 0
  %6145 = vmatprep.subr.bf16.mxu0 0
  %6146 = vmatpush2.bf16.msra.mxu0 0
  %6147 = vmatprep.subr.bf16.mxu0 0
  %6148 = vmatpush2.bf16.msra.mxu0 0
  %6149 = vmatprep.subr.bf16.mxu0 0
  %6150 = vmatpush2.bf16.msra.mxu0 0
  %6151 = vmatprep.subr.bf16.mxu0 0
  %6152 = vmatpush2.bf16.msra.mxu0 0
  %6153 = vmatprep.subr.bf16.mxu0 0
  %6154 = vmatpush2.bf16.msra.mxu0 0
  %6155 = vmatprep.subr.bf16.mxu0 0
  %6156 = vmatpush2.bf16.msra.mxu0 0
  %6157 = vmatprep.subr.bf16.mxu0 0
  %6158 = vmatpush2.bf16.msra.mxu0 0
  %6159 = vmatprep.mubr.bf16.mxu0 0
  %6160 = vmatmul.mubr.bf16.gmra.mxu0 %v6122
  %v6161 = vpop.f32.mrf.mxu0
  %v6162 = vadd.f32 0.0, %v6161
  %v6163 = vpop.f32.mrf.mxu0
  %v6164 = vpop.f32.mrf.mxu0
  %v6165 = vpop.f32.mrf.mxu0
  %6166 = vdwg.mxu0
  %v6168 = vsel %vm1607, %v6106, 0
  %v6171 = vsel %vm1611, %v6114, 0
  %6173 = vmatprep.subr.bf16.mxu0 0
  %6174 = vmatpush1.bf16.msra.mxu0 0
  %6175 = vmatprep.subr.bf16.mxu0 0
  %6176 = vmatpush1.bf16.msra.mxu0 0
  %6177 = vmatprep.subr.bf16.mxu0 0
  %6178 = vmatpush1.bf16.msra.mxu0 0
  %6179 = vmatprep.subr.bf16.mxu0 0
  %6180 = vmatpush1.bf16.msra.mxu0 0
  %6181 = vmatprep.subr.bf16.mxu0 0
  %6182 = vmatpush1.bf16.msra.mxu0 0
  %6183 = vmatprep.subr.bf16.mxu0 0
  %6184 = vmatpush1.bf16.msra.mxu0 0
  %6185 = vmatprep.subr.bf16.mxu0 0
  %6186 = vmatpush1.bf16.msra.mxu0 0
  %6187 = vmatprep.subr.bf16.mxu0 0
  %6188 = vmatpush1.bf16.msra.mxu0 %v6171
  %6189 = vmatprep.subr.bf16.mxu0 0
  %6190 = vmatpush2.bf16.msra.mxu0 0
  %6191 = vmatprep.subr.bf16.mxu0 0
  %6192 = vmatpush2.bf16.msra.mxu0 0
  %6193 = vmatprep.subr.bf16.mxu0 0
  %6194 = vmatpush2.bf16.msra.mxu0 0
  %6195 = vmatprep.subr.bf16.mxu0 0
  %6196 = vmatpush2.bf16.msra.mxu0 0
  %6197 = vmatprep.subr.bf16.mxu0 0
  %6198 = vmatpush2.bf16.msra.mxu0 0
  %6199 = vmatprep.subr.bf16.mxu0 0
  %6200 = vmatpush2.bf16.msra.mxu0 0
  %6201 = vmatprep.subr.bf16.mxu0 0
  %6202 = vmatpush2.bf16.msra.mxu0 0
  %6203 = vmatprep.subr.bf16.mxu0 0
  %6204 = vmatpush2.bf16.msra.mxu0 0
  %6205 = vmatprep.mubr.bf16.mxu0 0
  %6206 = vmatmul.mubr.bf16.gmra.mxu0 %v6168
  %v6207 = vpop.f32.mrf.mxu0
  %v6208 = vadd.f32 0.0, %v6207
  %v6209 = vpop.f32.mrf.mxu0
  %v6210 = vpop.f32.mrf.mxu0
  %v6211 = vpop.f32.mrf.mxu0
  %6212 = vdwg.mxu0
  %v6214 = vsel %vm1607, %v6107, 0
  %v6217 = vsel %vm1611, %v6115, 0
  %6219 = vmatprep.subr.bf16.mxu0 0
  %6220 = vmatpush1.bf16.msra.mxu0 0
  %6221 = vmatprep.subr.bf16.mxu0 0
  %6222 = vmatpush1.bf16.msra.mxu0 0
  %6223 = vmatprep.subr.bf16.mxu0 0
  %6224 = vmatpush1.bf16.msra.mxu0 0
  %6225 = vmatprep.subr.bf16.mxu0 0
  %6226 = vmatpush1.bf16.msra.mxu0 0
  %6227 = vmatprep.subr.bf16.mxu0 0
  %6228 = vmatpush1.bf16.msra.mxu0 0
  %6229 = vmatprep.subr.bf16.mxu0 0
  %6230 = vmatpush1.bf16.msra.mxu0 0
  %6231 = vmatprep.subr.bf16.mxu0 0
  %6232 = vmatpush1.bf16.msra.mxu0 0
  %6233 = vmatprep.subr.bf16.mxu0 0
  %6234 = vmatpush1.bf16.msra.mxu0 %v6217
  %6235 = vmatprep.subr.bf16.mxu0 0
  %6236 = vmatpush2.bf16.msra.mxu0 0
  %6237 = vmatprep.subr.bf16.mxu0 0
  %6238 = vmatpush2.bf16.msra.mxu0 0
  %6239 = vmatprep.subr.bf16.mxu0 0
  %6240 = vmatpush2.bf16.msra.mxu0 0
  %6241 = vmatprep.subr.bf16.mxu0 0
  %6242 = vmatpush2.bf16.msra.mxu0 0
  %6243 = vmatprep.subr.bf16.mxu0 0
  %6244 = vmatpush2.bf16.msra.mxu0 0
  %6245 = vmatprep.subr.bf16.mxu0 0
  %6246 = vmatpush2.bf16.msra.mxu0 0
  %6247 = vmatprep.subr.bf16.mxu0 0
  %6248 = vmatpush2.bf16.msra.mxu0 0
  %6249 = vmatprep.subr.bf16.mxu0 0
  %6250 = vmatpush2.bf16.msra.mxu0 0
  %6251 = vmatprep.mubr.bf16.mxu0 0
  %6252 = vmatmul.mubr.bf16.gmra.mxu0 %v6214
  %v6253 = vpop.f32.mrf.mxu0
  %v6254 = vadd.f32 0.0, %v6253
  %v6255 = vpop.f32.mrf.mxu0
  %v6256 = vpop.f32.mrf.mxu0
  %v6257 = vpop.f32.mrf.mxu0
  %6258 = vdwg.mxu0
  %v6260 = vsel %vm1607, %v6108, 0
  %v6263 = vsel %vm1611, %v6116, 0
  %6265 = vmatprep.subr.bf16.mxu0 0
  %6266 = vmatpush1.bf16.msra.mxu0 0
  %6267 = vmatprep.subr.bf16.mxu0 0
  %6268 = vmatpush1.bf16.msra.mxu0 0
  %6269 = vmatprep.subr.bf16.mxu0 0
  %6270 = vmatpush1.bf16.msra.mxu0 0
  %6271 = vmatprep.subr.bf16.mxu0 0
  %6272 = vmatpush1.bf16.msra.mxu0 0
  %6273 = vmatprep.subr.bf16.mxu0 0
  %6274 = vmatpush1.bf16.msra.mxu0 0
  %6275 = vmatprep.subr.bf16.mxu0 0
  %6276 = vmatpush1.bf16.msra.mxu0 0
  %6277 = vmatprep.subr.bf16.mxu0 0
  %6278 = vmatpush1.bf16.msra.mxu0 0
  %6279 = vmatprep.subr.bf16.mxu0 0
  %6280 = vmatpush1.bf16.msra.mxu0 %v6263
  %6281 = vmatprep.subr.bf16.mxu0 0
  %6282 = vmatpush2.bf16.msra.mxu0 0
  %6283 = vmatprep.subr.bf16.mxu0 0
  %6284 = vmatpush2.bf16.msra.mxu0 0
  %6285 = vmatprep.subr.bf16.mxu0 0
  %6286 = vmatpush2.bf16.msra.mxu0 0
  %6287 = vmatprep.subr.bf16.mxu0 0
  %6288 = vmatpush2.bf16.msra.mxu0 0
  %6289 = vmatprep.subr.bf16.mxu0 0
  %6290 = vmatpush2.bf16.msra.mxu0 0
  %6291 = vmatprep.subr.bf16.mxu0 0
  %6292 = vmatpush2.bf16.msra.mxu0 0
  %6293 = vmatprep.subr.bf16.mxu0 0
  %6294 = vmatpush2.bf16.msra.mxu0 0
  %6295 = vmatprep.subr.bf16.mxu0 0
  %6296 = vmatpush2.bf16.msra.mxu0 0
  %6297 = vmatprep.mubr.bf16.mxu0 0
  %6298 = vmatmul.mubr.bf16.gmra.mxu0 %v6260
  %v6299 = vpop.f32.mrf.mxu0
  %v6300 = vadd.f32 0.0, %v6299
  %v6301 = vpop.f32.mrf.mxu0
  %v6302 = vpop.f32.mrf.mxu0
  %v6303 = vpop.f32.mrf.mxu0
  %6304 = vdwg.mxu0
  %v6306 = vsel %vm1607, %v6109, 0
  %v6309 = vsel %vm1611, %v6117, 0
  %6311 = vmatprep.subr.bf16.mxu0 0
  %6312 = vmatpush1.bf16.msra.mxu0 0
  %6313 = vmatprep.subr.bf16.mxu0 0
  %6314 = vmatpush1.bf16.msra.mxu0 0
  %6315 = vmatprep.subr.bf16.mxu0 0
  %6316 = vmatpush1.bf16.msra.mxu0 0
  %6317 = vmatprep.subr.bf16.mxu0 0
  %6318 = vmatpush1.bf16.msra.mxu0 0
  %6319 = vmatprep.subr.bf16.mxu0 0
  %6320 = vmatpush1.bf16.msra.mxu0 0
  %6321 = vmatprep.subr.bf16.mxu0 0
  %6322 = vmatpush1.bf16.msra.mxu0 0
  %6323 = vmatprep.subr.bf16.mxu0 0
  %6324 = vmatpush1.bf16.msra.mxu0 0
  %6325 = vmatprep.subr.bf16.mxu0 0
  %6326 = vmatpush1.bf16.msra.mxu0 %v6309
  %6327 = vmatprep.subr.bf16.mxu0 0
  %6328 = vmatpush2.bf16.msra.mxu0 0
  %6329 = vmatprep.subr.bf16.mxu0 0
  %6330 = vmatpush2.bf16.msra.mxu0 0
  %6331 = vmatprep.subr.bf16.mxu0 0
  %6332 = vmatpush2.bf16.msra.mxu0 0
  %6333 = vmatprep.subr.bf16.mxu0 0
  %6334 = vmatpush2.bf16.msra.mxu0 0
  %6335 = vmatprep.subr.bf16.mxu0 0
  %6336 = vmatpush2.bf16.msra.mxu0 0
  %6337 = vmatprep.subr.bf16.mxu0 0
  %6338 = vmatpush2.bf16.msra.mxu0 0
  %6339 = vmatprep.subr.bf16.mxu0 0
  %6340 = vmatpush2.bf16.msra.mxu0 0
  %6341 = vmatprep.subr.bf16.mxu0 0
  %6342 = vmatpush2.bf16.msra.mxu0 0
  %6343 = vmatprep.mubr.bf16.mxu0 0
  %6344 = vmatmul.mubr.bf16.gmra.mxu0 %v6306
  %v6345 = vpop.f32.mrf.mxu0
  %v6346 = vadd.f32 0.0, %v6345
  %v6347 = vpop.f32.mrf.mxu0
  %v6348 = vpop.f32.mrf.mxu0
  %v6349 = vpop.f32.mrf.mxu0
  %6350 = vdwg.mxu0
  %v6352 = vsel %vm1607, %v6110, 0
  %v6355 = vsel %vm1611, %v6118, 0
  %6357 = vmatprep.subr.bf16.mxu0 0
  %6358 = vmatpush1.bf16.msra.mxu0 0
  %6359 = vmatprep.subr.bf16.mxu0 0
  %6360 = vmatpush1.bf16.msra.mxu0 0
  %6361 = vmatprep.subr.bf16.mxu0 0
  %6362 = vmatpush1.bf16.msra.mxu0 0
  %6363 = vmatprep.subr.bf16.mxu0 0
  %6364 = vmatpush1.bf16.msra.mxu0 0
  %6365 = vmatprep.subr.bf16.mxu0 0
  %6366 = vmatpush1.bf16.msra.mxu0 0
  %6367 = vmatprep.subr.bf16.mxu0 0
  %6368 = vmatpush1.bf16.msra.mxu0 0
  %6369 = vmatprep.subr.bf16.mxu0 0
  %6370 = vmatpush1.bf16.msra.mxu0 0
  %6371 = vmatprep.subr.bf16.mxu0 0
  %6372 = vmatpush1.bf16.msra.mxu0 %v6355
  %6373 = vmatprep.subr.bf16.mxu0 0
  %6374 = vmatpush2.bf16.msra.mxu0 0
  %6375 = vmatprep.subr.bf16.mxu0 0
  %6376 = vmatpush2.bf16.msra.mxu0 0
  %6377 = vmatprep.subr.bf16.mxu0 0
  %6378 = vmatpush2.bf16.msra.mxu0 0
  %6379 = vmatprep.subr.bf16.mxu0 0
  %6380 = vmatpush2.bf16.msra.mxu0 0
  %6381 = vmatprep.subr.bf16.mxu0 0
  %6382 = vmatpush2.bf16.msra.mxu0 0
  %6383 = vmatprep.subr.bf16.mxu0 0
  %6384 = vmatpush2.bf16.msra.mxu0 0
  %6385 = vmatprep.subr.bf16.mxu0 0
  %6386 = vmatpush2.bf16.msra.mxu0 0
  %6387 = vmatprep.subr.bf16.mxu0 0
  %6388 = vmatpush2.bf16.msra.mxu0 0
  %6389 = vmatprep.mubr.bf16.mxu0 0
  %6390 = vmatmul.mubr.bf16.gmra.mxu0 %v6352
  %v6391 = vpop.f32.mrf.mxu0
  %v6392 = vadd.f32 0.0, %v6391
  %v6393 = vpop.f32.mrf.mxu0
  %v6394 = vpop.f32.mrf.mxu0
  %v6395 = vpop.f32.mrf.mxu0
  %6396 = vdwg.mxu0
  %v6398 = vsel %vm1607, %v6111, 0
  %v6401 = vsel %vm1611, %v6119, 0
  %6403 = vmatprep.subr.bf16.mxu0 0
  %6404 = vmatpush1.bf16.msra.mxu0 0
  %6405 = vmatprep.subr.bf16.mxu0 0
  %6406 = vmatpush1.bf16.msra.mxu0 0
  %6407 = vmatprep.subr.bf16.mxu0 0
  %6408 = vmatpush1.bf16.msra.mxu0 0
  %6409 = vmatprep.subr.bf16.mxu0 0
  %6410 = vmatpush1.bf16.msra.mxu0 0
  %6411 = vmatprep.subr.bf16.mxu0 0
  %6412 = vmatpush1.bf16.msra.mxu0 0
  %6413 = vmatprep.subr.bf16.mxu0 0
  %6414 = vmatpush1.bf16.msra.mxu0 0
  %6415 = vmatprep.subr.bf16.mxu0 0
  %6416 = vmatpush1.bf16.msra.mxu0 0
  %6417 = vmatprep.subr.bf16.mxu0 0
  %6418 = vmatpush1.bf16.msra.mxu0 %v6401
  %6419 = vmatprep.subr.bf16.mxu0 0
  %6420 = vmatpush2.bf16.msra.mxu0 0
  %6421 = vmatprep.subr.bf16.mxu0 0
  %6422 = vmatpush2.bf16.msra.mxu0 0
  %6423 = vmatprep.subr.bf16.mxu0 0
  %6424 = vmatpush2.bf16.msra.mxu0 0
  %6425 = vmatprep.subr.bf16.mxu0 0
  %6426 = vmatpush2.bf16.msra.mxu0 0
  %6427 = vmatprep.subr.bf16.mxu0 0
  %6428 = vmatpush2.bf16.msra.mxu0 0
  %6429 = vmatprep.subr.bf16.mxu0 0
  %6430 = vmatpush2.bf16.msra.mxu0 0
  %6431 = vmatprep.subr.bf16.mxu0 0
  %6432 = vmatpush2.bf16.msra.mxu0 0
  %6433 = vmatprep.subr.bf16.mxu0 0
  %6434 = vmatpush2.bf16.msra.mxu0 0
  %6435 = vmatprep.mubr.bf16.mxu0 0
  %6436 = vmatmul.mubr.bf16.gmra.mxu0 %v6398
  %v6437 = vpop.f32.mrf.mxu0
  %v6438 = vadd.f32 0.0, %v6437
  %v6439 = vpop.f32.mrf.mxu0
  %v6440 = vpop.f32.mrf.mxu0
  %v6441 = vpop.f32.mrf.mxu0
  %6442 = vdwg.mxu0
  %v6444 = vsel %vm1607, %v6112, 0
  %v6447 = vsel %vm1611, %v6120, 0
  %6449 = vmatprep.subr.bf16.mxu0 0
  %6450 = vmatpush1.bf16.msra.mxu0 0
  %6451 = vmatprep.subr.bf16.mxu0 0
  %6452 = vmatpush1.bf16.msra.mxu0 0
  %6453 = vmatprep.subr.bf16.mxu0 0
  %6454 = vmatpush1.bf16.msra.mxu0 0
  %6455 = vmatprep.subr.bf16.mxu0 0
  %6456 = vmatpush1.bf16.msra.mxu0 0
  %6457 = vmatprep.subr.bf16.mxu0 0
  %6458 = vmatpush1.bf16.msra.mxu0 0
  %6459 = vmatprep.subr.bf16.mxu0 0
  %6460 = vmatpush1.bf16.msra.mxu0 0
  %6461 = vmatprep.subr.bf16.mxu0 0
  %6462 = vmatpush1.bf16.msra.mxu0 0
  %6463 = vmatprep.subr.bf16.mxu0 0
  %6464 = vmatpush1.bf16.msra.mxu0 %v6447
  %6465 = vmatprep.subr.bf16.mxu0 0
  %6466 = vmatpush2.bf16.msra.mxu0 0
  %6467 = vmatprep.subr.bf16.mxu0 0
  %6468 = vmatpush2.bf16.msra.mxu0 0
  %6469 = vmatprep.subr.bf16.mxu0 0
  %6470 = vmatpush2.bf16.msra.mxu0 0
  %6471 = vmatprep.subr.bf16.mxu0 0
  %6472 = vmatpush2.bf16.msra.mxu0 0
  %6473 = vmatprep.subr.bf16.mxu0 0
  %6474 = vmatpush2.bf16.msra.mxu0 0
  %6475 = vmatprep.subr.bf16.mxu0 0
  %6476 = vmatpush2.bf16.msra.mxu0 0
  %6477 = vmatprep.subr.bf16.mxu0 0
  %6478 = vmatpush2.bf16.msra.mxu0 0
  %6479 = vmatprep.subr.bf16.mxu0 0
  %6480 = vmatpush2.bf16.msra.mxu0 0
  %6481 = vmatprep.mubr.bf16.mxu0 0
  %6482 = vmatmul.mubr.bf16.gmra.mxu0 %v6444
  %v6483 = vpop.f32.mrf.mxu0
  %v6484 = vadd.f32 0.0, %v6483
  %v6485 = vpop.f32.mrf.mxu0
  %v6486 = vpop.f32.mrf.mxu0
  %v6487 = vpop.f32.mrf.mxu0
  %6488 = vdwg.mxu0
  %s6489 = scalar_lea.vmem %s7, 8
  %v6490 = vld [vmem:[%s6489] sm:$0xf]
  %v6491 = vpack.c.bf16 %v6162, %v6162
  %v6492 = vpack.c.bf16 %v6208, %v6208
  %v6493 = vpack.c.bf16 %v6254, %v6254
  %v6494 = vpack.c.bf16 %v6300, %v6300
  %v6495 = vpack.c.bf16 %v6346, %v6346
  %v6496 = vpack.c.bf16 %v6392, %v6392
  %v6497 = vpack.c.bf16 %v6438, %v6438
  %v6498 = vpack.c.bf16 %v6484, %v6484
  %v6500 = vsel %vm1125, %v6491, 0
  %v6503 = vsel %vm3898, %v6490, 0
  %6505 = vmatprep.subr.bf16.mxu0 0
  %6506 = vmatpush1.bf16.msra.mxu0 0
  %6507 = vmatprep.subr.bf16.mxu0 0
  %6508 = vmatpush1.bf16.msra.mxu0 0
  %6509 = vmatprep.subr.bf16.mxu0 0
  %6510 = vmatpush1.bf16.msra.mxu0 0
  %6511 = vmatprep.subr.bf16.mxu0 0
  %6512 = vmatpush1.bf16.msra.mxu0 0
  %6513 = vmatprep.subr.bf16.mxu0 0
  %6514 = vmatpush1.bf16.msra.mxu0 0
  %6515 = vmatprep.subr.bf16.mxu0 0
  %6516 = vmatpush1.bf16.msra.mxu0 0
  %6517 = vmatprep.subr.bf16.mxu0 0
  %6518 = vmatpush1.bf16.msra.mxu0 0
  %6519 = vmatprep.subr.bf16.mxu0 0
  %6520 = vmatpush1.bf16.msra.mxu0 %v6503
  %6521 = vmatprep.subr.bf16.mxu0 0
  %6522 = vmatpush2.bf16.msra.mxu0 0
  %6523 = vmatprep.subr.bf16.mxu0 0
  %6524 = vmatpush2.bf16.msra.mxu0 0
  %6525 = vmatprep.subr.bf16.mxu0 0
  %6526 = vmatpush2.bf16.msra.mxu0 0
  %6527 = vmatprep.subr.bf16.mxu0 0
  %6528 = vmatpush2.bf16.msra.mxu0 0
  %6529 = vmatprep.subr.bf16.mxu0 0
  %6530 = vmatpush2.bf16.msra.mxu0 0
  %6531 = vmatprep.subr.bf16.mxu0 0
  %6532 = vmatpush2.bf16.msra.mxu0 0
  %6533 = vmatprep.subr.bf16.mxu0 0
  %6534 = vmatpush2.bf16.msra.mxu0 0
  %6535 = vmatprep.subr.bf16.mxu0 0
  %6536 = vmatpush2.bf16.msra.mxu0 0
  %6537 = vmatprep.mubr.bf16.mxu0 0
  %6538 = vmatmul.mubr.bf16.gmra.mxu0 %v6500
  %v6539 = vpop.f32.mrf.mxu0
  %v6540 = vadd.f32 0.0, %v6539
  %v6541 = vpop.f32.mrf.mxu0
  %v6542 = vpop.f32.mrf.mxu0
  %v6543 = vpop.f32.mrf.mxu0
  %6544 = vdwg.mxu0
  %v6546 = vsel %vm1125, %v6492, 0
  %6548 = vmatprep.subr.bf16.mxu0 0
  %6549 = vmatpush1.bf16.msra.mxu0 0
  %6550 = vmatprep.subr.bf16.mxu0 0
  %6551 = vmatpush1.bf16.msra.mxu0 0
  %6552 = vmatprep.subr.bf16.mxu0 0
  %6553 = vmatpush1.bf16.msra.mxu0 0
  %6554 = vmatprep.subr.bf16.mxu0 0
  %6555 = vmatpush1.bf16.msra.mxu0 0
  %6556 = vmatprep.subr.bf16.mxu0 0
  %6557 = vmatpush1.bf16.msra.mxu0 0
  %6558 = vmatprep.subr.bf16.mxu0 0
  %6559 = vmatpush1.bf16.msra.mxu0 0
  %6560 = vmatprep.subr.bf16.mxu0 0
  %6561 = vmatpush1.bf16.msra.mxu0 0
  %6562 = vmatprep.subr.bf16.mxu0 0
  %6563 = vmatpush1.bf16.msra.mxu0 %v6503
  %6564 = vmatprep.subr.bf16.mxu0 0
  %6565 = vmatpush2.bf16.msra.mxu0 0
  %6566 = vmatprep.subr.bf16.mxu0 0
  %6567 = vmatpush2.bf16.msra.mxu0 0
  %6568 = vmatprep.subr.bf16.mxu0 0
  %6569 = vmatpush2.bf16.msra.mxu0 0
  %6570 = vmatprep.subr.bf16.mxu0 0
  %6571 = vmatpush2.bf16.msra.mxu0 0
  %6572 = vmatprep.subr.bf16.mxu0 0
  %6573 = vmatpush2.bf16.msra.mxu0 0
  %6574 = vmatprep.subr.bf16.mxu0 0
  %6575 = vmatpush2.bf16.msra.mxu0 0
  %6576 = vmatprep.subr.bf16.mxu0 0
  %6577 = vmatpush2.bf16.msra.mxu0 0
  %6578 = vmatprep.subr.bf16.mxu0 0
  %6579 = vmatpush2.bf16.msra.mxu0 0
  %6580 = vmatprep.mubr.bf16.mxu0 0
  %6581 = vmatmul.mubr.bf16.gmra.mxu0 %v6546
  %v6582 = vpop.f32.mrf.mxu0
  %v6583 = vadd.f32 0.0, %v6582
  %v6584 = vpop.f32.mrf.mxu0
  %v6585 = vpop.f32.mrf.mxu0
  %v6586 = vpop.f32.mrf.mxu0
  %6587 = vdwg.mxu0
  %v6589 = vsel %vm1125, %v6493, 0
  %6591 = vmatprep.subr.bf16.mxu0 0
  %6592 = vmatpush1.bf16.msra.mxu0 0
  %6593 = vmatprep.subr.bf16.mxu0 0
  %6594 = vmatpush1.bf16.msra.mxu0 0
  %6595 = vmatprep.subr.bf16.mxu0 0
  %6596 = vmatpush1.bf16.msra.mxu0 0
  %6597 = vmatprep.subr.bf16.mxu0 0
  %6598 = vmatpush1.bf16.msra.mxu0 0
  %6599 = vmatprep.subr.bf16.mxu0 0
  %6600 = vmatpush1.bf16.msra.mxu0 0
  %6601 = vmatprep.subr.bf16.mxu0 0
  %6602 = vmatpush1.bf16.msra.mxu0 0
  %6603 = vmatprep.subr.bf16.mxu0 0
  %6604 = vmatpush1.bf16.msra.mxu0 0
  %6605 = vmatprep.subr.bf16.mxu0 0
  %6606 = vmatpush1.bf16.msra.mxu0 %v6503
  %6607 = vmatprep.subr.bf16.mxu0 0
  %6608 = vmatpush2.bf16.msra.mxu0 0
  %6609 = vmatprep.subr.bf16.mxu0 0
  %6610 = vmatpush2.bf16.msra.mxu0 0
  %6611 = vmatprep.subr.bf16.mxu0 0
  %6612 = vmatpush2.bf16.msra.mxu0 0
  %6613 = vmatprep.subr.bf16.mxu0 0
  %6614 = vmatpush2.bf16.msra.mxu0 0
  %6615 = vmatprep.subr.bf16.mxu0 0
  %6616 = vmatpush2.bf16.msra.mxu0 0
  %6617 = vmatprep.subr.bf16.mxu0 0
  %6618 = vmatpush2.bf16.msra.mxu0 0
  %6619 = vmatprep.subr.bf16.mxu0 0
  %6620 = vmatpush2.bf16.msra.mxu0 0
  %6621 = vmatprep.subr.bf16.mxu0 0
  %6622 = vmatpush2.bf16.msra.mxu0 0
  %6623 = vmatprep.mubr.bf16.mxu0 0
  %6624 = vmatmul.mubr.bf16.gmra.mxu0 %v6589
  %v6625 = vpop.f32.mrf.mxu0
  %v6626 = vadd.f32 0.0, %v6625
  %v6627 = vpop.f32.mrf.mxu0
  %v6628 = vpop.f32.mrf.mxu0
  %v6629 = vpop.f32.mrf.mxu0
  %6630 = vdwg.mxu0
  %v6632 = vsel %vm1125, %v6494, 0
  %6634 = vmatprep.subr.bf16.mxu0 0
  %6635 = vmatpush1.bf16.msra.mxu0 0
  %6636 = vmatprep.subr.bf16.mxu0 0
  %6637 = vmatpush1.bf16.msra.mxu0 0
  %6638 = vmatprep.subr.bf16.mxu0 0
  %6639 = vmatpush1.bf16.msra.mxu0 0
  %6640 = vmatprep.subr.bf16.mxu0 0
  %6641 = vmatpush1.bf16.msra.mxu0 0
  %6642 = vmatprep.subr.bf16.mxu0 0
  %6643 = vmatpush1.bf16.msra.mxu0 0
  %6644 = vmatprep.subr.bf16.mxu0 0
  %6645 = vmatpush1.bf16.msra.mxu0 0
  %6646 = vmatprep.subr.bf16.mxu0 0
  %6647 = vmatpush1.bf16.msra.mxu0 0
  %6648 = vmatprep.subr.bf16.mxu0 0
  %6649 = vmatpush1.bf16.msra.mxu0 %v6503
  %6650 = vmatprep.subr.bf16.mxu0 0
  %6651 = vmatpush2.bf16.msra.mxu0 0
  %6652 = vmatprep.subr.bf16.mxu0 0
  %6653 = vmatpush2.bf16.msra.mxu0 0
  %6654 = vmatprep.subr.bf16.mxu0 0
  %6655 = vmatpush2.bf16.msra.mxu0 0
  %6656 = vmatprep.subr.bf16.mxu0 0
  %6657 = vmatpush2.bf16.msra.mxu0 0
  %6658 = vmatprep.subr.bf16.mxu0 0
  %6659 = vmatpush2.bf16.msra.mxu0 0
  %6660 = vmatprep.subr.bf16.mxu0 0
  %6661 = vmatpush2.bf16.msra.mxu0 0
  %6662 = vmatprep.subr.bf16.mxu0 0
  %6663 = vmatpush2.bf16.msra.mxu0 0
  %6664 = vmatprep.subr.bf16.mxu0 0
  %6665 = vmatpush2.bf16.msra.mxu0 0
  %6666 = vmatprep.mubr.bf16.mxu0 0
  %6667 = vmatmul.mubr.bf16.gmra.mxu0 %v6632
  %v6668 = vpop.f32.mrf.mxu0
  %v6669 = vadd.f32 0.0, %v6668
  %v6670 = vpop.f32.mrf.mxu0
  %v6671 = vpop.f32.mrf.mxu0
  %v6672 = vpop.f32.mrf.mxu0
  %6673 = vdwg.mxu0
  %v6675 = vsel %vm1125, %v6495, 0
  %6677 = vmatprep.subr.bf16.mxu0 0
  %6678 = vmatpush1.bf16.msra.mxu0 0
  %6679 = vmatprep.subr.bf16.mxu0 0
  %6680 = vmatpush1.bf16.msra.mxu0 0
  %6681 = vmatprep.subr.bf16.mxu0 0
  %6682 = vmatpush1.bf16.msra.mxu0 0
  %6683 = vmatprep.subr.bf16.mxu0 0
  %6684 = vmatpush1.bf16.msra.mxu0 0
  %6685 = vmatprep.subr.bf16.mxu0 0
  %6686 = vmatpush1.bf16.msra.mxu0 0
  %6687 = vmatprep.subr.bf16.mxu0 0
  %6688 = vmatpush1.bf16.msra.mxu0 0
  %6689 = vmatprep.subr.bf16.mxu0 0
  %6690 = vmatpush1.bf16.msra.mxu0 0
  %6691 = vmatprep.subr.bf16.mxu0 0
  %6692 = vmatpush1.bf16.msra.mxu0 %v6503
  %6693 = vmatprep.subr.bf16.mxu0 0
  %6694 = vmatpush2.bf16.msra.mxu0 0
  %6695 = vmatprep.subr.bf16.mxu0 0
  %6696 = vmatpush2.bf16.msra.mxu0 0
  %6697 = vmatprep.subr.bf16.mxu0 0
  %6698 = vmatpush2.bf16.msra.mxu0 0
  %6699 = vmatprep.subr.bf16.mxu0 0
  %6700 = vmatpush2.bf16.msra.mxu0 0
  %6701 = vmatprep.subr.bf16.mxu0 0
  %6702 = vmatpush2.bf16.msra.mxu0 0
  %6703 = vmatprep.subr.bf16.mxu0 0
  %6704 = vmatpush2.bf16.msra.mxu0 0
  %6705 = vmatprep.subr.bf16.mxu0 0
  %6706 = vmatpush2.bf16.msra.mxu0 0
  %6707 = vmatprep.subr.bf16.mxu0 0
  %6708 = vmatpush2.bf16.msra.mxu0 0
  %6709 = vmatprep.mubr.bf16.mxu0 0
  %6710 = vmatmul.mubr.bf16.gmra.mxu0 %v6675
  %v6711 = vpop.f32.mrf.mxu0
  %v6712 = vadd.f32 0.0, %v6711
  %v6713 = vpop.f32.mrf.mxu0
  %v6714 = vpop.f32.mrf.mxu0
  %v6715 = vpop.f32.mrf.mxu0
  %6716 = vdwg.mxu0
  %v6718 = vsel %vm1125, %v6496, 0
  %6720 = vmatprep.subr.bf16.mxu0 0
  %6721 = vmatpush1.bf16.msra.mxu0 0
  %6722 = vmatprep.subr.bf16.mxu0 0
  %6723 = vmatpush1.bf16.msra.mxu0 0
  %6724 = vmatprep.subr.bf16.mxu0 0
  %6725 = vmatpush1.bf16.msra.mxu0 0
  %6726 = vmatprep.subr.bf16.mxu0 0
  %6727 = vmatpush1.bf16.msra.mxu0 0
  %6728 = vmatprep.subr.bf16.mxu0 0
  %6729 = vmatpush1.bf16.msra.mxu0 0
  %6730 = vmatprep.subr.bf16.mxu0 0
  %6731 = vmatpush1.bf16.msra.mxu0 0
  %6732 = vmatprep.subr.bf16.mxu0 0
  %6733 = vmatpush1.bf16.msra.mxu0 0
  %6734 = vmatprep.subr.bf16.mxu0 0
  %6735 = vmatpush1.bf16.msra.mxu0 %v6503
  %6736 = vmatprep.subr.bf16.mxu0 0
  %6737 = vmatpush2.bf16.msra.mxu0 0
  %6738 = vmatprep.subr.bf16.mxu0 0
  %6739 = vmatpush2.bf16.msra.mxu0 0
  %6740 = vmatprep.subr.bf16.mxu0 0
  %6741 = vmatpush2.bf16.msra.mxu0 0
  %6742 = vmatprep.subr.bf16.mxu0 0
  %6743 = vmatpush2.bf16.msra.mxu0 0
  %6744 = vmatprep.subr.bf16.mxu0 0
  %6745 = vmatpush2.bf16.msra.mxu0 0
  %6746 = vmatprep.subr.bf16.mxu0 0
  %6747 = vmatpush2.bf16.msra.mxu0 0
  %6748 = vmatprep.subr.bf16.mxu0 0
  %6749 = vmatpush2.bf16.msra.mxu0 0
  %6750 = vmatprep.subr.bf16.mxu0 0
  %6751 = vmatpush2.bf16.msra.mxu0 0
  %6752 = vmatprep.mubr.bf16.mxu0 0
  %6753 = vmatmul.mubr.bf16.gmra.mxu0 %v6718
  %v6754 = vpop.f32.mrf.mxu0
  %v6755 = vadd.f32 0.0, %v6754
  %v6756 = vpop.f32.mrf.mxu0
  %v6757 = vpop.f32.mrf.mxu0
  %v6758 = vpop.f32.mrf.mxu0
  %6759 = vdwg.mxu0
  %v6761 = vsel %vm1125, %v6497, 0
  %6763 = vmatprep.subr.bf16.mxu0 0
  %6764 = vmatpush1.bf16.msra.mxu0 0
  %6765 = vmatprep.subr.bf16.mxu0 0
  %6766 = vmatpush1.bf16.msra.mxu0 0
  %6767 = vmatprep.subr.bf16.mxu0 0
  %6768 = vmatpush1.bf16.msra.mxu0 0
  %6769 = vmatprep.subr.bf16.mxu0 0
  %6770 = vmatpush1.bf16.msra.mxu0 0
  %6771 = vmatprep.subr.bf16.mxu0 0
  %6772 = vmatpush1.bf16.msra.mxu0 0
  %6773 = vmatprep.subr.bf16.mxu0 0
  %6774 = vmatpush1.bf16.msra.mxu0 0
  %6775 = vmatprep.subr.bf16.mxu0 0
  %6776 = vmatpush1.bf16.msra.mxu0 0
  %6777 = vmatprep.subr.bf16.mxu0 0
  %6778 = vmatpush1.bf16.msra.mxu0 %v6503
  %6779 = vmatprep.subr.bf16.mxu0 0
  %6780 = vmatpush2.bf16.msra.mxu0 0
  %6781 = vmatprep.subr.bf16.mxu0 0
  %6782 = vmatpush2.bf16.msra.mxu0 0
  %6783 = vmatprep.subr.bf16.mxu0 0
  %6784 = vmatpush2.bf16.msra.mxu0 0
  %6785 = vmatprep.subr.bf16.mxu0 0
  %6786 = vmatpush2.bf16.msra.mxu0 0
  %6787 = vmatprep.subr.bf16.mxu0 0
  %6788 = vmatpush2.bf16.msra.mxu0 0
  %6789 = vmatprep.subr.bf16.mxu0 0
  %6790 = vmatpush2.bf16.msra.mxu0 0
  %6791 = vmatprep.subr.bf16.mxu0 0
  %6792 = vmatpush2.bf16.msra.mxu0 0
  %6793 = vmatprep.subr.bf16.mxu0 0
  %6794 = vmatpush2.bf16.msra.mxu0 0
  %6795 = vmatprep.mubr.bf16.mxu0 0
  %6796 = vmatmul.mubr.bf16.gmra.mxu0 %v6761
  %v6797 = vpop.f32.mrf.mxu0
  %v6798 = vadd.f32 0.0, %v6797
  %v6799 = vpop.f32.mrf.mxu0
  %v6800 = vpop.f32.mrf.mxu0
  %v6801 = vpop.f32.mrf.mxu0
  %6802 = vdwg.mxu0
  %v6804 = vsel %vm1125, %v6498, 0
  %6806 = vmatprep.subr.bf16.mxu0 0
  %6807 = vmatpush1.bf16.msra.mxu0 0
  %6808 = vmatprep.subr.bf16.mxu0 0
  %6809 = vmatpush1.bf16.msra.mxu0 0
  %6810 = vmatprep.subr.bf16.mxu0 0
  %6811 = vmatpush1.bf16.msra.mxu0 0
  %6812 = vmatprep.subr.bf16.mxu0 0
  %6813 = vmatpush1.bf16.msra.mxu0 0
  %6814 = vmatprep.subr.bf16.mxu0 0
  %6815 = vmatpush1.bf16.msra.mxu0 0
  %6816 = vmatprep.subr.bf16.mxu0 0
  %6817 = vmatpush1.bf16.msra.mxu0 0
  %6818 = vmatprep.subr.bf16.mxu0 0
  %6819 = vmatpush1.bf16.msra.mxu0 0
  %6820 = vmatprep.subr.bf16.mxu0 0
  %6821 = vmatpush1.bf16.msra.mxu0 %v6503
  %6822 = vmatprep.subr.bf16.mxu0 0
  %6823 = vmatpush2.bf16.msra.mxu0 0
  %6824 = vmatprep.subr.bf16.mxu0 0
  %6825 = vmatpush2.bf16.msra.mxu0 0
  %6826 = vmatprep.subr.bf16.mxu0 0
  %6827 = vmatpush2.bf16.msra.mxu0 0
  %6828 = vmatprep.subr.bf16.mxu0 0
  %6829 = vmatpush2.bf16.msra.mxu0 0
  %6830 = vmatprep.subr.bf16.mxu0 0
  %6831 = vmatpush2.bf16.msra.mxu0 0
  %6832 = vmatprep.subr.bf16.mxu0 0
  %6833 = vmatpush2.bf16.msra.mxu0 0
  %6834 = vmatprep.subr.bf16.mxu0 0
  %6835 = vmatpush2.bf16.msra.mxu0 0
  %6836 = vmatprep.subr.bf16.mxu0 0
  %6837 = vmatpush2.bf16.msra.mxu0 0
  %6838 = vmatprep.mubr.bf16.mxu0 0
  %6839 = vmatmul.mubr.bf16.gmra.mxu0 %v6804
  %v6840 = vpop.f32.mrf.mxu0
  %v6841 = vadd.f32 0.0, %v6840
  %v6842 = vpop.f32.mrf.mxu0
  %v6843 = vpop.f32.mrf.mxu0
  %v6844 = vpop.f32.mrf.mxu0
  %6845 = vdwg.mxu0
  %v6846 = vadd.f32 %v4284, %v6540
  %v6847 = vadd.f32 %v4327, %v6583
  %v6848 = vadd.f32 %v4370, %v6626
  %v6849 = vadd.f32 %v4413, %v6669
  %v6850 = vadd.f32 %v4456, %v6712
  %v6851 = vadd.f32 %v4499, %v6755
  %v6852 = vadd.f32 %v4542, %v6798
  %v6853 = vadd.f32 %v4585, %v6841
  %s6854 = scalar_lea.vmem %s1, 48
  %v6855 = vld [vmem:[%s6854] sm:$0xf]
  %v6856 = vld [vmem:[%s6854 + $0x4] sm:$0xf]
  %v6857 = vld [vmem:[%s6854 + $0x8] sm:$0xf]
  %v6858 = vld [vmem:[%s6854 + $0xc] sm:$0xf]
  %s6859 = scalar_lea.vmem %s2, 48
  %v6860 = vld [vmem:[%s6859] sm:$0xf]
  %v6861 = vld [vmem:[%s6859 + $0x4] sm:$0xf]
  %v6862 = vld [vmem:[%s6859 + $0x8] sm:$0xf]
  %v6863 = vld [vmem:[%s6859 + $0xc] sm:$0xf]
  %s6864 = scalar_lea.vmem %s3, 48
  %v6865 = vld [vmem:[%s6864] sm:$0xf]
  %v6866 = vld [vmem:[%s6864 + $0x4] sm:$0xf]
  %v6867 = vld [vmem:[%s6864 + $0x8] sm:$0xf]
  %v6868 = vld [vmem:[%s6864 + $0xc] sm:$0xf]
  %s6869 = scalar_lea.vmem %s4, 3
  %v6870 = vld [vmem:[%s6869] sm:$0x1]
  %v6872 = vlaneseq
  %v6873 = vshrl.u32 %v6872, 7
  %v6874 = vsub.s32 0, %v6873
  %v6875 = vrot.slane %v6870, %v6874
  %v6881 = vunpack.c.l.b16 %v6855
  %v6882 = vunpack.c.l.b16 %v6856
  %v6883 = vunpack.c.l.b16 %v6857
  %v6884 = vunpack.c.l.b16 %v6858
  %v6885 = vpack.c.b16 %v6882, %v6881
  %v6886 = vpack.c.b16 %v6884, %v6883
  %6889 = vmatprep.subr.bf16.mxu0 0
  %6890 = vmatpush1.bf16.msra.mxu0 0
  %6891 = vmatprep.subr.bf16.mxu0 0
  %6892 = vmatpush1.bf16.msra.mxu0 0
  %6893 = vmatprep.subr.bf16.mxu0 0
  %6894 = vmatpush1.bf16.msra.mxu0 0
  %6895 = vmatprep.subr.bf16.mxu0 0
  %6896 = vmatpush1.bf16.msra.mxu0 0
  %6897 = vmatprep.subr.bf16.mxu0 0
  %6898 = vmatpush1.bf16.msra.mxu0 0
  %6899 = vmatprep.subr.bf16.mxu0 0
  %6900 = vmatpush1.bf16.msra.mxu0 0
  %6901 = vmatprep.subr.bf16.mxu0 0
  %6902 = vmatpush1.bf16.msra.mxu0 %v6886
  %6903 = vmatprep.subr.bf16.mxu0 0
  %6904 = vmatpush1.bf16.msra.mxu0 %v6885
  %6905 = vmatprep.subr.bf16.mxu0 0
  %6906 = vmatpush2.bf16.msra.mxu0 0
  %6907 = vmatprep.subr.bf16.mxu0 0
  %6908 = vmatpush2.bf16.msra.mxu0 0
  %6909 = vmatprep.subr.bf16.mxu0 0
  %6910 = vmatpush2.bf16.msra.mxu0 0
  %6911 = vmatprep.subr.bf16.mxu0 0
  %6912 = vmatpush2.bf16.msra.mxu0 0
  %6913 = vmatprep.subr.bf16.mxu0 0
  %6914 = vmatpush2.bf16.msra.mxu0 0
  %6915 = vmatprep.subr.bf16.mxu0 0
  %6916 = vmatpush2.bf16.msra.mxu0 0
  %6917 = vmatprep.subr.bf16.mxu0 0
  %6918 = vmatpush2.bf16.msra.mxu0 0
  %6919 = vmatprep.subr.bf16.mxu0 0
  %6920 = vmatpush2.bf16.msra.mxu0 0
  %6921 = vmatprep.mubr.bf16.mxu0 0
  %6922 = vmatmul.mubr.bf16.gmra.mxu0 %v88
  %v6923 = vpop.f32.mrf.mxu0
  %v6924 = vadd.f32 %v6875, %v6923
  %v6925 = vpop.f32.mrf.mxu0
  %v6926 = vpop.f32.mrf.mxu0
  %v6927 = vpop.f32.mrf.mxu0
  %6928 = vdwg.mxu0
  %6929 = vmatprep.subr.bf16.mxu0 0
  %6930 = vmatpush1.bf16.msra.mxu0 0
  %6931 = vmatprep.subr.bf16.mxu0 0
  %6932 = vmatpush1.bf16.msra.mxu0 0
  %6933 = vmatprep.subr.bf16.mxu0 0
  %6934 = vmatpush1.bf16.msra.mxu0 0
  %6935 = vmatprep.subr.bf16.mxu0 0
  %6936 = vmatpush1.bf16.msra.mxu0 0
  %6937 = vmatprep.subr.bf16.mxu0 0
  %6938 = vmatpush1.bf16.msra.mxu0 0
  %6939 = vmatprep.subr.bf16.mxu0 0
  %6940 = vmatpush1.bf16.msra.mxu0 0
  %6941 = vmatprep.subr.bf16.mxu0 0
  %6942 = vmatpush1.bf16.msra.mxu0 %v6886
  %6943 = vmatprep.subr.bf16.mxu0 0
  %6944 = vmatpush1.bf16.msra.mxu0 %v6885
  %6945 = vmatprep.subr.bf16.mxu0 0
  %6946 = vmatpush2.bf16.msra.mxu0 0
  %6947 = vmatprep.subr.bf16.mxu0 0
  %6948 = vmatpush2.bf16.msra.mxu0 0
  %6949 = vmatprep.subr.bf16.mxu0 0
  %6950 = vmatpush2.bf16.msra.mxu0 0
  %6951 = vmatprep.subr.bf16.mxu0 0
  %6952 = vmatpush2.bf16.msra.mxu0 0
  %6953 = vmatprep.subr.bf16.mxu0 0
  %6954 = vmatpush2.bf16.msra.mxu0 0
  %6955 = vmatprep.subr.bf16.mxu0 0
  %6956 = vmatpush2.bf16.msra.mxu0 0
  %6957 = vmatprep.subr.bf16.mxu0 0
  %6958 = vmatpush2.bf16.msra.mxu0 0
  %6959 = vmatprep.subr.bf16.mxu0 0
  %6960 = vmatpush2.bf16.msra.mxu0 0
  %6961 = vmatprep.mubr.bf16.mxu0 0
  %6962 = vmatmul.mubr.bf16.gmra.mxu0 %v131
  %v6963 = vpop.f32.mrf.mxu0
  %v6964 = vadd.f32 %v6875, %v6963
  %v6965 = vpop.f32.mrf.mxu0
  %v6966 = vpop.f32.mrf.mxu0
  %v6967 = vpop.f32.mrf.mxu0
  %6968 = vdwg.mxu0
  %6969 = vmatprep.subr.bf16.mxu0 0
  %6970 = vmatpush1.bf16.msra.mxu0 0
  %6971 = vmatprep.subr.bf16.mxu0 0
  %6972 = vmatpush1.bf16.msra.mxu0 0
  %6973 = vmatprep.subr.bf16.mxu0 0
  %6974 = vmatpush1.bf16.msra.mxu0 0
  %6975 = vmatprep.subr.bf16.mxu0 0
  %6976 = vmatpush1.bf16.msra.mxu0 0
  %6977 = vmatprep.subr.bf16.mxu0 0
  %6978 = vmatpush1.bf16.msra.mxu0 0
  %6979 = vmatprep.subr.bf16.mxu0 0
  %6980 = vmatpush1.bf16.msra.mxu0 0
  %6981 = vmatprep.subr.bf16.mxu0 0
  %6982 = vmatpush1.bf16.msra.mxu0 %v6886
  %6983 = vmatprep.subr.bf16.mxu0 0
  %6984 = vmatpush1.bf16.msra.mxu0 %v6885
  %6985 = vmatprep.subr.bf16.mxu0 0
  %6986 = vmatpush2.bf16.msra.mxu0 0
  %6987 = vmatprep.subr.bf16.mxu0 0
  %6988 = vmatpush2.bf16.msra.mxu0 0
  %6989 = vmatprep.subr.bf16.mxu0 0
  %6990 = vmatpush2.bf16.msra.mxu0 0
  %6991 = vmatprep.subr.bf16.mxu0 0
  %6992 = vmatpush2.bf16.msra.mxu0 0
  %6993 = vmatprep.subr.bf16.mxu0 0
  %6994 = vmatpush2.bf16.msra.mxu0 0
  %6995 = vmatprep.subr.bf16.mxu0 0
  %6996 = vmatpush2.bf16.msra.mxu0 0
  %6997 = vmatprep.subr.bf16.mxu0 0
  %6998 = vmatpush2.bf16.msra.mxu0 0
  %6999 = vmatprep.subr.bf16.mxu0 0
  %7000 = vmatpush2.bf16.msra.mxu0 0
  %7001 = vmatprep.mubr.bf16.mxu0 0
  %7002 = vmatmul.mubr.bf16.gmra.mxu0 %v174
  %v7003 = vpop.f32.mrf.mxu0
  %v7004 = vadd.f32 %v6875, %v7003
  %v7005 = vpop.f32.mrf.mxu0
  %v7006 = vpop.f32.mrf.mxu0
  %v7007 = vpop.f32.mrf.mxu0
  %7008 = vdwg.mxu0
  %7009 = vmatprep.subr.bf16.mxu0 0
  %7010 = vmatpush1.bf16.msra.mxu0 0
  %7011 = vmatprep.subr.bf16.mxu0 0
  %7012 = vmatpush1.bf16.msra.mxu0 0
  %7013 = vmatprep.subr.bf16.mxu0 0
  %7014 = vmatpush1.bf16.msra.mxu0 0
  %7015 = vmatprep.subr.bf16.mxu0 0
  %7016 = vmatpush1.bf16.msra.mxu0 0
  %7017 = vmatprep.subr.bf16.mxu0 0
  %7018 = vmatpush1.bf16.msra.mxu0 0
  %7019 = vmatprep.subr.bf16.mxu0 0
  %7020 = vmatpush1.bf16.msra.mxu0 0
  %7021 = vmatprep.subr.bf16.mxu0 0
  %7022 = vmatpush1.bf16.msra.mxu0 %v6886
  %7023 = vmatprep.subr.bf16.mxu0 0
  %7024 = vmatpush1.bf16.msra.mxu0 %v6885
  %7025 = vmatprep.subr.bf16.mxu0 0
  %7026 = vmatpush2.bf16.msra.mxu0 0
  %7027 = vmatprep.subr.bf16.mxu0 0
  %7028 = vmatpush2.bf16.msra.mxu0 0
  %7029 = vmatprep.subr.bf16.mxu0 0
  %7030 = vmatpush2.bf16.msra.mxu0 0
  %7031 = vmatprep.subr.bf16.mxu0 0
  %7032 = vmatpush2.bf16.msra.mxu0 0
  %7033 = vmatprep.subr.bf16.mxu0 0
  %7034 = vmatpush2.bf16.msra.mxu0 0
  %7035 = vmatprep.subr.bf16.mxu0 0
  %7036 = vmatpush2.bf16.msra.mxu0 0
  %7037 = vmatprep.subr.bf16.mxu0 0
  %7038 = vmatpush2.bf16.msra.mxu0 0
  %7039 = vmatprep.subr.bf16.mxu0 0
  %7040 = vmatpush2.bf16.msra.mxu0 0
  %7041 = vmatprep.mubr.bf16.mxu0 0
  %7042 = vmatmul.mubr.bf16.gmra.mxu0 %v217
  %v7043 = vpop.f32.mrf.mxu0
  %v7044 = vadd.f32 %v6875, %v7043
  %v7045 = vpop.f32.mrf.mxu0
  %v7046 = vpop.f32.mrf.mxu0
  %v7047 = vpop.f32.mrf.mxu0
  %7048 = vdwg.mxu0
  %7049 = vmatprep.subr.bf16.mxu0 0
  %7050 = vmatpush1.bf16.msra.mxu0 0
  %7051 = vmatprep.subr.bf16.mxu0 0
  %7052 = vmatpush1.bf16.msra.mxu0 0
  %7053 = vmatprep.subr.bf16.mxu0 0
  %7054 = vmatpush1.bf16.msra.mxu0 0
  %7055 = vmatprep.subr.bf16.mxu0 0
  %7056 = vmatpush1.bf16.msra.mxu0 0
  %7057 = vmatprep.subr.bf16.mxu0 0
  %7058 = vmatpush1.bf16.msra.mxu0 0
  %7059 = vmatprep.subr.bf16.mxu0 0
  %7060 = vmatpush1.bf16.msra.mxu0 0
  %7061 = vmatprep.subr.bf16.mxu0 0
  %7062 = vmatpush1.bf16.msra.mxu0 %v6886
  %7063 = vmatprep.subr.bf16.mxu0 0
  %7064 = vmatpush1.bf16.msra.mxu0 %v6885
  %7065 = vmatprep.subr.bf16.mxu0 0
  %7066 = vmatpush2.bf16.msra.mxu0 0
  %7067 = vmatprep.subr.bf16.mxu0 0
  %7068 = vmatpush2.bf16.msra.mxu0 0
  %7069 = vmatprep.subr.bf16.mxu0 0
  %7070 = vmatpush2.bf16.msra.mxu0 0
  %7071 = vmatprep.subr.bf16.mxu0 0
  %7072 = vmatpush2.bf16.msra.mxu0 0
  %7073 = vmatprep.subr.bf16.mxu0 0
  %7074 = vmatpush2.bf16.msra.mxu0 0
  %7075 = vmatprep.subr.bf16.mxu0 0
  %7076 = vmatpush2.bf16.msra.mxu0 0
  %7077 = vmatprep.subr.bf16.mxu0 0
  %7078 = vmatpush2.bf16.msra.mxu0 0
  %7079 = vmatprep.subr.bf16.mxu0 0
  %7080 = vmatpush2.bf16.msra.mxu0 0
  %7081 = vmatprep.mubr.bf16.mxu0 0
  %7082 = vmatmul.mubr.bf16.gmra.mxu0 %v260
  %v7083 = vpop.f32.mrf.mxu0
  %v7084 = vadd.f32 %v6875, %v7083
  %v7085 = vpop.f32.mrf.mxu0
  %v7086 = vpop.f32.mrf.mxu0
  %v7087 = vpop.f32.mrf.mxu0
  %7088 = vdwg.mxu0
  %7089 = vmatprep.subr.bf16.mxu0 0
  %7090 = vmatpush1.bf16.msra.mxu0 0
  %7091 = vmatprep.subr.bf16.mxu0 0
  %7092 = vmatpush1.bf16.msra.mxu0 0
  %7093 = vmatprep.subr.bf16.mxu0 0
  %7094 = vmatpush1.bf16.msra.mxu0 0
  %7095 = vmatprep.subr.bf16.mxu0 0
  %7096 = vmatpush1.bf16.msra.mxu0 0
  %7097 = vmatprep.subr.bf16.mxu0 0
  %7098 = vmatpush1.bf16.msra.mxu0 0
  %7099 = vmatprep.subr.bf16.mxu0 0
  %7100 = vmatpush1.bf16.msra.mxu0 0
  %7101 = vmatprep.subr.bf16.mxu0 0
  %7102 = vmatpush1.bf16.msra.mxu0 %v6886
  %7103 = vmatprep.subr.bf16.mxu0 0
  %7104 = vmatpush1.bf16.msra.mxu0 %v6885
  %7105 = vmatprep.subr.bf16.mxu0 0
  %7106 = vmatpush2.bf16.msra.mxu0 0
  %7107 = vmatprep.subr.bf16.mxu0 0
  %7108 = vmatpush2.bf16.msra.mxu0 0
  %7109 = vmatprep.subr.bf16.mxu0 0
  %7110 = vmatpush2.bf16.msra.mxu0 0
  %7111 = vmatprep.subr.bf16.mxu0 0
  %7112 = vmatpush2.bf16.msra.mxu0 0
  %7113 = vmatprep.subr.bf16.mxu0 0
  %7114 = vmatpush2.bf16.msra.mxu0 0
  %7115 = vmatprep.subr.bf16.mxu0 0
  %7116 = vmatpush2.bf16.msra.mxu0 0
  %7117 = vmatprep.subr.bf16.mxu0 0
  %7118 = vmatpush2.bf16.msra.mxu0 0
  %7119 = vmatprep.subr.bf16.mxu0 0
  %7120 = vmatpush2.bf16.msra.mxu0 0
  %7121 = vmatprep.mubr.bf16.mxu0 0
  %7122 = vmatmul.mubr.bf16.gmra.mxu0 %v303
  %v7123 = vpop.f32.mrf.mxu0
  %v7124 = vadd.f32 %v6875, %v7123
  %v7125 = vpop.f32.mrf.mxu0
  %v7126 = vpop.f32.mrf.mxu0
  %v7127 = vpop.f32.mrf.mxu0
  %7128 = vdwg.mxu0
  %7129 = vmatprep.subr.bf16.mxu0 0
  %7130 = vmatpush1.bf16.msra.mxu0 0
  %7131 = vmatprep.subr.bf16.mxu0 0
  %7132 = vmatpush1.bf16.msra.mxu0 0
  %7133 = vmatprep.subr.bf16.mxu0 0
  %7134 = vmatpush1.bf16.msra.mxu0 0
  %7135 = vmatprep.subr.bf16.mxu0 0
  %7136 = vmatpush1.bf16.msra.mxu0 0
  %7137 = vmatprep.subr.bf16.mxu0 0
  %7138 = vmatpush1.bf16.msra.mxu0 0
  %7139 = vmatprep.subr.bf16.mxu0 0
  %7140 = vmatpush1.bf16.msra.mxu0 0
  %7141 = vmatprep.subr.bf16.mxu0 0
  %7142 = vmatpush1.bf16.msra.mxu0 %v6886
  %7143 = vmatprep.subr.bf16.mxu0 0
  %7144 = vmatpush1.bf16.msra.mxu0 %v6885
  %7145 = vmatprep.subr.bf16.mxu0 0
  %7146 = vmatpush2.bf16.msra.mxu0 0
  %7147 = vmatprep.subr.bf16.mxu0 0
  %7148 = vmatpush2.bf16.msra.mxu0 0
  %7149 = vmatprep.subr.bf16.mxu0 0
  %7150 = vmatpush2.bf16.msra.mxu0 0
  %7151 = vmatprep.subr.bf16.mxu0 0
  %7152 = vmatpush2.bf16.msra.mxu0 0
  %7153 = vmatprep.subr.bf16.mxu0 0
  %7154 = vmatpush2.bf16.msra.mxu0 0
  %7155 = vmatprep.subr.bf16.mxu0 0
  %7156 = vmatpush2.bf16.msra.mxu0 0
  %7157 = vmatprep.subr.bf16.mxu0 0
  %7158 = vmatpush2.bf16.msra.mxu0 0
  %7159 = vmatprep.subr.bf16.mxu0 0
  %7160 = vmatpush2.bf16.msra.mxu0 0
  %7161 = vmatprep.mubr.bf16.mxu0 0
  %7162 = vmatmul.mubr.bf16.gmra.mxu0 %v346
  %v7163 = vpop.f32.mrf.mxu0
  %v7164 = vadd.f32 %v6875, %v7163
  %v7165 = vpop.f32.mrf.mxu0
  %v7166 = vpop.f32.mrf.mxu0
  %v7167 = vpop.f32.mrf.mxu0
  %7168 = vdwg.mxu0
  %7169 = vmatprep.subr.bf16.mxu0 0
  %7170 = vmatpush1.bf16.msra.mxu0 0
  %7171 = vmatprep.subr.bf16.mxu0 0
  %7172 = vmatpush1.bf16.msra.mxu0 0
  %7173 = vmatprep.subr.bf16.mxu0 0
  %7174 = vmatpush1.bf16.msra.mxu0 0
  %7175 = vmatprep.subr.bf16.mxu0 0
  %7176 = vmatpush1.bf16.msra.mxu0 0
  %7177 = vmatprep.subr.bf16.mxu0 0
  %7178 = vmatpush1.bf16.msra.mxu0 0
  %7179 = vmatprep.subr.bf16.mxu0 0
  %7180 = vmatpush1.bf16.msra.mxu0 0
  %7181 = vmatprep.subr.bf16.mxu0 0
  %7182 = vmatpush1.bf16.msra.mxu0 %v6886
  %7183 = vmatprep.subr.bf16.mxu0 0
  %7184 = vmatpush1.bf16.msra.mxu0 %v6885
  %7185 = vmatprep.subr.bf16.mxu0 0
  %7186 = vmatpush2.bf16.msra.mxu0 0
  %7187 = vmatprep.subr.bf16.mxu0 0
  %7188 = vmatpush2.bf16.msra.mxu0 0
  %7189 = vmatprep.subr.bf16.mxu0 0
  %7190 = vmatpush2.bf16.msra.mxu0 0
  %7191 = vmatprep.subr.bf16.mxu0 0
  %7192 = vmatpush2.bf16.msra.mxu0 0
  %7193 = vmatprep.subr.bf16.mxu0 0
  %7194 = vmatpush2.bf16.msra.mxu0 0
  %7195 = vmatprep.subr.bf16.mxu0 0
  %7196 = vmatpush2.bf16.msra.mxu0 0
  %7197 = vmatprep.subr.bf16.mxu0 0
  %7198 = vmatpush2.bf16.msra.mxu0 0
  %7199 = vmatprep.subr.bf16.mxu0 0
  %7200 = vmatpush2.bf16.msra.mxu0 0
  %7201 = vmatprep.mubr.bf16.mxu0 0
  %7202 = vmatmul.mubr.bf16.gmra.mxu0 %v389
  %v7203 = vpop.f32.mrf.mxu0
  %v7204 = vadd.f32 %v6875, %v7203
  %v7205 = vpop.f32.mrf.mxu0
  %v7206 = vpop.f32.mrf.mxu0
  %v7207 = vpop.f32.mrf.mxu0
  %7208 = vdwg.mxu0
  %s7209 = scalar_lea.vmem %s5, 3
  %v7210 = vld [vmem:[%s7209] sm:$0x1]
  %v7212 = vlaneseq
  %v7213 = vshrl.u32 %v7212, 7
  %v7214 = vsub.s32 0, %v7213
  %v7215 = vrot.slane %v7210, %v7214
  %v7221 = vunpack.c.l.b16 %v6860
  %v7222 = vunpack.c.l.b16 %v6861
  %v7223 = vunpack.c.l.b16 %v6862
  %v7224 = vunpack.c.l.b16 %v6863
  %v7225 = vpack.c.b16 %v7222, %v7221
  %v7226 = vpack.c.b16 %v7224, %v7223
  %7229 = vmatprep.subr.bf16.mxu0 0
  %7230 = vmatpush1.bf16.msra.mxu0 0
  %7231 = vmatprep.subr.bf16.mxu0 0
  %7232 = vmatpush1.bf16.msra.mxu0 0
  %7233 = vmatprep.subr.bf16.mxu0 0
  %7234 = vmatpush1.bf16.msra.mxu0 0
  %7235 = vmatprep.subr.bf16.mxu0 0
  %7236 = vmatpush1.bf16.msra.mxu0 0
  %7237 = vmatprep.subr.bf16.mxu0 0
  %7238 = vmatpush1.bf16.msra.mxu0 0
  %7239 = vmatprep.subr.bf16.mxu0 0
  %7240 = vmatpush1.bf16.msra.mxu0 0
  %7241 = vmatprep.subr.bf16.mxu0 0
  %7242 = vmatpush1.bf16.msra.mxu0 %v7226
  %7243 = vmatprep.subr.bf16.mxu0 0
  %7244 = vmatpush1.bf16.msra.mxu0 %v7225
  %7245 = vmatprep.subr.bf16.mxu0 0
  %7246 = vmatpush2.bf16.msra.mxu0 0
  %7247 = vmatprep.subr.bf16.mxu0 0
  %7248 = vmatpush2.bf16.msra.mxu0 0
  %7249 = vmatprep.subr.bf16.mxu0 0
  %7250 = vmatpush2.bf16.msra.mxu0 0
  %7251 = vmatprep.subr.bf16.mxu0 0
  %7252 = vmatpush2.bf16.msra.mxu0 0
  %7253 = vmatprep.subr.bf16.mxu0 0
  %7254 = vmatpush2.bf16.msra.mxu0 0
  %7255 = vmatprep.subr.bf16.mxu0 0
  %7256 = vmatpush2.bf16.msra.mxu0 0
  %7257 = vmatprep.subr.bf16.mxu0 0
  %7258 = vmatpush2.bf16.msra.mxu0 0
  %7259 = vmatprep.subr.bf16.mxu0 0
  %7260 = vmatpush2.bf16.msra.mxu0 0
  %7261 = vmatprep.mubr.bf16.mxu0 0
  %7262 = vmatmul.mubr.bf16.gmra.mxu0 %v88
  %v7263 = vpop.f32.mrf.mxu0
  %v7264 = vadd.f32 %v7215, %v7263
  %v7265 = vpop.f32.mrf.mxu0
  %v7266 = vpop.f32.mrf.mxu0
  %v7267 = vpop.f32.mrf.mxu0
  %7268 = vdwg.mxu0
  %7269 = vmatprep.subr.bf16.mxu0 0
  %7270 = vmatpush1.bf16.msra.mxu0 0
  %7271 = vmatprep.subr.bf16.mxu0 0
  %7272 = vmatpush1.bf16.msra.mxu0 0
  %7273 = vmatprep.subr.bf16.mxu0 0
  %7274 = vmatpush1.bf16.msra.mxu0 0
  %7275 = vmatprep.subr.bf16.mxu0 0
  %7276 = vmatpush1.bf16.msra.mxu0 0
  %7277 = vmatprep.subr.bf16.mxu0 0
  %7278 = vmatpush1.bf16.msra.mxu0 0
  %7279 = vmatprep.subr.bf16.mxu0 0
  %7280 = vmatpush1.bf16.msra.mxu0 0
  %7281 = vmatprep.subr.bf16.mxu0 0
  %7282 = vmatpush1.bf16.msra.mxu0 %v7226
  %7283 = vmatprep.subr.bf16.mxu0 0
  %7284 = vmatpush1.bf16.msra.mxu0 %v7225
  %7285 = vmatprep.subr.bf16.mxu0 0
  %7286 = vmatpush2.bf16.msra.mxu0 0
  %7287 = vmatprep.subr.bf16.mxu0 0
  %7288 = vmatpush2.bf16.msra.mxu0 0
  %7289 = vmatprep.subr.bf16.mxu0 0
  %7290 = vmatpush2.bf16.msra.mxu0 0
  %7291 = vmatprep.subr.bf16.mxu0 0
  %7292 = vmatpush2.bf16.msra.mxu0 0
  %7293 = vmatprep.subr.bf16.mxu0 0
  %7294 = vmatpush2.bf16.msra.mxu0 0
  %7295 = vmatprep.subr.bf16.mxu0 0
  %7296 = vmatpush2.bf16.msra.mxu0 0
  %7297 = vmatprep.subr.bf16.mxu0 0
  %7298 = vmatpush2.bf16.msra.mxu0 0
  %7299 = vmatprep.subr.bf16.mxu0 0
  %7300 = vmatpush2.bf16.msra.mxu0 0
  %7301 = vmatprep.mubr.bf16.mxu0 0
  %7302 = vmatmul.mubr.bf16.gmra.mxu0 %v131
  %v7303 = vpop.f32.mrf.mxu0
  %v7304 = vadd.f32 %v7215, %v7303
  %v7305 = vpop.f32.mrf.mxu0
  %v7306 = vpop.f32.mrf.mxu0
  %v7307 = vpop.f32.mrf.mxu0
  %7308 = vdwg.mxu0
  %7309 = vmatprep.subr.bf16.mxu0 0
  %7310 = vmatpush1.bf16.msra.mxu0 0
  %7311 = vmatprep.subr.bf16.mxu0 0
  %7312 = vmatpush1.bf16.msra.mxu0 0
  %7313 = vmatprep.subr.bf16.mxu0 0
  %7314 = vmatpush1.bf16.msra.mxu0 0
  %7315 = vmatprep.subr.bf16.mxu0 0
  %7316 = vmatpush1.bf16.msra.mxu0 0
  %7317 = vmatprep.subr.bf16.mxu0 0
  %7318 = vmatpush1.bf16.msra.mxu0 0
  %7319 = vmatprep.subr.bf16.mxu0 0
  %7320 = vmatpush1.bf16.msra.mxu0 0
  %7321 = vmatprep.subr.bf16.mxu0 0
  %7322 = vmatpush1.bf16.msra.mxu0 %v7226
  %7323 = vmatprep.subr.bf16.mxu0 0
  %7324 = vmatpush1.bf16.msra.mxu0 %v7225
  %7325 = vmatprep.subr.bf16.mxu0 0
  %7326 = vmatpush2.bf16.msra.mxu0 0
  %7327 = vmatprep.subr.bf16.mxu0 0
  %7328 = vmatpush2.bf16.msra.mxu0 0
  %7329 = vmatprep.subr.bf16.mxu0 0
  %7330 = vmatpush2.bf16.msra.mxu0 0
  %7331 = vmatprep.subr.bf16.mxu0 0
  %7332 = vmatpush2.bf16.msra.mxu0 0
  %7333 = vmatprep.subr.bf16.mxu0 0
  %7334 = vmatpush2.bf16.msra.mxu0 0
  %7335 = vmatprep.subr.bf16.mxu0 0
  %7336 = vmatpush2.bf16.msra.mxu0 0
  %7337 = vmatprep.subr.bf16.mxu0 0
  %7338 = vmatpush2.bf16.msra.mxu0 0
  %7339 = vmatprep.subr.bf16.mxu0 0
  %7340 = vmatpush2.bf16.msra.mxu0 0
  %7341 = vmatprep.mubr.bf16.mxu0 0
  %7342 = vmatmul.mubr.bf16.gmra.mxu0 %v174
  %v7343 = vpop.f32.mrf.mxu0
  %v7344 = vadd.f32 %v7215, %v7343
  %v7345 = vpop.f32.mrf.mxu0
  %v7346 = vpop.f32.mrf.mxu0
  %v7347 = vpop.f32.mrf.mxu0
  %7348 = vdwg.mxu0
  %7349 = vmatprep.subr.bf16.mxu0 0
  %7350 = vmatpush1.bf16.msra.mxu0 0
  %7351 = vmatprep.subr.bf16.mxu0 0
  %7352 = vmatpush1.bf16.msra.mxu0 0
  %7353 = vmatprep.subr.bf16.mxu0 0
  %7354 = vmatpush1.bf16.msra.mxu0 0
  %7355 = vmatprep.subr.bf16.mxu0 0
  %7356 = vmatpush1.bf16.msra.mxu0 0
  %7357 = vmatprep.subr.bf16.mxu0 0
  %7358 = vmatpush1.bf16.msra.mxu0 0
  %7359 = vmatprep.subr.bf16.mxu0 0
  %7360 = vmatpush1.bf16.msra.mxu0 0
  %7361 = vmatprep.subr.bf16.mxu0 0
  %7362 = vmatpush1.bf16.msra.mxu0 %v7226
  %7363 = vmatprep.subr.bf16.mxu0 0
  %7364 = vmatpush1.bf16.msra.mxu0 %v7225
  %7365 = vmatprep.subr.bf16.mxu0 0
  %7366 = vmatpush2.bf16.msra.mxu0 0
  %7367 = vmatprep.subr.bf16.mxu0 0
  %7368 = vmatpush2.bf16.msra.mxu0 0
  %7369 = vmatprep.subr.bf16.mxu0 0
  %7370 = vmatpush2.bf16.msra.mxu0 0
  %7371 = vmatprep.subr.bf16.mxu0 0
  %7372 = vmatpush2.bf16.msra.mxu0 0
  %7373 = vmatprep.subr.bf16.mxu0 0
  %7374 = vmatpush2.bf16.msra.mxu0 0
  %7375 = vmatprep.subr.bf16.mxu0 0
  %7376 = vmatpush2.bf16.msra.mxu0 0
  %7377 = vmatprep.subr.bf16.mxu0 0
  %7378 = vmatpush2.bf16.msra.mxu0 0
  %7379 = vmatprep.subr.bf16.mxu0 0
  %7380 = vmatpush2.bf16.msra.mxu0 0
  %7381 = vmatprep.mubr.bf16.mxu0 0
  %7382 = vmatmul.mubr.bf16.gmra.mxu0 %v217
  %v7383 = vpop.f32.mrf.mxu0
  %v7384 = vadd.f32 %v7215, %v7383
  %v7385 = vpop.f32.mrf.mxu0
  %v7386 = vpop.f32.mrf.mxu0
  %v7387 = vpop.f32.mrf.mxu0
  %7388 = vdwg.mxu0
  %7389 = vmatprep.subr.bf16.mxu0 0
  %7390 = vmatpush1.bf16.msra.mxu0 0
  %7391 = vmatprep.subr.bf16.mxu0 0
  %7392 = vmatpush1.bf16.msra.mxu0 0
  %7393 = vmatprep.subr.bf16.mxu0 0
  %7394 = vmatpush1.bf16.msra.mxu0 0
  %7395 = vmatprep.subr.bf16.mxu0 0
  %7396 = vmatpush1.bf16.msra.mxu0 0
  %7397 = vmatprep.subr.bf16.mxu0 0
  %7398 = vmatpush1.bf16.msra.mxu0 0
  %7399 = vmatprep.subr.bf16.mxu0 0
  %7400 = vmatpush1.bf16.msra.mxu0 0
  %7401 = vmatprep.subr.bf16.mxu0 0
  %7402 = vmatpush1.bf16.msra.mxu0 %v7226
  %7403 = vmatprep.subr.bf16.mxu0 0
  %7404 = vmatpush1.bf16.msra.mxu0 %v7225
  %7405 = vmatprep.subr.bf16.mxu0 0
  %7406 = vmatpush2.bf16.msra.mxu0 0
  %7407 = vmatprep.subr.bf16.mxu0 0
  %7408 = vmatpush2.bf16.msra.mxu0 0
  %7409 = vmatprep.subr.bf16.mxu0 0
  %7410 = vmatpush2.bf16.msra.mxu0 0
  %7411 = vmatprep.subr.bf16.mxu0 0
  %7412 = vmatpush2.bf16.msra.mxu0 0
  %7413 = vmatprep.subr.bf16.mxu0 0
  %7414 = vmatpush2.bf16.msra.mxu0 0
  %7415 = vmatprep.subr.bf16.mxu0 0
  %7416 = vmatpush2.bf16.msra.mxu0 0
  %7417 = vmatprep.subr.bf16.mxu0 0
  %7418 = vmatpush2.bf16.msra.mxu0 0
  %7419 = vmatprep.subr.bf16.mxu0 0
  %7420 = vmatpush2.bf16.msra.mxu0 0
  %7421 = vmatprep.mubr.bf16.mxu0 0
  %7422 = vmatmul.mubr.bf16.gmra.mxu0 %v260
  %v7423 = vpop.f32.mrf.mxu0
  %v7424 = vadd.f32 %v7215, %v7423
  %v7425 = vpop.f32.mrf.mxu0
  %v7426 = vpop.f32.mrf.mxu0
  %v7427 = vpop.f32.mrf.mxu0
  %7428 = vdwg.mxu0
  %7429 = vmatprep.subr.bf16.mxu0 0
  %7430 = vmatpush1.bf16.msra.mxu0 0
  %7431 = vmatprep.subr.bf16.mxu0 0
  %7432 = vmatpush1.bf16.msra.mxu0 0
  %7433 = vmatprep.subr.bf16.mxu0 0
  %7434 = vmatpush1.bf16.msra.mxu0 0
  %7435 = vmatprep.subr.bf16.mxu0 0
  %7436 = vmatpush1.bf16.msra.mxu0 0
  %7437 = vmatprep.subr.bf16.mxu0 0
  %7438 = vmatpush1.bf16.msra.mxu0 0
  %7439 = vmatprep.subr.bf16.mxu0 0
  %7440 = vmatpush1.bf16.msra.mxu0 0
  %7441 = vmatprep.subr.bf16.mxu0 0
  %7442 = vmatpush1.bf16.msra.mxu0 %v7226
  %7443 = vmatprep.subr.bf16.mxu0 0
  %7444 = vmatpush1.bf16.msra.mxu0 %v7225
  %7445 = vmatprep.subr.bf16.mxu0 0
  %7446 = vmatpush2.bf16.msra.mxu0 0
  %7447 = vmatprep.subr.bf16.mxu0 0
  %7448 = vmatpush2.bf16.msra.mxu0 0
  %7449 = vmatprep.subr.bf16.mxu0 0
  %7450 = vmatpush2.bf16.msra.mxu0 0
  %7451 = vmatprep.subr.bf16.mxu0 0
  %7452 = vmatpush2.bf16.msra.mxu0 0
  %7453 = vmatprep.subr.bf16.mxu0 0
  %7454 = vmatpush2.bf16.msra.mxu0 0
  %7455 = vmatprep.subr.bf16.mxu0 0
  %7456 = vmatpush2.bf16.msra.mxu0 0
  %7457 = vmatprep.subr.bf16.mxu0 0
  %7458 = vmatpush2.bf16.msra.mxu0 0
  %7459 = vmatprep.subr.bf16.mxu0 0
  %7460 = vmatpush2.bf16.msra.mxu0 0
  %7461 = vmatprep.mubr.bf16.mxu0 0
  %7462 = vmatmul.mubr.bf16.gmra.mxu0 %v303
  %v7463 = vpop.f32.mrf.mxu0
  %v7464 = vadd.f32 %v7215, %v7463
  %v7465 = vpop.f32.mrf.mxu0
  %v7466 = vpop.f32.mrf.mxu0
  %v7467 = vpop.f32.mrf.mxu0
  %7468 = vdwg.mxu0
  %7469 = vmatprep.subr.bf16.mxu0 0
  %7470 = vmatpush1.bf16.msra.mxu0 0
  %7471 = vmatprep.subr.bf16.mxu0 0
  %7472 = vmatpush1.bf16.msra.mxu0 0
  %7473 = vmatprep.subr.bf16.mxu0 0
  %7474 = vmatpush1.bf16.msra.mxu0 0
  %7475 = vmatprep.subr.bf16.mxu0 0
  %7476 = vmatpush1.bf16.msra.mxu0 0
  %7477 = vmatprep.subr.bf16.mxu0 0
  %7478 = vmatpush1.bf16.msra.mxu0 0
  %7479 = vmatprep.subr.bf16.mxu0 0
  %7480 = vmatpush1.bf16.msra.mxu0 0
  %7481 = vmatprep.subr.bf16.mxu0 0
  %7482 = vmatpush1.bf16.msra.mxu0 %v7226
  %7483 = vmatprep.subr.bf16.mxu0 0
  %7484 = vmatpush1.bf16.msra.mxu0 %v7225
  %7485 = vmatprep.subr.bf16.mxu0 0
  %7486 = vmatpush2.bf16.msra.mxu0 0
  %7487 = vmatprep.subr.bf16.mxu0 0
  %7488 = vmatpush2.bf16.msra.mxu0 0
  %7489 = vmatprep.subr.bf16.mxu0 0
  %7490 = vmatpush2.bf16.msra.mxu0 0
  %7491 = vmatprep.subr.bf16.mxu0 0
  %7492 = vmatpush2.bf16.msra.mxu0 0
  %7493 = vmatprep.subr.bf16.mxu0 0
  %7494 = vmatpush2.bf16.msra.mxu0 0
  %7495 = vmatprep.subr.bf16.mxu0 0
  %7496 = vmatpush2.bf16.msra.mxu0 0
  %7497 = vmatprep.subr.bf16.mxu0 0
  %7498 = vmatpush2.bf16.msra.mxu0 0
  %7499 = vmatprep.subr.bf16.mxu0 0
  %7500 = vmatpush2.bf16.msra.mxu0 0
  %7501 = vmatprep.mubr.bf16.mxu0 0
  %7502 = vmatmul.mubr.bf16.gmra.mxu0 %v346
  %v7503 = vpop.f32.mrf.mxu0
  %v7504 = vadd.f32 %v7215, %v7503
  %v7505 = vpop.f32.mrf.mxu0
  %v7506 = vpop.f32.mrf.mxu0
  %v7507 = vpop.f32.mrf.mxu0
  %7508 = vdwg.mxu0
  %7509 = vmatprep.subr.bf16.mxu0 0
  %7510 = vmatpush1.bf16.msra.mxu0 0
  %7511 = vmatprep.subr.bf16.mxu0 0
  %7512 = vmatpush1.bf16.msra.mxu0 0
  %7513 = vmatprep.subr.bf16.mxu0 0
  %7514 = vmatpush1.bf16.msra.mxu0 0
  %7515 = vmatprep.subr.bf16.mxu0 0
  %7516 = vmatpush1.bf16.msra.mxu0 0
  %7517 = vmatprep.subr.bf16.mxu0 0
  %7518 = vmatpush1.bf16.msra.mxu0 0
  %7519 = vmatprep.subr.bf16.mxu0 0
  %7520 = vmatpush1.bf16.msra.mxu0 0
  %7521 = vmatprep.subr.bf16.mxu0 0
  %7522 = vmatpush1.bf16.msra.mxu0 %v7226
  %7523 = vmatprep.subr.bf16.mxu0 0
  %7524 = vmatpush1.bf16.msra.mxu0 %v7225
  %7525 = vmatprep.subr.bf16.mxu0 0
  %7526 = vmatpush2.bf16.msra.mxu0 0
  %7527 = vmatprep.subr.bf16.mxu0 0
  %7528 = vmatpush2.bf16.msra.mxu0 0
  %7529 = vmatprep.subr.bf16.mxu0 0
  %7530 = vmatpush2.bf16.msra.mxu0 0
  %7531 = vmatprep.subr.bf16.mxu0 0
  %7532 = vmatpush2.bf16.msra.mxu0 0
  %7533 = vmatprep.subr.bf16.mxu0 0
  %7534 = vmatpush2.bf16.msra.mxu0 0
  %7535 = vmatprep.subr.bf16.mxu0 0
  %7536 = vmatpush2.bf16.msra.mxu0 0
  %7537 = vmatprep.subr.bf16.mxu0 0
  %7538 = vmatpush2.bf16.msra.mxu0 0
  %7539 = vmatprep.subr.bf16.mxu0 0
  %7540 = vmatpush2.bf16.msra.mxu0 0
  %7541 = vmatprep.mubr.bf16.mxu0 0
  %7542 = vmatmul.mubr.bf16.gmra.mxu0 %v389
  %v7543 = vpop.f32.mrf.mxu0
  %v7544 = vadd.f32 %v7215, %v7543
  %v7545 = vpop.f32.mrf.mxu0
  %v7546 = vpop.f32.mrf.mxu0
  %v7547 = vpop.f32.mrf.mxu0
  %7548 = vdwg.mxu0
  %s7549 = scalar_lea.vmem %s6, 3
  %v7550 = vld [vmem:[%s7549] sm:$0x1]
  %v7552 = vlaneseq
  %v7553 = vshrl.u32 %v7552, 7
  %v7554 = vsub.s32 0, %v7553
  %v7555 = vrot.slane %v7550, %v7554
  %v7561 = vunpack.c.l.b16 %v6865
  %v7562 = vunpack.c.l.b16 %v6866
  %v7563 = vunpack.c.l.b16 %v6867
  %v7564 = vunpack.c.l.b16 %v6868
  %v7565 = vpack.c.b16 %v7562, %v7561
  %v7566 = vpack.c.b16 %v7564, %v7563
  %7569 = vmatprep.subr.bf16.mxu0 0
  %7570 = vmatpush1.bf16.msra.mxu0 0
  %7571 = vmatprep.subr.bf16.mxu0 0
  %7572 = vmatpush1.bf16.msra.mxu0 0
  %7573 = vmatprep.subr.bf16.mxu0 0
  %7574 = vmatpush1.bf16.msra.mxu0 0
  %7575 = vmatprep.subr.bf16.mxu0 0
  %7576 = vmatpush1.bf16.msra.mxu0 0
  %7577 = vmatprep.subr.bf16.mxu0 0
  %7578 = vmatpush1.bf16.msra.mxu0 0
  %7579 = vmatprep.subr.bf16.mxu0 0
  %7580 = vmatpush1.bf16.msra.mxu0 0
  %7581 = vmatprep.subr.bf16.mxu0 0
  %7582 = vmatpush1.bf16.msra.mxu0 %v7566
  %7583 = vmatprep.subr.bf16.mxu0 0
  %7584 = vmatpush1.bf16.msra.mxu0 %v7565
  %7585 = vmatprep.subr.bf16.mxu0 0
  %7586 = vmatpush2.bf16.msra.mxu0 0
  %7587 = vmatprep.subr.bf16.mxu0 0
  %7588 = vmatpush2.bf16.msra.mxu0 0
  %7589 = vmatprep.subr.bf16.mxu0 0
  %7590 = vmatpush2.bf16.msra.mxu0 0
  %7591 = vmatprep.subr.bf16.mxu0 0
  %7592 = vmatpush2.bf16.msra.mxu0 0
  %7593 = vmatprep.subr.bf16.mxu0 0
  %7594 = vmatpush2.bf16.msra.mxu0 0
  %7595 = vmatprep.subr.bf16.mxu0 0
  %7596 = vmatpush2.bf16.msra.mxu0 0
  %7597 = vmatprep.subr.bf16.mxu0 0
  %7598 = vmatpush2.bf16.msra.mxu0 0
  %7599 = vmatprep.subr.bf16.mxu0 0
  %7600 = vmatpush2.bf16.msra.mxu0 0
  %7601 = vmatprep.mubr.bf16.mxu0 0
  %7602 = vmatmul.mubr.bf16.gmra.mxu0 %v88
  %v7603 = vpop.f32.mrf.mxu0
  %v7604 = vadd.f32 %v7555, %v7603
  %v7605 = vpop.f32.mrf.mxu0
  %v7606 = vpop.f32.mrf.mxu0
  %v7607 = vpop.f32.mrf.mxu0
  %7608 = vdwg.mxu0
  %7609 = vmatprep.subr.bf16.mxu0 0
  %7610 = vmatpush1.bf16.msra.mxu0 0
  %7611 = vmatprep.subr.bf16.mxu0 0
  %7612 = vmatpush1.bf16.msra.mxu0 0
  %7613 = vmatprep.subr.bf16.mxu0 0
  %7614 = vmatpush1.bf16.msra.mxu0 0
  %7615 = vmatprep.subr.bf16.mxu0 0
  %7616 = vmatpush1.bf16.msra.mxu0 0
  %7617 = vmatprep.subr.bf16.mxu0 0
  %7618 = vmatpush1.bf16.msra.mxu0 0
  %7619 = vmatprep.subr.bf16.mxu0 0
  %7620 = vmatpush1.bf16.msra.mxu0 0
  %7621 = vmatprep.subr.bf16.mxu0 0
  %7622 = vmatpush1.bf16.msra.mxu0 %v7566
  %7623 = vmatprep.subr.bf16.mxu0 0
  %7624 = vmatpush1.bf16.msra.mxu0 %v7565
  %7625 = vmatprep.subr.bf16.mxu0 0
  %7626 = vmatpush2.bf16.msra.mxu0 0
  %7627 = vmatprep.subr.bf16.mxu0 0
  %7628 = vmatpush2.bf16.msra.mxu0 0
  %7629 = vmatprep.subr.bf16.mxu0 0
  %7630 = vmatpush2.bf16.msra.mxu0 0
  %7631 = vmatprep.subr.bf16.mxu0 0
  %7632 = vmatpush2.bf16.msra.mxu0 0
  %7633 = vmatprep.subr.bf16.mxu0 0
  %7634 = vmatpush2.bf16.msra.mxu0 0
  %7635 = vmatprep.subr.bf16.mxu0 0
  %7636 = vmatpush2.bf16.msra.mxu0 0
  %7637 = vmatprep.subr.bf16.mxu0 0
  %7638 = vmatpush2.bf16.msra.mxu0 0
  %7639 = vmatprep.subr.bf16.mxu0 0
  %7640 = vmatpush2.bf16.msra.mxu0 0
  %7641 = vmatprep.mubr.bf16.mxu0 0
  %7642 = vmatmul.mubr.bf16.gmra.mxu0 %v131
  %v7643 = vpop.f32.mrf.mxu0
  %v7644 = vadd.f32 %v7555, %v7643
  %v7645 = vpop.f32.mrf.mxu0
  %v7646 = vpop.f32.mrf.mxu0
  %v7647 = vpop.f32.mrf.mxu0
  %7648 = vdwg.mxu0
  %7649 = vmatprep.subr.bf16.mxu0 0
  %7650 = vmatpush1.bf16.msra.mxu0 0
  %7651 = vmatprep.subr.bf16.mxu0 0
  %7652 = vmatpush1.bf16.msra.mxu0 0
  %7653 = vmatprep.subr.bf16.mxu0 0
  %7654 = vmatpush1.bf16.msra.mxu0 0
  %7655 = vmatprep.subr.bf16.mxu0 0
  %7656 = vmatpush1.bf16.msra.mxu0 0
  %7657 = vmatprep.subr.bf16.mxu0 0
  %7658 = vmatpush1.bf16.msra.mxu0 0
  %7659 = vmatprep.subr.bf16.mxu0 0
  %7660 = vmatpush1.bf16.msra.mxu0 0
  %7661 = vmatprep.subr.bf16.mxu0 0
  %7662 = vmatpush1.bf16.msra.mxu0 %v7566
  %7663 = vmatprep.subr.bf16.mxu0 0
  %7664 = vmatpush1.bf16.msra.mxu0 %v7565
  %7665 = vmatprep.subr.bf16.mxu0 0
  %7666 = vmatpush2.bf16.msra.mxu0 0
  %7667 = vmatprep.subr.bf16.mxu0 0
  %7668 = vmatpush2.bf16.msra.mxu0 0
  %7669 = vmatprep.subr.bf16.mxu0 0
  %7670 = vmatpush2.bf16.msra.mxu0 0
  %7671 = vmatprep.subr.bf16.mxu0 0
  %7672 = vmatpush2.bf16.msra.mxu0 0
  %7673 = vmatprep.subr.bf16.mxu0 0
  %7674 = vmatpush2.bf16.msra.mxu0 0
  %7675 = vmatprep.subr.bf16.mxu0 0
  %7676 = vmatpush2.bf16.msra.mxu0 0
  %7677 = vmatprep.subr.bf16.mxu0 0
  %7678 = vmatpush2.bf16.msra.mxu0 0
  %7679 = vmatprep.subr.bf16.mxu0 0
  %7680 = vmatpush2.bf16.msra.mxu0 0
  %7681 = vmatprep.mubr.bf16.mxu0 0
  %7682 = vmatmul.mubr.bf16.gmra.mxu0 %v174
  %v7683 = vpop.f32.mrf.mxu0
  %v7684 = vadd.f32 %v7555, %v7683
  %v7685 = vpop.f32.mrf.mxu0
  %v7686 = vpop.f32.mrf.mxu0
  %v7687 = vpop.f32.mrf.mxu0
  %7688 = vdwg.mxu0
  %7689 = vmatprep.subr.bf16.mxu0 0
  %7690 = vmatpush1.bf16.msra.mxu0 0
  %7691 = vmatprep.subr.bf16.mxu0 0
  %7692 = vmatpush1.bf16.msra.mxu0 0
  %7693 = vmatprep.subr.bf16.mxu0 0
  %7694 = vmatpush1.bf16.msra.mxu0 0
  %7695 = vmatprep.subr.bf16.mxu0 0
  %7696 = vmatpush1.bf16.msra.mxu0 0
  %7697 = vmatprep.subr.bf16.mxu0 0
  %7698 = vmatpush1.bf16.msra.mxu0 0
  %7699 = vmatprep.subr.bf16.mxu0 0
  %7700 = vmatpush1.bf16.msra.mxu0 0
  %7701 = vmatprep.subr.bf16.mxu0 0
  %7702 = vmatpush1.bf16.msra.mxu0 %v7566
  %7703 = vmatprep.subr.bf16.mxu0 0
  %7704 = vmatpush1.bf16.msra.mxu0 %v7565
  %7705 = vmatprep.subr.bf16.mxu0 0
  %7706 = vmatpush2.bf16.msra.mxu0 0
  %7707 = vmatprep.subr.bf16.mxu0 0
  %7708 = vmatpush2.bf16.msra.mxu0 0
  %7709 = vmatprep.subr.bf16.mxu0 0
  %7710 = vmatpush2.bf16.msra.mxu0 0
  %7711 = vmatprep.subr.bf16.mxu0 0
  %7712 = vmatpush2.bf16.msra.mxu0 0
  %7713 = vmatprep.subr.bf16.mxu0 0
  %7714 = vmatpush2.bf16.msra.mxu0 0
  %7715 = vmatprep.subr.bf16.mxu0 0
  %7716 = vmatpush2.bf16.msra.mxu0 0
  %7717 = vmatprep.subr.bf16.mxu0 0
  %7718 = vmatpush2.bf16.msra.mxu0 0
  %7719 = vmatprep.subr.bf16.mxu0 0
  %7720 = vmatpush2.bf16.msra.mxu0 0
  %7721 = vmatprep.mubr.bf16.mxu0 0
  %7722 = vmatmul.mubr.bf16.gmra.mxu0 %v217
  %v7723 = vpop.f32.mrf.mxu0
  %v7724 = vadd.f32 %v7555, %v7723
  %v7725 = vpop.f32.mrf.mxu0
  %v7726 = vpop.f32.mrf.mxu0
  %v7727 = vpop.f32.mrf.mxu0
  %7728 = vdwg.mxu0
  %7729 = vmatprep.subr.bf16.mxu0 0
  %7730 = vmatpush1.bf16.msra.mxu0 0
  %7731 = vmatprep.subr.bf16.mxu0 0
  %7732 = vmatpush1.bf16.msra.mxu0 0
  %7733 = vmatprep.subr.bf16.mxu0 0
  %7734 = vmatpush1.bf16.msra.mxu0 0
  %7735 = vmatprep.subr.bf16.mxu0 0
  %7736 = vmatpush1.bf16.msra.mxu0 0
  %7737 = vmatprep.subr.bf16.mxu0 0
  %7738 = vmatpush1.bf16.msra.mxu0 0
  %7739 = vmatprep.subr.bf16.mxu0 0
  %7740 = vmatpush1.bf16.msra.mxu0 0
  %7741 = vmatprep.subr.bf16.mxu0 0
  %7742 = vmatpush1.bf16.msra.mxu0 %v7566
  %7743 = vmatprep.subr.bf16.mxu0 0
  %7744 = vmatpush1.bf16.msra.mxu0 %v7565
  %7745 = vmatprep.subr.bf16.mxu0 0
  %7746 = vmatpush2.bf16.msra.mxu0 0
  %7747 = vmatprep.subr.bf16.mxu0 0
  %7748 = vmatpush2.bf16.msra.mxu0 0
  %7749 = vmatprep.subr.bf16.mxu0 0
  %7750 = vmatpush2.bf16.msra.mxu0 0
  %7751 = vmatprep.subr.bf16.mxu0 0
  %7752 = vmatpush2.bf16.msra.mxu0 0
  %7753 = vmatprep.subr.bf16.mxu0 0
  %7754 = vmatpush2.bf16.msra.mxu0 0
  %7755 = vmatprep.subr.bf16.mxu0 0
  %7756 = vmatpush2.bf16.msra.mxu0 0
  %7757 = vmatprep.subr.bf16.mxu0 0
  %7758 = vmatpush2.bf16.msra.mxu0 0
  %7759 = vmatprep.subr.bf16.mxu0 0
  %7760 = vmatpush2.bf16.msra.mxu0 0
  %7761 = vmatprep.mubr.bf16.mxu0 0
  %7762 = vmatmul.mubr.bf16.gmra.mxu0 %v260
  %v7763 = vpop.f32.mrf.mxu0
  %v7764 = vadd.f32 %v7555, %v7763
  %v7765 = vpop.f32.mrf.mxu0
  %v7766 = vpop.f32.mrf.mxu0
  %v7767 = vpop.f32.mrf.mxu0
  %7768 = vdwg.mxu0
  %7769 = vmatprep.subr.bf16.mxu0 0
  %7770 = vmatpush1.bf16.msra.mxu0 0
  %7771 = vmatprep.subr.bf16.mxu0 0
  %7772 = vmatpush1.bf16.msra.mxu0 0
  %7773 = vmatprep.subr.bf16.mxu0 0
  %7774 = vmatpush1.bf16.msra.mxu0 0
  %7775 = vmatprep.subr.bf16.mxu0 0
  %7776 = vmatpush1.bf16.msra.mxu0 0
  %7777 = vmatprep.subr.bf16.mxu0 0
  %7778 = vmatpush1.bf16.msra.mxu0 0
  %7779 = vmatprep.subr.bf16.mxu0 0
  %7780 = vmatpush1.bf16.msra.mxu0 0
  %7781 = vmatprep.subr.bf16.mxu0 0
  %7782 = vmatpush1.bf16.msra.mxu0 %v7566
  %7783 = vmatprep.subr.bf16.mxu0 0
  %7784 = vmatpush1.bf16.msra.mxu0 %v7565
  %7785 = vmatprep.subr.bf16.mxu0 0
  %7786 = vmatpush2.bf16.msra.mxu0 0
  %7787 = vmatprep.subr.bf16.mxu0 0
  %7788 = vmatpush2.bf16.msra.mxu0 0
  %7789 = vmatprep.subr.bf16.mxu0 0
  %7790 = vmatpush2.bf16.msra.mxu0 0
  %7791 = vmatprep.subr.bf16.mxu0 0
  %7792 = vmatpush2.bf16.msra.mxu0 0
  %7793 = vmatprep.subr.bf16.mxu0 0
  %7794 = vmatpush2.bf16.msra.mxu0 0
  %7795 = vmatprep.subr.bf16.mxu0 0
  %7796 = vmatpush2.bf16.msra.mxu0 0
  %7797 = vmatprep.subr.bf16.mxu0 0
  %7798 = vmatpush2.bf16.msra.mxu0 0
  %7799 = vmatprep.subr.bf16.mxu0 0
  %7800 = vmatpush2.bf16.msra.mxu0 0
  %7801 = vmatprep.mubr.bf16.mxu0 0
  %7802 = vmatmul.mubr.bf16.gmra.mxu0 %v303
  %v7803 = vpop.f32.mrf.mxu0
  %v7804 = vadd.f32 %v7555, %v7803
  %v7805 = vpop.f32.mrf.mxu0
  %v7806 = vpop.f32.mrf.mxu0
  %v7807 = vpop.f32.mrf.mxu0
  %7808 = vdwg.mxu0
  %7809 = vmatprep.subr.bf16.mxu0 0
  %7810 = vmatpush1.bf16.msra.mxu0 0
  %7811 = vmatprep.subr.bf16.mxu0 0
  %7812 = vmatpush1.bf16.msra.mxu0 0
  %7813 = vmatprep.subr.bf16.mxu0 0
  %7814 = vmatpush1.bf16.msra.mxu0 0
  %7815 = vmatprep.subr.bf16.mxu0 0
  %7816 = vmatpush1.bf16.msra.mxu0 0
  %7817 = vmatprep.subr.bf16.mxu0 0
  %7818 = vmatpush1.bf16.msra.mxu0 0
  %7819 = vmatprep.subr.bf16.mxu0 0
  %7820 = vmatpush1.bf16.msra.mxu0 0
  %7821 = vmatprep.subr.bf16.mxu0 0
  %7822 = vmatpush1.bf16.msra.mxu0 %v7566
  %7823 = vmatprep.subr.bf16.mxu0 0
  %7824 = vmatpush1.bf16.msra.mxu0 %v7565
  %7825 = vmatprep.subr.bf16.mxu0 0
  %7826 = vmatpush2.bf16.msra.mxu0 0
  %7827 = vmatprep.subr.bf16.mxu0 0
  %7828 = vmatpush2.bf16.msra.mxu0 0
  %7829 = vmatprep.subr.bf16.mxu0 0
  %7830 = vmatpush2.bf16.msra.mxu0 0
  %7831 = vmatprep.subr.bf16.mxu0 0
  %7832 = vmatpush2.bf16.msra.mxu0 0
  %7833 = vmatprep.subr.bf16.mxu0 0
  %7834 = vmatpush2.bf16.msra.mxu0 0
  %7835 = vmatprep.subr.bf16.mxu0 0
  %7836 = vmatpush2.bf16.msra.mxu0 0
  %7837 = vmatprep.subr.bf16.mxu0 0
  %7838 = vmatpush2.bf16.msra.mxu0 0
  %7839 = vmatprep.subr.bf16.mxu0 0
  %7840 = vmatpush2.bf16.msra.mxu0 0
  %7841 = vmatprep.mubr.bf16.mxu0 0
  %7842 = vmatmul.mubr.bf16.gmra.mxu0 %v346
  %v7843 = vpop.f32.mrf.mxu0
  %v7844 = vadd.f32 %v7555, %v7843
  %v7845 = vpop.f32.mrf.mxu0
  %v7846 = vpop.f32.mrf.mxu0
  %v7847 = vpop.f32.mrf.mxu0
  %7848 = vdwg.mxu0
  %7849 = vmatprep.subr.bf16.mxu0 0
  %7850 = vmatpush1.bf16.msra.mxu0 0
  %7851 = vmatprep.subr.bf16.mxu0 0
  %7852 = vmatpush1.bf16.msra.mxu0 0
  %7853 = vmatprep.subr.bf16.mxu0 0
  %7854 = vmatpush1.bf16.msra.mxu0 0
  %7855 = vmatprep.subr.bf16.mxu0 0
  %7856 = vmatpush1.bf16.msra.mxu0 0
  %7857 = vmatprep.subr.bf16.mxu0 0
  %7858 = vmatpush1.bf16.msra.mxu0 0
  %7859 = vmatprep.subr.bf16.mxu0 0
  %7860 = vmatpush1.bf16.msra.mxu0 0
  %7861 = vmatprep.subr.bf16.mxu0 0
  %7862 = vmatpush1.bf16.msra.mxu0 %v7566
  %7863 = vmatprep.subr.bf16.mxu0 0
  %7864 = vmatpush1.bf16.msra.mxu0 %v7565
  %7865 = vmatprep.subr.bf16.mxu0 0
  %7866 = vmatpush2.bf16.msra.mxu0 0
  %7867 = vmatprep.subr.bf16.mxu0 0
  %7868 = vmatpush2.bf16.msra.mxu0 0
  %7869 = vmatprep.subr.bf16.mxu0 0
  %7870 = vmatpush2.bf16.msra.mxu0 0
  %7871 = vmatprep.subr.bf16.mxu0 0
  %7872 = vmatpush2.bf16.msra.mxu0 0
  %7873 = vmatprep.subr.bf16.mxu0 0
  %7874 = vmatpush2.bf16.msra.mxu0 0
  %7875 = vmatprep.subr.bf16.mxu0 0
  %7876 = vmatpush2.bf16.msra.mxu0 0
  %7877 = vmatprep.subr.bf16.mxu0 0
  %7878 = vmatpush2.bf16.msra.mxu0 0
  %7879 = vmatprep.subr.bf16.mxu0 0
  %7880 = vmatpush2.bf16.msra.mxu0 0
  %7881 = vmatprep.mubr.bf16.mxu0 0
  %7882 = vmatmul.mubr.bf16.gmra.mxu0 %v389
  %v7883 = vpop.f32.mrf.mxu0
  %v7884 = vadd.f32 %v7555, %v7883
  %v7885 = vpop.f32.mrf.mxu0
  %v7886 = vpop.f32.mrf.mxu0
  %v7887 = vpop.f32.mrf.mxu0
  %7888 = vdwg.mxu0
  %v7889 = vpack.c.bf16 %v6924, %v6924
  %v7890 = vpack.c.bf16 %v6964, %v6964
  %v7891 = vpack.c.bf16 %v7004, %v7004
  %v7892 = vpack.c.bf16 %v7044, %v7044
  %v7893 = vpack.c.bf16 %v7084, %v7084
  %v7894 = vpack.c.bf16 %v7124, %v7124
  %v7895 = vpack.c.bf16 %v7164, %v7164
  %v7896 = vpack.c.bf16 %v7204, %v7204
  %v7897 = vpack.c.bf16 %v7264, %v7264
  %v7898 = vpack.c.bf16 %v7304, %v7304
  %v7899 = vpack.c.bf16 %v7344, %v7344
  %v7900 = vpack.c.bf16 %v7384, %v7384
  %v7901 = vpack.c.bf16 %v7424, %v7424
  %v7902 = vpack.c.bf16 %v7464, %v7464
  %v7903 = vpack.c.bf16 %v7504, %v7504
  %v7904 = vpack.c.bf16 %v7544, %v7544
  %v7906 = vsel %vm1125, %v7889, 0
  %v7909 = vsel %vm1125, %v7897, 0
  %7911 = vmatprep.subr.bf16.mxu0 0
  %7912 = vmatpush1.bf16.xpose.msra.mxu0 0
  %7913 = vmatprep.subr.bf16.mxu0 0
  %7914 = vmatpush1.bf16.xpose.msra.mxu0 0
  %7915 = vmatprep.subr.bf16.mxu0 0
  %7916 = vmatpush1.bf16.xpose.msra.mxu0 0
  %7917 = vmatprep.subr.bf16.mxu0 0
  %7918 = vmatpush1.bf16.xpose.msra.mxu0 0
  %7919 = vmatprep.subr.bf16.mxu0 0
  %7920 = vmatpush1.bf16.xpose.msra.mxu0 0
  %7921 = vmatprep.subr.bf16.mxu0 0
  %7922 = vmatpush1.bf16.xpose.msra.mxu0 0
  %7923 = vmatprep.subr.bf16.mxu0 0
  %7924 = vmatpush1.bf16.xpose.msra.mxu0 0
  %7925 = vmatprep.subr.bf16.mxu0 0
  %7926 = vmatpush1.bf16.xpose.msra.mxu0 %v7909
  %7927 = vmatprep.subr.bf16.mxu0 0
  %7928 = vmatpush2.bf16.xpose.msra.mxu0 0
  %7929 = vmatprep.subr.bf16.mxu0 0
  %7930 = vmatpush2.bf16.xpose.msra.mxu0 0
  %7931 = vmatprep.subr.bf16.mxu0 0
  %7932 = vmatpush2.bf16.xpose.msra.mxu0 0
  %7933 = vmatprep.subr.bf16.mxu0 0
  %7934 = vmatpush2.bf16.xpose.msra.mxu0 0
  %7935 = vmatprep.subr.bf16.mxu0 0
  %7936 = vmatpush2.bf16.xpose.msra.mxu0 0
  %7937 = vmatprep.subr.bf16.mxu0 0
  %7938 = vmatpush2.bf16.xpose.msra.mxu0 0
  %7939 = vmatprep.subr.bf16.mxu0 0
  %7940 = vmatpush2.bf16.xpose.msra.mxu0 0
  %7941 = vmatprep.subr.bf16.mxu0 0
  %7942 = vmatpush2.bf16.xpose.msra.mxu0 0
  %7943 = vmatprep.mubr.bf16.mxu0 0
  %7944 = vmatmul.mubr.bf16.gmra.mxu0 %v7906
  %v7945 = vpop.f32.mrf.mxu0
  %v7946 = vadd.f32 0.0, %v7945
  %v7947 = vpop.f32.mrf.mxu0
  %v7948 = vpop.f32.mrf.mxu0
  %v7949 = vpop.f32.mrf.mxu0
  %7950 = vdwg.mxu0
  %v7952 = vsel %vm1125, %v7890, 0
  %v7955 = vsel %vm1125, %v7898, 0
  %7957 = vmatprep.subr.bf16.mxu0 0
  %7958 = vmatpush1.bf16.xpose.msra.mxu0 0
  %7959 = vmatprep.subr.bf16.mxu0 0
  %7960 = vmatpush1.bf16.xpose.msra.mxu0 0
  %7961 = vmatprep.subr.bf16.mxu0 0
  %7962 = vmatpush1.bf16.xpose.msra.mxu0 0
  %7963 = vmatprep.subr.bf16.mxu0 0
  %7964 = vmatpush1.bf16.xpose.msra.mxu0 0
  %7965 = vmatprep.subr.bf16.mxu0 0
  %7966 = vmatpush1.bf16.xpose.msra.mxu0 0
  %7967 = vmatprep.subr.bf16.mxu0 0
  %7968 = vmatpush1.bf16.xpose.msra.mxu0 0
  %7969 = vmatprep.subr.bf16.mxu0 0
  %7970 = vmatpush1.bf16.xpose.msra.mxu0 0
  %7971 = vmatprep.subr.bf16.mxu0 0
  %7972 = vmatpush1.bf16.xpose.msra.mxu0 %v7955
  %7973 = vmatprep.subr.bf16.mxu0 0
  %7974 = vmatpush2.bf16.xpose.msra.mxu0 0
  %7975 = vmatprep.subr.bf16.mxu0 0
  %7976 = vmatpush2.bf16.xpose.msra.mxu0 0
  %7977 = vmatprep.subr.bf16.mxu0 0
  %7978 = vmatpush2.bf16.xpose.msra.mxu0 0
  %7979 = vmatprep.subr.bf16.mxu0 0
  %7980 = vmatpush2.bf16.xpose.msra.mxu0 0
  %7981 = vmatprep.subr.bf16.mxu0 0
  %7982 = vmatpush2.bf16.xpose.msra.mxu0 0
  %7983 = vmatprep.subr.bf16.mxu0 0
  %7984 = vmatpush2.bf16.xpose.msra.mxu0 0
  %7985 = vmatprep.subr.bf16.mxu0 0
  %7986 = vmatpush2.bf16.xpose.msra.mxu0 0
  %7987 = vmatprep.subr.bf16.mxu0 0
  %7988 = vmatpush2.bf16.xpose.msra.mxu0 0
  %7989 = vmatprep.mubr.bf16.mxu0 0
  %7990 = vmatmul.mubr.bf16.gmra.mxu0 %v7952
  %v7991 = vpop.f32.mrf.mxu0
  %v7992 = vadd.f32 0.0, %v7991
  %v7993 = vpop.f32.mrf.mxu0
  %v7994 = vpop.f32.mrf.mxu0
  %v7995 = vpop.f32.mrf.mxu0
  %7996 = vdwg.mxu0
  %v7998 = vsel %vm1125, %v7891, 0
  %v8001 = vsel %vm1125, %v7899, 0
  %8003 = vmatprep.subr.bf16.mxu0 0
  %8004 = vmatpush1.bf16.xpose.msra.mxu0 0
  %8005 = vmatprep.subr.bf16.mxu0 0
  %8006 = vmatpush1.bf16.xpose.msra.mxu0 0
  %8007 = vmatprep.subr.bf16.mxu0 0
  %8008 = vmatpush1.bf16.xpose.msra.mxu0 0
  %8009 = vmatprep.subr.bf16.mxu0 0
  %8010 = vmatpush1.bf16.xpose.msra.mxu0 0
  %8011 = vmatprep.subr.bf16.mxu0 0
  %8012 = vmatpush1.bf16.xpose.msra.mxu0 0
  %8013 = vmatprep.subr.bf16.mxu0 0
  %8014 = vmatpush1.bf16.xpose.msra.mxu0 0
  %8015 = vmatprep.subr.bf16.mxu0 0
  %8016 = vmatpush1.bf16.xpose.msra.mxu0 0
  %8017 = vmatprep.subr.bf16.mxu0 0
  %8018 = vmatpush1.bf16.xpose.msra.mxu0 %v8001
  %8019 = vmatprep.subr.bf16.mxu0 0
  %8020 = vmatpush2.bf16.xpose.msra.mxu0 0
  %8021 = vmatprep.subr.bf16.mxu0 0
  %8022 = vmatpush2.bf16.xpose.msra.mxu0 0
  %8023 = vmatprep.subr.bf16.mxu0 0
  %8024 = vmatpush2.bf16.xpose.msra.mxu0 0
  %8025 = vmatprep.subr.bf16.mxu0 0
  %8026 = vmatpush2.bf16.xpose.msra.mxu0 0
  %8027 = vmatprep.subr.bf16.mxu0 0
  %8028 = vmatpush2.bf16.xpose.msra.mxu0 0
  %8029 = vmatprep.subr.bf16.mxu0 0
  %8030 = vmatpush2.bf16.xpose.msra.mxu0 0
  %8031 = vmatprep.subr.bf16.mxu0 0
  %8032 = vmatpush2.bf16.xpose.msra.mxu0 0
  %8033 = vmatprep.subr.bf16.mxu0 0
  %8034 = vmatpush2.bf16.xpose.msra.mxu0 0
  %8035 = vmatprep.mubr.bf16.mxu0 0
  %8036 = vmatmul.mubr.bf16.gmra.mxu0 %v7998
  %v8037 = vpop.f32.mrf.mxu0
  %v8038 = vadd.f32 0.0, %v8037
  %v8039 = vpop.f32.mrf.mxu0
  %v8040 = vpop.f32.mrf.mxu0
  %v8041 = vpop.f32.mrf.mxu0
  %8042 = vdwg.mxu0
  %v8044 = vsel %vm1125, %v7892, 0
  %v8047 = vsel %vm1125, %v7900, 0
  %8049 = vmatprep.subr.bf16.mxu0 0
  %8050 = vmatpush1.bf16.xpose.msra.mxu0 0
  %8051 = vmatprep.subr.bf16.mxu0 0
  %8052 = vmatpush1.bf16.xpose.msra.mxu0 0
  %8053 = vmatprep.subr.bf16.mxu0 0
  %8054 = vmatpush1.bf16.xpose.msra.mxu0 0
  %8055 = vmatprep.subr.bf16.mxu0 0
  %8056 = vmatpush1.bf16.xpose.msra.mxu0 0
  %8057 = vmatprep.subr.bf16.mxu0 0
  %8058 = vmatpush1.bf16.xpose.msra.mxu0 0
  %8059 = vmatprep.subr.bf16.mxu0 0
  %8060 = vmatpush1.bf16.xpose.msra.mxu0 0
  %8061 = vmatprep.subr.bf16.mxu0 0
  %8062 = vmatpush1.bf16.xpose.msra.mxu0 0
  %8063 = vmatprep.subr.bf16.mxu0 0
  %8064 = vmatpush1.bf16.xpose.msra.mxu0 %v8047
  %8065 = vmatprep.subr.bf16.mxu0 0
  %8066 = vmatpush2.bf16.xpose.msra.mxu0 0
  %8067 = vmatprep.subr.bf16.mxu0 0
  %8068 = vmatpush2.bf16.xpose.msra.mxu0 0
  %8069 = vmatprep.subr.bf16.mxu0 0
  %8070 = vmatpush2.bf16.xpose.msra.mxu0 0
  %8071 = vmatprep.subr.bf16.mxu0 0
  %8072 = vmatpush2.bf16.xpose.msra.mxu0 0
  %8073 = vmatprep.subr.bf16.mxu0 0
  %8074 = vmatpush2.bf16.xpose.msra.mxu0 0
  %8075 = vmatprep.subr.bf16.mxu0 0
  %8076 = vmatpush2.bf16.xpose.msra.mxu0 0
  %8077 = vmatprep.subr.bf16.mxu0 0
  %8078 = vmatpush2.bf16.xpose.msra.mxu0 0
  %8079 = vmatprep.subr.bf16.mxu0 0
  %8080 = vmatpush2.bf16.xpose.msra.mxu0 0
  %8081 = vmatprep.mubr.bf16.mxu0 0
  %8082 = vmatmul.mubr.bf16.gmra.mxu0 %v8044
  %v8083 = vpop.f32.mrf.mxu0
  %v8084 = vadd.f32 0.0, %v8083
  %v8085 = vpop.f32.mrf.mxu0
  %v8086 = vpop.f32.mrf.mxu0
  %v8087 = vpop.f32.mrf.mxu0
  %8088 = vdwg.mxu0
  %v8090 = vsel %vm1125, %v7893, 0
  %v8093 = vsel %vm1125, %v7901, 0
  %8095 = vmatprep.subr.bf16.mxu0 0
  %8096 = vmatpush1.bf16.xpose.msra.mxu0 0
  %8097 = vmatprep.subr.bf16.mxu0 0
  %8098 = vmatpush1.bf16.xpose.msra.mxu0 0
  %8099 = vmatprep.subr.bf16.mxu0 0
  %8100 = vmatpush1.bf16.xpose.msra.mxu0 0
  %8101 = vmatprep.subr.bf16.mxu0 0
  %8102 = vmatpush1.bf16.xpose.msra.mxu0 0
  %8103 = vmatprep.subr.bf16.mxu0 0
  %8104 = vmatpush1.bf16.xpose.msra.mxu0 0
  %8105 = vmatprep.subr.bf16.mxu0 0
  %8106 = vmatpush1.bf16.xpose.msra.mxu0 0
  %8107 = vmatprep.subr.bf16.mxu0 0
  %8108 = vmatpush1.bf16.xpose.msra.mxu0 0
  %8109 = vmatprep.subr.bf16.mxu0 0
  %8110 = vmatpush1.bf16.xpose.msra.mxu0 %v8093
  %8111 = vmatprep.subr.bf16.mxu0 0
  %8112 = vmatpush2.bf16.xpose.msra.mxu0 0
  %8113 = vmatprep.subr.bf16.mxu0 0
  %8114 = vmatpush2.bf16.xpose.msra.mxu0 0
  %8115 = vmatprep.subr.bf16.mxu0 0
  %8116 = vmatpush2.bf16.xpose.msra.mxu0 0
  %8117 = vmatprep.subr.bf16.mxu0 0
  %8118 = vmatpush2.bf16.xpose.msra.mxu0 0
  %8119 = vmatprep.subr.bf16.mxu0 0
  %8120 = vmatpush2.bf16.xpose.msra.mxu0 0
  %8121 = vmatprep.subr.bf16.mxu0 0
  %8122 = vmatpush2.bf16.xpose.msra.mxu0 0
  %8123 = vmatprep.subr.bf16.mxu0 0
  %8124 = vmatpush2.bf16.xpose.msra.mxu0 0
  %8125 = vmatprep.subr.bf16.mxu0 0
  %8126 = vmatpush2.bf16.xpose.msra.mxu0 0
  %8127 = vmatprep.mubr.bf16.mxu0 0
  %8128 = vmatmul.mubr.bf16.gmra.mxu0 %v8090
  %v8129 = vpop.f32.mrf.mxu0
  %v8130 = vadd.f32 0.0, %v8129
  %v8131 = vpop.f32.mrf.mxu0
  %v8132 = vpop.f32.mrf.mxu0
  %v8133 = vpop.f32.mrf.mxu0
  %8134 = vdwg.mxu0
  %v8136 = vsel %vm1125, %v7894, 0
  %v8139 = vsel %vm1125, %v7902, 0
  %8141 = vmatprep.subr.bf16.mxu0 0
  %8142 = vmatpush1.bf16.xpose.msra.mxu0 0
  %8143 = vmatprep.subr.bf16.mxu0 0
  %8144 = vmatpush1.bf16.xpose.msra.mxu0 0
  %8145 = vmatprep.subr.bf16.mxu0 0
  %8146 = vmatpush1.bf16.xpose.msra.mxu0 0
  %8147 = vmatprep.subr.bf16.mxu0 0
  %8148 = vmatpush1.bf16.xpose.msra.mxu0 0
  %8149 = vmatprep.subr.bf16.mxu0 0
  %8150 = vmatpush1.bf16.xpose.msra.mxu0 0
  %8151 = vmatprep.subr.bf16.mxu0 0
  %8152 = vmatpush1.bf16.xpose.msra.mxu0 0
  %8153 = vmatprep.subr.bf16.mxu0 0
  %8154 = vmatpush1.bf16.xpose.msra.mxu0 0
  %8155 = vmatprep.subr.bf16.mxu0 0
  %8156 = vmatpush1.bf16.xpose.msra.mxu0 %v8139
  %8157 = vmatprep.subr.bf16.mxu0 0
  %8158 = vmatpush2.bf16.xpose.msra.mxu0 0
  %8159 = vmatprep.subr.bf16.mxu0 0
  %8160 = vmatpush2.bf16.xpose.msra.mxu0 0
  %8161 = vmatprep.subr.bf16.mxu0 0
  %8162 = vmatpush2.bf16.xpose.msra.mxu0 0
  %8163 = vmatprep.subr.bf16.mxu0 0
  %8164 = vmatpush2.bf16.xpose.msra.mxu0 0
  %8165 = vmatprep.subr.bf16.mxu0 0
  %8166 = vmatpush2.bf16.xpose.msra.mxu0 0
  %8167 = vmatprep.subr.bf16.mxu0 0
  %8168 = vmatpush2.bf16.xpose.msra.mxu0 0
  %8169 = vmatprep.subr.bf16.mxu0 0
  %8170 = vmatpush2.bf16.xpose.msra.mxu0 0
  %8171 = vmatprep.subr.bf16.mxu0 0
  %8172 = vmatpush2.bf16.xpose.msra.mxu0 0
  %8173 = vmatprep.mubr.bf16.mxu0 0
  %8174 = vmatmul.mubr.bf16.gmra.mxu0 %v8136
  %v8175 = vpop.f32.mrf.mxu0
  %v8176 = vadd.f32 0.0, %v8175
  %v8177 = vpop.f32.mrf.mxu0
  %v8178 = vpop.f32.mrf.mxu0
  %v8179 = vpop.f32.mrf.mxu0
  %8180 = vdwg.mxu0
  %v8182 = vsel %vm1125, %v7895, 0
  %v8185 = vsel %vm1125, %v7903, 0
  %8187 = vmatprep.subr.bf16.mxu0 0
  %8188 = vmatpush1.bf16.xpose.msra.mxu0 0
  %8189 = vmatprep.subr.bf16.mxu0 0
  %8190 = vmatpush1.bf16.xpose.msra.mxu0 0
  %8191 = vmatprep.subr.bf16.mxu0 0
  %8192 = vmatpush1.bf16.xpose.msra.mxu0 0
  %8193 = vmatprep.subr.bf16.mxu0 0
  %8194 = vmatpush1.bf16.xpose.msra.mxu0 0
  %8195 = vmatprep.subr.bf16.mxu0 0
  %8196 = vmatpush1.bf16.xpose.msra.mxu0 0
  %8197 = vmatprep.subr.bf16.mxu0 0
  %8198 = vmatpush1.bf16.xpose.msra.mxu0 0
  %8199 = vmatprep.subr.bf16.mxu0 0
  %8200 = vmatpush1.bf16.xpose.msra.mxu0 0
  %8201 = vmatprep.subr.bf16.mxu0 0
  %8202 = vmatpush1.bf16.xpose.msra.mxu0 %v8185
  %8203 = vmatprep.subr.bf16.mxu0 0
  %8204 = vmatpush2.bf16.xpose.msra.mxu0 0
  %8205 = vmatprep.subr.bf16.mxu0 0
  %8206 = vmatpush2.bf16.xpose.msra.mxu0 0
  %8207 = vmatprep.subr.bf16.mxu0 0
  %8208 = vmatpush2.bf16.xpose.msra.mxu0 0
  %8209 = vmatprep.subr.bf16.mxu0 0
  %8210 = vmatpush2.bf16.xpose.msra.mxu0 0
  %8211 = vmatprep.subr.bf16.mxu0 0
  %8212 = vmatpush2.bf16.xpose.msra.mxu0 0
  %8213 = vmatprep.subr.bf16.mxu0 0
  %8214 = vmatpush2.bf16.xpose.msra.mxu0 0
  %8215 = vmatprep.subr.bf16.mxu0 0
  %8216 = vmatpush2.bf16.xpose.msra.mxu0 0
  %8217 = vmatprep.subr.bf16.mxu0 0
  %8218 = vmatpush2.bf16.xpose.msra.mxu0 0
  %8219 = vmatprep.mubr.bf16.mxu0 0
  %8220 = vmatmul.mubr.bf16.gmra.mxu0 %v8182
  %v8221 = vpop.f32.mrf.mxu0
  %v8222 = vadd.f32 0.0, %v8221
  %v8223 = vpop.f32.mrf.mxu0
  %v8224 = vpop.f32.mrf.mxu0
  %v8225 = vpop.f32.mrf.mxu0
  %8226 = vdwg.mxu0
  %v8228 = vsel %vm1125, %v7896, 0
  %v8231 = vsel %vm1125, %v7904, 0
  %8233 = vmatprep.subr.bf16.mxu0 0
  %8234 = vmatpush1.bf16.xpose.msra.mxu0 0
  %8235 = vmatprep.subr.bf16.mxu0 0
  %8236 = vmatpush1.bf16.xpose.msra.mxu0 0
  %8237 = vmatprep.subr.bf16.mxu0 0
  %8238 = vmatpush1.bf16.xpose.msra.mxu0 0
  %8239 = vmatprep.subr.bf16.mxu0 0
  %8240 = vmatpush1.bf16.xpose.msra.mxu0 0
  %8241 = vmatprep.subr.bf16.mxu0 0
  %8242 = vmatpush1.bf16.xpose.msra.mxu0 0
  %8243 = vmatprep.subr.bf16.mxu0 0
  %8244 = vmatpush1.bf16.xpose.msra.mxu0 0
  %8245 = vmatprep.subr.bf16.mxu0 0
  %8246 = vmatpush1.bf16.xpose.msra.mxu0 0
  %8247 = vmatprep.subr.bf16.mxu0 0
  %8248 = vmatpush1.bf16.xpose.msra.mxu0 %v8231
  %8249 = vmatprep.subr.bf16.mxu0 0
  %8250 = vmatpush2.bf16.xpose.msra.mxu0 0
  %8251 = vmatprep.subr.bf16.mxu0 0
  %8252 = vmatpush2.bf16.xpose.msra.mxu0 0
  %8253 = vmatprep.subr.bf16.mxu0 0
  %8254 = vmatpush2.bf16.xpose.msra.mxu0 0
  %8255 = vmatprep.subr.bf16.mxu0 0
  %8256 = vmatpush2.bf16.xpose.msra.mxu0 0
  %8257 = vmatprep.subr.bf16.mxu0 0
  %8258 = vmatpush2.bf16.xpose.msra.mxu0 0
  %8259 = vmatprep.subr.bf16.mxu0 0
  %8260 = vmatpush2.bf16.xpose.msra.mxu0 0
  %8261 = vmatprep.subr.bf16.mxu0 0
  %8262 = vmatpush2.bf16.xpose.msra.mxu0 0
  %8263 = vmatprep.subr.bf16.mxu0 0
  %8264 = vmatpush2.bf16.xpose.msra.mxu0 0
  %8265 = vmatprep.mubr.bf16.mxu0 0
  %8266 = vmatmul.mubr.bf16.gmra.mxu0 %v8228
  %v8267 = vpop.f32.mrf.mxu0
  %v8268 = vadd.f32 0.0, %v8267
  %v8269 = vpop.f32.mrf.mxu0
  %v8270 = vpop.f32.mrf.mxu0
  %v8271 = vpop.f32.mrf.mxu0
  %8272 = vdwg.mxu0
  %v8273 = vmul.f32 %v7946, 0.35355338
  %v8274 = vmul.f32 %v7992, 0.35355338
  %v8275 = vmul.f32 %v8038, 0.35355338
  %v8276 = vmul.f32 %v8084, 0.35355338
  %v8277 = vmul.f32 %v8130, 0.35355338
  %v8278 = vmul.f32 %v8176, 0.35355338
  %v8279 = vmul.f32 %v8222, 0.35355338
  %v8280 = vmul.f32 %v8268, 0.35355338
  %v8281 = vsel %vm1502, %v8273, -inf
  %8282 = vmax.xlane.f32.xlu0 %v8281
  %v8283 = vpop.xlane.xlu0 %8282
  %v8284 = vsel %vm1502, %v8274, -inf
  %8285 = vmax.xlane.f32.xlu0 %v8284
  %v8286 = vpop.xlane.xlu0 %8285
  %v8287 = vsel %vm1502, %v8275, -inf
  %8288 = vmax.xlane.f32.xlu0 %v8287
  %v8289 = vpop.xlane.xlu0 %8288
  %v8290 = vsel %vm1502, %v8276, -inf
  %8291 = vmax.xlane.f32.xlu0 %v8290
  %v8292 = vpop.xlane.xlu0 %8291
  %v8293 = vsel %vm1502, %v8277, -inf
  %8294 = vmax.xlane.f32.xlu0 %v8293
  %v8295 = vpop.xlane.xlu0 %8294
  %v8296 = vsel %vm1502, %v8278, -inf
  %8297 = vmax.xlane.f32.xlu0 %v8296
  %v8298 = vpop.xlane.xlu0 %8297
  %v8299 = vsel %vm1502, %v8279, -inf
  %8300 = vmax.xlane.f32.xlu0 %v8299
  %v8301 = vpop.xlane.xlu0 %8300
  %v8302 = vsel %vm1502, %v8280, -inf
  %8303 = vmax.xlane.f32.xlu0 %v8302
  %v8304 = vpop.xlane.xlu0 %8303
  %v8305 = vsub.f32 %v8273, %v8283
  %v8306 = vsub.f32 %v8274, %v8286
  %v8307 = vsub.f32 %v8275, %v8289
  %v8308 = vsub.f32 %v8276, %v8292
  %v8309 = vsub.f32 %v8277, %v8295
  %v8310 = vsub.f32 %v8278, %v8298
  %v8311 = vsub.f32 %v8279, %v8301
  %v8312 = vsub.f32 %v8280, %v8304
  %v8313 = vmul.f32 %v8305, 1.442695
  %v8314 = vpow.pop %v8313
  %v8315 = vmul.f32 %v8306, 1.442695
  %v8316 = vpow.pop %v8315
  %v8317 = vmul.f32 %v8307, 1.442695
  %v8318 = vpow.pop %v8317
  %v8319 = vmul.f32 %v8308, 1.442695
  %v8320 = vpow.pop %v8319
  %v8321 = vmul.f32 %v8309, 1.442695
  %v8322 = vpow.pop %v8321
  %v8323 = vmul.f32 %v8310, 1.442695
  %v8324 = vpow.pop %v8323
  %v8325 = vmul.f32 %v8311, 1.442695
  %v8326 = vpow.pop %v8325
  %v8327 = vmul.f32 %v8312, 1.442695
  %v8328 = vpow.pop %v8327
  %v8329 = vsel %vm1502, %v8314, 0.0
  %8330 = vadd.xlane.f32.xlu0 %v8329
  %v8331 = vpop.xlane.xlu0 %8330
  %v8332 = vsel %vm1502, %v8316, 0.0
  %8333 = vadd.xlane.f32.xlu0 %v8332
  %v8334 = vpop.xlane.xlu0 %8333
  %v8335 = vsel %vm1502, %v8318, 0.0
  %8336 = vadd.xlane.f32.xlu0 %v8335
  %v8337 = vpop.xlane.xlu0 %8336
  %v8338 = vsel %vm1502, %v8320, 0.0
  %8339 = vadd.xlane.f32.xlu0 %v8338
  %v8340 = vpop.xlane.xlu0 %8339
  %v8341 = vsel %vm1502, %v8322, 0.0
  %8342 = vadd.xlane.f32.xlu0 %v8341
  %v8343 = vpop.xlane.xlu0 %8342
  %v8344 = vsel %vm1502, %v8324, 0.0
  %8345 = vadd.xlane.f32.xlu0 %v8344
  %v8346 = vpop.xlane.xlu0 %8345
  %v8347 = vsel %vm1502, %v8326, 0.0
  %8348 = vadd.xlane.f32.xlu0 %v8347
  %v8349 = vpop.xlane.xlu0 %8348
  %v8350 = vsel %vm1502, %v8328, 0.0
  %8351 = vadd.xlane.f32.xlu0 %v8350
  %v8352 = vpop.xlane.xlu0 %8351
  %v8353 = vrcp.pop %v8331
  %v8354 = vrcp.pop %v8334
  %v8355 = vrcp.pop %v8337
  %v8356 = vrcp.pop %v8340
  %v8357 = vrcp.pop %v8343
  %v8358 = vrcp.pop %v8346
  %v8359 = vrcp.pop %v8349
  %v8360 = vrcp.pop %v8352
  %v8361 = vmul.f32 %v8314, %v8353
  %v8362 = vmul.f32 %v8316, %v8354
  %v8363 = vmul.f32 %v8318, %v8355
  %v8364 = vmul.f32 %v8320, %v8356
  %v8365 = vmul.f32 %v8322, %v8357
  %v8366 = vmul.f32 %v8324, %v8358
  %v8367 = vmul.f32 %v8326, %v8359
  %v8368 = vmul.f32 %v8328, %v8360
  %v8369 = vpack.c.bf16 %v8361, %v8361
  %v8370 = vpack.c.bf16 %v8362, %v8362
  %v8371 = vpack.c.bf16 %v8363, %v8363
  %v8372 = vpack.c.bf16 %v8364, %v8364
  %v8373 = vpack.c.bf16 %v8365, %v8365
  %v8374 = vpack.c.bf16 %v8366, %v8366
  %v8375 = vpack.c.bf16 %v8367, %v8367
  %v8376 = vpack.c.bf16 %v8368, %v8368
  %v8377 = vpack.c.bf16 %v7604, %v7604
  %v8378 = vpack.c.bf16 %v7644, %v7644
  %v8379 = vpack.c.bf16 %v7684, %v7684
  %v8380 = vpack.c.bf16 %v7724, %v7724
  %v8381 = vpack.c.bf16 %v7764, %v7764
  %v8382 = vpack.c.bf16 %v7804, %v7804
  %v8383 = vpack.c.bf16 %v7844, %v7844
  %v8384 = vpack.c.bf16 %v7884, %v7884
  %v8386 = vsel %vm1607, %v8369, 0
  %v8389 = vsel %vm1611, %v8377, 0
  %8391 = vmatprep.subr.bf16.mxu0 0
  %8392 = vmatpush1.bf16.msra.mxu0 0
  %8393 = vmatprep.subr.bf16.mxu0 0
  %8394 = vmatpush1.bf16.msra.mxu0 0
  %8395 = vmatprep.subr.bf16.mxu0 0
  %8396 = vmatpush1.bf16.msra.mxu0 0
  %8397 = vmatprep.subr.bf16.mxu0 0
  %8398 = vmatpush1.bf16.msra.mxu0 0
  %8399 = vmatprep.subr.bf16.mxu0 0
  %8400 = vmatpush1.bf16.msra.mxu0 0
  %8401 = vmatprep.subr.bf16.mxu0 0
  %8402 = vmatpush1.bf16.msra.mxu0 0
  %8403 = vmatprep.subr.bf16.mxu0 0
  %8404 = vmatpush1.bf16.msra.mxu0 0
  %8405 = vmatprep.subr.bf16.mxu0 0
  %8406 = vmatpush1.bf16.msra.mxu0 %v8389
  %8407 = vmatprep.subr.bf16.mxu0 0
  %8408 = vmatpush2.bf16.msra.mxu0 0
  %8409 = vmatprep.subr.bf16.mxu0 0
  %8410 = vmatpush2.bf16.msra.mxu0 0
  %8411 = vmatprep.subr.bf16.mxu0 0
  %8412 = vmatpush2.bf16.msra.mxu0 0
  %8413 = vmatprep.subr.bf16.mxu0 0
  %8414 = vmatpush2.bf16.msra.mxu0 0
  %8415 = vmatprep.subr.bf16.mxu0 0
  %8416 = vmatpush2.bf16.msra.mxu0 0
  %8417 = vmatprep.subr.bf16.mxu0 0
  %8418 = vmatpush2.bf16.msra.mxu0 0
  %8419 = vmatprep.subr.bf16.mxu0 0
  %8420 = vmatpush2.bf16.msra.mxu0 0
  %8421 = vmatprep.subr.bf16.mxu0 0
  %8422 = vmatpush2.bf16.msra.mxu0 0
  %8423 = vmatprep.mubr.bf16.mxu0 0
  %8424 = vmatmul.mubr.bf16.gmra.mxu0 %v8386
  %v8425 = vpop.f32.mrf.mxu0
  %v8426 = vadd.f32 0.0, %v8425
  %v8427 = vpop.f32.mrf.mxu0
  %v8428 = vpop.f32.mrf.mxu0
  %v8429 = vpop.f32.mrf.mxu0
  %8430 = vdwg.mxu0
  %v8432 = vsel %vm1607, %v8370, 0
  %v8435 = vsel %vm1611, %v8378, 0
  %8437 = vmatprep.subr.bf16.mxu0 0
  %8438 = vmatpush1.bf16.msra.mxu0 0
  %8439 = vmatprep.subr.bf16.mxu0 0
  %8440 = vmatpush1.bf16.msra.mxu0 0
  %8441 = vmatprep.subr.bf16.mxu0 0
  %8442 = vmatpush1.bf16.msra.mxu0 0
  %8443 = vmatprep.subr.bf16.mxu0 0
  %8444 = vmatpush1.bf16.msra.mxu0 0
  %8445 = vmatprep.subr.bf16.mxu0 0
  %8446 = vmatpush1.bf16.msra.mxu0 0
  %8447 = vmatprep.subr.bf16.mxu0 0
  %8448 = vmatpush1.bf16.msra.mxu0 0
  %8449 = vmatprep.subr.bf16.mxu0 0
  %8450 = vmatpush1.bf16.msra.mxu0 0
  %8451 = vmatprep.subr.bf16.mxu0 0
  %8452 = vmatpush1.bf16.msra.mxu0 %v8435
  %8453 = vmatprep.subr.bf16.mxu0 0
  %8454 = vmatpush2.bf16.msra.mxu0 0
  %8455 = vmatprep.subr.bf16.mxu0 0
  %8456 = vmatpush2.bf16.msra.mxu0 0
  %8457 = vmatprep.subr.bf16.mxu0 0
  %8458 = vmatpush2.bf16.msra.mxu0 0
  %8459 = vmatprep.subr.bf16.mxu0 0
  %8460 = vmatpush2.bf16.msra.mxu0 0
  %8461 = vmatprep.subr.bf16.mxu0 0
  %8462 = vmatpush2.bf16.msra.mxu0 0
  %8463 = vmatprep.subr.bf16.mxu0 0
  %8464 = vmatpush2.bf16.msra.mxu0 0
  %8465 = vmatprep.subr.bf16.mxu0 0
  %8466 = vmatpush2.bf16.msra.mxu0 0
  %8467 = vmatprep.subr.bf16.mxu0 0
  %8468 = vmatpush2.bf16.msra.mxu0 0
  %8469 = vmatprep.mubr.bf16.mxu0 0
  %8470 = vmatmul.mubr.bf16.gmra.mxu0 %v8432
  %v8471 = vpop.f32.mrf.mxu0
  %v8472 = vadd.f32 0.0, %v8471
  %v8473 = vpop.f32.mrf.mxu0
  %v8474 = vpop.f32.mrf.mxu0
  %v8475 = vpop.f32.mrf.mxu0
  %8476 = vdwg.mxu0
  %v8478 = vsel %vm1607, %v8371, 0
  %v8481 = vsel %vm1611, %v8379, 0
  %8483 = vmatprep.subr.bf16.mxu0 0
  %8484 = vmatpush1.bf16.msra.mxu0 0
  %8485 = vmatprep.subr.bf16.mxu0 0
  %8486 = vmatpush1.bf16.msra.mxu0 0
  %8487 = vmatprep.subr.bf16.mxu0 0
  %8488 = vmatpush1.bf16.msra.mxu0 0
  %8489 = vmatprep.subr.bf16.mxu0 0
  %8490 = vmatpush1.bf16.msra.mxu0 0
  %8491 = vmatprep.subr.bf16.mxu0 0
  %8492 = vmatpush1.bf16.msra.mxu0 0
  %8493 = vmatprep.subr.bf16.mxu0 0
  %8494 = vmatpush1.bf16.msra.mxu0 0
  %8495 = vmatprep.subr.bf16.mxu0 0
  %8496 = vmatpush1.bf16.msra.mxu0 0
  %8497 = vmatprep.subr.bf16.mxu0 0
  %8498 = vmatpush1.bf16.msra.mxu0 %v8481
  %8499 = vmatprep.subr.bf16.mxu0 0
  %8500 = vmatpush2.bf16.msra.mxu0 0
  %8501 = vmatprep.subr.bf16.mxu0 0
  %8502 = vmatpush2.bf16.msra.mxu0 0
  %8503 = vmatprep.subr.bf16.mxu0 0
  %8504 = vmatpush2.bf16.msra.mxu0 0
  %8505 = vmatprep.subr.bf16.mxu0 0
  %8506 = vmatpush2.bf16.msra.mxu0 0
  %8507 = vmatprep.subr.bf16.mxu0 0
  %8508 = vmatpush2.bf16.msra.mxu0 0
  %8509 = vmatprep.subr.bf16.mxu0 0
  %8510 = vmatpush2.bf16.msra.mxu0 0
  %8511 = vmatprep.subr.bf16.mxu0 0
  %8512 = vmatpush2.bf16.msra.mxu0 0
  %8513 = vmatprep.subr.bf16.mxu0 0
  %8514 = vmatpush2.bf16.msra.mxu0 0
  %8515 = vmatprep.mubr.bf16.mxu0 0
  %8516 = vmatmul.mubr.bf16.gmra.mxu0 %v8478
  %v8517 = vpop.f32.mrf.mxu0
  %v8518 = vadd.f32 0.0, %v8517
  %v8519 = vpop.f32.mrf.mxu0
  %v8520 = vpop.f32.mrf.mxu0
  %v8521 = vpop.f32.mrf.mxu0
  %8522 = vdwg.mxu0
  %v8524 = vsel %vm1607, %v8372, 0
  %v8527 = vsel %vm1611, %v8380, 0
  %8529 = vmatprep.subr.bf16.mxu0 0
  %8530 = vmatpush1.bf16.msra.mxu0 0
  %8531 = vmatprep.subr.bf16.mxu0 0
  %8532 = vmatpush1.bf16.msra.mxu0 0
  %8533 = vmatprep.subr.bf16.mxu0 0
  %8534 = vmatpush1.bf16.msra.mxu0 0
  %8535 = vmatprep.subr.bf16.mxu0 0
  %8536 = vmatpush1.bf16.msra.mxu0 0
  %8537 = vmatprep.subr.bf16.mxu0 0
  %8538 = vmatpush1.bf16.msra.mxu0 0
  %8539 = vmatprep.subr.bf16.mxu0 0
  %8540 = vmatpush1.bf16.msra.mxu0 0
  %8541 = vmatprep.subr.bf16.mxu0 0
  %8542 = vmatpush1.bf16.msra.mxu0 0
  %8543 = vmatprep.subr.bf16.mxu0 0
  %8544 = vmatpush1.bf16.msra.mxu0 %v8527
  %8545 = vmatprep.subr.bf16.mxu0 0
  %8546 = vmatpush2.bf16.msra.mxu0 0
  %8547 = vmatprep.subr.bf16.mxu0 0
  %8548 = vmatpush2.bf16.msra.mxu0 0
  %8549 = vmatprep.subr.bf16.mxu0 0
  %8550 = vmatpush2.bf16.msra.mxu0 0
  %8551 = vmatprep.subr.bf16.mxu0 0
  %8552 = vmatpush2.bf16.msra.mxu0 0
  %8553 = vmatprep.subr.bf16.mxu0 0
  %8554 = vmatpush2.bf16.msra.mxu0 0
  %8555 = vmatprep.subr.bf16.mxu0 0
  %8556 = vmatpush2.bf16.msra.mxu0 0
  %8557 = vmatprep.subr.bf16.mxu0 0
  %8558 = vmatpush2.bf16.msra.mxu0 0
  %8559 = vmatprep.subr.bf16.mxu0 0
  %8560 = vmatpush2.bf16.msra.mxu0 0
  %8561 = vmatprep.mubr.bf16.mxu0 0
  %8562 = vmatmul.mubr.bf16.gmra.mxu0 %v8524
  %v8563 = vpop.f32.mrf.mxu0
  %v8564 = vadd.f32 0.0, %v8563
  %v8565 = vpop.f32.mrf.mxu0
  %v8566 = vpop.f32.mrf.mxu0
  %v8567 = vpop.f32.mrf.mxu0
  %8568 = vdwg.mxu0
  %v8570 = vsel %vm1607, %v8373, 0
  %v8573 = vsel %vm1611, %v8381, 0
  %8575 = vmatprep.subr.bf16.mxu0 0
  %8576 = vmatpush1.bf16.msra.mxu0 0
  %8577 = vmatprep.subr.bf16.mxu0 0
  %8578 = vmatpush1.bf16.msra.mxu0 0
  %8579 = vmatprep.subr.bf16.mxu0 0
  %8580 = vmatpush1.bf16.msra.mxu0 0
  %8581 = vmatprep.subr.bf16.mxu0 0
  %8582 = vmatpush1.bf16.msra.mxu0 0
  %8583 = vmatprep.subr.bf16.mxu0 0
  %8584 = vmatpush1.bf16.msra.mxu0 0
  %8585 = vmatprep.subr.bf16.mxu0 0
  %8586 = vmatpush1.bf16.msra.mxu0 0
  %8587 = vmatprep.subr.bf16.mxu0 0
  %8588 = vmatpush1.bf16.msra.mxu0 0
  %8589 = vmatprep.subr.bf16.mxu0 0
  %8590 = vmatpush1.bf16.msra.mxu0 %v8573
  %8591 = vmatprep.subr.bf16.mxu0 0
  %8592 = vmatpush2.bf16.msra.mxu0 0
  %8593 = vmatprep.subr.bf16.mxu0 0
  %8594 = vmatpush2.bf16.msra.mxu0 0
  %8595 = vmatprep.subr.bf16.mxu0 0
  %8596 = vmatpush2.bf16.msra.mxu0 0
  %8597 = vmatprep.subr.bf16.mxu0 0
  %8598 = vmatpush2.bf16.msra.mxu0 0
  %8599 = vmatprep.subr.bf16.mxu0 0
  %8600 = vmatpush2.bf16.msra.mxu0 0
  %8601 = vmatprep.subr.bf16.mxu0 0
  %8602 = vmatpush2.bf16.msra.mxu0 0
  %8603 = vmatprep.subr.bf16.mxu0 0
  %8604 = vmatpush2.bf16.msra.mxu0 0
  %8605 = vmatprep.subr.bf16.mxu0 0
  %8606 = vmatpush2.bf16.msra.mxu0 0
  %8607 = vmatprep.mubr.bf16.mxu0 0
  %8608 = vmatmul.mubr.bf16.gmra.mxu0 %v8570
  %v8609 = vpop.f32.mrf.mxu0
  %v8610 = vadd.f32 0.0, %v8609
  %v8611 = vpop.f32.mrf.mxu0
  %v8612 = vpop.f32.mrf.mxu0
  %v8613 = vpop.f32.mrf.mxu0
  %8614 = vdwg.mxu0
  %v8616 = vsel %vm1607, %v8374, 0
  %v8619 = vsel %vm1611, %v8382, 0
  %8621 = vmatprep.subr.bf16.mxu0 0
  %8622 = vmatpush1.bf16.msra.mxu0 0
  %8623 = vmatprep.subr.bf16.mxu0 0
  %8624 = vmatpush1.bf16.msra.mxu0 0
  %8625 = vmatprep.subr.bf16.mxu0 0
  %8626 = vmatpush1.bf16.msra.mxu0 0
  %8627 = vmatprep.subr.bf16.mxu0 0
  %8628 = vmatpush1.bf16.msra.mxu0 0
  %8629 = vmatprep.subr.bf16.mxu0 0
  %8630 = vmatpush1.bf16.msra.mxu0 0
  %8631 = vmatprep.subr.bf16.mxu0 0
  %8632 = vmatpush1.bf16.msra.mxu0 0
  %8633 = vmatprep.subr.bf16.mxu0 0
  %8634 = vmatpush1.bf16.msra.mxu0 0
  %8635 = vmatprep.subr.bf16.mxu0 0
  %8636 = vmatpush1.bf16.msra.mxu0 %v8619
  %8637 = vmatprep.subr.bf16.mxu0 0
  %8638 = vmatpush2.bf16.msra.mxu0 0
  %8639 = vmatprep.subr.bf16.mxu0 0
  %8640 = vmatpush2.bf16.msra.mxu0 0
  %8641 = vmatprep.subr.bf16.mxu0 0
  %8642 = vmatpush2.bf16.msra.mxu0 0
  %8643 = vmatprep.subr.bf16.mxu0 0
  %8644 = vmatpush2.bf16.msra.mxu0 0
  %8645 = vmatprep.subr.bf16.mxu0 0
  %8646 = vmatpush2.bf16.msra.mxu0 0
  %8647 = vmatprep.subr.bf16.mxu0 0
  %8648 = vmatpush2.bf16.msra.mxu0 0
  %8649 = vmatprep.subr.bf16.mxu0 0
  %8650 = vmatpush2.bf16.msra.mxu0 0
  %8651 = vmatprep.subr.bf16.mxu0 0
  %8652 = vmatpush2.bf16.msra.mxu0 0
  %8653 = vmatprep.mubr.bf16.mxu0 0
  %8654 = vmatmul.mubr.bf16.gmra.mxu0 %v8616
  %v8655 = vpop.f32.mrf.mxu0
  %v8656 = vadd.f32 0.0, %v8655
  %v8657 = vpop.f32.mrf.mxu0
  %v8658 = vpop.f32.mrf.mxu0
  %v8659 = vpop.f32.mrf.mxu0
  %8660 = vdwg.mxu0
  %v8662 = vsel %vm1607, %v8375, 0
  %v8665 = vsel %vm1611, %v8383, 0
  %8667 = vmatprep.subr.bf16.mxu0 0
  %8668 = vmatpush1.bf16.msra.mxu0 0
  %8669 = vmatprep.subr.bf16.mxu0 0
  %8670 = vmatpush1.bf16.msra.mxu0 0
  %8671 = vmatprep.subr.bf16.mxu0 0
  %8672 = vmatpush1.bf16.msra.mxu0 0
  %8673 = vmatprep.subr.bf16.mxu0 0
  %8674 = vmatpush1.bf16.msra.mxu0 0
  %8675 = vmatprep.subr.bf16.mxu0 0
  %8676 = vmatpush1.bf16.msra.mxu0 0
  %8677 = vmatprep.subr.bf16.mxu0 0
  %8678 = vmatpush1.bf16.msra.mxu0 0
  %8679 = vmatprep.subr.bf16.mxu0 0
  %8680 = vmatpush1.bf16.msra.mxu0 0
  %8681 = vmatprep.subr.bf16.mxu0 0
  %8682 = vmatpush1.bf16.msra.mxu0 %v8665
  %8683 = vmatprep.subr.bf16.mxu0 0
  %8684 = vmatpush2.bf16.msra.mxu0 0
  %8685 = vmatprep.subr.bf16.mxu0 0
  %8686 = vmatpush2.bf16.msra.mxu0 0
  %8687 = vmatprep.subr.bf16.mxu0 0
  %8688 = vmatpush2.bf16.msra.mxu0 0
  %8689 = vmatprep.subr.bf16.mxu0 0
  %8690 = vmatpush2.bf16.msra.mxu0 0
  %8691 = vmatprep.subr.bf16.mxu0 0
  %8692 = vmatpush2.bf16.msra.mxu0 0
  %8693 = vmatprep.subr.bf16.mxu0 0
  %8694 = vmatpush2.bf16.msra.mxu0 0
  %8695 = vmatprep.subr.bf16.mxu0 0
  %8696 = vmatpush2.bf16.msra.mxu0 0
  %8697 = vmatprep.subr.bf16.mxu0 0
  %8698 = vmatpush2.bf16.msra.mxu0 0
  %8699 = vmatprep.mubr.bf16.mxu0 0
  %8700 = vmatmul.mubr.bf16.gmra.mxu0 %v8662
  %v8701 = vpop.f32.mrf.mxu0
  %v8702 = vadd.f32 0.0, %v8701
  %v8703 = vpop.f32.mrf.mxu0
  %v8704 = vpop.f32.mrf.mxu0
  %v8705 = vpop.f32.mrf.mxu0
  %8706 = vdwg.mxu0
  %v8708 = vsel %vm1607, %v8376, 0
  %v8711 = vsel %vm1611, %v8384, 0
  %8713 = vmatprep.subr.bf16.mxu0 0
  %8714 = vmatpush1.bf16.msra.mxu0 0
  %8715 = vmatprep.subr.bf16.mxu0 0
  %8716 = vmatpush1.bf16.msra.mxu0 0
  %8717 = vmatprep.subr.bf16.mxu0 0
  %8718 = vmatpush1.bf16.msra.mxu0 0
  %8719 = vmatprep.subr.bf16.mxu0 0
  %8720 = vmatpush1.bf16.msra.mxu0 0
  %8721 = vmatprep.subr.bf16.mxu0 0
  %8722 = vmatpush1.bf16.msra.mxu0 0
  %8723 = vmatprep.subr.bf16.mxu0 0
  %8724 = vmatpush1.bf16.msra.mxu0 0
  %8725 = vmatprep.subr.bf16.mxu0 0
  %8726 = vmatpush1.bf16.msra.mxu0 0
  %8727 = vmatprep.subr.bf16.mxu0 0
  %8728 = vmatpush1.bf16.msra.mxu0 %v8711
  %8729 = vmatprep.subr.bf16.mxu0 0
  %8730 = vmatpush2.bf16.msra.mxu0 0
  %8731 = vmatprep.subr.bf16.mxu0 0
  %8732 = vmatpush2.bf16.msra.mxu0 0
  %8733 = vmatprep.subr.bf16.mxu0 0
  %8734 = vmatpush2.bf16.msra.mxu0 0
  %8735 = vmatprep.subr.bf16.mxu0 0
  %8736 = vmatpush2.bf16.msra.mxu0 0
  %8737 = vmatprep.subr.bf16.mxu0 0
  %8738 = vmatpush2.bf16.msra.mxu0 0
  %8739 = vmatprep.subr.bf16.mxu0 0
  %8740 = vmatpush2.bf16.msra.mxu0 0
  %8741 = vmatprep.subr.bf16.mxu0 0
  %8742 = vmatpush2.bf16.msra.mxu0 0
  %8743 = vmatprep.subr.bf16.mxu0 0
  %8744 = vmatpush2.bf16.msra.mxu0 0
  %8745 = vmatprep.mubr.bf16.mxu0 0
  %8746 = vmatmul.mubr.bf16.gmra.mxu0 %v8708
  %v8747 = vpop.f32.mrf.mxu0
  %v8748 = vadd.f32 0.0, %v8747
  %v8749 = vpop.f32.mrf.mxu0
  %v8750 = vpop.f32.mrf.mxu0
  %v8751 = vpop.f32.mrf.mxu0
  %8752 = vdwg.mxu0
  %s8753 = scalar_lea.vmem %s7, 12
  %v8754 = vld [vmem:[%s8753] sm:$0xf]
  %v8755 = vpack.c.bf16 %v8426, %v8426
  %v8756 = vpack.c.bf16 %v8472, %v8472
  %v8757 = vpack.c.bf16 %v8518, %v8518
  %v8758 = vpack.c.bf16 %v8564, %v8564
  %v8759 = vpack.c.bf16 %v8610, %v8610
  %v8760 = vpack.c.bf16 %v8656, %v8656
  %v8761 = vpack.c.bf16 %v8702, %v8702
  %v8762 = vpack.c.bf16 %v8748, %v8748
  %v8764 = vsel %vm1125, %v8755, 0
  %v8767 = vsel %vm3898, %v8754, 0
  %8769 = vmatprep.subr.bf16.mxu0 0
  %8770 = vmatpush1.bf16.msra.mxu0 0
  %8771 = vmatprep.subr.bf16.mxu0 0
  %8772 = vmatpush1.bf16.msra.mxu0 0
  %8773 = vmatprep.subr.bf16.mxu0 0
  %8774 = vmatpush1.bf16.msra.mxu0 0
  %8775 = vmatprep.subr.bf16.mxu0 0
  %8776 = vmatpush1.bf16.msra.mxu0 0
  %8777 = vmatprep.subr.bf16.mxu0 0
  %8778 = vmatpush1.bf16.msra.mxu0 0
  %8779 = vmatprep.subr.bf16.mxu0 0
  %8780 = vmatpush1.bf16.msra.mxu0 0
  %8781 = vmatprep.subr.bf16.mxu0 0
  %8782 = vmatpush1.bf16.msra.mxu0 0
  %8783 = vmatprep.subr.bf16.mxu0 0
  %8784 = vmatpush1.bf16.msra.mxu0 %v8767
  %8785 = vmatprep.subr.bf16.mxu0 0
  %8786 = vmatpush2.bf16.msra.mxu0 0
  %8787 = vmatprep.subr.bf16.mxu0 0
  %8788 = vmatpush2.bf16.msra.mxu0 0
  %8789 = vmatprep.subr.bf16.mxu0 0
  %8790 = vmatpush2.bf16.msra.mxu0 0
  %8791 = vmatprep.subr.bf16.mxu0 0
  %8792 = vmatpush2.bf16.msra.mxu0 0
  %8793 = vmatprep.subr.bf16.mxu0 0
  %8794 = vmatpush2.bf16.msra.mxu0 0
  %8795 = vmatprep.subr.bf16.mxu0 0
  %8796 = vmatpush2.bf16.msra.mxu0 0
  %8797 = vmatprep.subr.bf16.mxu0 0
  %8798 = vmatpush2.bf16.msra.mxu0 0
  %8799 = vmatprep.subr.bf16.mxu0 0
  %8800 = vmatpush2.bf16.msra.mxu0 0
  %8801 = vmatprep.mubr.bf16.mxu0 0
  %8802 = vmatmul.mubr.bf16.gmra.mxu0 %v8764
  %v8803 = vpop.f32.mrf.mxu0
  %v8804 = vadd.f32 0.0, %v8803
  %v8805 = vpop.f32.mrf.mxu0
  %v8806 = vpop.f32.mrf.mxu0
  %v8807 = vpop.f32.mrf.mxu0
  %8808 = vdwg.mxu0
  %v8810 = vsel %vm1125, %v8756, 0
  %8812 = vmatprep.subr.bf16.mxu0 0
  %8813 = vmatpush1.bf16.msra.mxu0 0
  %8814 = vmatprep.subr.bf16.mxu0 0
  %8815 = vmatpush1.bf16.msra.mxu0 0
  %8816 = vmatprep.subr.bf16.mxu0 0
  %8817 = vmatpush1.bf16.msra.mxu0 0
  %8818 = vmatprep.subr.bf16.mxu0 0
  %8819 = vmatpush1.bf16.msra.mxu0 0
  %8820 = vmatprep.subr.bf16.mxu0 0
  %8821 = vmatpush1.bf16.msra.mxu0 0
  %8822 = vmatprep.subr.bf16.mxu0 0
  %8823 = vmatpush1.bf16.msra.mxu0 0
  %8824 = vmatprep.subr.bf16.mxu0 0
  %8825 = vmatpush1.bf16.msra.mxu0 0
  %8826 = vmatprep.subr.bf16.mxu0 0
  %8827 = vmatpush1.bf16.msra.mxu0 %v8767
  %8828 = vmatprep.subr.bf16.mxu0 0
  %8829 = vmatpush2.bf16.msra.mxu0 0
  %8830 = vmatprep.subr.bf16.mxu0 0
  %8831 = vmatpush2.bf16.msra.mxu0 0
  %8832 = vmatprep.subr.bf16.mxu0 0
  %8833 = vmatpush2.bf16.msra.mxu0 0
  %8834 = vmatprep.subr.bf16.mxu0 0
  %8835 = vmatpush2.bf16.msra.mxu0 0
  %8836 = vmatprep.subr.bf16.mxu0 0
  %8837 = vmatpush2.bf16.msra.mxu0 0
  %8838 = vmatprep.subr.bf16.mxu0 0
  %8839 = vmatpush2.bf16.msra.mxu0 0
  %8840 = vmatprep.subr.bf16.mxu0 0
  %8841 = vmatpush2.bf16.msra.mxu0 0
  %8842 = vmatprep.subr.bf16.mxu0 0
  %8843 = vmatpush2.bf16.msra.mxu0 0
  %8844 = vmatprep.mubr.bf16.mxu0 0
  %8845 = vmatmul.mubr.bf16.gmra.mxu0 %v8810
  %v8846 = vpop.f32.mrf.mxu0
  %v8847 = vadd.f32 0.0, %v8846
  %v8848 = vpop.f32.mrf.mxu0
  %v8849 = vpop.f32.mrf.mxu0
  %v8850 = vpop.f32.mrf.mxu0
  %8851 = vdwg.mxu0
  %v8853 = vsel %vm1125, %v8757, 0
  %8855 = vmatprep.subr.bf16.mxu0 0
  %8856 = vmatpush1.bf16.msra.mxu0 0
  %8857 = vmatprep.subr.bf16.mxu0 0
  %8858 = vmatpush1.bf16.msra.mxu0 0
  %8859 = vmatprep.subr.bf16.mxu0 0
  %8860 = vmatpush1.bf16.msra.mxu0 0
  %8861 = vmatprep.subr.bf16.mxu0 0
  %8862 = vmatpush1.bf16.msra.mxu0 0
  %8863 = vmatprep.subr.bf16.mxu0 0
  %8864 = vmatpush1.bf16.msra.mxu0 0
  %8865 = vmatprep.subr.bf16.mxu0 0
  %8866 = vmatpush1.bf16.msra.mxu0 0
  %8867 = vmatprep.subr.bf16.mxu0 0
  %8868 = vmatpush1.bf16.msra.mxu0 0
  %8869 = vmatprep.subr.bf16.mxu0 0
  %8870 = vmatpush1.bf16.msra.mxu0 %v8767
  %8871 = vmatprep.subr.bf16.mxu0 0
  %8872 = vmatpush2.bf16.msra.mxu0 0
  %8873 = vmatprep.subr.bf16.mxu0 0
  %8874 = vmatpush2.bf16.msra.mxu0 0
  %8875 = vmatprep.subr.bf16.mxu0 0
  %8876 = vmatpush2.bf16.msra.mxu0 0
  %8877 = vmatprep.subr.bf16.mxu0 0
  %8878 = vmatpush2.bf16.msra.mxu0 0
  %8879 = vmatprep.subr.bf16.mxu0 0
  %8880 = vmatpush2.bf16.msra.mxu0 0
  %8881 = vmatprep.subr.bf16.mxu0 0
  %8882 = vmatpush2.bf16.msra.mxu0 0
  %8883 = vmatprep.subr.bf16.mxu0 0
  %8884 = vmatpush2.bf16.msra.mxu0 0
  %8885 = vmatprep.subr.bf16.mxu0 0
  %8886 = vmatpush2.bf16.msra.mxu0 0
  %8887 = vmatprep.mubr.bf16.mxu0 0
  %8888 = vmatmul.mubr.bf16.gmra.mxu0 %v8853
  %v8889 = vpop.f32.mrf.mxu0
  %v8890 = vadd.f32 0.0, %v8889
  %v8891 = vpop.f32.mrf.mxu0
  %v8892 = vpop.f32.mrf.mxu0
  %v8893 = vpop.f32.mrf.mxu0
  %8894 = vdwg.mxu0
  %v8896 = vsel %vm1125, %v8758, 0
  %8898 = vmatprep.subr.bf16.mxu0 0
  %8899 = vmatpush1.bf16.msra.mxu0 0
  %8900 = vmatprep.subr.bf16.mxu0 0
  %8901 = vmatpush1.bf16.msra.mxu0 0
  %8902 = vmatprep.subr.bf16.mxu0 0
  %8903 = vmatpush1.bf16.msra.mxu0 0
  %8904 = vmatprep.subr.bf16.mxu0 0
  %8905 = vmatpush1.bf16.msra.mxu0 0
  %8906 = vmatprep.subr.bf16.mxu0 0
  %8907 = vmatpush1.bf16.msra.mxu0 0
  %8908 = vmatprep.subr.bf16.mxu0 0
  %8909 = vmatpush1.bf16.msra.mxu0 0
  %8910 = vmatprep.subr.bf16.mxu0 0
  %8911 = vmatpush1.bf16.msra.mxu0 0
  %8912 = vmatprep.subr.bf16.mxu0 0
  %8913 = vmatpush1.bf16.msra.mxu0 %v8767
  %8914 = vmatprep.subr.bf16.mxu0 0
  %8915 = vmatpush2.bf16.msra.mxu0 0
  %8916 = vmatprep.subr.bf16.mxu0 0
  %8917 = vmatpush2.bf16.msra.mxu0 0
  %8918 = vmatprep.subr.bf16.mxu0 0
  %8919 = vmatpush2.bf16.msra.mxu0 0
  %8920 = vmatprep.subr.bf16.mxu0 0
  %8921 = vmatpush2.bf16.msra.mxu0 0
  %8922 = vmatprep.subr.bf16.mxu0 0
  %8923 = vmatpush2.bf16.msra.mxu0 0
  %8924 = vmatprep.subr.bf16.mxu0 0
  %8925 = vmatpush2.bf16.msra.mxu0 0
  %8926 = vmatprep.subr.bf16.mxu0 0
  %8927 = vmatpush2.bf16.msra.mxu0 0
  %8928 = vmatprep.subr.bf16.mxu0 0
  %8929 = vmatpush2.bf16.msra.mxu0 0
  %8930 = vmatprep.mubr.bf16.mxu0 0
  %8931 = vmatmul.mubr.bf16.gmra.mxu0 %v8896
  %v8932 = vpop.f32.mrf.mxu0
  %v8933 = vadd.f32 0.0, %v8932
  %v8934 = vpop.f32.mrf.mxu0
  %v8935 = vpop.f32.mrf.mxu0
  %v8936 = vpop.f32.mrf.mxu0
  %8937 = vdwg.mxu0
  %v8939 = vsel %vm1125, %v8759, 0
  %8941 = vmatprep.subr.bf16.mxu0 0
  %8942 = vmatpush1.bf16.msra.mxu0 0
  %8943 = vmatprep.subr.bf16.mxu0 0
  %8944 = vmatpush1.bf16.msra.mxu0 0
  %8945 = vmatprep.subr.bf16.mxu0 0
  %8946 = vmatpush1.bf16.msra.mxu0 0
  %8947 = vmatprep.subr.bf16.mxu0 0
  %8948 = vmatpush1.bf16.msra.mxu0 0
  %8949 = vmatprep.subr.bf16.mxu0 0
  %8950 = vmatpush1.bf16.msra.mxu0 0
  %8951 = vmatprep.subr.bf16.mxu0 0
  %8952 = vmatpush1.bf16.msra.mxu0 0
  %8953 = vmatprep.subr.bf16.mxu0 0
  %8954 = vmatpush1.bf16.msra.mxu0 0
  %8955 = vmatprep.subr.bf16.mxu0 0
  %8956 = vmatpush1.bf16.msra.mxu0 %v8767
  %8957 = vmatprep.subr.bf16.mxu0 0
  %8958 = vmatpush2.bf16.msra.mxu0 0
  %8959 = vmatprep.subr.bf16.mxu0 0
  %8960 = vmatpush2.bf16.msra.mxu0 0
  %8961 = vmatprep.subr.bf16.mxu0 0
  %8962 = vmatpush2.bf16.msra.mxu0 0
  %8963 = vmatprep.subr.bf16.mxu0 0
  %8964 = vmatpush2.bf16.msra.mxu0 0
  %8965 = vmatprep.subr.bf16.mxu0 0
  %8966 = vmatpush2.bf16.msra.mxu0 0
  %8967 = vmatprep.subr.bf16.mxu0 0
  %8968 = vmatpush2.bf16.msra.mxu0 0
  %8969 = vmatprep.subr.bf16.mxu0 0
  %8970 = vmatpush2.bf16.msra.mxu0 0
  %8971 = vmatprep.subr.bf16.mxu0 0
  %8972 = vmatpush2.bf16.msra.mxu0 0
  %8973 = vmatprep.mubr.bf16.mxu0 0
  %8974 = vmatmul.mubr.bf16.gmra.mxu0 %v8939
  %v8975 = vpop.f32.mrf.mxu0
  %v8976 = vadd.f32 0.0, %v8975
  %v8977 = vpop.f32.mrf.mxu0
  %v8978 = vpop.f32.mrf.mxu0
  %v8979 = vpop.f32.mrf.mxu0
  %8980 = vdwg.mxu0
  %v8982 = vsel %vm1125, %v8760, 0
  %8984 = vmatprep.subr.bf16.mxu0 0
  %8985 = vmatpush1.bf16.msra.mxu0 0
  %8986 = vmatprep.subr.bf16.mxu0 0
  %8987 = vmatpush1.bf16.msra.mxu0 0
  %8988 = vmatprep.subr.bf16.mxu0 0
  %8989 = vmatpush1.bf16.msra.mxu0 0
  %8990 = vmatprep.subr.bf16.mxu0 0
  %8991 = vmatpush1.bf16.msra.mxu0 0
  %8992 = vmatprep.subr.bf16.mxu0 0
  %8993 = vmatpush1.bf16.msra.mxu0 0
  %8994 = vmatprep.subr.bf16.mxu0 0
  %8995 = vmatpush1.bf16.msra.mxu0 0
  %8996 = vmatprep.subr.bf16.mxu0 0
  %8997 = vmatpush1.bf16.msra.mxu0 0
  %8998 = vmatprep.subr.bf16.mxu0 0
  %8999 = vmatpush1.bf16.msra.mxu0 %v8767
  %9000 = vmatprep.subr.bf16.mxu0 0
  %9001 = vmatpush2.bf16.msra.mxu0 0
  %9002 = vmatprep.subr.bf16.mxu0 0
  %9003 = vmatpush2.bf16.msra.mxu0 0
  %9004 = vmatprep.subr.bf16.mxu0 0
  %9005 = vmatpush2.bf16.msra.mxu0 0
  %9006 = vmatprep.subr.bf16.mxu0 0
  %9007 = vmatpush2.bf16.msra.mxu0 0
  %9008 = vmatprep.subr.bf16.mxu0 0
  %9009 = vmatpush2.bf16.msra.mxu0 0
  %9010 = vmatprep.subr.bf16.mxu0 0
  %9011 = vmatpush2.bf16.msra.mxu0 0
  %9012 = vmatprep.subr.bf16.mxu0 0
  %9013 = vmatpush2.bf16.msra.mxu0 0
  %9014 = vmatprep.subr.bf16.mxu0 0
  %9015 = vmatpush2.bf16.msra.mxu0 0
  %9016 = vmatprep.mubr.bf16.mxu0 0
  %9017 = vmatmul.mubr.bf16.gmra.mxu0 %v8982
  %v9018 = vpop.f32.mrf.mxu0
  %v9019 = vadd.f32 0.0, %v9018
  %v9020 = vpop.f32.mrf.mxu0
  %v9021 = vpop.f32.mrf.mxu0
  %v9022 = vpop.f32.mrf.mxu0
  %9023 = vdwg.mxu0
  %v9025 = vsel %vm1125, %v8761, 0
  %9027 = vmatprep.subr.bf16.mxu0 0
  %9028 = vmatpush1.bf16.msra.mxu0 0
  %9029 = vmatprep.subr.bf16.mxu0 0
  %9030 = vmatpush1.bf16.msra.mxu0 0
  %9031 = vmatprep.subr.bf16.mxu0 0
  %9032 = vmatpush1.bf16.msra.mxu0 0
  %9033 = vmatprep.subr.bf16.mxu0 0
  %9034 = vmatpush1.bf16.msra.mxu0 0
  %9035 = vmatprep.subr.bf16.mxu0 0
  %9036 = vmatpush1.bf16.msra.mxu0 0
  %9037 = vmatprep.subr.bf16.mxu0 0
  %9038 = vmatpush1.bf16.msra.mxu0 0
  %9039 = vmatprep.subr.bf16.mxu0 0
  %9040 = vmatpush1.bf16.msra.mxu0 0
  %9041 = vmatprep.subr.bf16.mxu0 0
  %9042 = vmatpush1.bf16.msra.mxu0 %v8767
  %9043 = vmatprep.subr.bf16.mxu0 0
  %9044 = vmatpush2.bf16.msra.mxu0 0
  %9045 = vmatprep.subr.bf16.mxu0 0
  %9046 = vmatpush2.bf16.msra.mxu0 0
  %9047 = vmatprep.subr.bf16.mxu0 0
  %9048 = vmatpush2.bf16.msra.mxu0 0
  %9049 = vmatprep.subr.bf16.mxu0 0
  %9050 = vmatpush2.bf16.msra.mxu0 0
  %9051 = vmatprep.subr.bf16.mxu0 0
  %9052 = vmatpush2.bf16.msra.mxu0 0
  %9053 = vmatprep.subr.bf16.mxu0 0
  %9054 = vmatpush2.bf16.msra.mxu0 0
  %9055 = vmatprep.subr.bf16.mxu0 0
  %9056 = vmatpush2.bf16.msra.mxu0 0
  %9057 = vmatprep.subr.bf16.mxu0 0
  %9058 = vmatpush2.bf16.msra.mxu0 0
  %9059 = vmatprep.mubr.bf16.mxu0 0
  %9060 = vmatmul.mubr.bf16.gmra.mxu0 %v9025
  %v9061 = vpop.f32.mrf.mxu0
  %v9062 = vadd.f32 0.0, %v9061
  %v9063 = vpop.f32.mrf.mxu0
  %v9064 = vpop.f32.mrf.mxu0
  %v9065 = vpop.f32.mrf.mxu0
  %9066 = vdwg.mxu0
  %v9068 = vsel %vm1125, %v8762, 0
  %9070 = vmatprep.subr.bf16.mxu0 0
  %9071 = vmatpush1.bf16.msra.mxu0 0
  %9072 = vmatprep.subr.bf16.mxu0 0
  %9073 = vmatpush1.bf16.msra.mxu0 0
  %9074 = vmatprep.subr.bf16.mxu0 0
  %9075 = vmatpush1.bf16.msra.mxu0 0
  %9076 = vmatprep.subr.bf16.mxu0 0
  %9077 = vmatpush1.bf16.msra.mxu0 0
  %9078 = vmatprep.subr.bf16.mxu0 0
  %9079 = vmatpush1.bf16.msra.mxu0 0
  %9080 = vmatprep.subr.bf16.mxu0 0
  %9081 = vmatpush1.bf16.msra.mxu0 0
  %9082 = vmatprep.subr.bf16.mxu0 0
  %9083 = vmatpush1.bf16.msra.mxu0 0
  %9084 = vmatprep.subr.bf16.mxu0 0
  %9085 = vmatpush1.bf16.msra.mxu0 %v8767
  %9086 = vmatprep.subr.bf16.mxu0 0
  %9087 = vmatpush2.bf16.msra.mxu0 0
  %9088 = vmatprep.subr.bf16.mxu0 0
  %9089 = vmatpush2.bf16.msra.mxu0 0
  %9090 = vmatprep.subr.bf16.mxu0 0
  %9091 = vmatpush2.bf16.msra.mxu0 0
  %9092 = vmatprep.subr.bf16.mxu0 0
  %9093 = vmatpush2.bf16.msra.mxu0 0
  %9094 = vmatprep.subr.bf16.mxu0 0
  %9095 = vmatpush2.bf16.msra.mxu0 0
  %9096 = vmatprep.subr.bf16.mxu0 0
  %9097 = vmatpush2.bf16.msra.mxu0 0
  %9098 = vmatprep.subr.bf16.mxu0 0
  %9099 = vmatpush2.bf16.msra.mxu0 0
  %9100 = vmatprep.subr.bf16.mxu0 0
  %9101 = vmatpush2.bf16.msra.mxu0 0
  %9102 = vmatprep.mubr.bf16.mxu0 0
  %9103 = vmatmul.mubr.bf16.gmra.mxu0 %v9068
  %v9104 = vpop.f32.mrf.mxu0
  %v9105 = vadd.f32 0.0, %v9104
  %v9106 = vpop.f32.mrf.mxu0
  %v9107 = vpop.f32.mrf.mxu0
  %v9108 = vpop.f32.mrf.mxu0
  %9109 = vdwg.mxu0
  %v9110 = vadd.f32 %v6846, %v8804
  %v9111 = vadd.f32 %v6847, %v8847
  %v9112 = vadd.f32 %v6848, %v8890
  %v9113 = vadd.f32 %v6849, %v8933
  %v9114 = vadd.f32 %v6850, %v8976
  %v9115 = vadd.f32 %v6851, %v9019
  %v9116 = vadd.f32 %v6852, %v9062
  %v9117 = vadd.f32 %v6853, %v9105
  %v9118 = vld [vmem:[%s8] sm:$0x1]
  %v9120 = vlaneseq
  %v9121 = vshrl.u32 %v9120, 7
  %v9122 = vsub.s32 0, %v9121
  %v9123 = vrot.slane %v9118, %v9122
  %v9125 = vadd.f32 %v9110, %v9123
  %v9126 = vadd.f32 %v9111, %v9123
  %v9127 = vadd.f32 %v9112, %v9123
  %v9128 = vadd.f32 %v9113, %v9123
  %v9129 = vadd.f32 %v9114, %v9123
  %v9130 = vadd.f32 %v9115, %v9123
  %v9131 = vadd.f32 %v9116, %v9123
  %v9132 = vadd.f32 %v9117, %v9123
  %v9133 = vadd.f32 %v39, %v9125
  %v9134 = vadd.f32 %v40, %v9126
  %v9135 = vadd.f32 %v41, %v9127
  %v9136 = vadd.f32 %v42, %v9128
  %v9137 = vadd.f32 %v43, %v9129
  %v9138 = vadd.f32 %v44, %v9130
  %v9139 = vadd.f32 %v45, %v9131
  %v9140 = vadd.f32 %v46, %v9132
  %vm9141 = vcmask 254976
  %v9142 = vsel %vm9141, %v9133, 0.0
  %9143 = vadd.xlane.f32.xlu0 %v9142
  %v9144 = vpop.xlane.xlu0 %9143
  %v9145 = vsel %vm9141, %v9134, 0.0
  %9146 = vadd.xlane.f32.xlu0 %v9145
  %v9147 = vpop.xlane.xlu0 %9146
  %v9148 = vsel %vm9141, %v9135, 0.0
  %9149 = vadd.xlane.f32.xlu0 %v9148
  %v9150 = vpop.xlane.xlu0 %9149
  %v9151 = vsel %vm9141, %v9136, 0.0
  %9152 = vadd.xlane.f32.xlu0 %v9151
  %v9153 = vpop.xlane.xlu0 %9152
  %v9154 = vsel %vm9141, %v9137, 0.0
  %9155 = vadd.xlane.f32.xlu0 %v9154
  %v9156 = vpop.xlane.xlu0 %9155
  %v9157 = vsel %vm9141, %v9138, 0.0
  %9158 = vadd.xlane.f32.xlu0 %v9157
  %v9159 = vpop.xlane.xlu0 %9158
  %v9160 = vsel %vm9141, %v9139, 0.0
  %9161 = vadd.xlane.f32.xlu0 %v9160
  %v9162 = vpop.xlane.xlu0 %9161
  %v9163 = vsel %vm9141, %v9140, 0.0
  %9164 = vadd.xlane.f32.xlu0 %v9163
  %v9165 = vpop.xlane.xlu0 %9164
  %v9166 = vrcp.pop 32.0
  %v9167 = vmul.f32 %v9144, %v9166
  %v9168 = vmul.f32 %v9147, %v9166
  %v9169 = vmul.f32 %v9150, %v9166
  %v9170 = vmul.f32 %v9153, %v9166
  %v9171 = vmul.f32 %v9156, %v9166
  %v9172 = vmul.f32 %v9159, %v9166
  %v9173 = vmul.f32 %v9162, %v9166
  %v9174 = vmul.f32 %v9165, %v9166
  %v9175 = vsub.f32 %v9133, %v9167
  %v9176 = vsub.f32 %v9134, %v9168
  %v9177 = vsub.f32 %v9135, %v9169
  %v9178 = vsub.f32 %v9136, %v9170
  %v9179 = vsub.f32 %v9137, %v9171
  %v9180 = vsub.f32 %v9138, %v9172
  %v9181 = vsub.f32 %v9139, %v9173
  %v9182 = vsub.f32 %v9140, %v9174
  %v9183 = vmul.f32 %v9175, %v9175
  %v9184 = vmul.f32 %v9176, %v9176
  %v9185 = vmul.f32 %v9177, %v9177
  %v9186 = vmul.f32 %v9178, %v9178
  %v9187 = vmul.f32 %v9179, %v9179
  %v9188 = vmul.f32 %v9180, %v9180
  %v9189 = vmul.f32 %v9181, %v9181
  %v9190 = vmul.f32 %v9182, %v9182
  %v9191 = vsel %vm9141, %v9183, 0.0
  %9192 = vadd.xlane.f32.xlu0 %v9191
  %v9193 = vpop.xlane.xlu0 %9192
  %v9194 = vsel %vm9141, %v9184, 0.0
  %9195 = vadd.xlane.f32.xlu0 %v9194
  %v9196 = vpop.xlane.xlu0 %9195
  %v9197 = vsel %vm9141, %v9185, 0.0
  %9198 = vadd.xlane.f32.xlu0 %v9197
  %v9199 = vpop.xlane.xlu0 %9198
  %v9200 = vsel %vm9141, %v9186, 0.0
  %9201 = vadd.xlane.f32.xlu0 %v9200
  %v9202 = vpop.xlane.xlu0 %9201
  %v9203 = vsel %vm9141, %v9187, 0.0
  %9204 = vadd.xlane.f32.xlu0 %v9203
  %v9205 = vpop.xlane.xlu0 %9204
  %v9206 = vsel %vm9141, %v9188, 0.0
  %9207 = vadd.xlane.f32.xlu0 %v9206
  %v9208 = vpop.xlane.xlu0 %9207
  %v9209 = vsel %vm9141, %v9189, 0.0
  %9210 = vadd.xlane.f32.xlu0 %v9209
  %v9211 = vpop.xlane.xlu0 %9210
  %v9212 = vsel %vm9141, %v9190, 0.0
  %9213 = vadd.xlane.f32.xlu0 %v9212
  %v9214 = vpop.xlane.xlu0 %9213
  %v9215 = vmul.f32 %v9193, %v9166
  %v9216 = vmul.f32 %v9196, %v9166
  %v9217 = vmul.f32 %v9199, %v9166
  %v9218 = vmul.f32 %v9202, %v9166
  %v9219 = vmul.f32 %v9205, %v9166
  %v9220 = vmul.f32 %v9208, %v9166
  %v9221 = vmul.f32 %v9211, %v9166
  %v9222 = vmul.f32 %v9214, %v9166
  %v9223 = vadd.f32 %v9215, 1e-05
  %v9224 = vadd.f32 %v9216, 1e-05
  %v9225 = vadd.f32 %v9217, 1e-05
  %v9226 = vadd.f32 %v9218, 1e-05
  %v9227 = vadd.f32 %v9219, 1e-05
  %v9228 = vadd.f32 %v9220, 1e-05
  %v9229 = vadd.f32 %v9221, 1e-05
  %v9230 = vadd.f32 %v9222, 1e-05
  %v9231 = vrsqrt.pop %v9223
  %v9232 = vrsqrt.pop %v9224
  %v9233 = vrsqrt.pop %v9225
  %v9234 = vrsqrt.pop %v9226
  %v9235 = vrsqrt.pop %v9227
  %v9236 = vrsqrt.pop %v9228
  %v9237 = vrsqrt.pop %v9229
  %v9238 = vrsqrt.pop %v9230
  %v9239 = vmul.f32 %v9175, %v9231
  %v9240 = vmul.f32 %v9176, %v9232
  %v9241 = vmul.f32 %v9177, %v9233
  %v9242 = vmul.f32 %v9178, %v9234
  %v9243 = vmul.f32 %v9179, %v9235
  %v9244 = vmul.f32 %v9180, %v9236
  %v9245 = vmul.f32 %v9181, %v9237
  %v9246 = vmul.f32 %v9182, %v9238
  %v9247 = vld [vmem:[%s9] sm:$0x1]
  %v9249 = vlaneseq
  %v9250 = vshrl.u32 %v9249, 7
  %v9251 = vsub.s32 0, %v9250
  %v9252 = vrot.slane %v9247, %v9251
  %v9254 = vmul.f32 %v9239, %v9252
  %v9255 = vmul.f32 %v9240, %v9252
  %v9256 = vmul.f32 %v9241, %v9252
  %v9257 = vmul.f32 %v9242, %v9252
  %v9258 = vmul.f32 %v9243, %v9252
  %v9259 = vmul.f32 %v9244, %v9252
  %v9260 = vmul.f32 %v9245, %v9252
  %v9261 = vmul.f32 %v9246, %v9252
  %v9262 = vld [vmem:[%s10] sm:$0x1]
  %v9264 = vlaneseq
  %v9265 = vshrl.u32 %v9264, 7
  %v9266 = vsub.s32 0, %v9265
  %v9267 = vrot.slane %v9262, %v9266
  %v9269 = vadd.f32 %v9254, %v9267
  %v9270 = vadd.f32 %v9255, %v9267
  %v9271 = vadd.f32 %v9256, %v9267
  %v9272 = vadd.f32 %v9257, %v9267
  %v9273 = vadd.f32 %v9258, %v9267
  %v9274 = vadd.f32 %v9259, %v9267
  %v9275 = vadd.f32 %v9260, %v9267
  %v9276 = vadd.f32 %v9261, %v9267
  %9277 = vst.msk [vmem:[%s11] sm:$0x3] %vm9141, %v9269
  %9278 = vst.msk [vmem:[%s11 + $0x2] sm:$0x3] %vm9141, %v9270
  %9279 = vst.msk [vmem:[%s11 + $0x4] sm:$0x3] %vm9141, %v9271
  %9280 = vst.msk [vmem:[%s11 + $0x6] sm:$0x3] %vm9141, %v9272
  %9281 = vst.msk [vmem:[%s11 + $0x8] sm:$0x3] %vm9141, %v9273
  %9282 = vst.msk [vmem:[%s11 + $0xa] sm:$0x3] %vm9141, %v9274
  %9283 = vst.msk [vmem:[%s11 + $0xc] sm:$0x3] %vm9141, %v9275
  %9284 = vst.msk [vmem:[%s11 + $0xe] sm:$0x3] %vm9141, %v9276
  // Predicated region
  $region46: #{ourgan_d_forward.9} parent=0 // pred_check
    _
  $region47: #{ourgan_d_forward.9} parent=0 // pred_check_branch
    %9286 = sbr.rel (0) target = $region49
  $region48: #{ourgan_d_forward.9} parent=0 // pred_region
    _
  $region49: #{ourgan_d_forward.9} parent=0 // pred_fallthru
    _
  // Predicated region
  $region50: #{ourgan_d_forward.9} parent=0 // pred_check
    _
  $region51: #{ourgan_d_forward.9} parent=0 // pred_check_branch
    %9288 = sbr.rel (0) target = $region53
  $region52: #{ourgan_d_forward.9} parent=0 // pred_region
    _
  $region53: #{ourgan_d_forward.9} parent=0 // pred_fallthru
    _

</llo_original>
